<compile_context>
chip_gen: v5e
topology: v5e:2x2
jax: 0.10.0
libtpu: 0.0.40
codegen_flags: <defaults>
</compile_context>

<pallas_src>
import math
import functools

import jax
import jax.numpy as jnp
from jax import lax
from jax.experimental import pallas as pl
from jax.experimental.pallas import tpu as pltpu


def _round_up(x, m):
    return (x + m - 1) // m * m


def _pick_tile(n, cap):
    """Largest tile <= cap that divides n (multiples of 8), else full n."""
    if n <= cap:
        return n
    for t in range(cap, 7, -8):
        if n % t == 0:
            return t
    return n


# --------------------------------------------------------------------------
# Generation-aware VMEM budget / tiles.
# --------------------------------------------------------------------------
def _vmem_capacity_bytes():
    try:
        return int(pltpu.get_tpu_info().vmem_capacity_bytes)
    except Exception:
        return 64 * 1024 * 1024          # conservative (v7x-sized) fallback


_VMEM_CAP = _vmem_capacity_bytes()
_VMEM_LIMIT = min(_VMEM_CAP * 3 // 4, 100 * 1024 * 1024)
_ROW_TILE = 256 if _VMEM_CAP <= 64 * 1024 * 1024 else 1024
_SEQ_TILE_CAP = 256


# --------------------------------------------------------------------------
# Probe once whether constant-index BlockSpecs accept single buffering
# (pipeline_mode=pl.Buffered(1)); fall back to default double-buffering.
# --------------------------------------------------------------------------
def _probe_const_single_buffer():
    try:
        kw = {"pipeline_mode": pl.Buffered(1)}

        def _k(c_ref, x_ref, o_ref):
            o_ref[...] = x_ref[...] + c_ref[...]

        f = pl.pallas_call(
            _k,
            out_shape=jax.ShapeDtypeStruct((16, 128), jnp.float32),
            grid=(2,),
            in_specs=[pl.BlockSpec((8, 128), lambda i: (0, 0), **kw),
                      pl.BlockSpec((8, 128), lambda i: (i, 0))],
            out_specs=pl.BlockSpec((8, 128), lambda i: (i, 0)),
        )
        y = f(jnp.ones((8, 128), jnp.float32), jnp.ones((16, 128), jnp.float32))
        jax.block_until_ready(y)
        if not bool(jnp.allclose(y, 2.0)):
            return {}
        return kw
    except Exception:
        return {}


_CONST_SPEC_KW = _probe_const_single_buffer()


def _const_spec(shape, grid_rank):
    """BlockSpec for a grid-invariant (weight/bias/LN/codebook) input."""
    zeros = (0,) * len(shape)
    if grid_rank == 1:
        imap = lambda i: zeros
    else:
        imap = lambda b, i: zeros
    return pl.BlockSpec(shape, imap, **_CONST_SPEC_KW)


# --------------------------------------------------------------------------
# Masked LayerNorm over the true (unpadded) feature width.  Relies on padded
# lanes of `y` being exactly zero (maintained throughout the network).
# --------------------------------------------------------------------------
def _masked_layer_norm(y, g, b, d_true):
    d_pad = y.shape[-1]
    mu = jnp.sum(y, axis=-1, keepdims=True) * (1.0 / d_true)
    yc = y - mu
    if d_pad != d_true:
        lane = lax.broadcasted_iota(jnp.int32, (1, d_pad), 1)
        yc = yc * (lane < d_true).astype(jnp.float32)
    var = jnp.sum(yc * yc, axis=-1, keepdims=True) * (1.0 / d_true)
    return yc * lax.rsqrt(var + 1e-5) * g + b


# --------------------------------------------------------------------------
# Kernel 1: fused multi-head-attention sub-layer
#   Q / packed-KV projections -> per-head SDPA -> single fused out-projection
#   -> +residual -> LayerNorm.  Grid = (batch, Sq tiles), both parallel.
# --------------------------------------------------------------------------
def _mha_block_kernel(qin_ref, kvin_ref, wq_ref, bq_ref, wkv_ref, bkv_ref,
                      wo_ref, bo_ref, g_ref, b_ref, o_ref, attn_ref, *,
                      num_heads, d_true):
    bf = jnp.bfloat16
    x = qin_ref[0]                               # (tq, Dp) f32, residual source
    kv_in = kvin_ref[0]                          # (Sk, Dp) f32
    _, d_pad = x.shape
    dh = d_true // num_heads

    # Projections: weights arrive bf16, scale already folded into Wq / bq.
    q = jnp.dot(x.astype(bf), wq_ref[...],
                preferred_element_type=jnp.float32) + bq_ref[...]
    kvp = jnp.dot(kv_in.astype(bf), wkv_ref[...],
                  preferred_element_type=jnp.float32) + bkv_ref[...]
    q = q.astype(bf)                             # cast once, slice per head
    k = kvp[:, :d_pad].astype(bf)
    v = kvp[:, d_pad:].astype(bf)

    if d_pad > d_true:                           # keep lane padding exactly 0
        attn_ref[...] = jnp.zeros_like(attn_ref)

    # TODO(synk): for long sequences, tile Sk flash-style (online-softmax
    # m/l/acc scratch) instead of materializing the full (tq, Sk) score block.
    for h in range(num_heads):
        sl = slice(h * dh, (h + 1) * dh)
        s = lax.dot_general(q[:, sl], k[:, sl], (((1,), (1,)), ((), ())),
                            preferred_element_type=jnp.float32)
        s = s - jnp.max(s, axis=-1, keepdims=True)     # stable softmax (f32)
        p = jnp.exp(s)
        p = p * pl.reciprocal(jnp.sum(p, axis=-1, keepdims=True), approx=False)
        attn_ref[:, sl] = jnp.dot(p.astype(bf), v[:, sl],
                                  preferred_element_type=jnp.float32)

    # Single head-merged out-projection: full-depth contraction on the MXU.
    proj = jnp.dot(attn_ref[...].astype(bf), wo_ref[...],
                   preferred_element_type=jnp.float32)
    y = proj + bo_ref[...] + x
    o_ref[0] = _masked_layer_norm(y, g_ref[...], b_ref[...], d_true)


def mha_block(q_in, kv_in, ap, ln_g, ln_b, num_heads, d_true):
    """Fused MHA sub-layer: LayerNorm(q_in + MHA(q_in, kv_in, kv_in))."""
    B, Sq, Dp = q_in.shape
    Sk = kv_in.shape[1]
    tq = _pick_tile(Sq, _SEQ_TILE_CAP)
    kernel = functools.partial(_mha_block_kernel,
                               num_heads=num_heads, d_true=d_true)
    return pl.pallas_call(
        kernel,
        out_shape=jax.ShapeDtypeStruct((B, Sq, Dp), jnp.float32),
        grid=(B, Sq // tq),
        in_specs=[
            pl.BlockSpec((1, tq, Dp), lambda b, i: (b, i, 0)),  # q / residual
            pl.BlockSpec((1, Sk, Dp), lambda b, i: (b, 0, 0)),  # kv source
            _const_spec((Dp, Dp), 2),                           # Wq (bf16, scaled)
            _const_spec((1, Dp), 2),                            # bq (scaled)
            _const_spec((Dp, 2 * Dp), 2),                       # Wk|Wv (bf16)
            _const_spec((1, 2 * Dp), 2),                        # bk|bv
            _const_spec((Dp, Dp), 2),                           # Wo (bf16)
            _const_spec((1, Dp), 2),                            # bo
            _const_spec((1, Dp), 2),                            # LN gamma
            _const_spec((1, Dp), 2),                            # LN beta
        ],
        out_specs=pl.BlockSpec((1, tq, Dp), lambda b, i: (b, i, 0)),
        scratch_shapes=[pltpu.VMEM((tq, Dp), jnp.float32)],     # head-merged attn
        compiler_params=pltpu.CompilerParams(
            dimension_semantics=("parallel", "parallel"),
            vmem_limit_bytes=_VMEM_LIMIT),
    )(q_in, kv_in, ap['wq'], ap['bq'], ap['wkv'], ap['bkv'],
      ap['wo'], ap['bo'], ln_g, ln_b)


# --------------------------------------------------------------------------
# Kernel 2: fused FFN sub-layer (linear -> ReLU -> linear + residual + LN),
# tiled over rows; bf16 weights resident in VMEM across the grid.
# --------------------------------------------------------------------------
def _ffn_block_kernel(x_ref, w1_ref, b1_ref, w2_ref, b2_ref, g_ref, b_ref,
                      o_ref, *, d_true):
    bf = jnp.bfloat16
    x = x_ref[...]                                  # (tm, Dp) f32, residual
    h = jnp.dot(x.astype(bf), w1_ref[...],
                preferred_element_type=jnp.float32) + b1_ref[...]
    h = jnp.maximum(h, 0.0)                         # ReLU (PyTorch default)
    y = jnp.dot(h.astype(bf), w2_ref[...],
                preferred_element_type=jnp.float32) + b2_ref[...]
    y = y + x
    o_ref[...] = _masked_layer_norm(y, g_ref[...], b_ref[...], d_true)


def ffn_block(x, w1, b1, w2, b2, ln_g, ln_b, d_true):
    """Fused FFN sub-layer: LayerNorm(x + W2 relu(W1 x + b1) + b2)."""
    # TODO(synk): for v5e, optionally emit bf16 activations (or fuse the whole
    # encoder layer into one pallas_call) to cut inter-kernel HBM traffic.
    B, S, Dp = x.shape
    Hp = w1.shape[1]
    M = B * S
    tm = min(_ROW_TILE, _round_up(M, 8))
    Mp = _round_up(M, tm)
    x2 = x.reshape(M, Dp)
    if Mp != M:
        x2 = jnp.pad(x2, ((0, Mp - M), (0, 0)))
    out = pl.pallas_call(
        functools.partial(_ffn_block_kernel, d_true=d_true),
        out_shape=jax.ShapeDtypeStruct((Mp, Dp), jnp.float32),
        grid=(Mp // tm,),
        in_specs=[pl.BlockSpec((tm, Dp), lambda i: (i, 0)),
                  _const_spec((Dp, Hp), 1),         # W1 (bf16)
                  _const_spec((1, Hp), 1),
                  _const_spec((Hp, Dp), 1),         # W2 (bf16)
                  _const_spec((1, Dp), 1),
                  _const_spec((1, Dp), 1),          # LN gamma
                  _const_spec((1, Dp), 1)],         # LN beta
        out_specs=pl.BlockSpec((tm, Dp), lambda i: (i, 0)),
        compiler_params=pltpu.CompilerParams(
            dimension_semantics=("parallel",),
            vmem_limit_bytes=_VMEM_LIMIT),
    )(x2, w1, b1, w2, b2, ln_g, ln_b)
    if Mp != M:
        out = out[:M]
    return out.reshape(B, S, Dp)


# --------------------------------------------------------------------------
# Kernel 3: vector quantizer (row-tiled parallel grid; codebook resident;
# ||e||^2 precomputed; per-tile partial losses reduced in JAX).
# --------------------------------------------------------------------------
def _vq_kernel(z_ref, e_ref, e2_ref, q_ref, loss_ref, *,
               beta, n_valid, d_true, row_tile):
    pid = pl.program_id(0)
    z = z_ref[...]                                   # (tn, Dp) f32
    e = e_ref[...]                                   # (K, Dp)  f32 codebook
    tn, _ = z.shape
    K = e.shape[0]

    # ||z-e||^2 = ||z||^2 - 2 z.e^T + ||e||^2.  Cross term stays in f32 so the
    # argmin matches the fp32 reference; ||e||^2 is computed once outside.
    z2 = jnp.sum(z * z, axis=1, keepdims=True)               # (tn, 1)
    cross = lax.dot_general(z, e, (((1,), (1,)), ((), ())),
                            preferred_element_type=jnp.float32)
    d = z2 - 2.0 * cross + e2_ref[...]                       # (tn, K)

    # first-argmin (torch.argmin tie-break) via min + iota trick
    min_d = jnp.min(d, axis=1, keepdims=True)
    iota_k = lax.broadcasted_iota(jnp.int32, (tn, K), 1)
    idx = jnp.min(jnp.where(d <= min_d, iota_k, K), axis=1, keepdims=True)
    onehot = (iota_k == idx).astype(jnp.float32)
    # TODO(synk): for codebooks with K in the thousands, tile K with a running
    # (min_d, argmin) carry and gather the selected rows instead of one-hot@e.
    qz = jnp.dot(onehot, e, preferred_element_type=jnp.float32)  # exact gather
    q_ref[...] = qz

    # masked contribution of this row tile to (1+beta) * mse(q, z)
    rows = pid * row_tile + lax.broadcasted_iota(jnp.int32, (tn, 1), 0)
    mask = (rows < n_valid).astype(jnp.float32)
    diff = (qz - z) * mask
    loss_ref[0] = ((1.0 + beta) / (n_valid * d_true)) * jnp.sum(
        diff * diff, keepdims=True)


def vector_quantize(z, codebook, e2, beta, d_true):
    B, S, Dp = z.shape
    K = codebook.shape[0]
    N = B * S
    tn = min(_ROW_TILE, _round_up(N, 8))
    Np = _round_up(N, tn)
    zf = z.reshape(N, Dp)
    if Np != N:
        zf = jnp.pad(zf, ((0, Np - N), (0, 0)))
    G = Np // tn
    kernel = functools.partial(_vq_kernel, beta=beta, n_valid=N,
                               d_true=d_true, row_tile=tn)
    q, part = pl.pallas_call(
        kernel,
        out_shape=(jax.ShapeDtypeStruct((Np, Dp), jnp.float32),
                   jax.ShapeDtypeStruct((G, 1, 1), jnp.float32)),
        grid=(G,),
        in_specs=[pl.BlockSpec((tn, Dp), lambda i: (i, 0)),
                  _const_spec((K, Dp), 1),           # codebook (f32, resident)
                  _const_spec((1, K), 1)],           # ||e||^2 (precomputed)
        out_specs=(pl.BlockSpec((tn, Dp), lambda i: (i, 0)),
                   pl.BlockSpec((1, 1, 1), lambda i: (i, 0, 0))),
        compiler_params=pltpu.CompilerParams(
            dimension_semantics=("parallel",),       # per-tile losses -> parallel
            vmem_limit_bytes=_VMEM_LIMIT),
    )(zf, codebook, e2)
    if Np != N:
        q = q[:N]
    return q.reshape(B, S, Dp), jnp.sum(part)


# --------------------------------------------------------------------------
# Model glue (layer stacking) in plain JAX
# --------------------------------------------------------------------------
def encoder_layer(x, p, num_heads, d_true):
    h = mha_block(x, x, p['self_attn'], p['ln1_g'], p['ln1_b'],
                  num_heads, d_true)
    return ffn_block(h, p['w1'], p['b1'], p['w2'], p['b2'],
                     p['ln2_g'], p['ln2_b'], d_true)


def decoder_layer(tgt, memory, p, num_heads, d_true):
    h = mha_block(tgt, tgt, p['self_attn'], p['ln1_g'], p['ln1_b'],
                  num_heads, d_true)
    h = mha_block(h, memory, p['cross_attn'], p['ln2_g'], p['ln2_b'],
                  num_heads, d_true)
    return ffn_block(h, p['w1'], p['b1'], p['w2'], p['b2'],
                     p['ln3_g'], p['ln3_b'], d_true)


def positional_encoding(S, D):
    pos = jnp.arange(S, dtype=jnp.float32)[:, None]
    div = jnp.exp(jnp.arange(0, D, 2, dtype=jnp.float32) *
                  (-math.log(10000.0) / D))
    ang = pos * div
    pe = jnp.zeros((S, D), jnp.float32)
    pe = pe.at[:, 0::2].set(jnp.sin(ang))
    pe = pe.at[:, 1::2].set(jnp.cos(ang)[:, :D // 2])   # handles odd D
    return pe


def vqvae_forward(x, prepared, num_heads, beta, d_true):
    B, S, D = x.shape
    x = x + positional_encoding(S, D)[None]          # eval-mode dropout = identity
    d_pad = prepared['codebook'].shape[1]
    if d_pad != D:                                   # lane-pad once at the input
        x = jnp.pad(x, ((0, 0), (0, 0), (0, d_pad - D)))

    enc = x
    for p in prepared['encoder_layers']:
        enc = encoder_layer(enc, p, num_heads, d_true)

    cb = prepared['codebook']
    e2 = jnp.sum(cb * cb, axis=1)[None, :]           # computed once, not per tile
    quantized, vq_loss = vector_quantize(enc, cb, e2, beta, d_true)

    # straight-through estimator only affects backward; forward value of
    # z + sg(q - z) equals q, which is what the decoder consumes.
    dec = quantized
    for p in prepared['decoder_layers']:
        dec = decoder_layer(dec, enc, p, num_heads, d_true)
    if d_pad != D:
        dec = dec[:, :, :D]
    return dec, vq_loss


# --------------------------------------------------------------------------
# Parameter initialization (raw f32, PyTorch-like) and host-side preparation
# (lane padding to multiples of 128, K/V packing, scale folding, bf16 cast).
# --------------------------------------------------------------------------
def init_params(key, D, hidden, num_embeddings, num_layers):
    keys = iter(jax.random.split(key, 1024))

    def dense(din, dout):
        return 0.05 * jax.random.normal(next(keys), (din, dout), jnp.float32)

    def attn_p():
        return {'wq': dense(D, D), 'bq': jnp.zeros((1, D), jnp.float32),
                'wk': dense(D, D), 'bk': jnp.zeros((1, D), jnp.float32),
                'wv': dense(D, D), 'bv': jnp.zeros((1, D), jnp.float32),
                'wo': dense(D, D), 'bo': jnp.zeros((1, D), jnp.float32)}

    def enc_layer_p():
        return {'self_attn': attn_p(),
                'ln1_g': jnp.ones((1, D), jnp.float32),
                'ln1_b': jnp.zeros((1, D), jnp.float32),
                'w1': dense(D, hidden), 'b1': jnp.zeros((1, hidden), jnp.float32),
                'w2': dense(hidden, D), 'b2': jnp.zeros((1, D), jnp.float32),
                'ln2_g': jnp.ones((1, D), jnp.float32),
                'ln2_b': jnp.zeros((1, D), jnp.float32)}

    def dec_layer_p():
        p = enc_layer_p()
        p['cross_attn'] = attn_p()
        p['ln3_g'] = jnp.ones((1, D), jnp.float32)
        p['ln3_b'] = jnp.zeros((1, D), jnp.float32)
        return p

    return {
        'encoder_layers': [enc_layer_p() for _ in range(num_layers)],
        'decoder_layers': [dec_layer_p() for _ in range(num_layers)],
        'codebook': jax.random.uniform(next(keys), (num_embeddings, D),
                                       jnp.float32, -1.0, 1.0),
    }


def prepare_params(params, d_true, hidden, num_heads):
    assert d_true % num_heads == 0
    bf = jnp.bfloat16
    d_pad = _round_up(d_true, 128)
    h_pad = _round_up(hidden, 128)
    scale = 1.0 / math.sqrt(d_true // num_heads)

    def padw(w, r, c):
        return jnp.pad(w, ((0, r - w.shape[0]), (0, c - w.shape[1])))

    def prep_attn(a):
        return {
            'wq': padw(a['wq'] * scale, d_pad, d_pad).astype(bf),   # scale folded
            'bq': padw(a['bq'] * scale, 1, d_pad),
            'wkv': jnp.concatenate([padw(a['wk'], d_pad, d_pad),
                                    padw(a['wv'], d_pad, d_pad)], 1).astype(bf),
            'bkv': jnp.concatenate([padw(a['bk'], 1, d_pad),
                                    padw(a['bv'], 1, d_pad)], 1),
            'wo': padw(a['wo'], d_pad, d_pad).astype(bf),
            'bo': padw(a['bo'], 1, d_pad),
        }

    def prep_ln(g, b):
        return padw(g, 1, d_pad), padw(b, 1, d_pad)   # zero-pad -> padded lanes = 0

    def prep_layer(p, has_cross):
        out = {'self_attn': prep_attn(p['self_attn'])}
        out['ln1_g'], out['ln1_b'] = prep_ln(p['ln1_g'], p['ln1_b'])
        out['ln2_g'], out['ln2_b'] = prep_ln(p['ln2_g'], p['ln2_b'])
        if has_cross:
            out['cross_attn'] = prep_attn(p['cross_attn'])
            out['ln3_g'], out['ln3_b'] = prep_ln(p['ln3_g'], p['ln3_b'])
        out['w1'] = padw(p['w1'], d_pad, h_pad).astype(bf)
        out['b1'] = padw(p['b1'], 1, h_pad)
        out['w2'] = padw(p['w2'], h_pad, d_pad).astype(bf)
        out['b2'] = padw(p['b2'], 1, d_pad)
        return out

    return {
        'encoder_layers': [prep_layer(p, False) for p in params['encoder_layers']],
        'decoder_layers': [prep_layer(p, True) for p in params['decoder_layers']],
        # codebook stays f32 so nearest-neighbor argmin matches fp32 reference
        'codebook': jnp.pad(params['codebook'], ((0, 0), (0, d_pad - d_true))),
    }


# --------------------------------------------------------------------------
# Entry point
# --------------------------------------------------------------------------
if __name__ == "__main__":
    # small, forward-consistent sizes: input_dim == embedding_dim (required for
    # the decoder cross-attention over `encoded`), hidden_dim is the FFN width.
    B, S = 2, 8
    input_dim = embedding_dim = 16
    hidden_dim = 32
    num_heads = 2
    num_layers = 2
    num_embeddings = 32
    beta = 0.25

    root = jax.random.PRNGKey(0)
    k_x, k_p = jax.random.split(root)
    x = jax.random.normal(k_x, (B, S, input_dim), jnp.float32)
    raw_params = init_params(k_p, input_dim, hidden_dim, num_embeddings,
                             num_layers)
    prepared = prepare_params(raw_params, input_dim, hidden_dim, num_heads)

    fwd = jax.jit(functools.partial(vqvae_forward, num_heads=num_heads,
                                    beta=beta, d_true=embedding_dim))
    decoded, vq_loss = fwd(x, prepared)
    jax.block_until_ready((decoded, vq_loss))

    assert decoded.shape == (B, S, embedding_dim)
    assert vq_loss.shape == ()
    assert bool(jnp.all(jnp.isfinite(decoded))) and bool(jnp.isfinite(vq_loss))
    print("KERNEL_OK")
</pallas_src>

<mosaic_0001>
module attributes {stable_mosaic.version = 11 : i64} {
  func.func @_k(%arg0: i32, %arg1: memref<8x128xf32, #tpu.memory_space<vmem>>, %arg2: memref<8x128xf32, #tpu.memory_space<vmem>>, %arg3: memref<8x128xf32, #tpu.memory_space<vmem>>) attributes {dimension_semantics = [#tpu.dimension_semantics<arbitrary>], iteration_bounds = array<i64: 2>, scalar_prefetch = 0 : i64, scratch_operands = 0 : i64, tpu.core_type = #tpu.core_type<tc>, window_params = [{pipeline_mode = #tpu.pipeline_mode<synchronous>, transform_indices = @transform_0, window_bounds = array<i64: 8, 128>}, {transform_indices = @transform_1, window_bounds = array<i64: 8, 128>}, {transform_indices = @transform_2, window_bounds = array<i64: 8, 128>}]} {
    %c0 = arith.constant 0 : index
    %c0_0 = arith.constant 0 : index
    %0 = vector.load %arg2[%c0, %c0_0] : memref<8x128xf32, #tpu.memory_space<vmem>>, vector<8x128xf32>
    %c0_1 = arith.constant 0 : index
    %c0_2 = arith.constant 0 : index
    %1 = vector.load %arg1[%c0_1, %c0_2] : memref<8x128xf32, #tpu.memory_space<vmem>>, vector<8x128xf32>
    %2 = arith.addf %0, %1 : vector<8x128xf32>
    %c0_3 = arith.constant 0 : index
    %c0_4 = arith.constant 0 : index
    %3 = vector.load %arg3[%c0_3, %c0_4] : memref<8x128xf32, #tpu.memory_space<vmem>>, vector<8x128xf32>
    tpu.vector_store %arg3[%c0_3, %c0_4], %2 {strides = array<i32>} : memref<8x128xf32, #tpu.memory_space<vmem>>, vector<8x128xf32>,
    return
  }
  func.func @transform_0(%arg0: i32) -> (i32, i32) {
    %c0_i32 = arith.constant 0 : i32
    %c0_i32_0 = arith.constant 0 : i32
    %c0_i32_1 = arith.constant 0 : i32
    return %c0_i32, %c0_i32_0 : i32, i32
  }
  func.func @transform_1(%arg0: i32) -> (i32, i32) {
    %c0_i32 = arith.constant 0 : i32
    %c0_i32_0 = arith.constant 0 : i32
    return %arg0, %c0_i32 : i32, i32
  }
  func.func @transform_2(%arg0: i32) -> (i32, i32) {
    %c0_i32 = arith.constant 0 : i32
    %c0_i32_0 = arith.constant 0 : i32
    return %arg0, %c0_i32 : i32, i32
  }
}

module attributes {stable_mosaic.version = 11 : i64} {
  func.func @_mha_block_kernel(%arg0: i32, %arg1: i32, %arg2: memref<1x8x128xf32, #tpu.memory_space<vmem>>, %arg3: memref<1x8x128xf32, #tpu.memory_space<vmem>>, %arg4: memref<128x128xbf16, #tpu.memory_space<vmem>>, %arg5: memref<1x128xf32, #tpu.memory_space<vmem>>, %arg6: memref<128x256xbf16, #tpu.memory_space<vmem>>, %arg7: memref<1x256xf32, #tpu.memory_space<vmem>>, %arg8: memref<128x128xbf16, #tpu.memory_space<vmem>>, %arg9: memref<1x128xf32, #tpu.memory_space<vmem>>, %arg10: memref<1x128xf32, #tpu.memory_space<vmem>>, %arg11: memref<1x128xf32, #tpu.memory_space<vmem>>, %arg12: memref<1x8x128xf32, #tpu.memory_space<vmem>>, %arg13: memref<8x128xf32, #tpu.memory_space<vmem>>) attributes {dimension_semantics = [#tpu.dimension_semantics<parallel>, #tpu.dimension_semantics<parallel>], iteration_bounds = array<i64: 2, 1>, scalar_prefetch = 0 : i64, scratch_operands = 1 : i64, tpu.core_type = #tpu.core_type<tc>, window_params = [{transform_indices = @transform_0, window_bounds = array<i64: 1, 8, 128>}, {transform_indices = @transform_1, window_bounds = array<i64: 1, 8, 128>}, {pipeline_mode = #tpu.pipeline_mode<synchronous>, transform_indices = @transform_2, window_bounds = array<i64: 128, 128>}, {pipeline_mode = #tpu.pipeline_mode<synchronous>, transform_indices = @transform_3, window_bounds = array<i64: 1, 128>}, {pipeline_mode = #tpu.pipeline_mode<synchronous>, transform_indices = @transform_4, window_bounds = array<i64: 128, 256>}, {pipeline_mode = #tpu.pipeline_mode<synchronous>, transform_indices = @transform_5, window_bounds = array<i64: 1, 256>}, {pipeline_mode = #tpu.pipeline_mode<synchronous>, transform_indices = @transform_6, window_bounds = array<i64: 128, 128>}, {pipeline_mode = #tpu.pipeline_mode<synchronous>, transform_indices = @transform_7, window_bounds = array<i64: 1, 128>}, {pipeline_mode = #tpu.pipeline_mode<synchronous>, transform_indices = @transform_8, window_bounds = array<i64: 1, 128>}, {pipeline_mode = #tpu.pipeline_mode<synchronous>, transform_indices = @transform_9, window_bounds = array<i64: 1, 128>}, {transform_indices = @transform_10, window_bounds = array<i64: 1, 8, 128>}]} {
    %c0 = arith.constant 0 : index
    %c0_0 = arith.constant 0 : index
    %c0_1 = arith.constant 0 : index
    %0 = vector.load %arg2[%c0, %c0_0, %c0_1] : memref<1x8x128xf32, #tpu.memory_space<vmem>>, vector<1x8x128xf32>
    %1 = vector.shape_cast %0 : vector<1x8x128xf32> to vector<8x128xf32>
    %c0_2 = arith.constant 0 : index
    %c0_3 = arith.constant 0 : index
    %c0_4 = arith.constant 0 : index
    %2 = vector.load %arg3[%c0_2, %c0_3, %c0_4] : memref<1x8x128xf32, #tpu.memory_space<vmem>>, vector<1x8x128xf32>
    %3 = vector.shape_cast %2 : vector<1x8x128xf32> to vector<8x128xf32>
    %4 = arith.truncf %1 : vector<8x128xf32> to vector<8x128xbf16>
    %c0_5 = arith.constant 0 : index
    %c0_6 = arith.constant 0 : index
    %5 = vector.load %arg4[%c0_5, %c0_6] : memref<128x128xbf16, #tpu.memory_space<vmem>>, vector<128x128xbf16>
    %cst = arith.constant dense<0.000000e+00> : vector<8x128xf32>
    %6 = tpu.matmul %4, %5, %cst {dimension_numbers = #tpu.dot_dimension_numbers<[1], [0], [0], [1], [0, 0, 1, 1], [], []>} : vector<8x128xbf16>, vector<128x128xbf16>, vector<8x128xf32> -> vector<8x128xf32>
    %c0_7 = arith.constant 0 : index
    %c0_8 = arith.constant 0 : index
    %7 = vector.load %arg5[%c0_7, %c0_8] : memref<1x128xf32, #tpu.memory_space<vmem>>, vector<1x128xf32>
    %8 = vector.broadcast %7 : vector<1x128xf32> to vector<8x128xf32>
    %9 = arith.addf %6, %8 : vector<8x128xf32>
    %10 = arith.truncf %3 : vector<8x128xf32> to vector<8x128xbf16>
    %c0_9 = arith.constant 0 : index
    %c0_10 = arith.constant 0 : index
    %11 = vector.load %arg6[%c0_9, %c0_10] : memref<128x256xbf16, #tpu.memory_space<vmem>>, vector<128x256xbf16>
    %cst_11 = arith.constant dense<0.000000e+00> : vector<8x256xf32>
    %12 = tpu.matmul %10, %11, %cst_11 {dimension_numbers = #tpu.dot_dimension_numbers<[1], [0], [0], [1], [0, 0, 1, 1], [], []>} : vector<8x128xbf16>, vector<128x256xbf16>, vector<8x256xf32> -> vector<8x256xf32>
    %c0_12 = arith.constant 0 : index
    %c0_13 = arith.constant 0 : index
    %13 = vector.load %arg7[%c0_12, %c0_13] : memref<1x256xf32, #tpu.memory_space<vmem>>, vector<1x256xf32>
    %14 = vector.broadcast %13 : vector<1x256xf32> to vector<8x256xf32>
    %15 = arith.addf %12, %14 : vector<8x256xf32>
    %16 = arith.truncf %9 : vector<8x128xf32> to vector<8x128xbf16>
    %17 = vector.extract_strided_slice %15 {offsets = [0, 0], sizes = [8, 128], strides = [1, 1]} : vector<8x256xf32> to vector<8x128xf32>
    %18 = arith.truncf %17 : vector<8x128xf32> to vector<8x128xbf16>
    %19 = vector.extract_strided_slice %15 {offsets = [0, 128], sizes = [8, 128], strides = [1, 1]} : vector<8x256xf32> to vector<8x128xf32>
    %20 = arith.truncf %19 : vector<8x128xf32> to vector<8x128xbf16>
    %cst_14 = arith.constant 0.000000e+00 : f32
    %21 = vector.broadcast %cst_14 : f32 to vector<8x128xf32>
    %c0_15 = arith.constant 0 : index
    %c0_16 = arith.constant 0 : index
    %22 = vector.load %arg13[%c0_15, %c0_16] : memref<8x128xf32, #tpu.memory_space<vmem>>, vector<8x128xf32>
    tpu.vector_store %arg13[%c0_15, %c0_16], %21 {strides = array<i32>} : memref<8x128xf32, #tpu.memory_space<vmem>>, vector<8x128xf32>,
    %23 = vector.extract_strided_slice %16 {offsets = [0, 0], sizes = [8, 8], strides = [1, 1]} : vector<8x128xbf16> to vector<8x8xbf16>
    %24 = vector.extract_strided_slice %18 {offsets = [0, 0], sizes = [8, 8], strides = [1, 1]} : vector<8x128xbf16> to vector<8x8xbf16>
    %cst_17 = arith.constant dense<0.000000e+00> : vector<8x8xf32>
    %25 = tpu.matmul %23, %24, %cst_17 {dimension_numbers = #tpu.dot_dimension_numbers<[1], [1], [0], [0], [0, 0, 1, 0], [], []>} : vector<8x8xbf16>, vector<8x8xbf16>, vector<8x8xf32> -> vector<8x8xf32>
    %cst_18 = arith.constant dense<0xFF800000> : vector<8xf32>
    %26 = vector.multi_reduction <maximumf>, %25, %cst_18 [1] : vector<8x8xf32> to vector<8xf32>
    %27 = vector.shape_cast %26 : vector<8xf32> to vector<8x1xf32>
    %28 = vector.broadcast %27 : vector<8x1xf32> to vector<8x8xf32>
    %29 = arith.subf %25, %28 : vector<8x8xf32>
    %30 = math.exp %29 : vector<8x8xf32>
    %cst_19 = arith.constant dense<0.000000e+00> : vector<8xf32>
    %31 = vector.multi_reduction <add>, %30, %cst_19 [1] : vector<8x8xf32> to vector<8xf32>
    %32 = vector.shape_cast %31 : vector<8xf32> to vector<8x1xf32>
    %33 = tpu.reciprocal %32 : vector<8x1xf32> -> vector<8x1xf32>
    %34 = vector.broadcast %33 : vector<8x1xf32> to vector<8x8xf32>
    %35 = arith.mulf %30, %34 : vector<8x8xf32>
    %36 = arith.truncf %35 : vector<8x8xf32> to vector<8x8xbf16>
    %37 = vector.extract_strided_slice %20 {offsets = [0, 0], sizes = [8, 8], strides = [1, 1]} : vector<8x128xbf16> to vector<8x8xbf16>
    %cst_20 = arith.constant dense<0.000000e+00> : vector<8x8xf32>
    %38 = tpu.matmul %36, %37, %cst_20 {dimension_numbers = #tpu.dot_dimension_numbers<[1], [0], [0], [1], [0, 0, 1, 1], [], []>} : vector<8x8xbf16>, vector<8x8xbf16>, vector<8x8xf32> -> vector<8x8xf32>
    %c0_21 = arith.constant 0 : index
    %c0_22 = arith.constant 0 : index
    %39 = vector.load %arg13[%c0_21, %c0_22] : memref<8x128xf32, #tpu.memory_space<vmem>>, vector<8x8xf32>
    tpu.vector_store %arg13[%c0_21, %c0_22], %38 {strides = array<i32>} : memref<8x128xf32, #tpu.memory_space<vmem>>, vector<8x8xf32>,
    %40 = vector.extract_strided_slice %16 {offsets = [0, 8], sizes = [8, 8], strides = [1, 1]} : vector<8x128xbf16> to vector<8x8xbf16>
    %41 = vector.extract_strided_slice %18 {offsets = [0, 8], sizes = [8, 8], strides = [1, 1]} : vector<8x128xbf16> to vector<8x8xbf16>
    %cst_23 = arith.constant dense<0.000000e+00> : vector<8x8xf32>
    %42 = tpu.matmul %40, %41, %cst_23 {dimension_numbers = #tpu.dot_dimension_numbers<[1], [1], [0], [0], [0, 0, 1, 0], [], []>} : vector<8x8xbf16>, vector<8x8xbf16>, vector<8x8xf32> -> vector<8x8xf32>
    %cst_24 = arith.constant dense<0xFF800000> : vector<8xf32>
    %43 = vector.multi_reduction <maximumf>, %42, %cst_24 [1] : vector<8x8xf32> to vector<8xf32>
    %44 = vector.shape_cast %43 : vector<8xf32> to vector<8x1xf32>
    %45 = vector.broadcast %44 : vector<8x1xf32> to vector<8x8xf32>
    %46 = arith.subf %42, %45 : vector<8x8xf32>
    %47 = math.exp %46 : vector<8x8xf32>
    %cst_25 = arith.constant dense<0.000000e+00> : vector<8xf32>
    %48 = vector.multi_reduction <add>, %47, %cst_25 [1] : vector<8x8xf32> to vector<8xf32>
    %49 = vector.shape_cast %48 : vector<8xf32> to vector<8x1xf32>
    %50 = tpu.reciprocal %49 : vector<8x1xf32> -> vector<8x1xf32>
    %51 = vector.broadcast %50 : vector<8x1xf32> to vector<8x8xf32>
    %52 = arith.mulf %47, %51 : vector<8x8xf32>
    %53 = arith.truncf %52 : vector<8x8xf32> to vector<8x8xbf16>
    %54 = vector.extract_strided_slice %20 {offsets = [0, 8], sizes = [8, 8], strides = [1, 1]} : vector<8x128xbf16> to vector<8x8xbf16>
    %cst_26 = arith.constant dense<0.000000e+00> : vector<8x8xf32>
    %55 = tpu.matmul %53, %54, %cst_26 {dimension_numbers = #tpu.dot_dimension_numbers<[1], [0], [0], [1], [0, 0, 1, 1], [], []>} : vector<8x8xbf16>, vector<8x8xbf16>, vector<8x8xf32> -> vector<8x8xf32>
    %c0_27 = arith.constant 0 : index
    %c8 = arith.constant 8 : index
    %56 = vector.load %arg13[%c0_27, %c8] : memref<8x128xf32, #tpu.memory_space<vmem>>, vector<8x8xf32>
    tpu.vector_store %arg13[%c0_27, %c8], %55 {strides = array<i32>} : memref<8x128xf32, #tpu.memory_space<vmem>>, vector<8x8xf32>,
    %c0_28 = arith.constant 0 : index
    %c0_29 = arith.constant 0 : index
    %57 = vector.load %arg13[%c0_28, %c0_29] : memref<8x128xf32, #tpu.memory_space<vmem>>, vector<8x128xf32>
    %58 = arith.truncf %57 : vector<8x128xf32> to vector<8x128xbf16>
    %c0_30 = arith.constant 0 : index
    %c0_31 = arith.constant 0 : index
    %59 = vector.load %arg8[%c0_30, %c0_31] : memref<128x128xbf16, #tpu.memory_space<vmem>>, vector<128x128xbf16>
    %cst_32 = arith.constant dense<0.000000e+00> : vector<8x128xf32>
    %60 = tpu.matmul %58, %59, %cst_32 {dimension_numbers = #tpu.dot_dimension_numbers<[1], [0], [0], [1], [0, 0, 1, 1], [], []>} : vector<8x128xbf16>, vector<128x128xbf16>, vector<8x128xf32> -> vector<8x128xf32>
    %c0_33 = arith.constant 0 : index
    %c0_34 = arith.constant 0 : index
    %61 = vector.load %arg9[%c0_33, %c0_34] : memref<1x128xf32, #tpu.memory_space<vmem>>, vector<1x128xf32>
    %62 = vector.broadcast %61 : vector<1x128xf32> to vector<8x128xf32>
    %63 = arith.addf %60, %62 : vector<8x128xf32>
    %64 = arith.addf %63, %1 : vector<8x128xf32>
    %c0_35 = arith.constant 0 : index
    %c0_36 = arith.constant 0 : index
    %65 = vector.load %arg10[%c0_35, %c0_36] : memref<1x128xf32, #tpu.memory_space<vmem>>, vector<1x128xf32>
    %c0_37 = arith.constant 0 : index
    %c0_38 = arith.constant 0 : index
    %66 = vector.load %arg11[%c0_37, %c0_38] : memref<1x128xf32, #tpu.memory_space<vmem>>, vector<1x128xf32>
    %cst_39 = arith.constant dense<0.000000e+00> : vector<8xf32>
    %67 = vector.multi_reduction <add>, %64, %cst_39 [1] : vector<8x128xf32> to vector<8xf32>
    %68 = vector.shape_cast %67 : vector<8xf32> to vector<8x1xf32>
    %cst_40 = arith.constant 6.250000e-02 : f32
    %69 = vector.broadcast %cst_40 : f32 to vector<8x1xf32>
    %70 = arith.mulf %68, %69 : vector<8x1xf32>
    %71 = vector.broadcast %70 : vector<8x1xf32> to vector<8x128xf32>
    %72 = arith.subf %64, %71 : vector<8x128xf32>
    %73 = tpu.iota {dimensions = array<i32: 1>} : vector<1x128xi32>
    %c16_i32 = arith.constant 16 : i32
    %74 = vector.broadcast %c16_i32 : i32 to vector<1x128xi32>
    %75 = arith.cmpi slt, %73, %74 : vector<1x128xi32>
    %76 = arith.extui %75 : vector<1x128xi1> to vector<1x128xi32>
    %77 = arith.sitofp %76 : vector<1x128xi32> to vector<1x128xf32>
    %78 = vector.broadcast %77 : vector<1x128xf32> to vector<8x128xf32>
    %79 = arith.mulf %72, %78 : vector<8x128xf32>
    %80 = arith.mulf %79, %79 : vector<8x128xf32>
    %cst_41 = arith.constant dense<0.000000e+00> : vector<8xf32>
    %81 = vector.multi_reduction <add>, %80, %cst_41 [1] : vector<8x128xf32> to vector<8xf32>
    %82 = vector.shape_cast %81 : vector<8xf32> to vector<8x1xf32>
    %cst_42 = arith.constant 6.250000e-02 : f32
    %83 = vector.broadcast %cst_42 : f32 to vector<8x1xf32>
    %84 = arith.mulf %82, %83 : vector<8x1xf32>
    %cst_43 = arith.constant 9.99999974E-6 : f32
    %85 = vector.broadcast %cst_43 : f32 to vector<8x1xf32>
    %86 = arith.addf %84, %85 : vector<8x1xf32>
    %87 = math.rsqrt %86 : vector<8x1xf32>
    %88 = vector.broadcast %87 : vector<8x1xf32> to vector<8x128xf32>
    %89 = arith.mulf %79, %88 : vector<8x128xf32>
    %90 = vector.broadcast %65 : vector<1x128xf32> to vector<8x128xf32>
    %91 = arith.mulf %89, %90 : vector<8x128xf32>
    %92 = vector.broadcast %66 : vector<1x128xf32> to vector<8x128xf32>
    %93 = arith.addf %91, %92 : vector<8x128xf32>
    %c0_44 = arith.constant 0 : index
    %c0_45 = arith.constant 0 : index
    %c0_46 = arith.constant 0 : index
    %94 = vector.load %arg12[%c0_44, %c0_45, %c0_46] : memref<1x8x128xf32, #tpu.memory_space<vmem>>, vector<1x8x128xf32>
    %95 = vector.shape_cast %94 : vector<1x8x128xf32> to vector<8x128xf32>
    %96 = vector.shape_cast %93 : vector<8x128xf32> to vector<1x8x128xf32>
    tpu.vector_store %arg12[%c0_44, %c0_45, %c0_46], %96 {strides = array<i32>} : memref<1x8x128xf32, #tpu.memory_space<vmem>>, vector<1x8x128xf32>,
    return
  }
  func.func @transform_0(%arg0: i32, %arg1: i32) -> (i32, i32, i32) {
    %c0_i32 = arith.constant 0 : i32
    %c0_i32_0 = arith.constant 0 : i32
    return %arg0, %arg1, %c0_i32 : i32, i32, i32
  }
  func.func @transform_1(%arg0: i32, %arg1: i32) -> (i32, i32, i32) {
    %c0_i32 = arith.constant 0 : i32
    %c0_i32_0 = arith.constant 0 : i32
    %c0_i32_1 = arith.constant 0 : i32
    return %arg0, %c0_i32, %c0_i32_0 : i32, i32, i32
  }
  func.func @transform_2(%arg0: i32, %arg1: i32) -> (i32, i32) {
    %c0_i32 = arith.constant 0 : i32
    %c0_i32_0 = arith.constant 0 : i32
    %c0_i32_1 = arith.constant 0 : i32
    return %c0_i32, %c0_i32_0 : i32, i32
  }
  func.func @transform_3(%arg0: i32, %arg1: i32) -> (i32, i32) {
    %c0_i32 = arith.constant 0 : i32
    %c0_i32_0 = arith.constant 0 : i32
    %c0_i32_1 = arith.constant 0 : i32
    return %c0_i32, %c0_i32_0 : i32, i32
  }
  func.func @transform_4(%arg0: i32, %arg1: i32) -> (i32, i32) {
    %c0_i32 = arith.constant 0 : i32
    %c0_i32_0 = arith.constant 0 : i32
    %c0_i32_1 = arith.constant 0 : i32
    return %c0_i32, %c0_i32_0 : i32, i32
  }
  func.func @transform_5(%arg0: i32, %arg1: i32) -> (i32, i32) {
    %c0_i32 = arith.constant 0 : i32
    %c0_i32_0 = arith.constant 0 : i32
    %c0_i32_1 = arith.constant 0 : i32
    return %c0_i32, %c0_i32_0 : i32, i32
  }
  func.func @transform_6(%arg0: i32, %arg1: i32) -> (i32, i32) {
    %c0_i32 = arith.constant 0 : i32
    %c0_i32_0 = arith.constant 0 : i32
    %c0_i32_1 = arith.constant 0 : i32
    return %c0_i32, %c0_i32_0 : i32, i32
  }
  func.func @transform_7(%arg0: i32, %arg1: i32) -> (i32, i32) {
    %c0_i32 = arith.constant 0 : i32
    %c0_i32_0 = arith.constant 0 : i32
    %c0_i32_1 = arith.constant 0 : i32
    return %c0_i32, %c0_i32_0 : i32, i32
  }
  func.func @transform_8(%arg0: i32, %arg1: i32) -> (i32, i32) {
    %c0_i32 = arith.constant 0 : i32
    %c0_i32_0 = arith.constant 0 : i32
    %c0_i32_1 = arith.constant 0 : i32
    return %c0_i32, %c0_i32_0 : i32, i32
  }
  func.func @transform_9(%arg0: i32, %arg1: i32) -> (i32, i32) {
    %c0_i32 = arith.constant 0 : i32
    %c0_i32_0 = arith.constant 0 : i32
    %c0_i32_1 = arith.constant 0 : i32
    return %c0_i32, %c0_i32_0 : i32, i32
  }
  func.func @transform_10(%arg0: i32, %arg1: i32) -> (i32, i32, i32) {
    %c0_i32 = arith.constant 0 : i32
    %c0_i32_0 = arith.constant 0 : i32
    return %arg0, %arg1, %c0_i32 : i32, i32, i32
  }
}

module attributes {stable_mosaic.version = 11 : i64} {
  func.func @_ffn_block_kernel(%arg0: i32, %arg1: memref<16x128xf32, #tpu.memory_space<vmem>>, %arg2: memref<128x128xbf16, #tpu.memory_space<vmem>>, %arg3: memref<1x128xf32, #tpu.memory_space<vmem>>, %arg4: memref<128x128xbf16, #tpu.memory_space<vmem>>, %arg5: memref<1x128xf32, #tpu.memory_space<vmem>>, %arg6: memref<1x128xf32, #tpu.memory_space<vmem>>, %arg7: memref<1x128xf32, #tpu.memory_space<vmem>>, %arg8: memref<16x128xf32, #tpu.memory_space<vmem>>) attributes {dimension_semantics = [#tpu.dimension_semantics<parallel>], iteration_bounds = array<i64: 1>, scalar_prefetch = 0 : i64, scratch_operands = 0 : i64, tpu.core_type = #tpu.core_type<tc>, window_params = [{transform_indices = @transform_0, window_bounds = array<i64: 16, 128>}, {pipeline_mode = #tpu.pipeline_mode<synchronous>, transform_indices = @transform_1, window_bounds = array<i64: 128, 128>}, {pipeline_mode = #tpu.pipeline_mode<synchronous>, transform_indices = @transform_2, window_bounds = array<i64: 1, 128>}, {pipeline_mode = #tpu.pipeline_mode<synchronous>, transform_indices = @transform_3, window_bounds = array<i64: 128, 128>}, {pipeline_mode = #tpu.pipeline_mode<synchronous>, transform_indices = @transform_4, window_bounds = array<i64: 1, 128>}, {pipeline_mode = #tpu.pipeline_mode<synchronous>, transform_indices = @transform_5, window_bounds = array<i64: 1, 128>}, {pipeline_mode = #tpu.pipeline_mode<synchronous>, transform_indices = @transform_6, window_bounds = array<i64: 1, 128>}, {transform_indices = @transform_7, window_bounds = array<i64: 16, 128>}]} {
    %c0 = arith.constant 0 : index
    %c0_0 = arith.constant 0 : index
    %0 = vector.load %arg1[%c0, %c0_0] : memref<16x128xf32, #tpu.memory_space<vmem>>, vector<16x128xf32>
    %1 = arith.truncf %0 : vector<16x128xf32> to vector<16x128xbf16>
    %c0_1 = arith.constant 0 : index
    %c0_2 = arith.constant 0 : index
    %2 = vector.load %arg2[%c0_1, %c0_2] : memref<128x128xbf16, #tpu.memory_space<vmem>>, vector<128x128xbf16>
    %cst = arith.constant dense<0.000000e+00> : vector<16x128xf32>
    %3 = tpu.matmul %1, %2, %cst {dimension_numbers = #tpu.dot_dimension_numbers<[1], [0], [0], [1], [0, 0, 1, 1], [], []>} : vector<16x128xbf16>, vector<128x128xbf16>, vector<16x128xf32> -> vector<16x128xf32>
    %c0_3 = arith.constant 0 : index
    %c0_4 = arith.constant 0 : index
    %4 = vector.load %arg3[%c0_3, %c0_4] : memref<1x128xf32, #tpu.memory_space<vmem>>, vector<1x128xf32>
    %5 = vector.broadcast %4 : vector<1x128xf32> to vector<16x128xf32>
    %6 = arith.addf %3, %5 : vector<16x128xf32>
    %cst_5 = arith.constant 0.000000e+00 : f32
    %7 = vector.broadcast %cst_5 : f32 to vector<16x128xf32>
    %8 = arith.maximumf %6, %7 : vector<16x128xf32>
    %9 = arith.truncf %8 : vector<16x128xf32> to vector<16x128xbf16>
    %c0_6 = arith.constant 0 : index
    %c0_7 = arith.constant 0 : index
    %10 = vector.load %arg4[%c0_6, %c0_7] : memref<128x128xbf16, #tpu.memory_space<vmem>>, vector<128x128xbf16>
    %cst_8 = arith.constant dense<0.000000e+00> : vector<16x128xf32>
    %11 = tpu.matmul %9, %10, %cst_8 {dimension_numbers = #tpu.dot_dimension_numbers<[1], [0], [0], [1], [0, 0, 1, 1], [], []>} : vector<16x128xbf16>, vector<128x128xbf16>, vector<16x128xf32> -> vector<16x128xf32>
    %c0_9 = arith.constant 0 : index
    %c0_10 = arith.constant 0 : index
    %12 = vector.load %arg5[%c0_9, %c0_10] : memref<1x128xf32, #tpu.memory_space<vmem>>, vector<1x128xf32>
    %13 = vector.broadcast %12 : vector<1x128xf32> to vector<16x128xf32>
    %14 = arith.addf %11, %13 : vector<16x128xf32>
    %15 = arith.addf %14, %0 : vector<16x128xf32>
    %c0_11 = arith.constant 0 : index
    %c0_12 = arith.constant 0 : index
    %16 = vector.load %arg6[%c0_11, %c0_12] : memref<1x128xf32, #tpu.memory_space<vmem>>, vector<1x128xf32>
    %c0_13 = arith.constant 0 : index
    %c0_14 = arith.constant 0 : index
    %17 = vector.load %arg7[%c0_13, %c0_14] : memref<1x128xf32, #tpu.memory_space<vmem>>, vector<1x128xf32>
    %cst_15 = arith.constant dense<0.000000e+00> : vector<16xf32>
    %18 = vector.multi_reduction <add>, %15, %cst_15 [1] : vector<16x128xf32> to vector<16xf32>
    %19 = vector.shape_cast %18 : vector<16xf32> to vector<16x1xf32>
    %cst_16 = arith.constant 6.250000e-02 : f32
    %20 = vector.broadcast %cst_16 : f32 to vector<16x1xf32>
    %21 = arith.mulf %19, %20 : vector<16x1xf32>
    %22 = vector.broadcast %21 : vector<16x1xf32> to vector<16x128xf32>
    %23 = arith.subf %15, %22 : vector<16x128xf32>
    %24 = tpu.iota {dimensions = array<i32: 1>} : vector<1x128xi32>
    %c16_i32 = arith.constant 16 : i32
    %25 = vector.broadcast %c16_i32 : i32 to vector<1x128xi32>
    %26 = arith.cmpi slt, %24, %25 : vector<1x128xi32>
    %27 = arith.extui %26 : vector<1x128xi1> to vector<1x128xi32>
    %28 = arith.sitofp %27 : vector<1x128xi32> to vector<1x128xf32>
    %29 = vector.broadcast %28 : vector<1x128xf32> to vector<16x128xf32>
    %30 = arith.mulf %23, %29 : vector<16x128xf32>
    %31 = arith.mulf %30, %30 : vector<16x128xf32>
    %cst_17 = arith.constant dense<0.000000e+00> : vector<16xf32>
    %32 = vector.multi_reduction <add>, %31, %cst_17 [1] : vector<16x128xf32> to vector<16xf32>
    %33 = vector.shape_cast %32 : vector<16xf32> to vector<16x1xf32>
    %cst_18 = arith.constant 6.250000e-02 : f32
    %34 = vector.broadcast %cst_18 : f32 to vector<16x1xf32>
    %35 = arith.mulf %33, %34 : vector<16x1xf32>
    %cst_19 = arith.constant 9.99999974E-6 : f32
    %36 = vector.broadcast %cst_19 : f32 to vector<16x1xf32>
    %37 = arith.addf %35, %36 : vector<16x1xf32>
    %38 = math.rsqrt %37 : vector<16x1xf32>
    %39 = vector.broadcast %38 : vector<16x1xf32> to vector<16x128xf32>
    %40 = arith.mulf %30, %39 : vector<16x128xf32>
    %41 = vector.broadcast %16 : vector<1x128xf32> to vector<16x128xf32>
    %42 = arith.mulf %40, %41 : vector<16x128xf32>
    %43 = vector.broadcast %17 : vector<1x128xf32> to vector<16x128xf32>
    %44 = arith.addf %42, %43 : vector<16x128xf32>
    %c0_20 = arith.constant 0 : index
    %c0_21 = arith.constant 0 : index
    %45 = vector.load %arg8[%c0_20, %c0_21] : memref<16x128xf32, #tpu.memory_space<vmem>>, vector<16x128xf32>
    tpu.vector_store %arg8[%c0_20, %c0_21], %44 {strides = array<i32>} : memref<16x128xf32, #tpu.memory_space<vmem>>, vector<16x128xf32>,
    return
  }
  func.func @transform_0(%arg0: i32) -> (i32, i32) {
    %c0_i32 = arith.constant 0 : i32
    %c0_i32_0 = arith.constant 0 : i32
    return %arg0, %c0_i32 : i32, i32
  }
  func.func @transform_1(%arg0: i32) -> (i32, i32) {
    %c0_i32 = arith.constant 0 : i32
    %c0_i32_0 = arith.constant 0 : i32
    %c0_i32_1 = arith.constant 0 : i32
    return %c0_i32, %c0_i32_0 : i32, i32
  }
  func.func @transform_2(%arg0: i32) -> (i32, i32) {
    %c0_i32 = arith.constant 0 : i32
    %c0_i32_0 = arith.constant 0 : i32
    %c0_i32_1 = arith.constant 0 : i32
    return %c0_i32, %c0_i32_0 : i32, i32
  }
  func.func @transform_3(%arg0: i32) -> (i32, i32) {
    %c0_i32 = arith.constant 0 : i32
    %c0_i32_0 = arith.constant 0 : i32
    %c0_i32_1 = arith.constant 0 : i32
    return %c0_i32, %c0_i32_0 : i32, i32
  }
  func.func @transform_4(%arg0: i32) -> (i32, i32) {
    %c0_i32 = arith.constant 0 : i32
    %c0_i32_0 = arith.constant 0 : i32
    %c0_i32_1 = arith.constant 0 : i32
    return %c0_i32, %c0_i32_0 : i32, i32
  }
  func.func @transform_5(%arg0: i32) -> (i32, i32) {
    %c0_i32 = arith.constant 0 : i32
    %c0_i32_0 = arith.constant 0 : i32
    %c0_i32_1 = arith.constant 0 : i32
    return %c0_i32, %c0_i32_0 : i32, i32
  }
  func.func @transform_6(%arg0: i32) -> (i32, i32) {
    %c0_i32 = arith.constant 0 : i32
    %c0_i32_0 = arith.constant 0 : i32
    %c0_i32_1 = arith.constant 0 : i32
    return %c0_i32, %c0_i32_0 : i32, i32
  }
  func.func @transform_7(%arg0: i32) -> (i32, i32) {
    %c0_i32 = arith.constant 0 : i32
    %c0_i32_0 = arith.constant 0 : i32
    return %arg0, %c0_i32 : i32, i32
  }
}

module attributes {stable_mosaic.version = 11 : i64} {
  func.func @_mha_block_kernel(%arg0: i32, %arg1: i32, %arg2: memref<1x8x128xf32, #tpu.memory_space<vmem>>, %arg3: memref<1x8x128xf32, #tpu.memory_space<vmem>>, %arg4: memref<128x128xbf16, #tpu.memory_space<vmem>>, %arg5: memref<1x128xf32, #tpu.memory_space<vmem>>, %arg6: memref<128x256xbf16, #tpu.memory_space<vmem>>, %arg7: memref<1x256xf32, #tpu.memory_space<vmem>>, %arg8: memref<128x128xbf16, #tpu.memory_space<vmem>>, %arg9: memref<1x128xf32, #tpu.memory_space<vmem>>, %arg10: memref<1x128xf32, #tpu.memory_space<vmem>>, %arg11: memref<1x128xf32, #tpu.memory_space<vmem>>, %arg12: memref<1x8x128xf32, #tpu.memory_space<vmem>>, %arg13: memref<8x128xf32, #tpu.memory_space<vmem>>) attributes {dimension_semantics = [#tpu.dimension_semantics<parallel>, #tpu.dimension_semantics<parallel>], iteration_bounds = array<i64: 2, 1>, scalar_prefetch = 0 : i64, scratch_operands = 1 : i64, tpu.core_type = #tpu.core_type<tc>, window_params = [{transform_indices = @transform_0, window_bounds = array<i64: 1, 8, 128>}, {transform_indices = @transform_1, window_bounds = array<i64: 1, 8, 128>}, {pipeline_mode = #tpu.pipeline_mode<synchronous>, transform_indices = @transform_2, window_bounds = array<i64: 128, 128>}, {pipeline_mode = #tpu.pipeline_mode<synchronous>, transform_indices = @transform_3, window_bounds = array<i64: 1, 128>}, {pipeline_mode = #tpu.pipeline_mode<synchronous>, transform_indices = @transform_4, window_bounds = array<i64: 128, 256>}, {pipeline_mode = #tpu.pipeline_mode<synchronous>, transform_indices = @transform_5, window_bounds = array<i64: 1, 256>}, {pipeline_mode = #tpu.pipeline_mode<synchronous>, transform_indices = @transform_6, window_bounds = array<i64: 128, 128>}, {pipeline_mode = #tpu.pipeline_mode<synchronous>, transform_indices = @transform_7, window_bounds = array<i64: 1, 128>}, {pipeline_mode = #tpu.pipeline_mode<synchronous>, transform_indices = @transform_8, window_bounds = array<i64: 1, 128>}, {pipeline_mode = #tpu.pipeline_mode<synchronous>, transform_indices = @transform_9, window_bounds = array<i64: 1, 128>}, {transform_indices = @transform_10, window_bounds = array<i64: 1, 8, 128>}]} {
    %c0 = arith.constant 0 : index
    %c0_0 = arith.constant 0 : index
    %c0_1 = arith.constant 0 : index
    %0 = vector.load %arg2[%c0, %c0_0, %c0_1] : memref<1x8x128xf32, #tpu.memory_space<vmem>>, vector<1x8x128xf32>
    %1 = vector.shape_cast %0 : vector<1x8x128xf32> to vector<8x128xf32>
    %c0_2 = arith.constant 0 : index
    %c0_3 = arith.constant 0 : index
    %c0_4 = arith.constant 0 : index
    %2 = vector.load %arg3[%c0_2, %c0_3, %c0_4] : memref<1x8x128xf32, #tpu.memory_space<vmem>>, vector<1x8x128xf32>
    %3 = vector.shape_cast %2 : vector<1x8x128xf32> to vector<8x128xf32>
    %4 = arith.truncf %1 : vector<8x128xf32> to vector<8x128xbf16>
    %c0_5 = arith.constant 0 : index
    %c0_6 = arith.constant 0 : index
    %5 = vector.load %arg4[%c0_5, %c0_6] : memref<128x128xbf16, #tpu.memory_space<vmem>>, vector<128x128xbf16>
    %cst = arith.constant dense<0.000000e+00> : vector<8x128xf32>
    %6 = tpu.matmul %4, %5, %cst {dimension_numbers = #tpu.dot_dimension_numbers<[1], [0], [0], [1], [0, 0, 1, 1], [], []>} : vector<8x128xbf16>, vector<128x128xbf16>, vector<8x128xf32> -> vector<8x128xf32>
    %c0_7 = arith.constant 0 : index
    %c0_8 = arith.constant 0 : index
    %7 = vector.load %arg5[%c0_7, %c0_8] : memref<1x128xf32, #tpu.memory_space<vmem>>, vector<1x128xf32>
    %8 = vector.broadcast %7 : vector<1x128xf32> to vector<8x128xf32>
    %9 = arith.addf %6, %8 : vector<8x128xf32>
    %10 = arith.truncf %3 : vector<8x128xf32> to vector<8x128xbf16>
    %c0_9 = arith.constant 0 : index
    %c0_10 = arith.constant 0 : index
    %11 = vector.load %arg6[%c0_9, %c0_10] : memref<128x256xbf16, #tpu.memory_space<vmem>>, vector<128x256xbf16>
    %cst_11 = arith.constant dense<0.000000e+00> : vector<8x256xf32>
    %12 = tpu.matmul %10, %11, %cst_11 {dimension_numbers = #tpu.dot_dimension_numbers<[1], [0], [0], [1], [0, 0, 1, 1], [], []>} : vector<8x128xbf16>, vector<128x256xbf16>, vector<8x256xf32> -> vector<8x256xf32>
    %c0_12 = arith.constant 0 : index
    %c0_13 = arith.constant 0 : index
    %13 = vector.load %arg7[%c0_12, %c0_13] : memref<1x256xf32, #tpu.memory_space<vmem>>, vector<1x256xf32>
    %14 = vector.broadcast %13 : vector<1x256xf32> to vector<8x256xf32>
    %15 = arith.addf %12, %14 : vector<8x256xf32>
    %16 = arith.truncf %9 : vector<8x128xf32> to vector<8x128xbf16>
    %17 = vector.extract_strided_slice %15 {offsets = [0, 0], sizes = [8, 128], strides = [1, 1]} : vector<8x256xf32> to vector<8x128xf32>
    %18 = arith.truncf %17 : vector<8x128xf32> to vector<8x128xbf16>
    %19 = vector.extract_strided_slice %15 {offsets = [0, 128], sizes = [8, 128], strides = [1, 1]} : vector<8x256xf32> to vector<8x128xf32>
    %20 = arith.truncf %19 : vector<8x128xf32> to vector<8x128xbf16>
    %cst_14 = arith.constant 0.000000e+00 : f32
    %21 = vector.broadcast %cst_14 : f32 to vector<8x128xf32>
    %c0_15 = arith.constant 0 : index
    %c0_16 = arith.constant 0 : index
    %22 = vector.load %arg13[%c0_15, %c0_16] : memref<8x128xf32, #tpu.memory_space<vmem>>, vector<8x128xf32>
    tpu.vector_store %arg13[%c0_15, %c0_16], %21 {strides = array<i32>} : memref<8x128xf32, #tpu.memory_space<vmem>>, vector<8x128xf32>,
    %23 = vector.extract_strided_slice %16 {offsets = [0, 0], sizes = [8, 8], strides = [1, 1]} : vector<8x128xbf16> to vector<8x8xbf16>
    %24 = vector.extract_strided_slice %18 {offsets = [0, 0], sizes = [8, 8], strides = [1, 1]} : vector<8x128xbf16> to vector<8x8xbf16>
    %cst_17 = arith.constant dense<0.000000e+00> : vector<8x8xf32>
    %25 = tpu.matmul %23, %24, %cst_17 {dimension_numbers = #tpu.dot_dimension_numbers<[1], [1], [0], [0], [0, 0, 1, 0], [], []>} : vector<8x8xbf16>, vector<8x8xbf16>, vector<8x8xf32> -> vector<8x8xf32>
    %cst_18 = arith.constant dense<0xFF800000> : vector<8xf32>
    %26 = vector.multi_reduction <maximumf>, %25, %cst_18 [1] : vector<8x8xf32> to vector<8xf32>
    %27 = vector.shape_cast %26 : vector<8xf32> to vector<8x1xf32>
    %28 = vector.broadcast %27 : vector<8x1xf32> to vector<8x8xf32>
    %29 = arith.subf %25, %28 : vector<8x8xf32>
    %30 = math.exp %29 : vector<8x8xf32>
    %cst_19 = arith.constant dense<0.000000e+00> : vector<8xf32>
    %31 = vector.multi_reduction <add>, %30, %cst_19 [1] : vector<8x8xf32> to vector<8xf32>
    %32 = vector.shape_cast %31 : vector<8xf32> to vector<8x1xf32>
    %33 = tpu.reciprocal %32 : vector<8x1xf32> -> vector<8x1xf32>
    %34 = vector.broadcast %33 : vector<8x1xf32> to vector<8x8xf32>
    %35 = arith.mulf %30, %34 : vector<8x8xf32>
    %36 = arith.truncf %35 : vector<8x8xf32> to vector<8x8xbf16>
    %37 = vector.extract_strided_slice %20 {offsets = [0, 0], sizes = [8, 8], strides = [1, 1]} : vector<8x128xbf16> to vector<8x8xbf16>
    %cst_20 = arith.constant dense<0.000000e+00> : vector<8x8xf32>
    %38 = tpu.matmul %36, %37, %cst_20 {dimension_numbers = #tpu.dot_dimension_numbers<[1], [0], [0], [1], [0, 0, 1, 1], [], []>} : vector<8x8xbf16>, vector<8x8xbf16>, vector<8x8xf32> -> vector<8x8xf32>
    %c0_21 = arith.constant 0 : index
    %c0_22 = arith.constant 0 : index
    %39 = vector.load %arg13[%c0_21, %c0_22] : memref<8x128xf32, #tpu.memory_space<vmem>>, vector<8x8xf32>
    tpu.vector_store %arg13[%c0_21, %c0_22], %38 {strides = array<i32>} : memref<8x128xf32, #tpu.memory_space<vmem>>, vector<8x8xf32>,
    %40 = vector.extract_strided_slice %16 {offsets = [0, 8], sizes = [8, 8], strides = [1, 1]} : vector<8x128xbf16> to vector<8x8xbf16>
    %41 = vector.extract_strided_slice %18 {offsets = [0, 8], sizes = [8, 8], strides = [1, 1]} : vector<8x128xbf16> to vector<8x8xbf16>
    %cst_23 = arith.constant dense<0.000000e+00> : vector<8x8xf32>
    %42 = tpu.matmul %40, %41, %cst_23 {dimension_numbers = #tpu.dot_dimension_numbers<[1], [1], [0], [0], [0, 0, 1, 0], [], []>} : vector<8x8xbf16>, vector<8x8xbf16>, vector<8x8xf32> -> vector<8x8xf32>
    %cst_24 = arith.constant dense<0xFF800000> : vector<8xf32>
    %43 = vector.multi_reduction <maximumf>, %42, %cst_24 [1] : vector<8x8xf32> to vector<8xf32>
    %44 = vector.shape_cast %43 : vector<8xf32> to vector<8x1xf32>
    %45 = vector.broadcast %44 : vector<8x1xf32> to vector<8x8xf32>
    %46 = arith.subf %42, %45 : vector<8x8xf32>
    %47 = math.exp %46 : vector<8x8xf32>
    %cst_25 = arith.constant dense<0.000000e+00> : vector<8xf32>
    %48 = vector.multi_reduction <add>, %47, %cst_25 [1] : vector<8x8xf32> to vector<8xf32>
    %49 = vector.shape_cast %48 : vector<8xf32> to vector<8x1xf32>
    %50 = tpu.reciprocal %49 : vector<8x1xf32> -> vector<8x1xf32>
    %51 = vector.broadcast %50 : vector<8x1xf32> to vector<8x8xf32>
    %52 = arith.mulf %47, %51 : vector<8x8xf32>
    %53 = arith.truncf %52 : vector<8x8xf32> to vector<8x8xbf16>
    %54 = vector.extract_strided_slice %20 {offsets = [0, 8], sizes = [8, 8], strides = [1, 1]} : vector<8x128xbf16> to vector<8x8xbf16>
    %cst_26 = arith.constant dense<0.000000e+00> : vector<8x8xf32>
    %55 = tpu.matmul %53, %54, %cst_26 {dimension_numbers = #tpu.dot_dimension_numbers<[1], [0], [0], [1], [0, 0, 1, 1], [], []>} : vector<8x8xbf16>, vector<8x8xbf16>, vector<8x8xf32> -> vector<8x8xf32>
    %c0_27 = arith.constant 0 : index
    %c8 = arith.constant 8 : index
    %56 = vector.load %arg13[%c0_27, %c8] : memref<8x128xf32, #tpu.memory_space<vmem>>, vector<8x8xf32>
    tpu.vector_store %arg13[%c0_27, %c8], %55 {strides = array<i32>} : memref<8x128xf32, #tpu.memory_space<vmem>>, vector<8x8xf32>,
    %c0_28 = arith.constant 0 : index
    %c0_29 = arith.constant 0 : index
    %57 = vector.load %arg13[%c0_28, %c0_29] : memref<8x128xf32, #tpu.memory_space<vmem>>, vector<8x128xf32>
    %58 = arith.truncf %57 : vector<8x128xf32> to vector<8x128xbf16>
    %c0_30 = arith.constant 0 : index
    %c0_31 = arith.constant 0 : index
    %59 = vector.load %arg8[%c0_30, %c0_31] : memref<128x128xbf16, #tpu.memory_space<vmem>>, vector<128x128xbf16>
    %cst_32 = arith.constant dense<0.000000e+00> : vector<8x128xf32>
    %60 = tpu.matmul %58, %59, %cst_32 {dimension_numbers = #tpu.dot_dimension_numbers<[1], [0], [0], [1], [0, 0, 1, 1], [], []>} : vector<8x128xbf16>, vector<128x128xbf16>, vector<8x128xf32> -> vector<8x128xf32>
    %c0_33 = arith.constant 0 : index
    %c0_34 = arith.constant 0 : index
    %61 = vector.load %arg9[%c0_33, %c0_34] : memref<1x128xf32, #tpu.memory_space<vmem>>, vector<1x128xf32>
    %62 = vector.broadcast %61 : vector<1x128xf32> to vector<8x128xf32>
    %63 = arith.addf %60, %62 : vector<8x128xf32>
    %64 = arith.addf %63, %1 : vector<8x128xf32>
    %c0_35 = arith.constant 0 : index
    %c0_36 = arith.constant 0 : index
    %65 = vector.load %arg10[%c0_35, %c0_36] : memref<1x128xf32, #tpu.memory_space<vmem>>, vector<1x128xf32>
    %c0_37 = arith.constant 0 : index
    %c0_38 = arith.constant 0 : index
    %66 = vector.load %arg11[%c0_37, %c0_38] : memref<1x128xf32, #tpu.memory_space<vmem>>, vector<1x128xf32>
    %cst_39 = arith.constant dense<0.000000e+00> : vector<8xf32>
    %67 = vector.multi_reduction <add>, %64, %cst_39 [1] : vector<8x128xf32> to vector<8xf32>
    %68 = vector.shape_cast %67 : vector<8xf32> to vector<8x1xf32>
    %cst_40 = arith.constant 6.250000e-02 : f32
    %69 = vector.broadcast %cst_40 : f32 to vector<8x1xf32>
    %70 = arith.mulf %68, %69 : vector<8x1xf32>
    %71 = vector.broadcast %70 : vector<8x1xf32> to vector<8x128xf32>
    %72 = arith.subf %64, %71 : vector<8x128xf32>
    %73 = tpu.iota {dimensions = array<i32: 1>} : vector<1x128xi32>
    %c16_i32 = arith.constant 16 : i32
    %74 = vector.broadcast %c16_i32 : i32 to vector<1x128xi32>
    %75 = arith.cmpi slt, %73, %74 : vector<1x128xi32>
    %76 = arith.extui %75 : vector<1x128xi1> to vector<1x128xi32>
    %77 = arith.sitofp %76 : vector<1x128xi32> to vector<1x128xf32>
    %78 = vector.broadcast %77 : vector<1x128xf32> to vector<8x128xf32>
    %79 = arith.mulf %72, %78 : vector<8x128xf32>
    %80 = arith.mulf %79, %79 : vector<8x128xf32>
    %cst_41 = arith.constant dense<0.000000e+00> : vector<8xf32>
    %81 = vector.multi_reduction <add>, %80, %cst_41 [1] : vector<8x128xf32> to vector<8xf32>
    %82 = vector.shape_cast %81 : vector<8xf32> to vector<8x1xf32>
    %cst_42 = arith.constant 6.250000e-02 : f32
    %83 = vector.broadcast %cst_42 : f32 to vector<8x1xf32>
    %84 = arith.mulf %82, %83 : vector<8x1xf32>
    %cst_43 = arith.constant 9.99999974E-6 : f32
    %85 = vector.broadcast %cst_43 : f32 to vector<8x1xf32>
    %86 = arith.addf %84, %85 : vector<8x1xf32>
    %87 = math.rsqrt %86 : vector<8x1xf32>
    %88 = vector.broadcast %87 : vector<8x1xf32> to vector<8x128xf32>
    %89 = arith.mulf %79, %88 : vector<8x128xf32>
    %90 = vector.broadcast %65 : vector<1x128xf32> to vector<8x128xf32>
    %91 = arith.mulf %89, %90 : vector<8x128xf32>
    %92 = vector.broadcast %66 : vector<1x128xf32> to vector<8x128xf32>
    %93 = arith.addf %91, %92 : vector<8x128xf32>
    %c0_44 = arith.constant 0 : index
    %c0_45 = arith.constant 0 : index
    %c0_46 = arith.constant 0 : index
    %94 = vector.load %arg12[%c0_44, %c0_45, %c0_46] : memref<1x8x128xf32, #tpu.memory_space<vmem>>, vector<1x8x128xf32>
    %95 = vector.shape_cast %94 : vector<1x8x128xf32> to vector<8x128xf32>
    %96 = vector.shape_cast %93 : vector<8x128xf32> to vector<1x8x128xf32>
    tpu.vector_store %arg12[%c0_44, %c0_45, %c0_46], %96 {strides = array<i32>} : memref<1x8x128xf32, #tpu.memory_space<vmem>>, vector<1x8x128xf32>,
    return
  }
  func.func @transform_0(%arg0: i32, %arg1: i32) -> (i32, i32, i32) {
    %c0_i32 = arith.constant 0 : i32
    %c0_i32_0 = arith.constant 0 : i32
    return %arg0, %arg1, %c0_i32 : i32, i32, i32
  }
  func.func @transform_1(%arg0: i32, %arg1: i32) -> (i32, i32, i32) {
    %c0_i32 = arith.constant 0 : i32
    %c0_i32_0 = arith.constant 0 : i32
    %c0_i32_1 = arith.constant 0 : i32
    return %arg0, %c0_i32, %c0_i32_0 : i32, i32, i32
  }
  func.func @transform_2(%arg0: i32, %arg1: i32) -> (i32, i32) {
    %c0_i32 = arith.constant 0 : i32
    %c0_i32_0 = arith.constant 0 : i32
    %c0_i32_1 = arith.constant 0 : i32
    return %c0_i32, %c0_i32_0 : i32, i32
  }
  func.func @transform_3(%arg0: i32, %arg1: i32) -> (i32, i32) {
    %c0_i32 = arith.constant 0 : i32
    %c0_i32_0 = arith.constant 0 : i32
    %c0_i32_1 = arith.constant 0 : i32
    return %c0_i32, %c0_i32_0 : i32, i32
  }
  func.func @transform_4(%arg0: i32, %arg1: i32) -> (i32, i32) {
    %c0_i32 = arith.constant 0 : i32
    %c0_i32_0 = arith.constant 0 : i32
    %c0_i32_1 = arith.constant 0 : i32
    return %c0_i32, %c0_i32_0 : i32, i32
  }
  func.func @transform_5(%arg0: i32, %arg1: i32) -> (i32, i32) {
    %c0_i32 = arith.constant 0 : i32
    %c0_i32_0 = arith.constant 0 : i32
    %c0_i32_1 = arith.constant 0 : i32
    return %c0_i32, %c0_i32_0 : i32, i32
  }
  func.func @transform_6(%arg0: i32, %arg1: i32) -> (i32, i32) {
    %c0_i32 = arith.constant 0 : i32
    %c0_i32_0 = arith.constant 0 : i32
    %c0_i32_1 = arith.constant 0 : i32
    return %c0_i32, %c0_i32_0 : i32, i32
  }
  func.func @transform_7(%arg0: i32, %arg1: i32) -> (i32, i32) {
    %c0_i32 = arith.constant 0 : i32
    %c0_i32_0 = arith.constant 0 : i32
    %c0_i32_1 = arith.constant 0 : i32
    return %c0_i32, %c0_i32_0 : i32, i32
  }
  func.func @transform_8(%arg0: i32, %arg1: i32) -> (i32, i32) {
    %c0_i32 = arith.constant 0 : i32
    %c0_i32_0 = arith.constant 0 : i32
    %c0_i32_1 = arith.constant 0 : i32
    return %c0_i32, %c0_i32_0 : i32, i32
  }
  func.func @transform_9(%arg0: i32, %arg1: i32) -> (i32, i32) {
    %c0_i32 = arith.constant 0 : i32
    %c0_i32_0 = arith.constant 0 : i32
    %c0_i32_1 = arith.constant 0 : i32
    return %c0_i32, %c0_i32_0 : i32, i32
  }
  func.func @transform_10(%arg0: i32, %arg1: i32) -> (i32, i32, i32) {
    %c0_i32 = arith.constant 0 : i32
    %c0_i32_0 = arith.constant 0 : i32
    return %arg0, %arg1, %c0_i32 : i32, i32, i32
  }
}

module attributes {stable_mosaic.version = 11 : i64} {
  func.func @_vq_kernel(%arg0: i32, %arg1: memref<16x128xf32, #tpu.memory_space<vmem>>, %arg2: memref<32x128xf32, #tpu.memory_space<vmem>>, %arg3: memref<1x32xf32, #tpu.memory_space<vmem>>, %arg4: memref<16x128xf32, #tpu.memory_space<vmem>>, %arg5: memref<1x1x1xf32, #tpu.memory_space<vmem>>) attributes {dimension_semantics = [#tpu.dimension_semantics<parallel>], iteration_bounds = array<i64: 1>, scalar_prefetch = 0 : i64, scratch_operands = 0 : i64, tpu.core_type = #tpu.core_type<tc>, window_params = [{transform_indices = @transform_0, window_bounds = array<i64: 16, 128>}, {pipeline_mode = #tpu.pipeline_mode<synchronous>, transform_indices = @transform_1, window_bounds = array<i64: 32, 128>}, {pipeline_mode = #tpu.pipeline_mode<synchronous>, transform_indices = @transform_2, window_bounds = array<i64: 1, 32>}, {transform_indices = @transform_3, window_bounds = array<i64: 16, 128>}, {transform_indices = @transform_4, window_bounds = array<i64: 1, 1, 1>}]} {
    %c0 = arith.constant 0 : index
    %c0_0 = arith.constant 0 : index
    %0 = vector.load %arg1[%c0, %c0_0] : memref<16x128xf32, #tpu.memory_space<vmem>>, vector<16x128xf32>
    %c0_1 = arith.constant 0 : index
    %c0_2 = arith.constant 0 : index
    %1 = vector.load %arg2[%c0_1, %c0_2] : memref<32x128xf32, #tpu.memory_space<vmem>>, vector<32x128xf32>
    %2 = arith.mulf %0, %0 : vector<16x128xf32>
    %cst = arith.constant dense<0.000000e+00> : vector<16xf32>
    %3 = vector.multi_reduction <add>, %2, %cst [1] : vector<16x128xf32> to vector<16xf32>
    %4 = vector.shape_cast %3 : vector<16xf32> to vector<16x1xf32>
    %cst_3 = arith.constant dense<0.000000e+00> : vector<16x32xf32>
    %5 = tpu.matmul %0, %1, %cst_3 {dimension_numbers = #tpu.dot_dimension_numbers<[1], [1], [0], [0], [0, 0, 1, 0], [], []>} : vector<16x128xf32>, vector<32x128xf32>, vector<16x32xf32> -> vector<16x32xf32>
    %cst_4 = arith.constant 2.000000e+00 : f32
    %6 = vector.broadcast %cst_4 : f32 to vector<16x32xf32>
    %7 = arith.mulf %6, %5 : vector<16x32xf32>
    %8 = vector.broadcast %4 : vector<16x1xf32> to vector<16x32xf32>
    %9 = arith.subf %8, %7 : vector<16x32xf32>
    %c0_5 = arith.constant 0 : index
    %c0_6 = arith.constant 0 : index
    %10 = vector.load %arg3[%c0_5, %c0_6] : memref<1x32xf32, #tpu.memory_space<vmem>>, vector<1x32xf32>
    %11 = vector.broadcast %10 : vector<1x32xf32> to vector<16x32xf32>
    %12 = arith.addf %9, %11 : vector<16x32xf32>
    %cst_7 = arith.constant dense<0x7F800000> : vector<16xf32>
    %13 = vector.multi_reduction <minimumf>, %12, %cst_7 [1] : vector<16x32xf32> to vector<16xf32>
    %14 = vector.shape_cast %13 : vector<16xf32> to vector<16x1xf32>
    %15 = tpu.iota {dimensions = array<i32: 1>} : vector<16x32xi32>
    %16 = vector.broadcast %14 : vector<16x1xf32> to vector<16x32xf32>
    %17 = arith.cmpf ole, %12, %16 : vector<16x32xf32>
    %c32_i32 = arith.constant 32 : i32
    %18 = vector.broadcast %c32_i32 : i32 to vector<16x32xi32>
    %19 = arith.select %17, %15, %18 : vector<16x32xi1>, vector<16x32xi32>
    %cst_8 = arith.constant dense<2147483647> : vector<16xi32>
    %20 = vector.multi_reduction <minsi>, %19, %cst_8 [1] : vector<16x32xi32> to vector<16xi32>
    %21 = vector.shape_cast %20 : vector<16xi32> to vector<16x1xi32>
    %22 = vector.broadcast %21 : vector<16x1xi32> to vector<16x32xi32>
    %23 = arith.cmpi eq, %15, %22 : vector<16x32xi32>
    %24 = arith.extui %23 : vector<16x32xi1> to vector<16x32xi32>
    %25 = arith.sitofp %24 : vector<16x32xi32> to vector<16x32xf32>
    %cst_9 = arith.constant dense<0.000000e+00> : vector<16x128xf32>
    %26 = tpu.matmul %25, %1, %cst_9 {dimension_numbers = #tpu.dot_dimension_numbers<[1], [0], [0], [1], [0, 0, 1, 1], [], []>} : vector<16x32xf32>, vector<32x128xf32>, vector<16x128xf32> -> vector<16x128xf32>
    %c0_10 = arith.constant 0 : index
    %c0_11 = arith.constant 0 : index
    %27 = vector.load %arg4[%c0_10, %c0_11] : memref<16x128xf32, #tpu.memory_space<vmem>>, vector<16x128xf32>
    tpu.vector_store %arg4[%c0_10, %c0_11], %26 {strides = array<i32>} : memref<16x128xf32, #tpu.memory_space<vmem>>, vector<16x128xf32>,
    %c16_i32 = arith.constant 16 : i32
    %28 = arith.muli %arg0, %c16_i32 : i32
    %29 = tpu.iota {dimensions = array<i32: 0>} : vector<16x1xi32>
    %30 = vector.broadcast %28 : i32 to vector<16x1xi32>
    %31 = arith.addi %30, %29 : vector<16x1xi32>
    %c16_i32_12 = arith.constant 16 : i32
    %32 = vector.broadcast %c16_i32_12 : i32 to vector<16x1xi32>
    %33 = arith.cmpi slt, %31, %32 : vector<16x1xi32>
    %34 = arith.extui %33 : vector<16x1xi1> to vector<16x1xi32>
    %35 = arith.sitofp %34 : vector<16x1xi32> to vector<16x1xf32>
    %36 = arith.subf %26, %0 : vector<16x128xf32>
    %37 = vector.broadcast %35 : vector<16x1xf32> to vector<16x128xf32>
    %38 = arith.mulf %36, %37 : vector<16x128xf32>
    %39 = arith.mulf %38, %38 : vector<16x128xf32>
    %40 = vector.shape_cast %39 : vector<16x128xf32> to vector<1x16x128xf32>
    %cst_13 = arith.constant dense<0.000000e+00> : vector<1xf32>
    %41 = vector.multi_reduction <add>, %40, %cst_13 [1, 2] : vector<1x16x128xf32> to vector<1xf32>
    %42 = vector.shape_cast %41 : vector<1xf32> to vector<1x1x1xf32>
    %43 = vector.extract %42[0, 0, 0] : f32 from vector<1x1x1xf32>
    %44 = vector.broadcast %43 : f32 to vector<1x1xf32>
    %cst_14 = arith.constant 0.0048828125 : f32
    %45 = vector.broadcast %cst_14 : f32 to vector<1x1xf32>
    %46 = arith.mulf %45, %44 : vector<1x1xf32>
    %c0_15 = arith.constant 0 : index
    %c0_16 = arith.constant 0 : index
    %c0_17 = arith.constant 0 : index
    %47 = vector.load %arg5[%c0_15, %c0_16, %c0_17] : memref<1x1x1xf32, #tpu.memory_space<vmem>>, vector<1x1x1xf32>
    %48 = vector.shape_cast %47 : vector<1x1x1xf32> to vector<1x1xf32>
    %49 = vector.shape_cast %46 : vector<1x1xf32> to vector<1x1x1xf32>
    tpu.vector_store %arg5[%c0_15, %c0_16, %c0_17], %49 {strides = array<i32>} : memref<1x1x1xf32, #tpu.memory_space<vmem>>, vector<1x1x1xf32>,
    return
  }
  func.func @transform_0(%arg0: i32) -> (i32, i32) {
    %c0_i32 = arith.constant 0 : i32
    %c0_i32_0 = arith.constant 0 : i32
    return %arg0, %c0_i32 : i32, i32
  }
  func.func @transform_1(%arg0: i32) -> (i32, i32) {
    %c0_i32 = arith.constant 0 : i32
    %c0_i32_0 = arith.constant 0 : i32
    %c0_i32_1 = arith.constant 0 : i32
    return %c0_i32, %c0_i32_0 : i32, i32
  }
  func.func @transform_2(%arg0: i32) -> (i32, i32) {
    %c0_i32 = arith.constant 0 : i32
    %c0_i32_0 = arith.constant 0 : i32
    %c0_i32_1 = arith.constant 0 : i32
    return %c0_i32, %c0_i32_0 : i32, i32
  }
  func.func @transform_3(%arg0: i32) -> (i32, i32) {
    %c0_i32 = arith.constant 0 : i32
    %c0_i32_0 = arith.constant 0 : i32
    return %arg0, %c0_i32 : i32, i32
  }
  func.func @transform_4(%arg0: i32) -> (i32, i32, i32) {
    %c0_i32 = arith.constant 0 : i32
    %c0_i32_0 = arith.constant 0 : i32
    %c0_i32_1 = arith.constant 0 : i32
    return %arg0, %c0_i32, %c0_i32_0 : i32, i32, i32
  }
}

module attributes {stable_mosaic.version = 11 : i64} {
  func.func @_mha_block_kernel(%arg0: i32, %arg1: i32, %arg2: memref<1x8x128xf32, #tpu.memory_space<vmem>>, %arg3: memref<1x8x128xf32, #tpu.memory_space<vmem>>, %arg4: memref<128x128xbf16, #tpu.memory_space<vmem>>, %arg5: memref<1x128xf32, #tpu.memory_space<vmem>>, %arg6: memref<128x256xbf16, #tpu.memory_space<vmem>>, %arg7: memref<1x256xf32, #tpu.memory_space<vmem>>, %arg8: memref<128x128xbf16, #tpu.memory_space<vmem>>, %arg9: memref<1x128xf32, #tpu.memory_space<vmem>>, %arg10: memref<1x128xf32, #tpu.memory_space<vmem>>, %arg11: memref<1x128xf32, #tpu.memory_space<vmem>>, %arg12: memref<1x8x128xf32, #tpu.memory_space<vmem>>, %arg13: memref<8x128xf32, #tpu.memory_space<vmem>>) attributes {dimension_semantics = [#tpu.dimension_semantics<parallel>, #tpu.dimension_semantics<parallel>], iteration_bounds = array<i64: 2, 1>, scalar_prefetch = 0 : i64, scratch_operands = 1 : i64, tpu.core_type = #tpu.core_type<tc>, window_params = [{transform_indices = @transform_0, window_bounds = array<i64: 1, 8, 128>}, {transform_indices = @transform_1, window_bounds = array<i64: 1, 8, 128>}, {pipeline_mode = #tpu.pipeline_mode<synchronous>, transform_indices = @transform_2, window_bounds = array<i64: 128, 128>}, {pipeline_mode = #tpu.pipeline_mode<synchronous>, transform_indices = @transform_3, window_bounds = array<i64: 1, 128>}, {pipeline_mode = #tpu.pipeline_mode<synchronous>, transform_indices = @transform_4, window_bounds = array<i64: 128, 256>}, {pipeline_mode = #tpu.pipeline_mode<synchronous>, transform_indices = @transform_5, window_bounds = array<i64: 1, 256>}, {pipeline_mode = #tpu.pipeline_mode<synchronous>, transform_indices = @transform_6, window_bounds = array<i64: 128, 128>}, {pipeline_mode = #tpu.pipeline_mode<synchronous>, transform_indices = @transform_7, window_bounds = array<i64: 1, 128>}, {pipeline_mode = #tpu.pipeline_mode<synchronous>, transform_indices = @transform_8, window_bounds = array<i64: 1, 128>}, {pipeline_mode = #tpu.pipeline_mode<synchronous>, transform_indices = @transform_9, window_bounds = array<i64: 1, 128>}, {transform_indices = @transform_10, window_bounds = array<i64: 1, 8, 128>}]} {
    %c0 = arith.constant 0 : index
    %c0_0 = arith.constant 0 : index
    %c0_1 = arith.constant 0 : index
    %0 = vector.load %arg2[%c0, %c0_0, %c0_1] : memref<1x8x128xf32, #tpu.memory_space<vmem>>, vector<1x8x128xf32>
    %1 = vector.shape_cast %0 : vector<1x8x128xf32> to vector<8x128xf32>
    %c0_2 = arith.constant 0 : index
    %c0_3 = arith.constant 0 : index
    %c0_4 = arith.constant 0 : index
    %2 = vector.load %arg3[%c0_2, %c0_3, %c0_4] : memref<1x8x128xf32, #tpu.memory_space<vmem>>, vector<1x8x128xf32>
    %3 = vector.shape_cast %2 : vector<1x8x128xf32> to vector<8x128xf32>
    %4 = arith.truncf %1 : vector<8x128xf32> to vector<8x128xbf16>
    %c0_5 = arith.constant 0 : index
    %c0_6 = arith.constant 0 : index
    %5 = vector.load %arg4[%c0_5, %c0_6] : memref<128x128xbf16, #tpu.memory_space<vmem>>, vector<128x128xbf16>
    %cst = arith.constant dense<0.000000e+00> : vector<8x128xf32>
    %6 = tpu.matmul %4, %5, %cst {dimension_numbers = #tpu.dot_dimension_numbers<[1], [0], [0], [1], [0, 0, 1, 1], [], []>} : vector<8x128xbf16>, vector<128x128xbf16>, vector<8x128xf32> -> vector<8x128xf32>
    %c0_7 = arith.constant 0 : index
    %c0_8 = arith.constant 0 : index
    %7 = vector.load %arg5[%c0_7, %c0_8] : memref<1x128xf32, #tpu.memory_space<vmem>>, vector<1x128xf32>
    %8 = vector.broadcast %7 : vector<1x128xf32> to vector<8x128xf32>
    %9 = arith.addf %6, %8 : vector<8x128xf32>
    %10 = arith.truncf %3 : vector<8x128xf32> to vector<8x128xbf16>
    %c0_9 = arith.constant 0 : index
    %c0_10 = arith.constant 0 : index
    %11 = vector.load %arg6[%c0_9, %c0_10] : memref<128x256xbf16, #tpu.memory_space<vmem>>, vector<128x256xbf16>
    %cst_11 = arith.constant dense<0.000000e+00> : vector<8x256xf32>
    %12 = tpu.matmul %10, %11, %cst_11 {dimension_numbers = #tpu.dot_dimension_numbers<[1], [0], [0], [1], [0, 0, 1, 1], [], []>} : vector<8x128xbf16>, vector<128x256xbf16>, vector<8x256xf32> -> vector<8x256xf32>
    %c0_12 = arith.constant 0 : index
    %c0_13 = arith.constant 0 : index
    %13 = vector.load %arg7[%c0_12, %c0_13] : memref<1x256xf32, #tpu.memory_space<vmem>>, vector<1x256xf32>
    %14 = vector.broadcast %13 : vector<1x256xf32> to vector<8x256xf32>
    %15 = arith.addf %12, %14 : vector<8x256xf32>
    %16 = arith.truncf %9 : vector<8x128xf32> to vector<8x128xbf16>
    %17 = vector.extract_strided_slice %15 {offsets = [0, 0], sizes = [8, 128], strides = [1, 1]} : vector<8x256xf32> to vector<8x128xf32>
    %18 = arith.truncf %17 : vector<8x128xf32> to vector<8x128xbf16>
    %19 = vector.extract_strided_slice %15 {offsets = [0, 128], sizes = [8, 128], strides = [1, 1]} : vector<8x256xf32> to vector<8x128xf32>
    %20 = arith.truncf %19 : vector<8x128xf32> to vector<8x128xbf16>
    %cst_14 = arith.constant 0.000000e+00 : f32
    %21 = vector.broadcast %cst_14 : f32 to vector<8x128xf32>
    %c0_15 = arith.constant 0 : index
    %c0_16 = arith.constant 0 : index
    %22 = vector.load %arg13[%c0_15, %c0_16] : memref<8x128xf32, #tpu.memory_space<vmem>>, vector<8x128xf32>
    tpu.vector_store %arg13[%c0_15, %c0_16], %21 {strides = array<i32>} : memref<8x128xf32, #tpu.memory_space<vmem>>, vector<8x128xf32>,
    %23 = vector.extract_strided_slice %16 {offsets = [0, 0], sizes = [8, 8], strides = [1, 1]} : vector<8x128xbf16> to vector<8x8xbf16>
    %24 = vector.extract_strided_slice %18 {offsets = [0, 0], sizes = [8, 8], strides = [1, 1]} : vector<8x128xbf16> to vector<8x8xbf16>
    %cst_17 = arith.constant dense<0.000000e+00> : vector<8x8xf32>
    %25 = tpu.matmul %23, %24, %cst_17 {dimension_numbers = #tpu.dot_dimension_numbers<[1], [1], [0], [0], [0, 0, 1, 0], [], []>} : vector<8x8xbf16>, vector<8x8xbf16>, vector<8x8xf32> -> vector<8x8xf32>
    %cst_18 = arith.constant dense<0xFF800000> : vector<8xf32>
    %26 = vector.multi_reduction <maximumf>, %25, %cst_18 [1] : vector<8x8xf32> to vector<8xf32>
    %27 = vector.shape_cast %26 : vector<8xf32> to vector<8x1xf32>
    %28 = vector.broadcast %27 : vector<8x1xf32> to vector<8x8xf32>
    %29 = arith.subf %25, %28 : vector<8x8xf32>
    %30 = math.exp %29 : vector<8x8xf32>
    %cst_19 = arith.constant dense<0.000000e+00> : vector<8xf32>
    %31 = vector.multi_reduction <add>, %30, %cst_19 [1] : vector<8x8xf32> to vector<8xf32>
    %32 = vector.shape_cast %31 : vector<8xf32> to vector<8x1xf32>
    %33 = tpu.reciprocal %32 : vector<8x1xf32> -> vector<8x1xf32>
    %34 = vector.broadcast %33 : vector<8x1xf32> to vector<8x8xf32>
    %35 = arith.mulf %30, %34 : vector<8x8xf32>
    %36 = arith.truncf %35 : vector<8x8xf32> to vector<8x8xbf16>
    %37 = vector.extract_strided_slice %20 {offsets = [0, 0], sizes = [8, 8], strides = [1, 1]} : vector<8x128xbf16> to vector<8x8xbf16>
    %cst_20 = arith.constant dense<0.000000e+00> : vector<8x8xf32>
    %38 = tpu.matmul %36, %37, %cst_20 {dimension_numbers = #tpu.dot_dimension_numbers<[1], [0], [0], [1], [0, 0, 1, 1], [], []>} : vector<8x8xbf16>, vector<8x8xbf16>, vector<8x8xf32> -> vector<8x8xf32>
    %c0_21 = arith.constant 0 : index
    %c0_22 = arith.constant 0 : index
    %39 = vector.load %arg13[%c0_21, %c0_22] : memref<8x128xf32, #tpu.memory_space<vmem>>, vector<8x8xf32>
    tpu.vector_store %arg13[%c0_21, %c0_22], %38 {strides = array<i32>} : memref<8x128xf32, #tpu.memory_space<vmem>>, vector<8x8xf32>,
    %40 = vector.extract_strided_slice %16 {offsets = [0, 8], sizes = [8, 8], strides = [1, 1]} : vector<8x128xbf16> to vector<8x8xbf16>
    %41 = vector.extract_strided_slice %18 {offsets = [0, 8], sizes = [8, 8], strides = [1, 1]} : vector<8x128xbf16> to vector<8x8xbf16>
    %cst_23 = arith.constant dense<0.000000e+00> : vector<8x8xf32>
    %42 = tpu.matmul %40, %41, %cst_23 {dimension_numbers = #tpu.dot_dimension_numbers<[1], [1], [0], [0], [0, 0, 1, 0], [], []>} : vector<8x8xbf16>, vector<8x8xbf16>, vector<8x8xf32> -> vector<8x8xf32>
    %cst_24 = arith.constant dense<0xFF800000> : vector<8xf32>
    %43 = vector.multi_reduction <maximumf>, %42, %cst_24 [1] : vector<8x8xf32> to vector<8xf32>
    %44 = vector.shape_cast %43 : vector<8xf32> to vector<8x1xf32>
    %45 = vector.broadcast %44 : vector<8x1xf32> to vector<8x8xf32>
    %46 = arith.subf %42, %45 : vector<8x8xf32>
    %47 = math.exp %46 : vector<8x8xf32>
    %cst_25 = arith.constant dense<0.000000e+00> : vector<8xf32>
    %48 = vector.multi_reduction <add>, %47, %cst_25 [1] : vector<8x8xf32> to vector<8xf32>
    %49 = vector.shape_cast %48 : vector<8xf32> to vector<8x1xf32>
    %50 = tpu.reciprocal %49 : vector<8x1xf32> -> vector<8x1xf32>
    %51 = vector.broadcast %50 : vector<8x1xf32> to vector<8x8xf32>
    %52 = arith.mulf %47, %51 : vector<8x8xf32>
    %53 = arith.truncf %52 : vector<8x8xf32> to vector<8x8xbf16>
    %54 = vector.extract_strided_slice %20 {offsets = [0, 8], sizes = [8, 8], strides = [1, 1]} : vector<8x128xbf16> to vector<8x8xbf16>
    %cst_26 = arith.constant dense<0.000000e+00> : vector<8x8xf32>
    %55 = tpu.matmul %53, %54, %cst_26 {dimension_numbers = #tpu.dot_dimension_numbers<[1], [0], [0], [1], [0, 0, 1, 1], [], []>} : vector<8x8xbf16>, vector<8x8xbf16>, vector<8x8xf32> -> vector<8x8xf32>
    %c0_27 = arith.constant 0 : index
    %c8 = arith.constant 8 : index
    %56 = vector.load %arg13[%c0_27, %c8] : memref<8x128xf32, #tpu.memory_space<vmem>>, vector<8x8xf32>
    tpu.vector_store %arg13[%c0_27, %c8], %55 {strides = array<i32>} : memref<8x128xf32, #tpu.memory_space<vmem>>, vector<8x8xf32>,
    %c0_28 = arith.constant 0 : index
    %c0_29 = arith.constant 0 : index
    %57 = vector.load %arg13[%c0_28, %c0_29] : memref<8x128xf32, #tpu.memory_space<vmem>>, vector<8x128xf32>
    %58 = arith.truncf %57 : vector<8x128xf32> to vector<8x128xbf16>
    %c0_30 = arith.constant 0 : index
    %c0_31 = arith.constant 0 : index
    %59 = vector.load %arg8[%c0_30, %c0_31] : memref<128x128xbf16, #tpu.memory_space<vmem>>, vector<128x128xbf16>
    %cst_32 = arith.constant dense<0.000000e+00> : vector<8x128xf32>
    %60 = tpu.matmul %58, %59, %cst_32 {dimension_numbers = #tpu.dot_dimension_numbers<[1], [0], [0], [1], [0, 0, 1, 1], [], []>} : vector<8x128xbf16>, vector<128x128xbf16>, vector<8x128xf32> -> vector<8x128xf32>
    %c0_33 = arith.constant 0 : index
    %c0_34 = arith.constant 0 : index
    %61 = vector.load %arg9[%c0_33, %c0_34] : memref<1x128xf32, #tpu.memory_space<vmem>>, vector<1x128xf32>
    %62 = vector.broadcast %61 : vector<1x128xf32> to vector<8x128xf32>
    %63 = arith.addf %60, %62 : vector<8x128xf32>
    %64 = arith.addf %63, %1 : vector<8x128xf32>
    %c0_35 = arith.constant 0 : index
    %c0_36 = arith.constant 0 : index
    %65 = vector.load %arg10[%c0_35, %c0_36] : memref<1x128xf32, #tpu.memory_space<vmem>>, vector<1x128xf32>
    %c0_37 = arith.constant 0 : index
    %c0_38 = arith.constant 0 : index
    %66 = vector.load %arg11[%c0_37, %c0_38] : memref<1x128xf32, #tpu.memory_space<vmem>>, vector<1x128xf32>
    %cst_39 = arith.constant dense<0.000000e+00> : vector<8xf32>
    %67 = vector.multi_reduction <add>, %64, %cst_39 [1] : vector<8x128xf32> to vector<8xf32>
    %68 = vector.shape_cast %67 : vector<8xf32> to vector<8x1xf32>
    %cst_40 = arith.constant 6.250000e-02 : f32
    %69 = vector.broadcast %cst_40 : f32 to vector<8x1xf32>
    %70 = arith.mulf %68, %69 : vector<8x1xf32>
    %71 = vector.broadcast %70 : vector<8x1xf32> to vector<8x128xf32>
    %72 = arith.subf %64, %71 : vector<8x128xf32>
    %73 = tpu.iota {dimensions = array<i32: 1>} : vector<1x128xi32>
    %c16_i32 = arith.constant 16 : i32
    %74 = vector.broadcast %c16_i32 : i32 to vector<1x128xi32>
    %75 = arith.cmpi slt, %73, %74 : vector<1x128xi32>
    %76 = arith.extui %75 : vector<1x128xi1> to vector<1x128xi32>
    %77 = arith.sitofp %76 : vector<1x128xi32> to vector<1x128xf32>
    %78 = vector.broadcast %77 : vector<1x128xf32> to vector<8x128xf32>
    %79 = arith.mulf %72, %78 : vector<8x128xf32>
    %80 = arith.mulf %79, %79 : vector<8x128xf32>
    %cst_41 = arith.constant dense<0.000000e+00> : vector<8xf32>
    %81 = vector.multi_reduction <add>, %80, %cst_41 [1] : vector<8x128xf32> to vector<8xf32>
    %82 = vector.shape_cast %81 : vector<8xf32> to vector<8x1xf32>
    %cst_42 = arith.constant 6.250000e-02 : f32
    %83 = vector.broadcast %cst_42 : f32 to vector<8x1xf32>
    %84 = arith.mulf %82, %83 : vector<8x1xf32>
    %cst_43 = arith.constant 9.99999974E-6 : f32
    %85 = vector.broadcast %cst_43 : f32 to vector<8x1xf32>
    %86 = arith.addf %84, %85 : vector<8x1xf32>
    %87 = math.rsqrt %86 : vector<8x1xf32>
    %88 = vector.broadcast %87 : vector<8x1xf32> to vector<8x128xf32>
    %89 = arith.mulf %79, %88 : vector<8x128xf32>
    %90 = vector.broadcast %65 : vector<1x128xf32> to vector<8x128xf32>
    %91 = arith.mulf %89, %90 : vector<8x128xf32>
    %92 = vector.broadcast %66 : vector<1x128xf32> to vector<8x128xf32>
    %93 = arith.addf %91, %92 : vector<8x128xf32>
    %c0_44 = arith.constant 0 : index
    %c0_45 = arith.constant 0 : index
    %c0_46 = arith.constant 0 : index
    %94 = vector.load %arg12[%c0_44, %c0_45, %c0_46] : memref<1x8x128xf32, #tpu.memory_space<vmem>>, vector<1x8x128xf32>
    %95 = vector.shape_cast %94 : vector<1x8x128xf32> to vector<8x128xf32>
    %96 = vector.shape_cast %93 : vector<8x128xf32> to vector<1x8x128xf32>
    tpu.vector_store %arg12[%c0_44, %c0_45, %c0_46], %96 {strides = array<i32>} : memref<1x8x128xf32, #tpu.memory_space<vmem>>, vector<1x8x128xf32>,
    return
  }
  func.func @transform_0(%arg0: i32, %arg1: i32) -> (i32, i32, i32) {
    %c0_i32 = arith.constant 0 : i32
    %c0_i32_0 = arith.constant 0 : i32
    return %arg0, %arg1, %c0_i32 : i32, i32, i32
  }
  func.func @transform_1(%arg0: i32, %arg1: i32) -> (i32, i32, i32) {
    %c0_i32 = arith.constant 0 : i32
    %c0_i32_0 = arith.constant 0 : i32
    %c0_i32_1 = arith.constant 0 : i32
    return %arg0, %c0_i32, %c0_i32_0 : i32, i32, i32
  }
  func.func @transform_2(%arg0: i32, %arg1: i32) -> (i32, i32) {
    %c0_i32 = arith.constant 0 : i32
    %c0_i32_0 = arith.constant 0 : i32
    %c0_i32_1 = arith.constant 0 : i32
    return %c0_i32, %c0_i32_0 : i32, i32
  }
  func.func @transform_3(%arg0: i32, %arg1: i32) -> (i32, i32) {
    %c0_i32 = arith.constant 0 : i32
    %c0_i32_0 = arith.constant 0 : i32
    %c0_i32_1 = arith.constant 0 : i32
    return %c0_i32, %c0_i32_0 : i32, i32
  }
  func.func @transform_4(%arg0: i32, %arg1: i32) -> (i32, i32) {
    %c0_i32 = arith.constant 0 : i32
    %c0_i32_0 = arith.constant 0 : i32
    %c0_i32_1 = arith.constant 0 : i32
    return %c0_i32, %c0_i32_0 : i32, i32
  }
  func.func @transform_5(%arg0: i32, %arg1: i32) -> (i32, i32) {
    %c0_i32 = arith.constant 0 : i32
    %c0_i32_0 = arith.constant 0 : i32
    %c0_i32_1 = arith.constant 0 : i32
    return %c0_i32, %c0_i32_0 : i32, i32
  }
  func.func @transform_6(%arg0: i32, %arg1: i32) -> (i32, i32) {
    %c0_i32 = arith.constant 0 : i32
    %c0_i32_0 = arith.constant 0 : i32
    %c0_i32_1 = arith.constant 0 : i32
    return %c0_i32, %c0_i32_0 : i32, i32
  }
  func.func @transform_7(%arg0: i32, %arg1: i32) -> (i32, i32) {
    %c0_i32 = arith.constant 0 : i32
    %c0_i32_0 = arith.constant 0 : i32
    %c0_i32_1 = arith.constant 0 : i32
    return %c0_i32, %c0_i32_0 : i32, i32
  }
  func.func @transform_8(%arg0: i32, %arg1: i32) -> (i32, i32) {
    %c0_i32 = arith.constant 0 : i32
    %c0_i32_0 = arith.constant 0 : i32
    %c0_i32_1 = arith.constant 0 : i32
    return %c0_i32, %c0_i32_0 : i32, i32
  }
  func.func @transform_9(%arg0: i32, %arg1: i32) -> (i32, i32) {
    %c0_i32 = arith.constant 0 : i32
    %c0_i32_0 = arith.constant 0 : i32
    %c0_i32_1 = arith.constant 0 : i32
    return %c0_i32, %c0_i32_0 : i32, i32
  }
  func.func @transform_10(%arg0: i32, %arg1: i32) -> (i32, i32, i32) {
    %c0_i32 = arith.constant 0 : i32
    %c0_i32_0 = arith.constant 0 : i32
    return %arg0, %arg1, %c0_i32 : i32, i32, i32
  }
}

module attributes {stable_mosaic.version = 11 : i64} {
  func.func @_mha_block_kernel(%arg0: i32, %arg1: i32, %arg2: memref<1x8x128xf32, #tpu.memory_space<vmem>>, %arg3: memref<1x8x128xf32, #tpu.memory_space<vmem>>, %arg4: memref<128x128xbf16, #tpu.memory_space<vmem>>, %arg5: memref<1x128xf32, #tpu.memory_space<vmem>>, %arg6: memref<128x256xbf16, #tpu.memory_space<vmem>>, %arg7: memref<1x256xf32, #tpu.memory_space<vmem>>, %arg8: memref<128x128xbf16, #tpu.memory_space<vmem>>, %arg9: memref<1x128xf32, #tpu.memory_space<vmem>>, %arg10: memref<1x128xf32, #tpu.memory_space<vmem>>, %arg11: memref<1x128xf32, #tpu.memory_space<vmem>>, %arg12: memref<1x8x128xf32, #tpu.memory_space<vmem>>, %arg13: memref<8x128xf32, #tpu.memory_space<vmem>>) attributes {dimension_semantics = [#tpu.dimension_semantics<parallel>, #tpu.dimension_semantics<parallel>], iteration_bounds = array<i64: 2, 1>, scalar_prefetch = 0 : i64, scratch_operands = 1 : i64, tpu.core_type = #tpu.core_type<tc>, window_params = [{transform_indices = @transform_0, window_bounds = array<i64: 1, 8, 128>}, {transform_indices = @transform_1, window_bounds = array<i64: 1, 8, 128>}, {pipeline_mode = #tpu.pipeline_mode<synchronous>, transform_indices = @transform_2, window_bounds = array<i64: 128, 128>}, {pipeline_mode = #tpu.pipeline_mode<synchronous>, transform_indices = @transform_3, window_bounds = array<i64: 1, 128>}, {pipeline_mode = #tpu.pipeline_mode<synchronous>, transform_indices = @transform_4, window_bounds = array<i64: 128, 256>}, {pipeline_mode = #tpu.pipeline_mode<synchronous>, transform_indices = @transform_5, window_bounds = array<i64: 1, 256>}, {pipeline_mode = #tpu.pipeline_mode<synchronous>, transform_indices = @transform_6, window_bounds = array<i64: 128, 128>}, {pipeline_mode = #tpu.pipeline_mode<synchronous>, transform_indices = @transform_7, window_bounds = array<i64: 1, 128>}, {pipeline_mode = #tpu.pipeline_mode<synchronous>, transform_indices = @transform_8, window_bounds = array<i64: 1, 128>}, {pipeline_mode = #tpu.pipeline_mode<synchronous>, transform_indices = @transform_9, window_bounds = array<i64: 1, 128>}, {transform_indices = @transform_10, window_bounds = array<i64: 1, 8, 128>}]} {
    %c0 = arith.constant 0 : index
    %c0_0 = arith.constant 0 : index
    %c0_1 = arith.constant 0 : index
    %0 = vector.load %arg2[%c0, %c0_0, %c0_1] : memref<1x8x128xf32, #tpu.memory_space<vmem>>, vector<1x8x128xf32>
    %1 = vector.shape_cast %0 : vector<1x8x128xf32> to vector<8x128xf32>
    %c0_2 = arith.constant 0 : index
    %c0_3 = arith.constant 0 : index
    %c0_4 = arith.constant 0 : index
    %2 = vector.load %arg3[%c0_2, %c0_3, %c0_4] : memref<1x8x128xf32, #tpu.memory_space<vmem>>, vector<1x8x128xf32>
    %3 = vector.shape_cast %2 : vector<1x8x128xf32> to vector<8x128xf32>
    %4 = arith.truncf %1 : vector<8x128xf32> to vector<8x128xbf16>
    %c0_5 = arith.constant 0 : index
    %c0_6 = arith.constant 0 : index
    %5 = vector.load %arg4[%c0_5, %c0_6] : memref<128x128xbf16, #tpu.memory_space<vmem>>, vector<128x128xbf16>
    %cst = arith.constant dense<0.000000e+00> : vector<8x128xf32>
    %6 = tpu.matmul %4, %5, %cst {dimension_numbers = #tpu.dot_dimension_numbers<[1], [0], [0], [1], [0, 0, 1, 1], [], []>} : vector<8x128xbf16>, vector<128x128xbf16>, vector<8x128xf32> -> vector<8x128xf32>
    %c0_7 = arith.constant 0 : index
    %c0_8 = arith.constant 0 : index
    %7 = vector.load %arg5[%c0_7, %c0_8] : memref<1x128xf32, #tpu.memory_space<vmem>>, vector<1x128xf32>
    %8 = vector.broadcast %7 : vector<1x128xf32> to vector<8x128xf32>
    %9 = arith.addf %6, %8 : vector<8x128xf32>
    %10 = arith.truncf %3 : vector<8x128xf32> to vector<8x128xbf16>
    %c0_9 = arith.constant 0 : index
    %c0_10 = arith.constant 0 : index
    %11 = vector.load %arg6[%c0_9, %c0_10] : memref<128x256xbf16, #tpu.memory_space<vmem>>, vector<128x256xbf16>
    %cst_11 = arith.constant dense<0.000000e+00> : vector<8x256xf32>
    %12 = tpu.matmul %10, %11, %cst_11 {dimension_numbers = #tpu.dot_dimension_numbers<[1], [0], [0], [1], [0, 0, 1, 1], [], []>} : vector<8x128xbf16>, vector<128x256xbf16>, vector<8x256xf32> -> vector<8x256xf32>
    %c0_12 = arith.constant 0 : index
    %c0_13 = arith.constant 0 : index
    %13 = vector.load %arg7[%c0_12, %c0_13] : memref<1x256xf32, #tpu.memory_space<vmem>>, vector<1x256xf32>
    %14 = vector.broadcast %13 : vector<1x256xf32> to vector<8x256xf32>
    %15 = arith.addf %12, %14 : vector<8x256xf32>
    %16 = arith.truncf %9 : vector<8x128xf32> to vector<8x128xbf16>
    %17 = vector.extract_strided_slice %15 {offsets = [0, 0], sizes = [8, 128], strides = [1, 1]} : vector<8x256xf32> to vector<8x128xf32>
    %18 = arith.truncf %17 : vector<8x128xf32> to vector<8x128xbf16>
    %19 = vector.extract_strided_slice %15 {offsets = [0, 128], sizes = [8, 128], strides = [1, 1]} : vector<8x256xf32> to vector<8x128xf32>
    %20 = arith.truncf %19 : vector<8x128xf32> to vector<8x128xbf16>
    %cst_14 = arith.constant 0.000000e+00 : f32
    %21 = vector.broadcast %cst_14 : f32 to vector<8x128xf32>
    %c0_15 = arith.constant 0 : index
    %c0_16 = arith.constant 0 : index
    %22 = vector.load %arg13[%c0_15, %c0_16] : memref<8x128xf32, #tpu.memory_space<vmem>>, vector<8x128xf32>
    tpu.vector_store %arg13[%c0_15, %c0_16], %21 {strides = array<i32>} : memref<8x128xf32, #tpu.memory_space<vmem>>, vector<8x128xf32>,
    %23 = vector.extract_strided_slice %16 {offsets = [0, 0], sizes = [8, 8], strides = [1, 1]} : vector<8x128xbf16> to vector<8x8xbf16>
    %24 = vector.extract_strided_slice %18 {offsets = [0, 0], sizes = [8, 8], strides = [1, 1]} : vector<8x128xbf16> to vector<8x8xbf16>
    %cst_17 = arith.constant dense<0.000000e+00> : vector<8x8xf32>
    %25 = tpu.matmul %23, %24, %cst_17 {dimension_numbers = #tpu.dot_dimension_numbers<[1], [1], [0], [0], [0, 0, 1, 0], [], []>} : vector<8x8xbf16>, vector<8x8xbf16>, vector<8x8xf32> -> vector<8x8xf32>
    %cst_18 = arith.constant dense<0xFF800000> : vector<8xf32>
    %26 = vector.multi_reduction <maximumf>, %25, %cst_18 [1] : vector<8x8xf32> to vector<8xf32>
    %27 = vector.shape_cast %26 : vector<8xf32> to vector<8x1xf32>
    %28 = vector.broadcast %27 : vector<8x1xf32> to vector<8x8xf32>
    %29 = arith.subf %25, %28 : vector<8x8xf32>
    %30 = math.exp %29 : vector<8x8xf32>
    %cst_19 = arith.constant dense<0.000000e+00> : vector<8xf32>
    %31 = vector.multi_reduction <add>, %30, %cst_19 [1] : vector<8x8xf32> to vector<8xf32>
    %32 = vector.shape_cast %31 : vector<8xf32> to vector<8x1xf32>
    %33 = tpu.reciprocal %32 : vector<8x1xf32> -> vector<8x1xf32>
    %34 = vector.broadcast %33 : vector<8x1xf32> to vector<8x8xf32>
    %35 = arith.mulf %30, %34 : vector<8x8xf32>
    %36 = arith.truncf %35 : vector<8x8xf32> to vector<8x8xbf16>
    %37 = vector.extract_strided_slice %20 {offsets = [0, 0], sizes = [8, 8], strides = [1, 1]} : vector<8x128xbf16> to vector<8x8xbf16>
    %cst_20 = arith.constant dense<0.000000e+00> : vector<8x8xf32>
    %38 = tpu.matmul %36, %37, %cst_20 {dimension_numbers = #tpu.dot_dimension_numbers<[1], [0], [0], [1], [0, 0, 1, 1], [], []>} : vector<8x8xbf16>, vector<8x8xbf16>, vector<8x8xf32> -> vector<8x8xf32>
    %c0_21 = arith.constant 0 : index
    %c0_22 = arith.constant 0 : index
    %39 = vector.load %arg13[%c0_21, %c0_22] : memref<8x128xf32, #tpu.memory_space<vmem>>, vector<8x8xf32>
    tpu.vector_store %arg13[%c0_21, %c0_22], %38 {strides = array<i32>} : memref<8x128xf32, #tpu.memory_space<vmem>>, vector<8x8xf32>,
    %40 = vector.extract_strided_slice %16 {offsets = [0, 8], sizes = [8, 8], strides = [1, 1]} : vector<8x128xbf16> to vector<8x8xbf16>
    %41 = vector.extract_strided_slice %18 {offsets = [0, 8], sizes = [8, 8], strides = [1, 1]} : vector<8x128xbf16> to vector<8x8xbf16>
    %cst_23 = arith.constant dense<0.000000e+00> : vector<8x8xf32>
    %42 = tpu.matmul %40, %41, %cst_23 {dimension_numbers = #tpu.dot_dimension_numbers<[1], [1], [0], [0], [0, 0, 1, 0], [], []>} : vector<8x8xbf16>, vector<8x8xbf16>, vector<8x8xf32> -> vector<8x8xf32>
    %cst_24 = arith.constant dense<0xFF800000> : vector<8xf32>
    %43 = vector.multi_reduction <maximumf>, %42, %cst_24 [1] : vector<8x8xf32> to vector<8xf32>
    %44 = vector.shape_cast %43 : vector<8xf32> to vector<8x1xf32>
    %45 = vector.broadcast %44 : vector<8x1xf32> to vector<8x8xf32>
    %46 = arith.subf %42, %45 : vector<8x8xf32>
    %47 = math.exp %46 : vector<8x8xf32>
    %cst_25 = arith.constant dense<0.000000e+00> : vector<8xf32>
    %48 = vector.multi_reduction <add>, %47, %cst_25 [1] : vector<8x8xf32> to vector<8xf32>
    %49 = vector.shape_cast %48 : vector<8xf32> to vector<8x1xf32>
    %50 = tpu.reciprocal %49 : vector<8x1xf32> -> vector<8x1xf32>
    %51 = vector.broadcast %50 : vector<8x1xf32> to vector<8x8xf32>
    %52 = arith.mulf %47, %51 : vector<8x8xf32>
    %53 = arith.truncf %52 : vector<8x8xf32> to vector<8x8xbf16>
    %54 = vector.extract_strided_slice %20 {offsets = [0, 8], sizes = [8, 8], strides = [1, 1]} : vector<8x128xbf16> to vector<8x8xbf16>
    %cst_26 = arith.constant dense<0.000000e+00> : vector<8x8xf32>
    %55 = tpu.matmul %53, %54, %cst_26 {dimension_numbers = #tpu.dot_dimension_numbers<[1], [0], [0], [1], [0, 0, 1, 1], [], []>} : vector<8x8xbf16>, vector<8x8xbf16>, vector<8x8xf32> -> vector<8x8xf32>
    %c0_27 = arith.constant 0 : index
    %c8 = arith.constant 8 : index
    %56 = vector.load %arg13[%c0_27, %c8] : memref<8x128xf32, #tpu.memory_space<vmem>>, vector<8x8xf32>
    tpu.vector_store %arg13[%c0_27, %c8], %55 {strides = array<i32>} : memref<8x128xf32, #tpu.memory_space<vmem>>, vector<8x8xf32>,
    %c0_28 = arith.constant 0 : index
    %c0_29 = arith.constant 0 : index
    %57 = vector.load %arg13[%c0_28, %c0_29] : memref<8x128xf32, #tpu.memory_space<vmem>>, vector<8x128xf32>
    %58 = arith.truncf %57 : vector<8x128xf32> to vector<8x128xbf16>
    %c0_30 = arith.constant 0 : index
    %c0_31 = arith.constant 0 : index
    %59 = vector.load %arg8[%c0_30, %c0_31] : memref<128x128xbf16, #tpu.memory_space<vmem>>, vector<128x128xbf16>
    %cst_32 = arith.constant dense<0.000000e+00> : vector<8x128xf32>
    %60 = tpu.matmul %58, %59, %cst_32 {dimension_numbers = #tpu.dot_dimension_numbers<[1], [0], [0], [1], [0, 0, 1, 1], [], []>} : vector<8x128xbf16>, vector<128x128xbf16>, vector<8x128xf32> -> vector<8x128xf32>
    %c0_33 = arith.constant 0 : index
    %c0_34 = arith.constant 0 : index
    %61 = vector.load %arg9[%c0_33, %c0_34] : memref<1x128xf32, #tpu.memory_space<vmem>>, vector<1x128xf32>
    %62 = vector.broadcast %61 : vector<1x128xf32> to vector<8x128xf32>
    %63 = arith.addf %60, %62 : vector<8x128xf32>
    %64 = arith.addf %63, %1 : vector<8x128xf32>
    %c0_35 = arith.constant 0 : index
    %c0_36 = arith.constant 0 : index
    %65 = vector.load %arg10[%c0_35, %c0_36] : memref<1x128xf32, #tpu.memory_space<vmem>>, vector<1x128xf32>
    %c0_37 = arith.constant 0 : index
    %c0_38 = arith.constant 0 : index
    %66 = vector.load %arg11[%c0_37, %c0_38] : memref<1x128xf32, #tpu.memory_space<vmem>>, vector<1x128xf32>
    %cst_39 = arith.constant dense<0.000000e+00> : vector<8xf32>
    %67 = vector.multi_reduction <add>, %64, %cst_39 [1] : vector<8x128xf32> to vector<8xf32>
    %68 = vector.shape_cast %67 : vector<8xf32> to vector<8x1xf32>
    %cst_40 = arith.constant 6.250000e-02 : f32
    %69 = vector.broadcast %cst_40 : f32 to vector<8x1xf32>
    %70 = arith.mulf %68, %69 : vector<8x1xf32>
    %71 = vector.broadcast %70 : vector<8x1xf32> to vector<8x128xf32>
    %72 = arith.subf %64, %71 : vector<8x128xf32>
    %73 = tpu.iota {dimensions = array<i32: 1>} : vector<1x128xi32>
    %c16_i32 = arith.constant 16 : i32
    %74 = vector.broadcast %c16_i32 : i32 to vector<1x128xi32>
    %75 = arith.cmpi slt, %73, %74 : vector<1x128xi32>
    %76 = arith.extui %75 : vector<1x128xi1> to vector<1x128xi32>
    %77 = arith.sitofp %76 : vector<1x128xi32> to vector<1x128xf32>
    %78 = vector.broadcast %77 : vector<1x128xf32> to vector<8x128xf32>
    %79 = arith.mulf %72, %78 : vector<8x128xf32>
    %80 = arith.mulf %79, %79 : vector<8x128xf32>
    %cst_41 = arith.constant dense<0.000000e+00> : vector<8xf32>
    %81 = vector.multi_reduction <add>, %80, %cst_41 [1] : vector<8x128xf32> to vector<8xf32>
    %82 = vector.shape_cast %81 : vector<8xf32> to vector<8x1xf32>
    %cst_42 = arith.constant 6.250000e-02 : f32
    %83 = vector.broadcast %cst_42 : f32 to vector<8x1xf32>
    %84 = arith.mulf %82, %83 : vector<8x1xf32>
    %cst_43 = arith.constant 9.99999974E-6 : f32
    %85 = vector.broadcast %cst_43 : f32 to vector<8x1xf32>
    %86 = arith.addf %84, %85 : vector<8x1xf32>
    %87 = math.rsqrt %86 : vector<8x1xf32>
    %88 = vector.broadcast %87 : vector<8x1xf32> to vector<8x128xf32>
    %89 = arith.mulf %79, %88 : vector<8x128xf32>
    %90 = vector.broadcast %65 : vector<1x128xf32> to vector<8x128xf32>
    %91 = arith.mulf %89, %90 : vector<8x128xf32>
    %92 = vector.broadcast %66 : vector<1x128xf32> to vector<8x128xf32>
    %93 = arith.addf %91, %92 : vector<8x128xf32>
    %c0_44 = arith.constant 0 : index
    %c0_45 = arith.constant 0 : index
    %c0_46 = arith.constant 0 : index
    %94 = vector.load %arg12[%c0_44, %c0_45, %c0_46] : memref<1x8x128xf32, #tpu.memory_space<vmem>>, vector<1x8x128xf32>
    %95 = vector.shape_cast %94 : vector<1x8x128xf32> to vector<8x128xf32>
    %96 = vector.shape_cast %93 : vector<8x128xf32> to vector<1x8x128xf32>
    tpu.vector_store %arg12[%c0_44, %c0_45, %c0_46], %96 {strides = array<i32>} : memref<1x8x128xf32, #tpu.memory_space<vmem>>, vector<1x8x128xf32>,
    return
  }
  func.func @transform_0(%arg0: i32, %arg1: i32) -> (i32, i32, i32) {
    %c0_i32 = arith.constant 0 : i32
    %c0_i32_0 = arith.constant 0 : i32
    return %arg0, %arg1, %c0_i32 : i32, i32, i32
  }
  func.func @transform_1(%arg0: i32, %arg1: i32) -> (i32, i32, i32) {
    %c0_i32 = arith.constant 0 : i32
    %c0_i32_0 = arith.constant 0 : i32
    %c0_i32_1 = arith.constant 0 : i32
    return %arg0, %c0_i32, %c0_i32_0 : i32, i32, i32
  }
  func.func @transform_2(%arg0: i32, %arg1: i32) -> (i32, i32) {
    %c0_i32 = arith.constant 0 : i32
    %c0_i32_0 = arith.constant 0 : i32
    %c0_i32_1 = arith.constant 0 : i32
    return %c0_i32, %c0_i32_0 : i32, i32
  }
  func.func @transform_3(%arg0: i32, %arg1: i32) -> (i32, i32) {
    %c0_i32 = arith.constant 0 : i32
    %c0_i32_0 = arith.constant 0 : i32
    %c0_i32_1 = arith.constant 0 : i32
    return %c0_i32, %c0_i32_0 : i32, i32
  }
  func.func @transform_4(%arg0: i32, %arg1: i32) -> (i32, i32) {
    %c0_i32 = arith.constant 0 : i32
    %c0_i32_0 = arith.constant 0 : i32
    %c0_i32_1 = arith.constant 0 : i32
    return %c0_i32, %c0_i32_0 : i32, i32
  }
  func.func @transform_5(%arg0: i32, %arg1: i32) -> (i32, i32) {
    %c0_i32 = arith.constant 0 : i32
    %c0_i32_0 = arith.constant 0 : i32
    %c0_i32_1 = arith.constant 0 : i32
    return %c0_i32, %c0_i32_0 : i32, i32
  }
  func.func @transform_6(%arg0: i32, %arg1: i32) -> (i32, i32) {
    %c0_i32 = arith.constant 0 : i32
    %c0_i32_0 = arith.constant 0 : i32
    %c0_i32_1 = arith.constant 0 : i32
    return %c0_i32, %c0_i32_0 : i32, i32
  }
  func.func @transform_7(%arg0: i32, %arg1: i32) -> (i32, i32) {
    %c0_i32 = arith.constant 0 : i32
    %c0_i32_0 = arith.constant 0 : i32
    %c0_i32_1 = arith.constant 0 : i32
    return %c0_i32, %c0_i32_0 : i32, i32
  }
  func.func @transform_8(%arg0: i32, %arg1: i32) -> (i32, i32) {
    %c0_i32 = arith.constant 0 : i32
    %c0_i32_0 = arith.constant 0 : i32
    %c0_i32_1 = arith.constant 0 : i32
    return %c0_i32, %c0_i32_0 : i32, i32
  }
  func.func @transform_9(%arg0: i32, %arg1: i32) -> (i32, i32) {
    %c0_i32 = arith.constant 0 : i32
    %c0_i32_0 = arith.constant 0 : i32
    %c0_i32_1 = arith.constant 0 : i32
    return %c0_i32, %c0_i32_0 : i32, i32
  }
  func.func @transform_10(%arg0: i32, %arg1: i32) -> (i32, i32, i32) {
    %c0_i32 = arith.constant 0 : i32
    %c0_i32_0 = arith.constant 0 : i32
    return %arg0, %arg1, %c0_i32 : i32, i32, i32
  }
}

module attributes {stable_mosaic.version = 11 : i64} {
  func.func @_ffn_block_kernel(%arg0: i32, %arg1: memref<16x128xf32, #tpu.memory_space<vmem>>, %arg2: memref<128x128xbf16, #tpu.memory_space<vmem>>, %arg3: memref<1x128xf32, #tpu.memory_space<vmem>>, %arg4: memref<128x128xbf16, #tpu.memory_space<vmem>>, %arg5: memref<1x128xf32, #tpu.memory_space<vmem>>, %arg6: memref<1x128xf32, #tpu.memory_space<vmem>>, %arg7: memref<1x128xf32, #tpu.memory_space<vmem>>, %arg8: memref<16x128xf32, #tpu.memory_space<vmem>>) attributes {dimension_semantics = [#tpu.dimension_semantics<parallel>], iteration_bounds = array<i64: 1>, scalar_prefetch = 0 : i64, scratch_operands = 0 : i64, tpu.core_type = #tpu.core_type<tc>, window_params = [{transform_indices = @transform_0, window_bounds = array<i64: 16, 128>}, {pipeline_mode = #tpu.pipeline_mode<synchronous>, transform_indices = @transform_1, window_bounds = array<i64: 128, 128>}, {pipeline_mode = #tpu.pipeline_mode<synchronous>, transform_indices = @transform_2, window_bounds = array<i64: 1, 128>}, {pipeline_mode = #tpu.pipeline_mode<synchronous>, transform_indices = @transform_3, window_bounds = array<i64: 128, 128>}, {pipeline_mode = #tpu.pipeline_mode<synchronous>, transform_indices = @transform_4, window_bounds = array<i64: 1, 128>}, {pipeline_mode = #tpu.pipeline_mode<synchronous>, transform_indices = @transform_5, window_bounds = array<i64: 1, 128>}, {pipeline_mode = #tpu.pipeline_mode<synchronous>, transform_indices = @transform_6, window_bounds = array<i64: 1, 128>}, {transform_indices = @transform_7, window_bounds = array<i64: 16, 128>}]} {
    %c0 = arith.constant 0 : index
    %c0_0 = arith.constant 0 : index
    %0 = vector.load %arg1[%c0, %c0_0] : memref<16x128xf32, #tpu.memory_space<vmem>>, vector<16x128xf32>
    %1 = arith.truncf %0 : vector<16x128xf32> to vector<16x128xbf16>
    %c0_1 = arith.constant 0 : index
    %c0_2 = arith.constant 0 : index
    %2 = vector.load %arg2[%c0_1, %c0_2] : memref<128x128xbf16, #tpu.memory_space<vmem>>, vector<128x128xbf16>
    %cst = arith.constant dense<0.000000e+00> : vector<16x128xf32>
    %3 = tpu.matmul %1, %2, %cst {dimension_numbers = #tpu.dot_dimension_numbers<[1], [0], [0], [1], [0, 0, 1, 1], [], []>} : vector<16x128xbf16>, vector<128x128xbf16>, vector<16x128xf32> -> vector<16x128xf32>
    %c0_3 = arith.constant 0 : index
    %c0_4 = arith.constant 0 : index
    %4 = vector.load %arg3[%c0_3, %c0_4] : memref<1x128xf32, #tpu.memory_space<vmem>>, vector<1x128xf32>
    %5 = vector.broadcast %4 : vector<1x128xf32> to vector<16x128xf32>
    %6 = arith.addf %3, %5 : vector<16x128xf32>
    %cst_5 = arith.constant 0.000000e+00 : f32
    %7 = vector.broadcast %cst_5 : f32 to vector<16x128xf32>
    %8 = arith.maximumf %6, %7 : vector<16x128xf32>
    %9 = arith.truncf %8 : vector<16x128xf32> to vector<16x128xbf16>
    %c0_6 = arith.constant 0 : index
    %c0_7 = arith.constant 0 : index
    %10 = vector.load %arg4[%c0_6, %c0_7] : memref<128x128xbf16, #tpu.memory_space<vmem>>, vector<128x128xbf16>
    %cst_8 = arith.constant dense<0.000000e+00> : vector<16x128xf32>
    %11 = tpu.matmul %9, %10, %cst_8 {dimension_numbers = #tpu.dot_dimension_numbers<[1], [0], [0], [1], [0, 0, 1, 1], [], []>} : vector<16x128xbf16>, vector<128x128xbf16>, vector<16x128xf32> -> vector<16x128xf32>
    %c0_9 = arith.constant 0 : index
    %c0_10 = arith.constant 0 : index
    %12 = vector.load %arg5[%c0_9, %c0_10] : memref<1x128xf32, #tpu.memory_space<vmem>>, vector<1x128xf32>
    %13 = vector.broadcast %12 : vector<1x128xf32> to vector<16x128xf32>
    %14 = arith.addf %11, %13 : vector<16x128xf32>
    %15 = arith.addf %14, %0 : vector<16x128xf32>
    %c0_11 = arith.constant 0 : index
    %c0_12 = arith.constant 0 : index
    %16 = vector.load %arg6[%c0_11, %c0_12] : memref<1x128xf32, #tpu.memory_space<vmem>>, vector<1x128xf32>
    %c0_13 = arith.constant 0 : index
    %c0_14 = arith.constant 0 : index
    %17 = vector.load %arg7[%c0_13, %c0_14] : memref<1x128xf32, #tpu.memory_space<vmem>>, vector<1x128xf32>
    %cst_15 = arith.constant dense<0.000000e+00> : vector<16xf32>
    %18 = vector.multi_reduction <add>, %15, %cst_15 [1] : vector<16x128xf32> to vector<16xf32>
    %19 = vector.shape_cast %18 : vector<16xf32> to vector<16x1xf32>
    %cst_16 = arith.constant 6.250000e-02 : f32
    %20 = vector.broadcast %cst_16 : f32 to vector<16x1xf32>
    %21 = arith.mulf %19, %20 : vector<16x1xf32>
    %22 = vector.broadcast %21 : vector<16x1xf32> to vector<16x128xf32>
    %23 = arith.subf %15, %22 : vector<16x128xf32>
    %24 = tpu.iota {dimensions = array<i32: 1>} : vector<1x128xi32>
    %c16_i32 = arith.constant 16 : i32
    %25 = vector.broadcast %c16_i32 : i32 to vector<1x128xi32>
    %26 = arith.cmpi slt, %24, %25 : vector<1x128xi32>
    %27 = arith.extui %26 : vector<1x128xi1> to vector<1x128xi32>
    %28 = arith.sitofp %27 : vector<1x128xi32> to vector<1x128xf32>
    %29 = vector.broadcast %28 : vector<1x128xf32> to vector<16x128xf32>
    %30 = arith.mulf %23, %29 : vector<16x128xf32>
    %31 = arith.mulf %30, %30 : vector<16x128xf32>
    %cst_17 = arith.constant dense<0.000000e+00> : vector<16xf32>
    %32 = vector.multi_reduction <add>, %31, %cst_17 [1] : vector<16x128xf32> to vector<16xf32>
    %33 = vector.shape_cast %32 : vector<16xf32> to vector<16x1xf32>
    %cst_18 = arith.constant 6.250000e-02 : f32
    %34 = vector.broadcast %cst_18 : f32 to vector<16x1xf32>
    %35 = arith.mulf %33, %34 : vector<16x1xf32>
    %cst_19 = arith.constant 9.99999974E-6 : f32
    %36 = vector.broadcast %cst_19 : f32 to vector<16x1xf32>
    %37 = arith.addf %35, %36 : vector<16x1xf32>
    %38 = math.rsqrt %37 : vector<16x1xf32>
    %39 = vector.broadcast %38 : vector<16x1xf32> to vector<16x128xf32>
    %40 = arith.mulf %30, %39 : vector<16x128xf32>
    %41 = vector.broadcast %16 : vector<1x128xf32> to vector<16x128xf32>
    %42 = arith.mulf %40, %41 : vector<16x128xf32>
    %43 = vector.broadcast %17 : vector<1x128xf32> to vector<16x128xf32>
    %44 = arith.addf %42, %43 : vector<16x128xf32>
    %c0_20 = arith.constant 0 : index
    %c0_21 = arith.constant 0 : index
    %45 = vector.load %arg8[%c0_20, %c0_21] : memref<16x128xf32, #tpu.memory_space<vmem>>, vector<16x128xf32>
    tpu.vector_store %arg8[%c0_20, %c0_21], %44 {strides = array<i32>} : memref<16x128xf32, #tpu.memory_space<vmem>>, vector<16x128xf32>,
    return
  }
  func.func @transform_0(%arg0: i32) -> (i32, i32) {
    %c0_i32 = arith.constant 0 : i32
    %c0_i32_0 = arith.constant 0 : i32
    return %arg0, %c0_i32 : i32, i32
  }
  func.func @transform_1(%arg0: i32) -> (i32, i32) {
    %c0_i32 = arith.constant 0 : i32
    %c0_i32_0 = arith.constant 0 : i32
    %c0_i32_1 = arith.constant 0 : i32
    return %c0_i32, %c0_i32_0 : i32, i32
  }
  func.func @transform_2(%arg0: i32) -> (i32, i32) {
    %c0_i32 = arith.constant 0 : i32
    %c0_i32_0 = arith.constant 0 : i32
    %c0_i32_1 = arith.constant 0 : i32
    return %c0_i32, %c0_i32_0 : i32, i32
  }
  func.func @transform_3(%arg0: i32) -> (i32, i32) {
    %c0_i32 = arith.constant 0 : i32
    %c0_i32_0 = arith.constant 0 : i32
    %c0_i32_1 = arith.constant 0 : i32
    return %c0_i32, %c0_i32_0 : i32, i32
  }
  func.func @transform_4(%arg0: i32) -> (i32, i32) {
    %c0_i32 = arith.constant 0 : i32
    %c0_i32_0 = arith.constant 0 : i32
    %c0_i32_1 = arith.constant 0 : i32
    return %c0_i32, %c0_i32_0 : i32, i32
  }
  func.func @transform_5(%arg0: i32) -> (i32, i32) {
    %c0_i32 = arith.constant 0 : i32
    %c0_i32_0 = arith.constant 0 : i32
    %c0_i32_1 = arith.constant 0 : i32
    return %c0_i32, %c0_i32_0 : i32, i32
  }
  func.func @transform_6(%arg0: i32) -> (i32, i32) {
    %c0_i32 = arith.constant 0 : i32
    %c0_i32_0 = arith.constant 0 : i32
    %c0_i32_1 = arith.constant 0 : i32
    return %c0_i32, %c0_i32_0 : i32, i32
  }
  func.func @transform_7(%arg0: i32) -> (i32, i32) {
    %c0_i32 = arith.constant 0 : i32
    %c0_i32_0 = arith.constant 0 : i32
    return %arg0, %c0_i32 : i32, i32
  }
}

</mosaic_0001>

<llo_original>
// kernel: tpu_custom_call.1
$region0: #{tpu_custom_call.1}
  #allocation0 [shape = 'u32[]', space=smem, size = 0x4, offset = 0x4, fixed_abs, tag = 'smem constant byte address 0x4 - core index']
  #allocation1 [shape = 'u32[72,128]{1,0:T(1,128)}', space=vmem, size = 0x9000, scoped, tag = 'internal scratch']
  %s0 = inlined_call_operand.hbm [shape: f32[8,128], index: 0, kind: input, shape index: {}]
  %s1 = inlined_call_operand.hbm [shape: f32[16,128], index: 1, kind: input, shape index: {}]
  %s2 = inlined_call_operand.hbm [shape: f32[16,128], index: 2, kind: output, shape index: {}]
  %s3 = sld [smem:[#allocation0]]
  $region49: #{tpu_custom_call.1} parent=0
    _
  %s5 = ssub.s32 1, %s3
  %s6 = scalar_select 0, %s5, %s3
  $region1: #{tpu_custom_call.1} parent=0
    #allocation2 [shape = 'u8[4096]{0}', space=vmem, size = 0x1000, scoped, tag = 'input window, operand 0, single buffered']
    #allocation3 [shape = 's32[2]{0}', space=sflag, size = 0x8, scoped, tag = 'scoped memory for tpu_custom_call.1']
    #allocation4 [shape = 's32[2]{0}', space=sflag, size = 0x8, scoped, tag = 'scoped memory for tpu_custom_call.1']
    #allocation5 [shape = 'u8[8192]{0}', space=vmem, size = 0x2000, scoped, tag = 'input window, operand 1']
    #allocation6 [shape = 's32[2]{0}', space=sflag, size = 0x8, scoped, tag = 'scoped memory for tpu_custom_call.1']
    #allocation7 [shape = 'u8[8192]{0}', space=vmem, size = 0x2000, scoped, tag = 'output window, operand 0']
    %7 = vsyncpa [#allocation3], 0
    %8 = vsyncpa [#allocation6], 0
    %s9 = scalar_lea.sflag [#allocation6], 1
    %10 = vsyncpa %s9, 0
    %11 = vsyncpa [#allocation4], 0
    %s12 = scalar_lea.sflag [#allocation4], 1
    %13 = vsyncpa %s12, 0
    loop: start=0, step=1, limit=4
    $region2: #{tpu_custom_call.1} parent=1 // loop_pre_header
      _
    $region3: #{tpu_custom_call.1} parent=1 // loop_header
      %s15 = sphi 0, %s19
      %p16 = scmp.ge.s32.totalorder %s15, 4
      %s23 = sphi 0, %s23
      %s25 = sphi 0, %s23
      %s26 = sphi 0, %s25
      %s40 = sphi 0, %s26
      %s46 = sphi 0, %s48
      %s49 = sphi 0, %s46
      %s50 = sphi 0, %s49
      %s66 = sphi 0, %s50
      %s72 = sphi 0, %s74
      %s75 = sphi 0, %s72
      %s76 = sphi 0, %s75
      %s92 = sphi 0, %s76
    $region4: #{tpu_custom_call.1} parent=1 // loop_header_branch
      %18 = sbr.rel (%p16) target = $region8
    $region5: #{tpu_custom_call.1} parent=1 // loop_body
      %s20 = ssub.s32 %s15, 1
      %s21 = ssub.s32 %s15, 2
      %s22 = sadd.s32 %s15, 1
      %s24 = sadd.s32 %s23, 1
      %p27 = scmp.eq.s32.totalorder %s15, 1
      %p28 = scmp.ne.s32.totalorder %s23, %s25
      %p29 = scmp.eq.s32.totalorder %s15, 0
      %p30 = por %p28, %p29
      %p31 = scmp.ne.s32.totalorder %s23, %s25
      %p32 = scmp.eq.s32.totalorder %s20, 1
      %p33 = por %p31, %p32
      %p34 = scmp.ne.s32.totalorder %s25, %s26
      %p35 = scmp.eq.s32.totalorder %s20, 0
      %p36 = por %p34, %p35
      %p37 = scmp.ne.s32.totalorder %s25, %s26
      %p38 = scmp.eq.s32.totalorder %s21, 1
      %p39 = por %p37, %p38
      %p41 = scmp.ne.s32.totalorder %s26, %s40
      %p42 = scmp.eq.s32.totalorder %s21, 0
      %p43 = por %p41, %p42
      %s44 = ssub.s32 %s15, %s22
      %p45 = scmp.eq.s32.totalorder %s44, 0
      %s47 = sadd.s32 %s46, 1
      %s48 = scalar_select %p45, %s46, %s47
      %p51 = pneg %p45
      %p52 = scmp.eq.s32.totalorder %s15, 1
      %p53 = por %p51, %p52
      %p54 = scmp.ne.s32.totalorder %s46, %s49
      %p55 = scmp.eq.s32.totalorder %s15, 0
      %p56 = por %p54, %p55
      %p57 = scmp.ne.s32.totalorder %s46, %s49
      %p58 = scmp.eq.s32.totalorder %s20, 1
      %p59 = por %p57, %p58
      %p60 = scmp.ne.s32.totalorder %s49, %s50
      %p61 = scmp.eq.s32.totalorder %s20, 0
      %p62 = por %p60, %p61
      %p63 = scmp.ne.s32.totalorder %s49, %s50
      %p64 = scmp.eq.s32.totalorder %s21, 1
      %p65 = por %p63, %p64
      %p67 = scmp.ne.s32.totalorder %s50, %s66
      %p68 = scmp.eq.s32.totalorder %s21, 0
      %p69 = por %p67, %p68
      %s70 = ssub.s32 %s15, %s22
      %p71 = scmp.eq.s32.totalorder %s70, 0
      %s73 = sadd.s32 %s72, 1
      %s74 = scalar_select %p71, %s72, %s73
      %p77 = pneg %p71
      %p78 = scmp.eq.s32.totalorder %s15, 1
      %p79 = por %p77, %p78
      %p80 = scmp.ne.s32.totalorder %s72, %s75
      %p81 = scmp.eq.s32.totalorder %s15, 0
      %p82 = por %p80, %p81
      %p83 = scmp.ne.s32.totalorder %s72, %s75
      %p84 = scmp.eq.s32.totalorder %s20, 1
      %p85 = por %p83, %p84
      %p86 = scmp.ne.s32.totalorder %s75, %s76
      %p87 = scmp.eq.s32.totalorder %s20, 0
      %p88 = por %p86, %p87
      %p89 = scmp.ne.s32.totalorder %s75, %s76
      %p90 = scmp.eq.s32.totalorder %s21, 1
      %p91 = por %p89, %p90
      %p93 = scmp.ne.s32.totalorder %s76, %s92
      %p94 = scmp.eq.s32.totalorder %s21, 0
      %p95 = por %p93, %p94
      %p96 = scmp.le.s32.totalorder 1, %s15
      %p97 = scmp.lt.s32.totalorder %s15, 3
      %p98 = pnand %p96, %p97
      %p99 = pneg %p98
      // Predicated region
      $region9: #{tpu_custom_call.1} parent=5 // pred_check
        _
      $region10: #{tpu_custom_call.1} parent=5 // pred_check_branch
        %101 = sbr.rel (%p98) target = $region12
      $region11: #{tpu_custom_call.1} parent=5 // pred_region
        %s102 = ssub.s32 %s15, 1
        // Predicated region
        $region13: #{tpu_custom_call.1} parent=11 // pred_check
          %p103 = pneg %p36
        $region14: #{tpu_custom_call.1} parent=11 // pred_check_branch
          %105 = sbr.rel (%p103) target = $region16
        $region15: #{tpu_custom_call.1} parent=11 // pred_region
          %107 = vsyncadd [#allocation3], 0
          %s109 = sshll.u32 %s0, 4
          %s110 = int_to_ptr.hbm [resolvable:$true] %s109
          %s111 = sshll.u32 [#allocation2], 4
          %s112 = int_to_ptr.vmem [resolvable:$true] %s111
          %114 = dma.hbm_to_vmem [thread:$0]  %s110, 128, %s112, [#allocation3]
        $region16: #{tpu_custom_call.1} parent=11 // pred_fallthru
          _
      $region12: #{tpu_custom_call.1} parent=5 // pred_fallthru
        _
      %p115 = scmp.lt.s32.totalorder %s15, 2
      // Predicated region
      $region17: #{tpu_custom_call.1} parent=5 // pred_check
        %p116 = pneg %p115
      $region18: #{tpu_custom_call.1} parent=5 // pred_check_branch
        %118 = sbr.rel (%p116) target = $region20
      $region19: #{tpu_custom_call.1} parent=5 // pred_region
        // Predicated region
        $region21: #{tpu_custom_call.1} parent=19 // pred_check
          %p119 = pneg %p56
        $region22: #{tpu_custom_call.1} parent=19 // pred_check_branch
          %121 = sbr.rel (%p119) target = $region24
        $region23: #{tpu_custom_call.1} parent=19 // pred_region
          %s122 = sand.u32 %s46, 1
          %s123 = scalar_lea.sflag [#allocation6], %s122
          %s124 = sand.u32 %s46, 1
          %s125 = smul.addr %s124, 8
          %s126 = scalar_lea.vmem [#allocation5], %s125
          %128 = vsyncadd %s123, 0
          %s129 = smul.addr %s15, 8
          %s130 = scalar_lea.hbm %s1, %s129
          %s132 = sshll.u32 %s130, 4
          %s133 = int_to_ptr.hbm [resolvable:$true] %s132
          %s134 = sshll.u32 %s126, 4
          %s135 = int_to_ptr.vmem [resolvable:$true] %s134
          %137 = dma.hbm_to_vmem [thread:$0]  %s133, 128, %s135, %s123
        $region24: #{tpu_custom_call.1} parent=19 // pred_fallthru
          _
      $region20: #{tpu_custom_call.1} parent=5 // pred_fallthru
        _
      %p138 = scmp.le.s32.totalorder 1, %s15
      %p139 = scmp.lt.s32.totalorder %s15, 3
      %p140 = pnand %p138, %p139
      %p141 = pneg %p140
      // Predicated region
      $region25: #{tpu_custom_call.1} parent=5 // pred_check
        _
      $region26: #{tpu_custom_call.1} parent=5 // pred_check_branch
        %143 = sbr.rel (%p140) target = $region28
      $region27: #{tpu_custom_call.1} parent=5 // pred_region
        %s144 = ssub.s32 %s15, 1
        // Predicated region
        $region29: #{tpu_custom_call.1} parent=27 // pred_check
          %p145 = pneg %p36
        $region30: #{tpu_custom_call.1} parent=27 // pred_check_branch
          %147 = sbr.rel (%p145) target = $region32
        $region31: #{tpu_custom_call.1} parent=27 // pred_region
          %149 = dma.done [#allocation3], 128
        $region32: #{tpu_custom_call.1} parent=27 // pred_fallthru
          _
        %s150 = sand.u32 %s49, 1
        %s151 = scalar_lea.sflag [#allocation6], %s150
        %s152 = sand.u32 %s49, 1
        %s153 = smul.addr %s152, 8
        %s154 = scalar_lea.vmem [#allocation5], %s153
        // Predicated region
        $region33: #{tpu_custom_call.1} parent=27 // pred_check
          %p155 = pneg %p62
        $region34: #{tpu_custom_call.1} parent=27 // pred_check_branch
          %157 = sbr.rel (%p155) target = $region36
        $region35: #{tpu_custom_call.1} parent=27 // pred_region
          %159 = dma.done %s151, 128
        $region36: #{tpu_custom_call.1} parent=27 // pred_fallthru
          _
        %p160 = pneg %p36
        %p161 = pneg %p33
        %s162 = sand.u32 %s49, 1
        %s163 = scalar_lea.sflag [#allocation6], %s162
        %s164 = sand.u32 %s49, 1
        %s165 = smul.addr %s164, 8
        %s166 = scalar_lea.vmem [#allocation5], %s165
        %p167 = pneg %p62
        %p168 = pneg %p59
        %p169 = pneg %p88
        %p170 = pneg %p85
        %s171 = sand.u32 %s75, 1
        %s172 = scalar_lea.sflag [#allocation4], %s171
        %s173 = sand.u32 %s75, 1
        %s174 = smul.addr %s173, 8
        %s175 = scalar_lea.vmem [#allocation7], %s174
        %v176 = vld [vmem:[%s154] sm:$0xff]
        %v177 = vld [vmem:[#allocation2] sm:$0xff]
        %v178 = vadd.f32 %v176, %v177
        %179 = vst [vmem:[%s175] sm:$0xff] %v178
        %s180 = sand.u32 %s75, 1
        %s181 = scalar_lea.sflag [#allocation4], %s180
        %s182 = sand.u32 %s75, 1
        %s183 = smul.addr %s182, 8
        %s184 = scalar_lea.vmem [#allocation7], %s183
        // Predicated region
        $region37: #{tpu_custom_call.1} parent=27 // pred_check
          %p185 = pneg %p85
        $region38: #{tpu_custom_call.1} parent=27 // pred_check_branch
          %187 = sbr.rel (%p185) target = $region40
        $region39: #{tpu_custom_call.1} parent=27 // pred_region
          %189 = vsyncadd %s181, 0
          %s190 = smul.addr %s20, 8
          %s191 = scalar_lea.hbm %s2, %s190
          %s193 = sshll.u32 %s184, 4
          %s194 = int_to_ptr.vmem [resolvable:$true] %s193
          %s195 = sshll.u32 %s191, 4
          %s196 = int_to_ptr.hbm [resolvable:$true] %s195
          %198 = dma.vmem_to_hbm [thread:$0]  %s194, 128, %s196, %s181
        $region40: #{tpu_custom_call.1} parent=27 // pred_fallthru
          _
      $region28: #{tpu_custom_call.1} parent=5 // pred_fallthru
        _
      %p199 = scmp.le.s32.totalorder 2, %s15
      // Predicated region
      $region41: #{tpu_custom_call.1} parent=5 // pred_check
        %p200 = pneg %p199
      $region42: #{tpu_custom_call.1} parent=5 // pred_check_branch
        %202 = sbr.rel (%p200) target = $region44
      $region43: #{tpu_custom_call.1} parent=5 // pred_region
        %s203 = ssub.s32 %s15, 2
        // Predicated region
        $region45: #{tpu_custom_call.1} parent=43 // pred_check
          %p204 = pneg %p91
        $region46: #{tpu_custom_call.1} parent=43 // pred_check_branch
          %206 = sbr.rel (%p204) target = $region48
        $region47: #{tpu_custom_call.1} parent=43 // pred_region
          %s207 = sand.u32 %s76, 1
          %s208 = scalar_lea.sflag [#allocation4], %s207
          %s209 = sand.u32 %s76, 1
          %s210 = smul.addr %s209, 8
          %s211 = scalar_lea.vmem [#allocation7], %s210
          %213 = dma.done %s208, 128
        $region48: #{tpu_custom_call.1} parent=43 // pred_fallthru
          _
      $region44: #{tpu_custom_call.1} parent=5 // pred_fallthru
        _
    $region6: #{tpu_custom_call.1} parent=1 // loop_footer
      %s19 = sadd.s32 1, %s15
    $region7: #{tpu_custom_call.1} parent=1 // loop_footer_branch
      %14 = sbr.rel target = $region3
    $region8: #{tpu_custom_call.1} parent=1 // loop_exit
      _
    %214 = vsyncpa [#allocation3], 1
    %s215 = scalar_lea.sflag [#allocation3], 1
    %216 = vsyncpa %s215, 1
    %217 = vsyncpa [#allocation6], 1
    %s218 = scalar_lea.sflag [#allocation6], 1
    %219 = vsyncpa %s218, 1
    %220 = vsyncpa [#allocation4], 1
    %s221 = scalar_lea.sflag [#allocation4], 1
    %222 = vsyncpa %s221, 1

// kernel: vqvae_forward.12
$region0: #{vqvae_forward.12}
  #allocation0 [shape = 'u32[]', space=smem, size = 0x4, offset = 0x4, fixed_abs, tag = 'smem constant byte address 0x4 - core index']
  #allocation1 [shape = 'u32[72,128]{1,0:T(1,128)}', space=vmem, size = 0x9000, scoped, tag = 'internal scratch']
  %s0 = inlined_call_operand.vmem [shape: f32[16,128], index: 0, kind: input, shape index: {}]
  %s1 = inlined_call_operand.hbm [shape: bf16[128,128], index: 1, kind: input, shape index: {}]
  %s2 = inlined_call_operand.vmem [shape: f32[1,128], index: 2, kind: input, shape index: {}]
  %s3 = inlined_call_operand.hbm [shape: bf16[128,128], index: 3, kind: input, shape index: {}]
  %s4 = inlined_call_operand.vmem [shape: f32[1,128], index: 4, kind: input, shape index: {}]
  %s5 = inlined_call_operand.vmem [shape: f32[1,128], index: 5, kind: input, shape index: {}]
  %s6 = inlined_call_operand.vmem [shape: f32[1,128], index: 6, kind: input, shape index: {}]
  %s7 = inlined_call_operand.vmem [shape: f32[16,128], index: 7, kind: output, shape index: {}]
  %s8 = sld [smem:[#allocation0]]
  $region46: #{vqvae_forward.12} parent=0
    _
  %s10 = ssub.s32 1, %s8
  %s11 = scalar_select 0, %s10, %s8
  $region1: #{vqvae_forward.12} parent=0
    #allocation2 [shape = 'u8[32768]{0}', space=vmem, size = 0x8000, scoped, tag = 'input window, operand 1, single buffered']
    #allocation3 [shape = 's32[1]{0}', space=sflag, size = 0x4, scoped, tag = 'scoped memory for vqvae_forward.12']
    #allocation4 [shape = 'u8[32768]{0}', space=vmem, size = 0x8000, scoped, tag = 'input window, operand 3, single buffered']
    #allocation5 [shape = 's32[1]{0}', space=sflag, size = 0x4, scoped, tag = 'scoped memory for vqvae_forward.12']
    %12 = vsyncpa [#allocation3], 0
    %13 = vsyncpa [#allocation5], 0
    // Predicated region
    $region2: #{vqvae_forward.12} parent=1 // pred_check
      _
    $region3: #{vqvae_forward.12} parent=1 // pred_check_branch
      %15 = sbr.rel (0) target = $region5
    $region4: #{vqvae_forward.12} parent=1 // pred_region
      _
    $region5: #{vqvae_forward.12} parent=1 // pred_fallthru
      _
    // Predicated region
    $region6: #{vqvae_forward.12} parent=1 // pred_check
      _
    $region7: #{vqvae_forward.12} parent=1 // pred_check_branch
      %17 = sbr.rel (0) target = $region9
    $region8: #{vqvae_forward.12} parent=1 // pred_region
      %19 = vsyncadd [#allocation3], 0
      %s20 = sshll.u32 %s1, 4
      %s21 = int_to_ptr.hbm [resolvable:$true] %s20
      %s22 = sshll.u32 [#allocation2], 4
      %s23 = int_to_ptr.vmem [resolvable:$true] %s22
      %28 = dma.hbm_to_vmem [thread:$0]  %s21, 1024, %s23, [#allocation3], 64, 64, 4
    $region9: #{vqvae_forward.12} parent=1 // pred_fallthru
      _
    // Predicated region
    $region10: #{vqvae_forward.12} parent=1 // pred_check
      _
    $region11: #{vqvae_forward.12} parent=1 // pred_check_branch
      %30 = sbr.rel (0) target = $region13
    $region12: #{vqvae_forward.12} parent=1 // pred_region
      _
    $region13: #{vqvae_forward.12} parent=1 // pred_fallthru
      _
    // Predicated region
    $region14: #{vqvae_forward.12} parent=1 // pred_check
      _
    $region15: #{vqvae_forward.12} parent=1 // pred_check_branch
      %32 = sbr.rel (0) target = $region17
    $region16: #{vqvae_forward.12} parent=1 // pred_region
      %34 = vsyncadd [#allocation5], 0
      %s35 = sshll.u32 %s3, 4
      %s36 = int_to_ptr.hbm [resolvable:$true] %s35
      %s37 = sshll.u32 [#allocation4], 4
      %s38 = int_to_ptr.vmem [resolvable:$true] %s37
      %43 = dma.hbm_to_vmem [thread:$0]  %s36, 1024, %s38, [#allocation5], 64, 64, 4
    $region17: #{vqvae_forward.12} parent=1 // pred_fallthru
      _
    // Predicated region
    $region18: #{vqvae_forward.12} parent=1 // pred_check
      _
    $region19: #{vqvae_forward.12} parent=1 // pred_check_branch
      %45 = sbr.rel (0) target = $region21
    $region20: #{vqvae_forward.12} parent=1 // pred_region
      _
    $region21: #{vqvae_forward.12} parent=1 // pred_fallthru
      _
    // Predicated region
    $region22: #{vqvae_forward.12} parent=1 // pred_check
      _
    $region23: #{vqvae_forward.12} parent=1 // pred_check_branch
      %47 = sbr.rel (0) target = $region25
    $region24: #{vqvae_forward.12} parent=1 // pred_region
      _
    $region25: #{vqvae_forward.12} parent=1 // pred_fallthru
      _
    // Predicated region
    $region26: #{vqvae_forward.12} parent=1 // pred_check
      _
    $region27: #{vqvae_forward.12} parent=1 // pred_check_branch
      %49 = sbr.rel (0) target = $region29
    $region28: #{vqvae_forward.12} parent=1 // pred_region
      _
    $region29: #{vqvae_forward.12} parent=1 // pred_fallthru
      _
    // Predicated region
    $region30: #{vqvae_forward.12} parent=1 // pred_check
      _
    $region31: #{vqvae_forward.12} parent=1 // pred_check_branch
      %51 = sbr.rel (0) target = $region33
    $region32: #{vqvae_forward.12} parent=1 // pred_region
      %53 = dma.done [#allocation3], 1024
    $region33: #{vqvae_forward.12} parent=1 // pred_fallthru
      _
    // Predicated region
    $region34: #{vqvae_forward.12} parent=1 // pred_check
      _
    $region35: #{vqvae_forward.12} parent=1 // pred_check_branch
      %55 = sbr.rel (0) target = $region37
    $region36: #{vqvae_forward.12} parent=1 // pred_region
      %57 = dma.done [#allocation5], 1024
    $region37: #{vqvae_forward.12} parent=1 // pred_fallthru
      _
    %v58 = vld [vmem:[%s0] sm:$0xff]
    %v59 = vld [vmem:[%s0 + $0x8] sm:$0xff]
    %v60 = vpack.c.bf16 %v59, %v58
    %v61 = vld [vmem:[#allocation2] sm:$0xf]
    %v62 = vld [vmem:[#allocation2 + $0x4] sm:$0xf]
    %v63 = vld [vmem:[#allocation2 + $0x8] sm:$0xf]
    %v64 = vld [vmem:[#allocation2 + $0xc] sm:$0xf]
    %v65 = vld [vmem:[#allocation2 + $0x10] sm:$0xf]
    %v66 = vld [vmem:[#allocation2 + $0x14] sm:$0xf]
    %v67 = vld [vmem:[#allocation2 + $0x18] sm:$0xf]
    %v68 = vld [vmem:[#allocation2 + $0x1c] sm:$0xf]
    %v69 = vld [vmem:[#allocation2 + $0x20] sm:$0xf]
    %v70 = vld [vmem:[#allocation2 + $0x24] sm:$0xf]
    %v71 = vld [vmem:[#allocation2 + $0x28] sm:$0xf]
    %v72 = vld [vmem:[#allocation2 + $0x2c] sm:$0xf]
    %v73 = vld [vmem:[#allocation2 + $0x30] sm:$0xf]
    %v74 = vld [vmem:[#allocation2 + $0x34] sm:$0xf]
    %v75 = vld [vmem:[#allocation2 + $0x38] sm:$0xf]
    %v76 = vld [vmem:[#allocation2 + $0x3c] sm:$0xf]
    %v77 = vld [vmem:[%s2] sm:$0x1]
    %v79 = vperm.slane %v77, 0
    %v97 = vunpack.c.l.b16 %v61
    %v98 = vunpack.c.l.b16 %v62
    %v99 = vunpack.c.l.b16 %v63
    %v100 = vunpack.c.l.b16 %v64
    %v101 = vunpack.c.l.b16 %v65
    %v102 = vunpack.c.l.b16 %v66
    %v103 = vunpack.c.l.b16 %v67
    %v104 = vunpack.c.l.b16 %v68
    %v105 = vunpack.c.l.b16 %v69
    %v106 = vunpack.c.l.b16 %v70
    %v107 = vunpack.c.l.b16 %v71
    %v108 = vunpack.c.l.b16 %v72
    %v109 = vunpack.c.l.b16 %v73
    %v110 = vunpack.c.l.b16 %v74
    %v111 = vunpack.c.l.b16 %v75
    %v112 = vunpack.c.l.b16 %v76
    %v113 = vpack.c.b16 %v98, %v97
    %v114 = vpack.c.b16 %v100, %v99
    %v115 = vpack.c.b16 %v102, %v101
    %v116 = vpack.c.b16 %v104, %v103
    %v117 = vpack.c.b16 %v106, %v105
    %v118 = vpack.c.b16 %v108, %v107
    %v119 = vpack.c.b16 %v110, %v109
    %v120 = vpack.c.b16 %v112, %v111
    %129 = vmatpush.bf16.msra.mxu0 %v120
    %130 = vmatpush.bf16.msra.mxu0 %v119
    %131 = vmatpush.bf16.msra.mxu0 %v118
    %132 = vmatpush.bf16.msra.mxu0 %v117
    %133 = vmatpush.bf16.msra.mxu0 %v116
    %134 = vmatpush.bf16.msra.mxu0 %v115
    %135 = vmatpush.bf16.msra.mxu0 %v114
    %136 = vmatpush.bf16.msra.mxu0 %v113
    %137 = vmatmul.bf16.gmra.mxu0 %v60
    %v138 = vpop.f32.mrf.mxu0
    %v139 = vadd.f32 %v79, %v138
    %v140 = vpop.f32.mrf.mxu0
    %v141 = vadd.f32 %v79, %v140
    %142 = vdwg.mxu0
    %v143 = vmax.f32 %v139, 0.0
    %v144 = vmax.f32 %v141, 0.0
    %v145 = vpack.c.bf16 %v144, %v143
    %v146 = vld [vmem:[#allocation4] sm:$0xf]
    %v147 = vld [vmem:[#allocation4 + $0x4] sm:$0xf]
    %v148 = vld [vmem:[#allocation4 + $0x8] sm:$0xf]
    %v149 = vld [vmem:[#allocation4 + $0xc] sm:$0xf]
    %v150 = vld [vmem:[#allocation4 + $0x10] sm:$0xf]
    %v151 = vld [vmem:[#allocation4 + $0x14] sm:$0xf]
    %v152 = vld [vmem:[#allocation4 + $0x18] sm:$0xf]
    %v153 = vld [vmem:[#allocation4 + $0x1c] sm:$0xf]
    %v154 = vld [vmem:[#allocation4 + $0x20] sm:$0xf]
    %v155 = vld [vmem:[#allocation4 + $0x24] sm:$0xf]
    %v156 = vld [vmem:[#allocation4 + $0x28] sm:$0xf]
    %v157 = vld [vmem:[#allocation4 + $0x2c] sm:$0xf]
    %v158 = vld [vmem:[#allocation4 + $0x30] sm:$0xf]
    %v159 = vld [vmem:[#allocation4 + $0x34] sm:$0xf]
    %v160 = vld [vmem:[#allocation4 + $0x38] sm:$0xf]
    %v161 = vld [vmem:[#allocation4 + $0x3c] sm:$0xf]
    %v162 = vld [vmem:[%s4] sm:$0x1]
    %v164 = vperm.slane %v162, 0
    %v182 = vunpack.c.l.b16 %v146
    %v183 = vunpack.c.l.b16 %v147
    %v184 = vunpack.c.l.b16 %v148
    %v185 = vunpack.c.l.b16 %v149
    %v186 = vunpack.c.l.b16 %v150
    %v187 = vunpack.c.l.b16 %v151
    %v188 = vunpack.c.l.b16 %v152
    %v189 = vunpack.c.l.b16 %v153
    %v190 = vunpack.c.l.b16 %v154
    %v191 = vunpack.c.l.b16 %v155
    %v192 = vunpack.c.l.b16 %v156
    %v193 = vunpack.c.l.b16 %v157
    %v194 = vunpack.c.l.b16 %v158
    %v195 = vunpack.c.l.b16 %v159
    %v196 = vunpack.c.l.b16 %v160
    %v197 = vunpack.c.l.b16 %v161
    %v198 = vpack.c.b16 %v183, %v182
    %v199 = vpack.c.b16 %v185, %v184
    %v200 = vpack.c.b16 %v187, %v186
    %v201 = vpack.c.b16 %v189, %v188
    %v202 = vpack.c.b16 %v191, %v190
    %v203 = vpack.c.b16 %v193, %v192
    %v204 = vpack.c.b16 %v195, %v194
    %v205 = vpack.c.b16 %v197, %v196
    %214 = vmatpush.bf16.msra.mxu0 %v205
    %215 = vmatpush.bf16.msra.mxu0 %v204
    %216 = vmatpush.bf16.msra.mxu0 %v203
    %217 = vmatpush.bf16.msra.mxu0 %v202
    %218 = vmatpush.bf16.msra.mxu0 %v201
    %219 = vmatpush.bf16.msra.mxu0 %v200
    %220 = vmatpush.bf16.msra.mxu0 %v199
    %221 = vmatpush.bf16.msra.mxu0 %v198
    %222 = vmatmul.bf16.gmra.mxu0 %v145
    %v223 = vpop.f32.mrf.mxu0
    %v224 = vadd.f32 %v164, %v223
    %v225 = vpop.f32.mrf.mxu0
    %v226 = vadd.f32 %v164, %v225
    %227 = vdwg.mxu0
    %v228 = vadd.f32 %v224, %v58
    %v229 = vadd.f32 %v226, %v59
    %v230 = vld [vmem:[%s5] sm:$0x1]
    %v231 = vld [vmem:[%s6] sm:$0x1]
    %232 = vadd.xlane.f32.xlu0 %v228
    %v233 = vpop.xlane.xlu0 %232
    %234 = vadd.xlane.f32.xlu0 %v229
    %v235 = vpop.xlane.xlu0 %234
    %v236 = vmul.f32 %v233, 0.0625
    %v237 = vmul.f32 %v235, 0.0625
    %v238 = vsub.f32 %v228, %v236
    %v239 = vsub.f32 %v229, %v237
    %v240 = vlaneseq
    %v241 = vand.u32 %v240, 127
    %vm242 = vcmp.lt.s32.totalorder %v241, 16
    %v243 = vsel %vm242, 1, 0
    %v244 = vcvt.s32.f32 %v243
    %v245 = vmul.f32 %v238, %v244
    %v246 = vmul.f32 %v239, %v244
    %v247 = vmul.f32 %v245, %v245
    %v248 = vmul.f32 %v246, %v246
    %249 = vadd.xlane.f32.xlu0 %v247
    %v250 = vpop.xlane.xlu0 %249
    %251 = vadd.xlane.f32.xlu0 %v248
    %v252 = vpop.xlane.xlu0 %251
    %v253 = vmul.f32 %v250, 0.0625
    %v254 = vmul.f32 %v252, 0.0625
    %v255 = vadd.f32 %v253, 1e-05
    %v256 = vadd.f32 %v254, 1e-05
    %v257 = vrsqrt.pop %v255
    %v258 = vmul.f32 %v257, %v255
    %v259 = vmul.f32 %v258, %v257
    %v260 = vmul.f32 0.5, %v259
    %v261 = vsub.f32 1.5, %v260
    %v262 = vmul.f32 %v257, %v261
    %vm263 = vweird.f32 %v255
    %vm264 = vweird.f32 %v257
    %vm265 = vmor %vm263, %vm264
    %v266 = vsel %vm265, %v257, %v262
    %v267 = vrsqrt.pop %v256
    %v268 = vmul.f32 %v267, %v256
    %v269 = vmul.f32 %v268, %v267
    %v270 = vmul.f32 0.5, %v269
    %v271 = vsub.f32 1.5, %v270
    %v272 = vmul.f32 %v267, %v271
    %vm273 = vweird.f32 %v256
    %vm274 = vweird.f32 %v267
    %vm275 = vmor %vm273, %vm274
    %v276 = vsel %vm275, %v267, %v272
    %v277 = vmul.f32 %v245, %v266
    %v278 = vmul.f32 %v246, %v276
    %v280 = vperm.slane %v230, 0
    %v282 = vmul.f32 %v277, %v280
    %v283 = vmul.f32 %v278, %v280
    %v285 = vperm.slane %v231, 0
    %v287 = vadd.f32 %v282, %v285
    %v288 = vadd.f32 %v283, %v285
    %289 = vst [vmem:[%s7] sm:$0xff] %v287
    %290 = vst [vmem:[%s7 + $0x8] sm:$0xff] %v288
    // Predicated region
    $region38: #{vqvae_forward.12} parent=1 // pred_check
      _
    $region39: #{vqvae_forward.12} parent=1 // pred_check_branch
      %292 = sbr.rel (0) target = $region41
    $region40: #{vqvae_forward.12} parent=1 // pred_region
      _
    $region41: #{vqvae_forward.12} parent=1 // pred_fallthru
      _
    // Predicated region
    $region42: #{vqvae_forward.12} parent=1 // pred_check
      _
    $region43: #{vqvae_forward.12} parent=1 // pred_check_branch
      %294 = sbr.rel (0) target = $region45
    $region44: #{vqvae_forward.12} parent=1 // pred_region
      _
    $region45: #{vqvae_forward.12} parent=1 // pred_fallthru
      _
    %295 = vsyncpa [#allocation3], 1
    %296 = vsyncpa [#allocation5], 1

// kernel: vqvae_forward.11
$region0: #{vqvae_forward.11}
  #allocation0 [shape = 'u32[]', space=smem, size = 0x4, offset = 0x4, fixed_abs, tag = 'smem constant byte address 0x4 - core index']
  #allocation1 [shape = 'u32[72,128]{1,0:T(1,128)}', space=vmem, size = 0x9000, scoped, tag = 'internal scratch']
  #allocation2 [shape = 'f32[8,128]{1,0:T(8,128)}', space=vmem, size = 0x1000, scoped, tag = 'scratch operand']
  %s0 = inlined_call_operand.vmem [shape: f32[2,8,128], index: 0, kind: input, shape index: {}, may-alias: {0,1}]
  %s1 = inlined_call_operand.vmem [shape: f32[2,8,128], index: 1, kind: input, shape index: {}, may-alias: {0,1}]
  %s2 = inlined_call_operand.vmem [shape: bf16[128,128], index: 2, kind: input, shape index: {}]
  %s3 = inlined_call_operand.vmem [shape: f32[1,128], index: 3, kind: input, shape index: {}]
  %s4 = inlined_call_operand.hbm [shape: bf16[128,256], index: 4, kind: input, shape index: {}]
  %s5 = inlined_call_operand.vmem [shape: f32[1,256], index: 5, kind: input, shape index: {}]
  %s6 = inlined_call_operand.vmem [shape: bf16[128,128], index: 6, kind: input, shape index: {}]
  %s7 = inlined_call_operand.vmem [shape: f32[1,128], index: 7, kind: input, shape index: {}]
  %s8 = inlined_call_operand.vmem [shape: f32[1,128], index: 8, kind: input, shape index: {}]
  %s9 = inlined_call_operand.vmem [shape: f32[1,128], index: 9, kind: input, shape index: {}]
  %s10 = inlined_call_operand.vmem [shape: f32[2,8,128], index: 10, kind: output, shape index: {}]
  %s11 = sld [smem:[#allocation0]]
  $region77: #{vqvae_forward.11} parent=0
    _
  %s13 = ssub.s32 1, %s11
  %s14 = scalar_select 0, %s13, %s11
  $region1: #{vqvae_forward.11} parent=0
    #allocation3 [shape = 'u8[65536]{0}', space=vmem, size = 0x10000, scoped, tag = 'input window, operand 4, single buffered']
    #allocation4 [shape = 's32[2]{0}', space=sflag, size = 0x8, scoped, tag = 'scoped memory for vqvae_forward.11']
    %15 = vsyncpa [#allocation4], 0
    loop: start=0, step=1, limit=4
    $region2: #{vqvae_forward.11} parent=1 // loop_pre_header
      _
    $region3: #{vqvae_forward.11} parent=1 // loop_header
      %s17 = sphi 0, %s21
      %p18 = scmp.ge.s32.totalorder %s17, 4
      %s24 = sphi 0, %s36
      %s25 = sphi 0, %s32
      %s26 = sphi 0, %s24
      %s27 = sphi 0, %s25
      %s28 = sphi 0, %s26
      %s29 = sphi 0, %s27
      %s41 = sphi 0, %s43
      %s44 = sphi 0, %s41
      %s45 = sphi 0, %s44
      %s61 = sphi 0, %s45
      %s67 = sphi 0, %s69
      %s70 = sphi 0, %s67
      %s71 = sphi 0, %s70
      %s87 = sphi 0, %s71
      %s91 = sphi 0, %s91
      %s93 = sphi 0, %s91
      %s94 = sphi 0, %s93
      %s108 = sphi 0, %s94
      %s112 = sphi 0, %s112
      %s114 = sphi 0, %s112
      %s115 = sphi 0, %s114
      %s129 = sphi 0, %s115
      %s133 = sphi 0, %s133
      %s135 = sphi 0, %s133
      %s136 = sphi 0, %s135
      %s150 = sphi 0, %s136
      %s154 = sphi 0, %s154
      %s156 = sphi 0, %s154
      %s157 = sphi 0, %s156
      %s171 = sphi 0, %s157
      %s175 = sphi 0, %s175
      %s177 = sphi 0, %s175
      %s178 = sphi 0, %s177
      %s192 = sphi 0, %s178
      %s196 = sphi 0, %s196
      %s198 = sphi 0, %s196
      %s199 = sphi 0, %s198
      %s213 = sphi 0, %s199
      %s217 = sphi 0, %s217
      %s219 = sphi 0, %s217
      %s220 = sphi 0, %s219
      %s234 = sphi 0, %s220
      %s238 = sphi 0, %s238
      %s240 = sphi 0, %s238
      %s241 = sphi 0, %s240
      %s255 = sphi 0, %s241
      %s263 = sphi 0, %s265
      %s266 = sphi 0, %s263
      %s267 = sphi 0, %s266
      %s283 = sphi 0, %s267
    $region4: #{vqvae_forward.11} parent=1 // loop_header_branch
      %20 = sbr.rel (%p18) target = $region8
    $region5: #{vqvae_forward.11} parent=1 // loop_body
      %s22 = ssub.s32 %s17, 1
      %s23 = ssub.s32 %s17, 2
      %s30 = sadd.s32 1, %s25
      %p31 = scmp.ge.s32.totalorder %s30, 1
      %s32 = scalar_select %p31, 0, %s30
      %s33 = sadd.s32 1, %s24
      %s34 = scalar_select %p31, %s33, %s24
      %p35 = scmp.ge.s32.totalorder %s34, 2
      %s36 = scalar_select %p35, 0, %s34
      %s37 = ssub.s32 %s24, %s36
      %s38 = ssub.s32 %s25, %s32
      %s39 = sor.u32 %s37, %s38
      %p40 = scmp.eq.s32.totalorder %s39, 0
      %s42 = sadd.s32 %s41, 1
      %s43 = scalar_select %p40, %s41, %s42
      %p46 = pneg %p40
      %p47 = scmp.eq.s32.totalorder %s17, 1
      %p48 = por %p46, %p47
      %p49 = scmp.ne.s32.totalorder %s41, %s44
      %p50 = scmp.eq.s32.totalorder %s17, 0
      %p51 = por %p49, %p50
      %p52 = scmp.ne.s32.totalorder %s41, %s44
      %p53 = scmp.eq.s32.totalorder %s22, 1
      %p54 = por %p52, %p53
      %p55 = scmp.ne.s32.totalorder %s44, %s45
      %p56 = scmp.eq.s32.totalorder %s22, 0
      %p57 = por %p55, %p56
      %p58 = scmp.ne.s32.totalorder %s44, %s45
      %p59 = scmp.eq.s32.totalorder %s23, 1
      %p60 = por %p58, %p59
      %p62 = scmp.ne.s32.totalorder %s45, %s61
      %p63 = scmp.eq.s32.totalorder %s23, 0
      %p64 = por %p62, %p63
      %s65 = ssub.s32 %s24, %s36
      %p66 = scmp.eq.s32.totalorder %s65, 0
      %s68 = sadd.s32 %s67, 1
      %s69 = scalar_select %p66, %s67, %s68
      %p72 = pneg %p66
      %p73 = scmp.eq.s32.totalorder %s17, 1
      %p74 = por %p72, %p73
      %p75 = scmp.ne.s32.totalorder %s67, %s70
      %p76 = scmp.eq.s32.totalorder %s17, 0
      %p77 = por %p75, %p76
      %p78 = scmp.ne.s32.totalorder %s67, %s70
      %p79 = scmp.eq.s32.totalorder %s22, 1
      %p80 = por %p78, %p79
      %p81 = scmp.ne.s32.totalorder %s70, %s71
      %p82 = scmp.eq.s32.totalorder %s22, 0
      %p83 = por %p81, %p82
      %p84 = scmp.ne.s32.totalorder %s70, %s71
      %p85 = scmp.eq.s32.totalorder %s23, 1
      %p86 = por %p84, %p85
      %p88 = scmp.ne.s32.totalorder %s71, %s87
      %p89 = scmp.eq.s32.totalorder %s23, 0
      %p90 = por %p88, %p89
      %s92 = sadd.s32 %s91, 1
      %p95 = scmp.eq.s32.totalorder %s17, 1
      %p96 = scmp.ne.s32.totalorder %s91, %s93
      %p97 = scmp.eq.s32.totalorder %s17, 0
      %p98 = por %p96, %p97
      %p99 = scmp.ne.s32.totalorder %s91, %s93
      %p100 = scmp.eq.s32.totalorder %s22, 1
      %p101 = por %p99, %p100
      %p102 = scmp.ne.s32.totalorder %s93, %s94
      %p103 = scmp.eq.s32.totalorder %s22, 0
      %p104 = por %p102, %p103
      %p105 = scmp.ne.s32.totalorder %s93, %s94
      %p106 = scmp.eq.s32.totalorder %s23, 1
      %p107 = por %p105, %p106
      %p109 = scmp.ne.s32.totalorder %s94, %s108
      %p110 = scmp.eq.s32.totalorder %s23, 0
      %p111 = por %p109, %p110
      %s113 = sadd.s32 %s112, 1
      %p116 = scmp.eq.s32.totalorder %s17, 1
      %p117 = scmp.ne.s32.totalorder %s112, %s114
      %p118 = scmp.eq.s32.totalorder %s17, 0
      %p119 = por %p117, %p118
      %p120 = scmp.ne.s32.totalorder %s112, %s114
      %p121 = scmp.eq.s32.totalorder %s22, 1
      %p122 = por %p120, %p121
      %p123 = scmp.ne.s32.totalorder %s114, %s115
      %p124 = scmp.eq.s32.totalorder %s22, 0
      %p125 = por %p123, %p124
      %p126 = scmp.ne.s32.totalorder %s114, %s115
      %p127 = scmp.eq.s32.totalorder %s23, 1
      %p128 = por %p126, %p127
      %p130 = scmp.ne.s32.totalorder %s115, %s129
      %p131 = scmp.eq.s32.totalorder %s23, 0
      %p132 = por %p130, %p131
      %s134 = sadd.s32 %s133, 1
      %p137 = scmp.eq.s32.totalorder %s17, 1
      %p138 = scmp.ne.s32.totalorder %s133, %s135
      %p139 = scmp.eq.s32.totalorder %s17, 0
      %p140 = por %p138, %p139
      %p141 = scmp.ne.s32.totalorder %s133, %s135
      %p142 = scmp.eq.s32.totalorder %s22, 1
      %p143 = por %p141, %p142
      %p144 = scmp.ne.s32.totalorder %s135, %s136
      %p145 = scmp.eq.s32.totalorder %s22, 0
      %p146 = por %p144, %p145
      %p147 = scmp.ne.s32.totalorder %s135, %s136
      %p148 = scmp.eq.s32.totalorder %s23, 1
      %p149 = por %p147, %p148
      %p151 = scmp.ne.s32.totalorder %s136, %s150
      %p152 = scmp.eq.s32.totalorder %s23, 0
      %p153 = por %p151, %p152
      %s155 = sadd.s32 %s154, 1
      %p158 = scmp.eq.s32.totalorder %s17, 1
      %p159 = scmp.ne.s32.totalorder %s154, %s156
      %p160 = scmp.eq.s32.totalorder %s17, 0
      %p161 = por %p159, %p160
      %p162 = scmp.ne.s32.totalorder %s154, %s156
      %p163 = scmp.eq.s32.totalorder %s22, 1
      %p164 = por %p162, %p163
      %p165 = scmp.ne.s32.totalorder %s156, %s157
      %p166 = scmp.eq.s32.totalorder %s22, 0
      %p167 = por %p165, %p166
      %p168 = scmp.ne.s32.totalorder %s156, %s157
      %p169 = scmp.eq.s32.totalorder %s23, 1
      %p170 = por %p168, %p169
      %p172 = scmp.ne.s32.totalorder %s157, %s171
      %p173 = scmp.eq.s32.totalorder %s23, 0
      %p174 = por %p172, %p173
      %s176 = sadd.s32 %s175, 1
      %p179 = scmp.eq.s32.totalorder %s17, 1
      %p180 = scmp.ne.s32.totalorder %s175, %s177
      %p181 = scmp.eq.s32.totalorder %s17, 0
      %p182 = por %p180, %p181
      %p183 = scmp.ne.s32.totalorder %s175, %s177
      %p184 = scmp.eq.s32.totalorder %s22, 1
      %p185 = por %p183, %p184
      %p186 = scmp.ne.s32.totalorder %s177, %s178
      %p187 = scmp.eq.s32.totalorder %s22, 0
      %p188 = por %p186, %p187
      %p189 = scmp.ne.s32.totalorder %s177, %s178
      %p190 = scmp.eq.s32.totalorder %s23, 1
      %p191 = por %p189, %p190
      %p193 = scmp.ne.s32.totalorder %s178, %s192
      %p194 = scmp.eq.s32.totalorder %s23, 0
      %p195 = por %p193, %p194
      %s197 = sadd.s32 %s196, 1
      %p200 = scmp.eq.s32.totalorder %s17, 1
      %p201 = scmp.ne.s32.totalorder %s196, %s198
      %p202 = scmp.eq.s32.totalorder %s17, 0
      %p203 = por %p201, %p202
      %p204 = scmp.ne.s32.totalorder %s196, %s198
      %p205 = scmp.eq.s32.totalorder %s22, 1
      %p206 = por %p204, %p205
      %p207 = scmp.ne.s32.totalorder %s198, %s199
      %p208 = scmp.eq.s32.totalorder %s22, 0
      %p209 = por %p207, %p208
      %p210 = scmp.ne.s32.totalorder %s198, %s199
      %p211 = scmp.eq.s32.totalorder %s23, 1
      %p212 = por %p210, %p211
      %p214 = scmp.ne.s32.totalorder %s199, %s213
      %p215 = scmp.eq.s32.totalorder %s23, 0
      %p216 = por %p214, %p215
      %s218 = sadd.s32 %s217, 1
      %p221 = scmp.eq.s32.totalorder %s17, 1
      %p222 = scmp.ne.s32.totalorder %s217, %s219
      %p223 = scmp.eq.s32.totalorder %s17, 0
      %p224 = por %p222, %p223
      %p225 = scmp.ne.s32.totalorder %s217, %s219
      %p226 = scmp.eq.s32.totalorder %s22, 1
      %p227 = por %p225, %p226
      %p228 = scmp.ne.s32.totalorder %s219, %s220
      %p229 = scmp.eq.s32.totalorder %s22, 0
      %p230 = por %p228, %p229
      %p231 = scmp.ne.s32.totalorder %s219, %s220
      %p232 = scmp.eq.s32.totalorder %s23, 1
      %p233 = por %p231, %p232
      %p235 = scmp.ne.s32.totalorder %s220, %s234
      %p236 = scmp.eq.s32.totalorder %s23, 0
      %p237 = por %p235, %p236
      %s239 = sadd.s32 %s238, 1
      %p242 = scmp.eq.s32.totalorder %s17, 1
      %p243 = scmp.ne.s32.totalorder %s238, %s240
      %p244 = scmp.eq.s32.totalorder %s17, 0
      %p245 = por %p243, %p244
      %p246 = scmp.ne.s32.totalorder %s238, %s240
      %p247 = scmp.eq.s32.totalorder %s22, 1
      %p248 = por %p246, %p247
      %p249 = scmp.ne.s32.totalorder %s240, %s241
      %p250 = scmp.eq.s32.totalorder %s22, 0
      %p251 = por %p249, %p250
      %p252 = scmp.ne.s32.totalorder %s240, %s241
      %p253 = scmp.eq.s32.totalorder %s23, 1
      %p254 = por %p252, %p253
      %p256 = scmp.ne.s32.totalorder %s241, %s255
      %p257 = scmp.eq.s32.totalorder %s23, 0
      %p258 = por %p256, %p257
      %s259 = ssub.s32 %s24, %s36
      %s260 = ssub.s32 %s25, %s32
      %s261 = sor.u32 %s259, %s260
      %p262 = scmp.eq.s32.totalorder %s261, 0
      %s264 = sadd.s32 %s263, 1
      %s265 = scalar_select %p262, %s263, %s264
      %p268 = pneg %p262
      %p269 = scmp.eq.s32.totalorder %s17, 1
      %p270 = por %p268, %p269
      %p271 = scmp.ne.s32.totalorder %s263, %s266
      %p272 = scmp.eq.s32.totalorder %s17, 0
      %p273 = por %p271, %p272
      %p274 = scmp.ne.s32.totalorder %s263, %s266
      %p275 = scmp.eq.s32.totalorder %s22, 1
      %p276 = por %p274, %p275
      %p277 = scmp.ne.s32.totalorder %s266, %s267
      %p278 = scmp.eq.s32.totalorder %s22, 0
      %p279 = por %p277, %p278
      %p280 = scmp.ne.s32.totalorder %s266, %s267
      %p281 = scmp.eq.s32.totalorder %s23, 1
      %p282 = por %p280, %p281
      %p284 = scmp.ne.s32.totalorder %s267, %s283
      %p285 = scmp.eq.s32.totalorder %s23, 0
      %p286 = por %p284, %p285
      %p287 = scmp.le.s32.totalorder 1, %s17
      %p288 = scmp.lt.s32.totalorder %s17, 3
      %p289 = pnand %p287, %p288
      %p290 = pneg %p289
      // Predicated region
      $region9: #{vqvae_forward.11} parent=5 // pred_check
        _
      $region10: #{vqvae_forward.11} parent=5 // pred_check_branch
        %292 = sbr.rel (%p289) target = $region12
      $region11: #{vqvae_forward.11} parent=5 // pred_region
        %s293 = ssub.s32 %s17, 1
        // Predicated region
        $region13: #{vqvae_forward.11} parent=11 // pred_check
          %p294 = pneg %p104
        $region14: #{vqvae_forward.11} parent=11 // pred_check_branch
          %296 = sbr.rel (%p294) target = $region16
        $region15: #{vqvae_forward.11} parent=11 // pred_region
          _
        $region16: #{vqvae_forward.11} parent=11 // pred_fallthru
          _
        // Predicated region
        $region17: #{vqvae_forward.11} parent=11 // pred_check
          %p297 = pneg %p125
        $region18: #{vqvae_forward.11} parent=11 // pred_check_branch
          %299 = sbr.rel (%p297) target = $region20
        $region19: #{vqvae_forward.11} parent=11 // pred_region
          _
        $region20: #{vqvae_forward.11} parent=11 // pred_fallthru
          _
        // Predicated region
        $region21: #{vqvae_forward.11} parent=11 // pred_check
          %p300 = pneg %p146
        $region22: #{vqvae_forward.11} parent=11 // pred_check_branch
          %302 = sbr.rel (%p300) target = $region24
        $region23: #{vqvae_forward.11} parent=11 // pred_region
          %304 = vsyncadd [#allocation4], 0
          %s305 = sshll.u32 %s4, 4
          %s306 = int_to_ptr.hbm [resolvable:$true] %s305
          %s307 = sshll.u32 [#allocation3], 4
          %s308 = int_to_ptr.vmem [resolvable:$true] %s307
          %313 = dma.hbm_to_vmem [thread:$0]  %s306, 2048, %s308, [#allocation4], 128, 128, 8
        $region24: #{vqvae_forward.11} parent=11 // pred_fallthru
          _
        // Predicated region
        $region25: #{vqvae_forward.11} parent=11 // pred_check
          %p314 = pneg %p167
        $region26: #{vqvae_forward.11} parent=11 // pred_check_branch
          %316 = sbr.rel (%p314) target = $region28
        $region27: #{vqvae_forward.11} parent=11 // pred_region
          _
        $region28: #{vqvae_forward.11} parent=11 // pred_fallthru
          _
        // Predicated region
        $region29: #{vqvae_forward.11} parent=11 // pred_check
          %p317 = pneg %p188
        $region30: #{vqvae_forward.11} parent=11 // pred_check_branch
          %319 = sbr.rel (%p317) target = $region32
        $region31: #{vqvae_forward.11} parent=11 // pred_region
          _
        $region32: #{vqvae_forward.11} parent=11 // pred_fallthru
          _
        // Predicated region
        $region33: #{vqvae_forward.11} parent=11 // pred_check
          %p320 = pneg %p209
        $region34: #{vqvae_forward.11} parent=11 // pred_check_branch
          %322 = sbr.rel (%p320) target = $region36
        $region35: #{vqvae_forward.11} parent=11 // pred_region
          _
        $region36: #{vqvae_forward.11} parent=11 // pred_fallthru
          _
        // Predicated region
        $region37: #{vqvae_forward.11} parent=11 // pred_check
          %p323 = pneg %p230
        $region38: #{vqvae_forward.11} parent=11 // pred_check_branch
          %325 = sbr.rel (%p323) target = $region40
        $region39: #{vqvae_forward.11} parent=11 // pred_region
          _
        $region40: #{vqvae_forward.11} parent=11 // pred_fallthru
          _
        // Predicated region
        $region41: #{vqvae_forward.11} parent=11 // pred_check
          %p326 = pneg %p251
        $region42: #{vqvae_forward.11} parent=11 // pred_check_branch
          %328 = sbr.rel (%p326) target = $region44
        $region43: #{vqvae_forward.11} parent=11 // pred_region
          _
        $region44: #{vqvae_forward.11} parent=11 // pred_fallthru
          _
      $region12: #{vqvae_forward.11} parent=5 // pred_fallthru
        _
      %p329 = scmp.lt.s32.totalorder %s17, 2
      // Predicated region
      $region45: #{vqvae_forward.11} parent=5 // pred_check
        %p330 = pneg %p329
      $region46: #{vqvae_forward.11} parent=5 // pred_check_branch
        %332 = sbr.rel (%p330) target = $region48
      $region47: #{vqvae_forward.11} parent=5 // pred_region
        // Predicated region
        $region49: #{vqvae_forward.11} parent=47 // pred_check
          %p333 = pneg %p51
        $region50: #{vqvae_forward.11} parent=47 // pred_check_branch
          %335 = sbr.rel (%p333) target = $region52
        $region51: #{vqvae_forward.11} parent=47 // pred_region
          %p336 = scmp.lt.s32.totalorder %s24, 1
          %s337 = scalar_select %p336, %s24, 1
          %p338 = scmp.lt.s32.totalorder %s25, 0
          %s339 = scalar_select %p338, %s25, 0
          %s340 = sadd.s32 %s339, %s337
          %s341 = smul.addr %s340, 8
          %s342 = scalar_lea.vmem %s0, %s341
        $region52: #{vqvae_forward.11} parent=47 // pred_fallthru
          _
        // Predicated region
        $region53: #{vqvae_forward.11} parent=47 // pred_check
          %p343 = pneg %p77
        $region54: #{vqvae_forward.11} parent=47 // pred_check_branch
          %345 = sbr.rel (%p343) target = $region56
        $region55: #{vqvae_forward.11} parent=47 // pred_region
          %p346 = scmp.lt.s32.totalorder %s24, 1
          %s347 = scalar_select %p346, %s24, 1
          %s348 = smul.addr %s347, 8
          %s349 = scalar_lea.vmem %s1, %s348
        $region56: #{vqvae_forward.11} parent=47 // pred_fallthru
          _
      $region48: #{vqvae_forward.11} parent=5 // pred_fallthru
        _
      %p350 = scmp.le.s32.totalorder 1, %s17
      %p351 = scmp.lt.s32.totalorder %s17, 3
      %p352 = pnand %p350, %p351
      %p353 = pneg %p352
      // Predicated region
      $region57: #{vqvae_forward.11} parent=5 // pred_check
        _
      $region58: #{vqvae_forward.11} parent=5 // pred_check_branch
        %355 = sbr.rel (%p352) target = $region60
      $region59: #{vqvae_forward.11} parent=5 // pred_region
        %s356 = ssub.s32 %s17, 1
        // Predicated region
        $region61: #{vqvae_forward.11} parent=59 // pred_check
          %p357 = pneg %p146
        $region62: #{vqvae_forward.11} parent=59 // pred_check_branch
          %359 = sbr.rel (%p357) target = $region64
        $region63: #{vqvae_forward.11} parent=59 // pred_region
          %361 = dma.done [#allocation4], 2048
        $region64: #{vqvae_forward.11} parent=59 // pred_fallthru
          _
        %p362 = scmp.lt.s32.totalorder %s26, 1
        %s363 = scalar_select %p362, %s26, 1
        %p364 = scmp.lt.s32.totalorder %s27, 0
        %s365 = scalar_select %p364, %s27, 0
        %s366 = sadd.s32 %s365, %s363
        %s367 = smul.addr %s366, 8
        %s368 = scalar_lea.vmem %s0, %s367
        %p369 = pneg %p57
        %p370 = pneg %p54
        %p371 = scmp.lt.s32.totalorder %s26, 1
        %s372 = scalar_select %p371, %s26, 1
        %s373 = smul.addr %s372, 8
        %s374 = scalar_lea.vmem %s1, %s373
        %p375 = pneg %p83
        %p376 = pneg %p80
        %p377 = pneg %p104
        %p378 = pneg %p101
        %p379 = pneg %p125
        %p380 = pneg %p122
        %p381 = pneg %p146
        %p382 = pneg %p143
        %p383 = pneg %p167
        %p384 = pneg %p164
        %p385 = pneg %p188
        %p386 = pneg %p185
        %p387 = pneg %p209
        %p388 = pneg %p206
        %p389 = pneg %p230
        %p390 = pneg %p227
        %p391 = pneg %p251
        %p392 = pneg %p248
        %p393 = pneg %p279
        %p394 = pneg %p276
        %p395 = scmp.lt.s32.totalorder %s26, 1
        %s396 = scalar_select %p395, %s26, 1
        %p397 = scmp.lt.s32.totalorder %s27, 0
        %s398 = scalar_select %p397, %s27, 0
        %s399 = sadd.s32 %s398, %s396
        %s400 = smul.addr %s399, 8
        %s401 = scalar_lea.vmem %s10, %s400
        %p402 = scmp.lt.s32.totalorder %s26, 1
        %s403 = scalar_select %p402, %s26, 1
        %p404 = scmp.lt.s32.totalorder %s27, 0
        %s405 = scalar_select %p404, %s27, 0
        %s406 = sadd.s32 %s405, %s403
        %s407 = smul.addr %s406, 8
        %s408 = scalar_lea.vmem %s0, %s407
        %p409 = scmp.lt.s32.totalorder %s26, 1
        %s410 = scalar_select %p409, %s26, 1
        %s411 = smul.addr %s410, 8
        %s412 = scalar_lea.vmem %s1, %s411
        %p413 = scmp.lt.s32.totalorder %s26, 1
        %s414 = scalar_select %p413, %s26, 1
        %p415 = scmp.lt.s32.totalorder %s27, 0
        %s416 = scalar_select %p415, %s27, 0
        %s417 = sadd.s32 %s416, %s414
        %s418 = smul.addr %s417, 8
        %s419 = scalar_lea.vmem %s10, %s418
        %v421 = vld [vmem:[%s408] sm:$0xff]
        %v422 = vld [vmem:[%s412] sm:$0xff]
        %v423 = vpack.c.bf16 %v421, %v421
        %v424 = vld [vmem:[%s2] sm:$0xf]
        %v425 = vld [vmem:[%s2 + $0x4] sm:$0xf]
        %v426 = vld [vmem:[%s2 + $0x8] sm:$0xf]
        %v427 = vld [vmem:[%s2 + $0xc] sm:$0xf]
        %v428 = vld [vmem:[%s2 + $0x10] sm:$0xf]
        %v429 = vld [vmem:[%s2 + $0x14] sm:$0xf]
        %v430 = vld [vmem:[%s2 + $0x18] sm:$0xf]
        %v431 = vld [vmem:[%s2 + $0x1c] sm:$0xf]
        %v432 = vld [vmem:[%s2 + $0x20] sm:$0xf]
        %v433 = vld [vmem:[%s2 + $0x24] sm:$0xf]
        %v434 = vld [vmem:[%s2 + $0x28] sm:$0xf]
        %v435 = vld [vmem:[%s2 + $0x2c] sm:$0xf]
        %v436 = vld [vmem:[%s2 + $0x30] sm:$0xf]
        %v437 = vld [vmem:[%s2 + $0x34] sm:$0xf]
        %v438 = vld [vmem:[%s2 + $0x38] sm:$0xf]
        %v439 = vld [vmem:[%s2 + $0x3c] sm:$0xf]
        %v440 = vld [vmem:[%s3] sm:$0x1]
        %v442 = vperm.slane %v440, 0
        %v460 = vunpack.c.l.b16 %v424
        %v461 = vunpack.c.l.b16 %v425
        %v462 = vunpack.c.l.b16 %v426
        %v463 = vunpack.c.l.b16 %v427
        %v464 = vunpack.c.l.b16 %v428
        %v465 = vunpack.c.l.b16 %v429
        %v466 = vunpack.c.l.b16 %v430
        %v467 = vunpack.c.l.b16 %v431
        %v468 = vunpack.c.l.b16 %v432
        %v469 = vunpack.c.l.b16 %v433
        %v470 = vunpack.c.l.b16 %v434
        %v471 = vunpack.c.l.b16 %v435
        %v472 = vunpack.c.l.b16 %v436
        %v473 = vunpack.c.l.b16 %v437
        %v474 = vunpack.c.l.b16 %v438
        %v475 = vunpack.c.l.b16 %v439
        %v476 = vpack.c.b16 %v461, %v460
        %v477 = vpack.c.b16 %v463, %v462
        %v478 = vpack.c.b16 %v465, %v464
        %v479 = vpack.c.b16 %v467, %v466
        %v480 = vpack.c.b16 %v469, %v468
        %v481 = vpack.c.b16 %v471, %v470
        %v482 = vpack.c.b16 %v473, %v472
        %v483 = vpack.c.b16 %v475, %v474
        %492 = vmatpush.bf16.msra.mxu0 %v483
        %493 = vmatpush.bf16.msra.mxu0 %v482
        %494 = vmatpush.bf16.msra.mxu0 %v481
        %495 = vmatpush.bf16.msra.mxu0 %v480
        %496 = vmatpush.bf16.msra.mxu0 %v479
        %497 = vmatpush.bf16.msra.mxu0 %v478
        %498 = vmatpush.bf16.msra.mxu0 %v477
        %499 = vmatpush.bf16.msra.mxu0 %v476
        %500 = vmatmul.bf16.gmra.mxu0 %v423
        %v501 = vpop.f32.mrf.mxu0
        %v502 = vadd.f32 %v442, %v501
        %v503 = vpop.f32.mrf.mxu0
        %504 = vdwg.mxu0
        %v505 = vpack.c.bf16 %v422, %v422
        %v506 = vld [vmem:[#allocation3] sm:$0xff]
        %v507 = vld [vmem:[#allocation3 + $0x8] sm:$0xff]
        %v508 = vld [vmem:[#allocation3 + $0x10] sm:$0xff]
        %v509 = vld [vmem:[#allocation3 + $0x18] sm:$0xff]
        %v510 = vld [vmem:[#allocation3 + $0x20] sm:$0xff]
        %v511 = vld [vmem:[#allocation3 + $0x28] sm:$0xff]
        %v512 = vld [vmem:[#allocation3 + $0x30] sm:$0xff]
        %v513 = vld [vmem:[#allocation3 + $0x38] sm:$0xff]
        %v514 = vld [vmem:[#allocation3 + $0x40] sm:$0xff]
        %v515 = vld [vmem:[#allocation3 + $0x48] sm:$0xff]
        %v516 = vld [vmem:[#allocation3 + $0x50] sm:$0xff]
        %v517 = vld [vmem:[#allocation3 + $0x58] sm:$0xff]
        %v518 = vld [vmem:[#allocation3 + $0x60] sm:$0xff]
        %v519 = vld [vmem:[#allocation3 + $0x68] sm:$0xff]
        %v520 = vld [vmem:[#allocation3 + $0x70] sm:$0xff]
        %v521 = vld [vmem:[#allocation3 + $0x78] sm:$0xff]
        %v522 = vld [vmem:[%s5] sm:$0x3]
        %v524 = vperm.slane %v522, 0
        %v525 = vperm.slane %v522, 1
        %v544 = vunpack.c.l.b16 %v506
        %v545 = vunpack.c.h.b16 %v506
        %v546 = vunpack.c.l.b16 %v507
        %v547 = vunpack.c.h.b16 %v507
        %v548 = vunpack.c.l.b16 %v508
        %v549 = vunpack.c.h.b16 %v508
        %v550 = vunpack.c.l.b16 %v509
        %v551 = vunpack.c.h.b16 %v509
        %v552 = vunpack.c.l.b16 %v510
        %v553 = vunpack.c.h.b16 %v510
        %v554 = vunpack.c.l.b16 %v511
        %v555 = vunpack.c.h.b16 %v511
        %v556 = vunpack.c.l.b16 %v512
        %v557 = vunpack.c.h.b16 %v512
        %v558 = vunpack.c.l.b16 %v513
        %v559 = vunpack.c.h.b16 %v513
        %v560 = vunpack.c.l.b16 %v514
        %v561 = vunpack.c.h.b16 %v514
        %v562 = vunpack.c.l.b16 %v515
        %v563 = vunpack.c.h.b16 %v515
        %v564 = vunpack.c.l.b16 %v516
        %v565 = vunpack.c.h.b16 %v516
        %v566 = vunpack.c.l.b16 %v517
        %v567 = vunpack.c.h.b16 %v517
        %v568 = vunpack.c.l.b16 %v518
        %v569 = vunpack.c.h.b16 %v518
        %v570 = vunpack.c.l.b16 %v519
        %v571 = vunpack.c.h.b16 %v519
        %v572 = vunpack.c.l.b16 %v520
        %v573 = vunpack.c.h.b16 %v520
        %v574 = vunpack.c.l.b16 %v521
        %v575 = vunpack.c.h.b16 %v521
        %v576 = vpack.c.b16 %v546, %v544
        %v577 = vpack.c.b16 %v547, %v545
        %v578 = vpack.c.b16 %v550, %v548
        %v579 = vpack.c.b16 %v551, %v549
        %v580 = vpack.c.b16 %v554, %v552
        %v581 = vpack.c.b16 %v555, %v553
        %v582 = vpack.c.b16 %v558, %v556
        %v583 = vpack.c.b16 %v559, %v557
        %v584 = vpack.c.b16 %v562, %v560
        %v585 = vpack.c.b16 %v563, %v561
        %v586 = vpack.c.b16 %v566, %v564
        %v587 = vpack.c.b16 %v567, %v565
        %v588 = vpack.c.b16 %v570, %v568
        %v589 = vpack.c.b16 %v571, %v569
        %v590 = vpack.c.b16 %v574, %v572
        %v591 = vpack.c.b16 %v575, %v573
        %608 = vmatpush.bf16.msra.mxu0 %v590
        %609 = vmatpush.bf16.msra.mxu0 %v588
        %610 = vmatpush.bf16.msra.mxu0 %v586
        %611 = vmatpush.bf16.msra.mxu0 %v584
        %612 = vmatpush.bf16.msra.mxu0 %v582
        %613 = vmatpush.bf16.msra.mxu0 %v580
        %614 = vmatpush.bf16.msra.mxu0 %v578
        %615 = vmatpush.bf16.msra.mxu0 %v576
        %616 = vmatmul.bf16.gmra.mxu0 %v505
        %v617 = vpop.f32.mrf.mxu0
        %v618 = vadd.f32 %v524, %v617
        %v619 = vpop.f32.mrf.mxu0
        %620 = vdwg.mxu0
        %621 = vmatpush.bf16.msra.mxu0 %v591
        %622 = vmatpush.bf16.msra.mxu0 %v589
        %623 = vmatpush.bf16.msra.mxu0 %v587
        %624 = vmatpush.bf16.msra.mxu0 %v585
        %625 = vmatpush.bf16.msra.mxu0 %v583
        %626 = vmatpush.bf16.msra.mxu0 %v581
        %627 = vmatpush.bf16.msra.mxu0 %v579
        %628 = vmatpush.bf16.msra.mxu0 %v577
        %629 = vmatmul.bf16.gmra.mxu0 %v505
        %v630 = vpop.f32.mrf.mxu0
        %v631 = vadd.f32 %v525, %v630
        %v632 = vpop.f32.mrf.mxu0
        %633 = vdwg.mxu0
        %v634 = vpack.c.bf16 %v502, %v502
        %v635 = vpack.c.bf16 %v618, %v618
        %v636 = vpack.c.bf16 %v631, %v631
        %637 = vst [vmem:[#allocation2] sm:$0xff] 0.0
        %vm638 = vcmask 64512
        %v640 = vsel %vm638, %v634, 0
        %v643 = vsel %vm638, %v635, 0
        %645 = vmatpush.bf16.xpose.msra.mxu0 0
        %646 = vmatpush.bf16.xpose.msra.mxu0 0
        %647 = vmatpush.bf16.xpose.msra.mxu0 0
        %648 = vmatpush.bf16.xpose.msra.mxu0 0
        %649 = vmatpush.bf16.xpose.msra.mxu0 0
        %650 = vmatpush.bf16.xpose.msra.mxu0 0
        %651 = vmatpush.bf16.xpose.msra.mxu0 0
        %652 = vmatpush.bf16.xpose.msra.mxu0 %v643
        %653 = vmatmul.bf16.gmra.mxu0 %v640
        %v654 = vpop.f32.mrf.mxu0
        %v655 = vadd.f32 0.0, %v654
        %v656 = vpop.f32.mrf.mxu0
        %657 = vdwg.mxu0
        %v658 = vsel %vm638, %v655, -inf
        %659 = vmax.xlane.f32.xlu0 %v658
        %v660 = vpop.xlane.xlu0 %659
        %v661 = vsub.f32 %v655, %v660
        %v662 = vmul.f32 %v661, 1.442695
        %v663 = vpow.pop %v662
        %v664 = vsel %vm638, %v663, 0.0
        %665 = vadd.xlane.f32.xlu0 %v664
        %v666 = vpop.xlane.xlu0 %665
        %v667 = vrcp.pop %v666
        %v668 = vmul.f32 %v666, %v667
        %v669 = vsub.f32 1.0, %v668
        %v670 = vmul.f32 %v667, %v669
        %v671 = vadd.f32 %v667, %v670
        %vm672 = vweird.f32 %v666
        %vm673 = vweird.f32 %v667
        %vm674 = vmor %vm672, %vm673
        %v675 = vsel %vm674, %v667, %v671
        %v676 = vand.u32 2147483647, %v666
        %vm677 = vcmp.eq.f32.partialorder %v676, 8.507059e+37
        %v678 = vand.u32 %v666, 2147483648
        %v679 = vor.u32 1.1754944e-38, %v678
        %v680 = vsel %vm677, %v679, %v675
        %v681 = vmul.f32 %v663, %v680
        %v682 = vpack.c.bf16 %v681, %v681
        %v684 = vsel %vm638, %v682, 0
        %vm686 = vcmask 1043456
        %v688 = vsel %vm686, %v636, 0
        %690 = vmatpush.bf16.msra.mxu0 0
        %691 = vmatpush.bf16.msra.mxu0 0
        %692 = vmatpush.bf16.msra.mxu0 0
        %693 = vmatpush.bf16.msra.mxu0 0
        %694 = vmatpush.bf16.msra.mxu0 0
        %695 = vmatpush.bf16.msra.mxu0 0
        %696 = vmatpush.bf16.msra.mxu0 0
        %697 = vmatpush.bf16.msra.mxu0 %v688
        %698 = vmatmul.bf16.gmra.mxu0 %v684
        %v699 = vpop.f32.mrf.mxu0
        %v700 = vadd.f32 0.0, %v699
        %v701 = vpop.f32.mrf.mxu0
        %702 = vdwg.mxu0
        %703 = vst.msk [vmem:[#allocation2] sm:$0xff] %vm638, %v700
        %v705 = vunpack.c.l.b16 %v634
        %v706 = vpack.c.b16 %v705, %v705
        %707 = vrot.lane.b32.xlu0 %v706, 120
        %v708 = vpop.permute.xlu0 %707
        %v710 = vunpack.c.l.b16 %v635
        %v711 = vpack.c.b16 %v710, %v710
        %712 = vrot.lane.b32.xlu0 %v711, 120
        %v713 = vpop.permute.xlu0 %712
        %v715 = vsel %vm638, %v708, 0
        %v718 = vsel %vm638, %v713, 0
        %720 = vmatpush.bf16.xpose.msra.mxu0 0
        %721 = vmatpush.bf16.xpose.msra.mxu0 0
        %722 = vmatpush.bf16.xpose.msra.mxu0 0
        %723 = vmatpush.bf16.xpose.msra.mxu0 0
        %724 = vmatpush.bf16.xpose.msra.mxu0 0
        %725 = vmatpush.bf16.xpose.msra.mxu0 0
        %726 = vmatpush.bf16.xpose.msra.mxu0 0
        %727 = vmatpush.bf16.xpose.msra.mxu0 %v718
        %728 = vmatmul.bf16.gmra.mxu0 %v715
        %v729 = vpop.f32.mrf.mxu0
        %v730 = vadd.f32 0.0, %v729
        %v731 = vpop.f32.mrf.mxu0
        %732 = vdwg.mxu0
        %v733 = vsel %vm638, %v730, -inf
        %734 = vmax.xlane.f32.xlu0 %v733
        %v735 = vpop.xlane.xlu0 %734
        %v736 = vsub.f32 %v730, %v735
        %v737 = vmul.f32 %v736, 1.442695
        %v738 = vpow.pop %v737
        %v739 = vsel %vm638, %v738, 0.0
        %740 = vadd.xlane.f32.xlu0 %v739
        %v741 = vpop.xlane.xlu0 %740
        %v742 = vrcp.pop %v741
        %v743 = vmul.f32 %v741, %v742
        %v744 = vsub.f32 1.0, %v743
        %v745 = vmul.f32 %v742, %v744
        %v746 = vadd.f32 %v742, %v745
        %vm747 = vweird.f32 %v741
        %vm748 = vweird.f32 %v742
        %vm749 = vmor %vm747, %vm748
        %v750 = vsel %vm749, %v742, %v746
        %v751 = vand.u32 2147483647, %v741
        %vm752 = vcmp.eq.f32.partialorder %v751, 8.507059e+37
        %v753 = vand.u32 %v741, 2147483648
        %v754 = vor.u32 1.1754944e-38, %v753
        %v755 = vsel %vm752, %v754, %v750
        %v756 = vmul.f32 %v738, %v755
        %v757 = vpack.c.bf16 %v756, %v756
        %v759 = vunpack.c.l.b16 %v636
        %v760 = vpack.c.b16 %v759, %v759
        %761 = vrot.lane.b32.xlu0 %v760, 120
        %v762 = vpop.permute.xlu0 %761
        %v764 = vsel %vm638, %v757, 0
        %v767 = vsel %vm686, %v762, 0
        %769 = vmatpush.bf16.msra.mxu0 0
        %770 = vmatpush.bf16.msra.mxu0 0
        %771 = vmatpush.bf16.msra.mxu0 0
        %772 = vmatpush.bf16.msra.mxu0 0
        %773 = vmatpush.bf16.msra.mxu0 0
        %774 = vmatpush.bf16.msra.mxu0 0
        %775 = vmatpush.bf16.msra.mxu0 0
        %776 = vmatpush.bf16.msra.mxu0 %v767
        %777 = vmatmul.bf16.gmra.mxu0 %v764
        %v778 = vpop.f32.mrf.mxu0
        %v779 = vadd.f32 0.0, %v778
        %v780 = vpop.f32.mrf.mxu0
        %781 = vdwg.mxu0
        %783 = vrot.lane.b32.xlu0 %v779, 8
        %v784 = vpop.permute.xlu0 %783
        %vm786 = vcmask 130112
        %787 = vst.msk [vmem:[#allocation2] sm:$0xff] %vm786, %v784
        %v788 = vld [vmem:[#allocation2] sm:$0xff]
        %v789 = vpack.c.bf16 %v788, %v788
        %v790 = vld [vmem:[%s6] sm:$0xf]
        %v791 = vld [vmem:[%s6 + $0x4] sm:$0xf]
        %v792 = vld [vmem:[%s6 + $0x8] sm:$0xf]
        %v793 = vld [vmem:[%s6 + $0xc] sm:$0xf]
        %v794 = vld [vmem:[%s6 + $0x10] sm:$0xf]
        %v795 = vld [vmem:[%s6 + $0x14] sm:$0xf]
        %v796 = vld [vmem:[%s6 + $0x18] sm:$0xf]
        %v797 = vld [vmem:[%s6 + $0x1c] sm:$0xf]
        %v798 = vld [vmem:[%s6 + $0x20] sm:$0xf]
        %v799 = vld [vmem:[%s6 + $0x24] sm:$0xf]
        %v800 = vld [vmem:[%s6 + $0x28] sm:$0xf]
        %v801 = vld [vmem:[%s6 + $0x2c] sm:$0xf]
        %v802 = vld [vmem:[%s6 + $0x30] sm:$0xf]
        %v803 = vld [vmem:[%s6 + $0x34] sm:$0xf]
        %v804 = vld [vmem:[%s6 + $0x38] sm:$0xf]
        %v805 = vld [vmem:[%s6 + $0x3c] sm:$0xf]
        %v806 = vld [vmem:[%s7] sm:$0x1]
        %v808 = vperm.slane %v806, 0
        %v826 = vunpack.c.l.b16 %v790
        %v827 = vunpack.c.l.b16 %v791
        %v828 = vunpack.c.l.b16 %v792
        %v829 = vunpack.c.l.b16 %v793
        %v830 = vunpack.c.l.b16 %v794
        %v831 = vunpack.c.l.b16 %v795
        %v832 = vunpack.c.l.b16 %v796
        %v833 = vunpack.c.l.b16 %v797
        %v834 = vunpack.c.l.b16 %v798
        %v835 = vunpack.c.l.b16 %v799
        %v836 = vunpack.c.l.b16 %v800
        %v837 = vunpack.c.l.b16 %v801
        %v838 = vunpack.c.l.b16 %v802
        %v839 = vunpack.c.l.b16 %v803
        %v840 = vunpack.c.l.b16 %v804
        %v841 = vunpack.c.l.b16 %v805
        %v842 = vpack.c.b16 %v827, %v826
        %v843 = vpack.c.b16 %v829, %v828
        %v844 = vpack.c.b16 %v831, %v830
        %v845 = vpack.c.b16 %v833, %v832
        %v846 = vpack.c.b16 %v835, %v834
        %v847 = vpack.c.b16 %v837, %v836
        %v848 = vpack.c.b16 %v839, %v838
        %v849 = vpack.c.b16 %v841, %v840
        %858 = vmatpush.bf16.msra.mxu0 %v849
        %859 = vmatpush.bf16.msra.mxu0 %v848
        %860 = vmatpush.bf16.msra.mxu0 %v847
        %861 = vmatpush.bf16.msra.mxu0 %v846
        %862 = vmatpush.bf16.msra.mxu0 %v845
        %863 = vmatpush.bf16.msra.mxu0 %v844
        %864 = vmatpush.bf16.msra.mxu0 %v843
        %865 = vmatpush.bf16.msra.mxu0 %v842
        %866 = vmatmul.bf16.gmra.mxu0 %v789
        %v867 = vpop.f32.mrf.mxu0
        %v868 = vadd.f32 %v808, %v867
        %v869 = vpop.f32.mrf.mxu0
        %870 = vdwg.mxu0
        %v871 = vadd.f32 %v868, %v421
        %v872 = vld [vmem:[%s8] sm:$0x1]
        %v873 = vld [vmem:[%s9] sm:$0x1]
        %874 = vadd.xlane.f32.xlu0 %v871
        %v875 = vpop.xlane.xlu0 %874
        %v876 = vmul.f32 %v875, 0.0625
        %v877 = vsub.f32 %v871, %v876
        %v878 = vlaneseq
        %v879 = vand.u32 %v878, 127
        %vm880 = vcmp.lt.s32.totalorder %v879, 16
        %v881 = vsel %vm880, 1, 0
        %v882 = vcvt.s32.f32 %v881
        %v883 = vmul.f32 %v877, %v882
        %v884 = vmul.f32 %v883, %v883
        %885 = vadd.xlane.f32.xlu0 %v884
        %v886 = vpop.xlane.xlu0 %885
        %v887 = vmul.f32 %v886, 0.0625
        %v888 = vadd.f32 %v887, 1e-05
        %v889 = vrsqrt.pop %v888
        %v890 = vmul.f32 %v889, %v888
        %v891 = vmul.f32 %v890, %v889
        %v892 = vmul.f32 0.5, %v891
        %v893 = vsub.f32 1.5, %v892
        %v894 = vmul.f32 %v889, %v893
        %vm895 = vweird.f32 %v888
        %vm896 = vweird.f32 %v889
        %vm897 = vmor %vm895, %vm896
        %v898 = vsel %vm897, %v889, %v894
        %v899 = vmul.f32 %v883, %v898
        %v901 = vperm.slane %v872, 0
        %v903 = vmul.f32 %v899, %v901
        %v905 = vperm.slane %v873, 0
        %v907 = vadd.f32 %v903, %v905
        %908 = vst [vmem:[%s419] sm:$0xff] %v907
        %p909 = scmp.lt.s32.totalorder %s26, 1
        %s910 = scalar_select %p909, %s26, 1
        %p911 = scmp.lt.s32.totalorder %s27, 0
        %s912 = scalar_select %p911, %s27, 0
        %s913 = sadd.s32 %s912, %s910
        %s914 = smul.addr %s913, 8
        %s915 = scalar_lea.vmem %s10, %s914
        // Predicated region
        $region65: #{vqvae_forward.11} parent=59 // pred_check
          %p916 = pneg %p276
        $region66: #{vqvae_forward.11} parent=59 // pred_check_branch
          %918 = sbr.rel (%p916) target = $region68
        $region67: #{vqvae_forward.11} parent=59 // pred_region
          _
        $region68: #{vqvae_forward.11} parent=59 // pred_fallthru
          _
      $region60: #{vqvae_forward.11} parent=5 // pred_fallthru
        _
      %p919 = scmp.le.s32.totalorder 2, %s17
      // Predicated region
      $region69: #{vqvae_forward.11} parent=5 // pred_check
        %p920 = pneg %p919
      $region70: #{vqvae_forward.11} parent=5 // pred_check_branch
        %922 = sbr.rel (%p920) target = $region72
      $region71: #{vqvae_forward.11} parent=5 // pred_region
        %s923 = ssub.s32 %s17, 2
        // Predicated region
        $region73: #{vqvae_forward.11} parent=71 // pred_check
          %p924 = pneg %p282
        $region74: #{vqvae_forward.11} parent=71 // pred_check_branch
          %926 = sbr.rel (%p924) target = $region76
        $region75: #{vqvae_forward.11} parent=71 // pred_region
          %p927 = scmp.lt.s32.totalorder %s28, 1
          %s928 = scalar_select %p927, %s28, 1
          %p929 = scmp.lt.s32.totalorder %s29, 0
          %s930 = scalar_select %p929, %s29, 0
          %s931 = sadd.s32 %s930, %s928
          %s932 = smul.addr %s931, 8
          %s933 = scalar_lea.vmem %s10, %s932
        $region76: #{vqvae_forward.11} parent=71 // pred_fallthru
          _
      $region72: #{vqvae_forward.11} parent=5 // pred_fallthru
        _
    $region6: #{vqvae_forward.11} parent=1 // loop_footer
      %s21 = sadd.s32 1, %s17
    $region7: #{vqvae_forward.11} parent=1 // loop_footer_branch
      %16 = sbr.rel target = $region3
    $region8: #{vqvae_forward.11} parent=1 // loop_exit
      _
    %934 = vsyncpa [#allocation4], 1
    %s935 = scalar_lea.sflag [#allocation4], 1
    %936 = vsyncpa %s935, 1

// kernel: vqvae_forward.13
$region0: #{vqvae_forward.13}
  #allocation0 [shape = 'u32[]', space=smem, size = 0x4, offset = 0x4, fixed_abs, tag = 'smem constant byte address 0x4 - core index']
  #allocation1 [shape = 'u32[72,128]{1,0:T(1,128)}', space=vmem, size = 0x9000, scoped, tag = 'internal scratch']
  #allocation2 [shape = 'f32[8,128]{1,0:T(8,128)}', space=vmem, size = 0x1000, scoped, tag = 'scratch operand']
  %s0 = inlined_call_operand.vmem [shape: f32[2,8,128], index: 0, kind: input, shape index: {}, may-alias: {0,1}]
  %s1 = inlined_call_operand.vmem [shape: f32[2,8,128], index: 1, kind: input, shape index: {}, may-alias: {0,1}]
  %s2 = inlined_call_operand.hbm [shape: bf16[128,128], index: 2, kind: input, shape index: {}]
  %s3 = inlined_call_operand.vmem [shape: f32[1,128], index: 3, kind: input, shape index: {}]
  %s4 = inlined_call_operand.hbm [shape: bf16[128,256], index: 4, kind: input, shape index: {}]
  %s5 = inlined_call_operand.vmem [shape: f32[1,256], index: 5, kind: input, shape index: {}]
  %s6 = inlined_call_operand.hbm [shape: bf16[128,128], index: 6, kind: input, shape index: {}]
  %s7 = inlined_call_operand.vmem [shape: f32[1,128], index: 7, kind: input, shape index: {}]
  %s8 = inlined_call_operand.vmem [shape: f32[1,128], index: 8, kind: input, shape index: {}]
  %s9 = inlined_call_operand.vmem [shape: f32[1,128], index: 9, kind: input, shape index: {}]
  %s10 = inlined_call_operand.vmem [shape: f32[2,8,128], index: 10, kind: output, shape index: {}]
  %s11 = sld [smem:[#allocation0]]
  $region85: #{vqvae_forward.13} parent=0
    _
  %s13 = ssub.s32 1, %s11
  %s14 = scalar_select 0, %s13, %s11
  $region1: #{vqvae_forward.13} parent=0
    #allocation3 [shape = 'u8[32768]{0}', space=vmem, size = 0x8000, scoped, tag = 'input window, operand 2, single buffered']
    #allocation4 [shape = 's32[2]{0}', space=sflag, size = 0x8, scoped, tag = 'scoped memory for vqvae_forward.13']
    #allocation5 [shape = 'u8[65536]{0}', space=vmem, size = 0x10000, scoped, tag = 'input window, operand 4, single buffered']
    #allocation6 [shape = 's32[1]{0}', space=sflag, size = 0x4, scoped, tag = 'scoped memory for vqvae_forward.13']
    #allocation7 [shape = 'u8[32768]{0}', space=vmem, size = 0x8000, scoped, tag = 'input window, operand 6, single buffered']
    %15 = vsyncpa [#allocation4], 0
    %16 = vsyncpa [#allocation6], 0
    loop: start=0, step=1, limit=4
    $region2: #{vqvae_forward.13} parent=1 // loop_pre_header
      _
    $region3: #{vqvae_forward.13} parent=1 // loop_header
      %s18 = sphi 0, %s22
      %p19 = scmp.ge.s32.totalorder %s18, 4
      %s25 = sphi 0, %s37
      %s26 = sphi 0, %s33
      %s27 = sphi 0, %s25
      %s28 = sphi 0, %s26
      %s29 = sphi 0, %s27
      %s30 = sphi 0, %s28
      %s42 = sphi 0, %s44
      %s45 = sphi 0, %s42
      %s46 = sphi 0, %s45
      %s62 = sphi 0, %s46
      %s68 = sphi 0, %s70
      %s71 = sphi 0, %s68
      %s72 = sphi 0, %s71
      %s88 = sphi 0, %s72
      %s92 = sphi 0, %s92
      %s94 = sphi 0, %s92
      %s95 = sphi 0, %s94
      %s109 = sphi 0, %s95
      %s113 = sphi 0, %s113
      %s115 = sphi 0, %s113
      %s116 = sphi 0, %s115
      %s130 = sphi 0, %s116
      %s134 = sphi 0, %s134
      %s136 = sphi 0, %s134
      %s137 = sphi 0, %s136
      %s151 = sphi 0, %s137
      %s155 = sphi 0, %s155
      %s157 = sphi 0, %s155
      %s158 = sphi 0, %s157
      %s172 = sphi 0, %s158
      %s176 = sphi 0, %s176
      %s178 = sphi 0, %s176
      %s179 = sphi 0, %s178
      %s193 = sphi 0, %s179
      %s197 = sphi 0, %s197
      %s199 = sphi 0, %s197
      %s200 = sphi 0, %s199
      %s214 = sphi 0, %s200
      %s218 = sphi 0, %s218
      %s220 = sphi 0, %s218
      %s221 = sphi 0, %s220
      %s235 = sphi 0, %s221
      %s239 = sphi 0, %s239
      %s241 = sphi 0, %s239
      %s242 = sphi 0, %s241
      %s256 = sphi 0, %s242
      %s264 = sphi 0, %s266
      %s267 = sphi 0, %s264
      %s268 = sphi 0, %s267
      %s284 = sphi 0, %s268
    $region4: #{vqvae_forward.13} parent=1 // loop_header_branch
      %21 = sbr.rel (%p19) target = $region8
    $region5: #{vqvae_forward.13} parent=1 // loop_body
      %s23 = ssub.s32 %s18, 1
      %s24 = ssub.s32 %s18, 2
      %s31 = sadd.s32 1, %s26
      %p32 = scmp.ge.s32.totalorder %s31, 1
      %s33 = scalar_select %p32, 0, %s31
      %s34 = sadd.s32 1, %s25
      %s35 = scalar_select %p32, %s34, %s25
      %p36 = scmp.ge.s32.totalorder %s35, 2
      %s37 = scalar_select %p36, 0, %s35
      %s38 = ssub.s32 %s25, %s37
      %s39 = ssub.s32 %s26, %s33
      %s40 = sor.u32 %s38, %s39
      %p41 = scmp.eq.s32.totalorder %s40, 0
      %s43 = sadd.s32 %s42, 1
      %s44 = scalar_select %p41, %s42, %s43
      %p47 = pneg %p41
      %p48 = scmp.eq.s32.totalorder %s18, 1
      %p49 = por %p47, %p48
      %p50 = scmp.ne.s32.totalorder %s42, %s45
      %p51 = scmp.eq.s32.totalorder %s18, 0
      %p52 = por %p50, %p51
      %p53 = scmp.ne.s32.totalorder %s42, %s45
      %p54 = scmp.eq.s32.totalorder %s23, 1
      %p55 = por %p53, %p54
      %p56 = scmp.ne.s32.totalorder %s45, %s46
      %p57 = scmp.eq.s32.totalorder %s23, 0
      %p58 = por %p56, %p57
      %p59 = scmp.ne.s32.totalorder %s45, %s46
      %p60 = scmp.eq.s32.totalorder %s24, 1
      %p61 = por %p59, %p60
      %p63 = scmp.ne.s32.totalorder %s46, %s62
      %p64 = scmp.eq.s32.totalorder %s24, 0
      %p65 = por %p63, %p64
      %s66 = ssub.s32 %s25, %s37
      %p67 = scmp.eq.s32.totalorder %s66, 0
      %s69 = sadd.s32 %s68, 1
      %s70 = scalar_select %p67, %s68, %s69
      %p73 = pneg %p67
      %p74 = scmp.eq.s32.totalorder %s18, 1
      %p75 = por %p73, %p74
      %p76 = scmp.ne.s32.totalorder %s68, %s71
      %p77 = scmp.eq.s32.totalorder %s18, 0
      %p78 = por %p76, %p77
      %p79 = scmp.ne.s32.totalorder %s68, %s71
      %p80 = scmp.eq.s32.totalorder %s23, 1
      %p81 = por %p79, %p80
      %p82 = scmp.ne.s32.totalorder %s71, %s72
      %p83 = scmp.eq.s32.totalorder %s23, 0
      %p84 = por %p82, %p83
      %p85 = scmp.ne.s32.totalorder %s71, %s72
      %p86 = scmp.eq.s32.totalorder %s24, 1
      %p87 = por %p85, %p86
      %p89 = scmp.ne.s32.totalorder %s72, %s88
      %p90 = scmp.eq.s32.totalorder %s24, 0
      %p91 = por %p89, %p90
      %s93 = sadd.s32 %s92, 1
      %p96 = scmp.eq.s32.totalorder %s18, 1
      %p97 = scmp.ne.s32.totalorder %s92, %s94
      %p98 = scmp.eq.s32.totalorder %s18, 0
      %p99 = por %p97, %p98
      %p100 = scmp.ne.s32.totalorder %s92, %s94
      %p101 = scmp.eq.s32.totalorder %s23, 1
      %p102 = por %p100, %p101
      %p103 = scmp.ne.s32.totalorder %s94, %s95
      %p104 = scmp.eq.s32.totalorder %s23, 0
      %p105 = por %p103, %p104
      %p106 = scmp.ne.s32.totalorder %s94, %s95
      %p107 = scmp.eq.s32.totalorder %s24, 1
      %p108 = por %p106, %p107
      %p110 = scmp.ne.s32.totalorder %s95, %s109
      %p111 = scmp.eq.s32.totalorder %s24, 0
      %p112 = por %p110, %p111
      %s114 = sadd.s32 %s113, 1
      %p117 = scmp.eq.s32.totalorder %s18, 1
      %p118 = scmp.ne.s32.totalorder %s113, %s115
      %p119 = scmp.eq.s32.totalorder %s18, 0
      %p120 = por %p118, %p119
      %p121 = scmp.ne.s32.totalorder %s113, %s115
      %p122 = scmp.eq.s32.totalorder %s23, 1
      %p123 = por %p121, %p122
      %p124 = scmp.ne.s32.totalorder %s115, %s116
      %p125 = scmp.eq.s32.totalorder %s23, 0
      %p126 = por %p124, %p125
      %p127 = scmp.ne.s32.totalorder %s115, %s116
      %p128 = scmp.eq.s32.totalorder %s24, 1
      %p129 = por %p127, %p128
      %p131 = scmp.ne.s32.totalorder %s116, %s130
      %p132 = scmp.eq.s32.totalorder %s24, 0
      %p133 = por %p131, %p132
      %s135 = sadd.s32 %s134, 1
      %p138 = scmp.eq.s32.totalorder %s18, 1
      %p139 = scmp.ne.s32.totalorder %s134, %s136
      %p140 = scmp.eq.s32.totalorder %s18, 0
      %p141 = por %p139, %p140
      %p142 = scmp.ne.s32.totalorder %s134, %s136
      %p143 = scmp.eq.s32.totalorder %s23, 1
      %p144 = por %p142, %p143
      %p145 = scmp.ne.s32.totalorder %s136, %s137
      %p146 = scmp.eq.s32.totalorder %s23, 0
      %p147 = por %p145, %p146
      %p148 = scmp.ne.s32.totalorder %s136, %s137
      %p149 = scmp.eq.s32.totalorder %s24, 1
      %p150 = por %p148, %p149
      %p152 = scmp.ne.s32.totalorder %s137, %s151
      %p153 = scmp.eq.s32.totalorder %s24, 0
      %p154 = por %p152, %p153
      %s156 = sadd.s32 %s155, 1
      %p159 = scmp.eq.s32.totalorder %s18, 1
      %p160 = scmp.ne.s32.totalorder %s155, %s157
      %p161 = scmp.eq.s32.totalorder %s18, 0
      %p162 = por %p160, %p161
      %p163 = scmp.ne.s32.totalorder %s155, %s157
      %p164 = scmp.eq.s32.totalorder %s23, 1
      %p165 = por %p163, %p164
      %p166 = scmp.ne.s32.totalorder %s157, %s158
      %p167 = scmp.eq.s32.totalorder %s23, 0
      %p168 = por %p166, %p167
      %p169 = scmp.ne.s32.totalorder %s157, %s158
      %p170 = scmp.eq.s32.totalorder %s24, 1
      %p171 = por %p169, %p170
      %p173 = scmp.ne.s32.totalorder %s158, %s172
      %p174 = scmp.eq.s32.totalorder %s24, 0
      %p175 = por %p173, %p174
      %s177 = sadd.s32 %s176, 1
      %p180 = scmp.eq.s32.totalorder %s18, 1
      %p181 = scmp.ne.s32.totalorder %s176, %s178
      %p182 = scmp.eq.s32.totalorder %s18, 0
      %p183 = por %p181, %p182
      %p184 = scmp.ne.s32.totalorder %s176, %s178
      %p185 = scmp.eq.s32.totalorder %s23, 1
      %p186 = por %p184, %p185
      %p187 = scmp.ne.s32.totalorder %s178, %s179
      %p188 = scmp.eq.s32.totalorder %s23, 0
      %p189 = por %p187, %p188
      %p190 = scmp.ne.s32.totalorder %s178, %s179
      %p191 = scmp.eq.s32.totalorder %s24, 1
      %p192 = por %p190, %p191
      %p194 = scmp.ne.s32.totalorder %s179, %s193
      %p195 = scmp.eq.s32.totalorder %s24, 0
      %p196 = por %p194, %p195
      %s198 = sadd.s32 %s197, 1
      %p201 = scmp.eq.s32.totalorder %s18, 1
      %p202 = scmp.ne.s32.totalorder %s197, %s199
      %p203 = scmp.eq.s32.totalorder %s18, 0
      %p204 = por %p202, %p203
      %p205 = scmp.ne.s32.totalorder %s197, %s199
      %p206 = scmp.eq.s32.totalorder %s23, 1
      %p207 = por %p205, %p206
      %p208 = scmp.ne.s32.totalorder %s199, %s200
      %p209 = scmp.eq.s32.totalorder %s23, 0
      %p210 = por %p208, %p209
      %p211 = scmp.ne.s32.totalorder %s199, %s200
      %p212 = scmp.eq.s32.totalorder %s24, 1
      %p213 = por %p211, %p212
      %p215 = scmp.ne.s32.totalorder %s200, %s214
      %p216 = scmp.eq.s32.totalorder %s24, 0
      %p217 = por %p215, %p216
      %s219 = sadd.s32 %s218, 1
      %p222 = scmp.eq.s32.totalorder %s18, 1
      %p223 = scmp.ne.s32.totalorder %s218, %s220
      %p224 = scmp.eq.s32.totalorder %s18, 0
      %p225 = por %p223, %p224
      %p226 = scmp.ne.s32.totalorder %s218, %s220
      %p227 = scmp.eq.s32.totalorder %s23, 1
      %p228 = por %p226, %p227
      %p229 = scmp.ne.s32.totalorder %s220, %s221
      %p230 = scmp.eq.s32.totalorder %s23, 0
      %p231 = por %p229, %p230
      %p232 = scmp.ne.s32.totalorder %s220, %s221
      %p233 = scmp.eq.s32.totalorder %s24, 1
      %p234 = por %p232, %p233
      %p236 = scmp.ne.s32.totalorder %s221, %s235
      %p237 = scmp.eq.s32.totalorder %s24, 0
      %p238 = por %p236, %p237
      %s240 = sadd.s32 %s239, 1
      %p243 = scmp.eq.s32.totalorder %s18, 1
      %p244 = scmp.ne.s32.totalorder %s239, %s241
      %p245 = scmp.eq.s32.totalorder %s18, 0
      %p246 = por %p244, %p245
      %p247 = scmp.ne.s32.totalorder %s239, %s241
      %p248 = scmp.eq.s32.totalorder %s23, 1
      %p249 = por %p247, %p248
      %p250 = scmp.ne.s32.totalorder %s241, %s242
      %p251 = scmp.eq.s32.totalorder %s23, 0
      %p252 = por %p250, %p251
      %p253 = scmp.ne.s32.totalorder %s241, %s242
      %p254 = scmp.eq.s32.totalorder %s24, 1
      %p255 = por %p253, %p254
      %p257 = scmp.ne.s32.totalorder %s242, %s256
      %p258 = scmp.eq.s32.totalorder %s24, 0
      %p259 = por %p257, %p258
      %s260 = ssub.s32 %s25, %s37
      %s261 = ssub.s32 %s26, %s33
      %s262 = sor.u32 %s260, %s261
      %p263 = scmp.eq.s32.totalorder %s262, 0
      %s265 = sadd.s32 %s264, 1
      %s266 = scalar_select %p263, %s264, %s265
      %p269 = pneg %p263
      %p270 = scmp.eq.s32.totalorder %s18, 1
      %p271 = por %p269, %p270
      %p272 = scmp.ne.s32.totalorder %s264, %s267
      %p273 = scmp.eq.s32.totalorder %s18, 0
      %p274 = por %p272, %p273
      %p275 = scmp.ne.s32.totalorder %s264, %s267
      %p276 = scmp.eq.s32.totalorder %s23, 1
      %p277 = por %p275, %p276
      %p278 = scmp.ne.s32.totalorder %s267, %s268
      %p279 = scmp.eq.s32.totalorder %s23, 0
      %p280 = por %p278, %p279
      %p281 = scmp.ne.s32.totalorder %s267, %s268
      %p282 = scmp.eq.s32.totalorder %s24, 1
      %p283 = por %p281, %p282
      %p285 = scmp.ne.s32.totalorder %s268, %s284
      %p286 = scmp.eq.s32.totalorder %s24, 0
      %p287 = por %p285, %p286
      %p288 = scmp.le.s32.totalorder 1, %s18
      %p289 = scmp.lt.s32.totalorder %s18, 3
      %p290 = pnand %p288, %p289
      %p291 = pneg %p290
      // Predicated region
      $region9: #{vqvae_forward.13} parent=5 // pred_check
        _
      $region10: #{vqvae_forward.13} parent=5 // pred_check_branch
        %293 = sbr.rel (%p290) target = $region12
      $region11: #{vqvae_forward.13} parent=5 // pred_region
        %s294 = ssub.s32 %s18, 1
        // Predicated region
        $region13: #{vqvae_forward.13} parent=11 // pred_check
          %p295 = pneg %p105
        $region14: #{vqvae_forward.13} parent=11 // pred_check_branch
          %297 = sbr.rel (%p295) target = $region16
        $region15: #{vqvae_forward.13} parent=11 // pred_region
          %299 = vsyncadd [#allocation4], 0
          %s300 = sshll.u32 %s2, 4
          %s301 = int_to_ptr.hbm [resolvable:$true] %s300
          %s302 = sshll.u32 [#allocation3], 4
          %s303 = int_to_ptr.vmem [resolvable:$true] %s302
          %308 = dma.hbm_to_vmem [thread:$0]  %s301, 1024, %s303, [#allocation4], 64, 64, 4
        $region16: #{vqvae_forward.13} parent=11 // pred_fallthru
          _
        // Predicated region
        $region17: #{vqvae_forward.13} parent=11 // pred_check
          %p309 = pneg %p126
        $region18: #{vqvae_forward.13} parent=11 // pred_check_branch
          %311 = sbr.rel (%p309) target = $region20
        $region19: #{vqvae_forward.13} parent=11 // pred_region
          _
        $region20: #{vqvae_forward.13} parent=11 // pred_fallthru
          _
        // Predicated region
        $region21: #{vqvae_forward.13} parent=11 // pred_check
          %p312 = pneg %p147
        $region22: #{vqvae_forward.13} parent=11 // pred_check_branch
          %314 = sbr.rel (%p312) target = $region24
        $region23: #{vqvae_forward.13} parent=11 // pred_region
          %316 = vsyncadd [#allocation6], 0
          %s317 = sshll.u32 %s4, 4
          %s318 = int_to_ptr.hbm [resolvable:$true] %s317
          %s319 = sshll.u32 [#allocation5], 4
          %s320 = int_to_ptr.vmem [resolvable:$true] %s319
          %325 = dma.hbm_to_vmem [thread:$0]  %s318, 2048, %s320, [#allocation6], 128, 128, 8
        $region24: #{vqvae_forward.13} parent=11 // pred_fallthru
          _
        // Predicated region
        $region25: #{vqvae_forward.13} parent=11 // pred_check
          %p326 = pneg %p168
        $region26: #{vqvae_forward.13} parent=11 // pred_check_branch
          %328 = sbr.rel (%p326) target = $region28
        $region27: #{vqvae_forward.13} parent=11 // pred_region
          _
        $region28: #{vqvae_forward.13} parent=11 // pred_fallthru
          _
        // Predicated region
        $region29: #{vqvae_forward.13} parent=11 // pred_check
          %p329 = pneg %p189
        $region30: #{vqvae_forward.13} parent=11 // pred_check_branch
          %331 = sbr.rel (%p329) target = $region32
        $region31: #{vqvae_forward.13} parent=11 // pred_region
          %333 = vsyncadd [#allocation6], 0
          %s334 = sshll.u32 %s6, 4
          %s335 = int_to_ptr.hbm [resolvable:$true] %s334
          %s336 = sshll.u32 [#allocation7], 4
          %s337 = int_to_ptr.vmem [resolvable:$true] %s336
          %342 = dma.hbm_to_vmem [thread:$0]  %s335, 1024, %s337, [#allocation6], 64, 64, 4
        $region32: #{vqvae_forward.13} parent=11 // pred_fallthru
          _
        // Predicated region
        $region33: #{vqvae_forward.13} parent=11 // pred_check
          %p343 = pneg %p210
        $region34: #{vqvae_forward.13} parent=11 // pred_check_branch
          %345 = sbr.rel (%p343) target = $region36
        $region35: #{vqvae_forward.13} parent=11 // pred_region
          _
        $region36: #{vqvae_forward.13} parent=11 // pred_fallthru
          _
        // Predicated region
        $region37: #{vqvae_forward.13} parent=11 // pred_check
          %p346 = pneg %p231
        $region38: #{vqvae_forward.13} parent=11 // pred_check_branch
          %348 = sbr.rel (%p346) target = $region40
        $region39: #{vqvae_forward.13} parent=11 // pred_region
          _
        $region40: #{vqvae_forward.13} parent=11 // pred_fallthru
          _
        // Predicated region
        $region41: #{vqvae_forward.13} parent=11 // pred_check
          %p349 = pneg %p252
        $region42: #{vqvae_forward.13} parent=11 // pred_check_branch
          %351 = sbr.rel (%p349) target = $region44
        $region43: #{vqvae_forward.13} parent=11 // pred_region
          _
        $region44: #{vqvae_forward.13} parent=11 // pred_fallthru
          _
      $region12: #{vqvae_forward.13} parent=5 // pred_fallthru
        _
      %p352 = scmp.lt.s32.totalorder %s18, 2
      // Predicated region
      $region45: #{vqvae_forward.13} parent=5 // pred_check
        %p353 = pneg %p352
      $region46: #{vqvae_forward.13} parent=5 // pred_check_branch
        %355 = sbr.rel (%p353) target = $region48
      $region47: #{vqvae_forward.13} parent=5 // pred_region
        // Predicated region
        $region49: #{vqvae_forward.13} parent=47 // pred_check
          %p356 = pneg %p52
        $region50: #{vqvae_forward.13} parent=47 // pred_check_branch
          %358 = sbr.rel (%p356) target = $region52
        $region51: #{vqvae_forward.13} parent=47 // pred_region
          %p359 = scmp.lt.s32.totalorder %s25, 1
          %s360 = scalar_select %p359, %s25, 1
          %p361 = scmp.lt.s32.totalorder %s26, 0
          %s362 = scalar_select %p361, %s26, 0
          %s363 = sadd.s32 %s362, %s360
          %s364 = smul.addr %s363, 8
          %s365 = scalar_lea.vmem %s0, %s364
        $region52: #{vqvae_forward.13} parent=47 // pred_fallthru
          _
        // Predicated region
        $region53: #{vqvae_forward.13} parent=47 // pred_check
          %p366 = pneg %p78
        $region54: #{vqvae_forward.13} parent=47 // pred_check_branch
          %368 = sbr.rel (%p366) target = $region56
        $region55: #{vqvae_forward.13} parent=47 // pred_region
          %p369 = scmp.lt.s32.totalorder %s25, 1
          %s370 = scalar_select %p369, %s25, 1
          %s371 = smul.addr %s370, 8
          %s372 = scalar_lea.vmem %s1, %s371
        $region56: #{vqvae_forward.13} parent=47 // pred_fallthru
          _
      $region48: #{vqvae_forward.13} parent=5 // pred_fallthru
        _
      %p373 = scmp.le.s32.totalorder 1, %s18
      %p374 = scmp.lt.s32.totalorder %s18, 3
      %p375 = pnand %p373, %p374
      %p376 = pneg %p375
      // Predicated region
      $region57: #{vqvae_forward.13} parent=5 // pred_check
        _
      $region58: #{vqvae_forward.13} parent=5 // pred_check_branch
        %378 = sbr.rel (%p375) target = $region60
      $region59: #{vqvae_forward.13} parent=5 // pred_region
        %s379 = ssub.s32 %s18, 1
        // Predicated region
        $region61: #{vqvae_forward.13} parent=59 // pred_check
          %p380 = pneg %p105
        $region62: #{vqvae_forward.13} parent=59 // pred_check_branch
          %382 = sbr.rel (%p380) target = $region64
        $region63: #{vqvae_forward.13} parent=59 // pred_region
          %384 = dma.done [#allocation4], 1024
        $region64: #{vqvae_forward.13} parent=59 // pred_fallthru
          _
        // Predicated region
        $region65: #{vqvae_forward.13} parent=59 // pred_check
          %p385 = pneg %p147
        $region66: #{vqvae_forward.13} parent=59 // pred_check_branch
          %387 = sbr.rel (%p385) target = $region68
        $region67: #{vqvae_forward.13} parent=59 // pred_region
          %389 = dma.done [#allocation6], 2048
        $region68: #{vqvae_forward.13} parent=59 // pred_fallthru
          _
        // Predicated region
        $region69: #{vqvae_forward.13} parent=59 // pred_check
          %p390 = pneg %p189
        $region70: #{vqvae_forward.13} parent=59 // pred_check_branch
          %392 = sbr.rel (%p390) target = $region72
        $region71: #{vqvae_forward.13} parent=59 // pred_region
          %394 = dma.done [#allocation6], 1024
        $region72: #{vqvae_forward.13} parent=59 // pred_fallthru
          _
        %p395 = scmp.lt.s32.totalorder %s27, 1
        %s396 = scalar_select %p395, %s27, 1
        %p397 = scmp.lt.s32.totalorder %s28, 0
        %s398 = scalar_select %p397, %s28, 0
        %s399 = sadd.s32 %s398, %s396
        %s400 = smul.addr %s399, 8
        %s401 = scalar_lea.vmem %s0, %s400
        %p402 = pneg %p58
        %p403 = pneg %p55
        %p404 = scmp.lt.s32.totalorder %s27, 1
        %s405 = scalar_select %p404, %s27, 1
        %s406 = smul.addr %s405, 8
        %s407 = scalar_lea.vmem %s1, %s406
        %p408 = pneg %p84
        %p409 = pneg %p81
        %p410 = pneg %p105
        %p411 = pneg %p102
        %p412 = pneg %p126
        %p413 = pneg %p123
        %p414 = pneg %p147
        %p415 = pneg %p144
        %p416 = pneg %p168
        %p417 = pneg %p165
        %p418 = pneg %p189
        %p419 = pneg %p186
        %p420 = pneg %p210
        %p421 = pneg %p207
        %p422 = pneg %p231
        %p423 = pneg %p228
        %p424 = pneg %p252
        %p425 = pneg %p249
        %p426 = pneg %p280
        %p427 = pneg %p277
        %p428 = scmp.lt.s32.totalorder %s27, 1
        %s429 = scalar_select %p428, %s27, 1
        %p430 = scmp.lt.s32.totalorder %s28, 0
        %s431 = scalar_select %p430, %s28, 0
        %s432 = sadd.s32 %s431, %s429
        %s433 = smul.addr %s432, 8
        %s434 = scalar_lea.vmem %s10, %s433
        %p435 = scmp.lt.s32.totalorder %s27, 1
        %s436 = scalar_select %p435, %s27, 1
        %p437 = scmp.lt.s32.totalorder %s28, 0
        %s438 = scalar_select %p437, %s28, 0
        %s439 = sadd.s32 %s438, %s436
        %s440 = smul.addr %s439, 8
        %s441 = scalar_lea.vmem %s0, %s440
        %p442 = scmp.lt.s32.totalorder %s27, 1
        %s443 = scalar_select %p442, %s27, 1
        %s444 = smul.addr %s443, 8
        %s445 = scalar_lea.vmem %s1, %s444
        %p446 = scmp.lt.s32.totalorder %s27, 1
        %s447 = scalar_select %p446, %s27, 1
        %p448 = scmp.lt.s32.totalorder %s28, 0
        %s449 = scalar_select %p448, %s28, 0
        %s450 = sadd.s32 %s449, %s447
        %s451 = smul.addr %s450, 8
        %s452 = scalar_lea.vmem %s10, %s451
        %v454 = vld [vmem:[%s441] sm:$0xff]
        %v455 = vld [vmem:[%s445] sm:$0xff]
        %v456 = vpack.c.bf16 %v454, %v454
        %v457 = vld [vmem:[#allocation3] sm:$0xf]
        %v458 = vld [vmem:[#allocation3 + $0x4] sm:$0xf]
        %v459 = vld [vmem:[#allocation3 + $0x8] sm:$0xf]
        %v460 = vld [vmem:[#allocation3 + $0xc] sm:$0xf]
        %v461 = vld [vmem:[#allocation3 + $0x10] sm:$0xf]
        %v462 = vld [vmem:[#allocation3 + $0x14] sm:$0xf]
        %v463 = vld [vmem:[#allocation3 + $0x18] sm:$0xf]
        %v464 = vld [vmem:[#allocation3 + $0x1c] sm:$0xf]
        %v465 = vld [vmem:[#allocation3 + $0x20] sm:$0xf]
        %v466 = vld [vmem:[#allocation3 + $0x24] sm:$0xf]
        %v467 = vld [vmem:[#allocation3 + $0x28] sm:$0xf]
        %v468 = vld [vmem:[#allocation3 + $0x2c] sm:$0xf]
        %v469 = vld [vmem:[#allocation3 + $0x30] sm:$0xf]
        %v470 = vld [vmem:[#allocation3 + $0x34] sm:$0xf]
        %v471 = vld [vmem:[#allocation3 + $0x38] sm:$0xf]
        %v472 = vld [vmem:[#allocation3 + $0x3c] sm:$0xf]
        %v473 = vld [vmem:[%s3] sm:$0x1]
        %v475 = vperm.slane %v473, 0
        %v493 = vunpack.c.l.b16 %v457
        %v494 = vunpack.c.l.b16 %v458
        %v495 = vunpack.c.l.b16 %v459
        %v496 = vunpack.c.l.b16 %v460
        %v497 = vunpack.c.l.b16 %v461
        %v498 = vunpack.c.l.b16 %v462
        %v499 = vunpack.c.l.b16 %v463
        %v500 = vunpack.c.l.b16 %v464
        %v501 = vunpack.c.l.b16 %v465
        %v502 = vunpack.c.l.b16 %v466
        %v503 = vunpack.c.l.b16 %v467
        %v504 = vunpack.c.l.b16 %v468
        %v505 = vunpack.c.l.b16 %v469
        %v506 = vunpack.c.l.b16 %v470
        %v507 = vunpack.c.l.b16 %v471
        %v508 = vunpack.c.l.b16 %v472
        %v509 = vpack.c.b16 %v494, %v493
        %v510 = vpack.c.b16 %v496, %v495
        %v511 = vpack.c.b16 %v498, %v497
        %v512 = vpack.c.b16 %v500, %v499
        %v513 = vpack.c.b16 %v502, %v501
        %v514 = vpack.c.b16 %v504, %v503
        %v515 = vpack.c.b16 %v506, %v505
        %v516 = vpack.c.b16 %v508, %v507
        %525 = vmatpush.bf16.msra.mxu0 %v516
        %526 = vmatpush.bf16.msra.mxu0 %v515
        %527 = vmatpush.bf16.msra.mxu0 %v514
        %528 = vmatpush.bf16.msra.mxu0 %v513
        %529 = vmatpush.bf16.msra.mxu0 %v512
        %530 = vmatpush.bf16.msra.mxu0 %v511
        %531 = vmatpush.bf16.msra.mxu0 %v510
        %532 = vmatpush.bf16.msra.mxu0 %v509
        %533 = vmatmul.bf16.gmra.mxu0 %v456
        %v534 = vpop.f32.mrf.mxu0
        %v535 = vadd.f32 %v475, %v534
        %v536 = vpop.f32.mrf.mxu0
        %537 = vdwg.mxu0
        %v538 = vpack.c.bf16 %v455, %v455
        %v539 = vld [vmem:[#allocation5] sm:$0xff]
        %v540 = vld [vmem:[#allocation5 + $0x8] sm:$0xff]
        %v541 = vld [vmem:[#allocation5 + $0x10] sm:$0xff]
        %v542 = vld [vmem:[#allocation5 + $0x18] sm:$0xff]
        %v543 = vld [vmem:[#allocation5 + $0x20] sm:$0xff]
        %v544 = vld [vmem:[#allocation5 + $0x28] sm:$0xff]
        %v545 = vld [vmem:[#allocation5 + $0x30] sm:$0xff]
        %v546 = vld [vmem:[#allocation5 + $0x38] sm:$0xff]
        %v547 = vld [vmem:[#allocation5 + $0x40] sm:$0xff]
        %v548 = vld [vmem:[#allocation5 + $0x48] sm:$0xff]
        %v549 = vld [vmem:[#allocation5 + $0x50] sm:$0xff]
        %v550 = vld [vmem:[#allocation5 + $0x58] sm:$0xff]
        %v551 = vld [vmem:[#allocation5 + $0x60] sm:$0xff]
        %v552 = vld [vmem:[#allocation5 + $0x68] sm:$0xff]
        %v553 = vld [vmem:[#allocation5 + $0x70] sm:$0xff]
        %v554 = vld [vmem:[#allocation5 + $0x78] sm:$0xff]
        %v555 = vld [vmem:[%s5] sm:$0x3]
        %v557 = vperm.slane %v555, 0
        %v558 = vperm.slane %v555, 1
        %v577 = vunpack.c.l.b16 %v539
        %v578 = vunpack.c.h.b16 %v539
        %v579 = vunpack.c.l.b16 %v540
        %v580 = vunpack.c.h.b16 %v540
        %v581 = vunpack.c.l.b16 %v541
        %v582 = vunpack.c.h.b16 %v541
        %v583 = vunpack.c.l.b16 %v542
        %v584 = vunpack.c.h.b16 %v542
        %v585 = vunpack.c.l.b16 %v543
        %v586 = vunpack.c.h.b16 %v543
        %v587 = vunpack.c.l.b16 %v544
        %v588 = vunpack.c.h.b16 %v544
        %v589 = vunpack.c.l.b16 %v545
        %v590 = vunpack.c.h.b16 %v545
        %v591 = vunpack.c.l.b16 %v546
        %v592 = vunpack.c.h.b16 %v546
        %v593 = vunpack.c.l.b16 %v547
        %v594 = vunpack.c.h.b16 %v547
        %v595 = vunpack.c.l.b16 %v548
        %v596 = vunpack.c.h.b16 %v548
        %v597 = vunpack.c.l.b16 %v549
        %v598 = vunpack.c.h.b16 %v549
        %v599 = vunpack.c.l.b16 %v550
        %v600 = vunpack.c.h.b16 %v550
        %v601 = vunpack.c.l.b16 %v551
        %v602 = vunpack.c.h.b16 %v551
        %v603 = vunpack.c.l.b16 %v552
        %v604 = vunpack.c.h.b16 %v552
        %v605 = vunpack.c.l.b16 %v553
        %v606 = vunpack.c.h.b16 %v553
        %v607 = vunpack.c.l.b16 %v554
        %v608 = vunpack.c.h.b16 %v554
        %v609 = vpack.c.b16 %v579, %v577
        %v610 = vpack.c.b16 %v580, %v578
        %v611 = vpack.c.b16 %v583, %v581
        %v612 = vpack.c.b16 %v584, %v582
        %v613 = vpack.c.b16 %v587, %v585
        %v614 = vpack.c.b16 %v588, %v586
        %v615 = vpack.c.b16 %v591, %v589
        %v616 = vpack.c.b16 %v592, %v590
        %v617 = vpack.c.b16 %v595, %v593
        %v618 = vpack.c.b16 %v596, %v594
        %v619 = vpack.c.b16 %v599, %v597
        %v620 = vpack.c.b16 %v600, %v598
        %v621 = vpack.c.b16 %v603, %v601
        %v622 = vpack.c.b16 %v604, %v602
        %v623 = vpack.c.b16 %v607, %v605
        %v624 = vpack.c.b16 %v608, %v606
        %641 = vmatpush.bf16.msra.mxu0 %v623
        %642 = vmatpush.bf16.msra.mxu0 %v621
        %643 = vmatpush.bf16.msra.mxu0 %v619
        %644 = vmatpush.bf16.msra.mxu0 %v617
        %645 = vmatpush.bf16.msra.mxu0 %v615
        %646 = vmatpush.bf16.msra.mxu0 %v613
        %647 = vmatpush.bf16.msra.mxu0 %v611
        %648 = vmatpush.bf16.msra.mxu0 %v609
        %649 = vmatmul.bf16.gmra.mxu0 %v538
        %v650 = vpop.f32.mrf.mxu0
        %v651 = vadd.f32 %v557, %v650
        %v652 = vpop.f32.mrf.mxu0
        %653 = vdwg.mxu0
        %654 = vmatpush.bf16.msra.mxu0 %v624
        %655 = vmatpush.bf16.msra.mxu0 %v622
        %656 = vmatpush.bf16.msra.mxu0 %v620
        %657 = vmatpush.bf16.msra.mxu0 %v618
        %658 = vmatpush.bf16.msra.mxu0 %v616
        %659 = vmatpush.bf16.msra.mxu0 %v614
        %660 = vmatpush.bf16.msra.mxu0 %v612
        %661 = vmatpush.bf16.msra.mxu0 %v610
        %662 = vmatmul.bf16.gmra.mxu0 %v538
        %v663 = vpop.f32.mrf.mxu0
        %v664 = vadd.f32 %v558, %v663
        %v665 = vpop.f32.mrf.mxu0
        %666 = vdwg.mxu0
        %v667 = vpack.c.bf16 %v535, %v535
        %v668 = vpack.c.bf16 %v651, %v651
        %v669 = vpack.c.bf16 %v664, %v664
        %670 = vst [vmem:[#allocation2] sm:$0xff] 0.0
        %vm671 = vcmask 64512
        %v673 = vsel %vm671, %v667, 0
        %v676 = vsel %vm671, %v668, 0
        %678 = vmatpush.bf16.xpose.msra.mxu0 0
        %679 = vmatpush.bf16.xpose.msra.mxu0 0
        %680 = vmatpush.bf16.xpose.msra.mxu0 0
        %681 = vmatpush.bf16.xpose.msra.mxu0 0
        %682 = vmatpush.bf16.xpose.msra.mxu0 0
        %683 = vmatpush.bf16.xpose.msra.mxu0 0
        %684 = vmatpush.bf16.xpose.msra.mxu0 0
        %685 = vmatpush.bf16.xpose.msra.mxu0 %v676
        %686 = vmatmul.bf16.gmra.mxu0 %v673
        %v687 = vpop.f32.mrf.mxu0
        %v688 = vadd.f32 0.0, %v687
        %v689 = vpop.f32.mrf.mxu0
        %690 = vdwg.mxu0
        %v691 = vsel %vm671, %v688, -inf
        %692 = vmax.xlane.f32.xlu0 %v691
        %v693 = vpop.xlane.xlu0 %692
        %v694 = vsub.f32 %v688, %v693
        %v695 = vmul.f32 %v694, 1.442695
        %v696 = vpow.pop %v695
        %v697 = vsel %vm671, %v696, 0.0
        %698 = vadd.xlane.f32.xlu0 %v697
        %v699 = vpop.xlane.xlu0 %698
        %v700 = vrcp.pop %v699
        %v701 = vmul.f32 %v699, %v700
        %v702 = vsub.f32 1.0, %v701
        %v703 = vmul.f32 %v700, %v702
        %v704 = vadd.f32 %v700, %v703
        %vm705 = vweird.f32 %v699
        %vm706 = vweird.f32 %v700
        %vm707 = vmor %vm705, %vm706
        %v708 = vsel %vm707, %v700, %v704
        %v709 = vand.u32 2147483647, %v699
        %vm710 = vcmp.eq.f32.partialorder %v709, 8.507059e+37
        %v711 = vand.u32 %v699, 2147483648
        %v712 = vor.u32 1.1754944e-38, %v711
        %v713 = vsel %vm710, %v712, %v708
        %v714 = vmul.f32 %v696, %v713
        %v715 = vpack.c.bf16 %v714, %v714
        %v717 = vsel %vm671, %v715, 0
        %vm719 = vcmask 1043456
        %v721 = vsel %vm719, %v669, 0
        %723 = vmatpush.bf16.msra.mxu0 0
        %724 = vmatpush.bf16.msra.mxu0 0
        %725 = vmatpush.bf16.msra.mxu0 0
        %726 = vmatpush.bf16.msra.mxu0 0
        %727 = vmatpush.bf16.msra.mxu0 0
        %728 = vmatpush.bf16.msra.mxu0 0
        %729 = vmatpush.bf16.msra.mxu0 0
        %730 = vmatpush.bf16.msra.mxu0 %v721
        %731 = vmatmul.bf16.gmra.mxu0 %v717
        %v732 = vpop.f32.mrf.mxu0
        %v733 = vadd.f32 0.0, %v732
        %v734 = vpop.f32.mrf.mxu0
        %735 = vdwg.mxu0
        %736 = vst.msk [vmem:[#allocation2] sm:$0xff] %vm671, %v733
        %v738 = vunpack.c.l.b16 %v667
        %v739 = vpack.c.b16 %v738, %v738
        %740 = vrot.lane.b32.xlu0 %v739, 120
        %v741 = vpop.permute.xlu0 %740
        %v743 = vunpack.c.l.b16 %v668
        %v744 = vpack.c.b16 %v743, %v743
        %745 = vrot.lane.b32.xlu0 %v744, 120
        %v746 = vpop.permute.xlu0 %745
        %v748 = vsel %vm671, %v741, 0
        %v751 = vsel %vm671, %v746, 0
        %753 = vmatpush.bf16.xpose.msra.mxu0 0
        %754 = vmatpush.bf16.xpose.msra.mxu0 0
        %755 = vmatpush.bf16.xpose.msra.mxu0 0
        %756 = vmatpush.bf16.xpose.msra.mxu0 0
        %757 = vmatpush.bf16.xpose.msra.mxu0 0
        %758 = vmatpush.bf16.xpose.msra.mxu0 0
        %759 = vmatpush.bf16.xpose.msra.mxu0 0
        %760 = vmatpush.bf16.xpose.msra.mxu0 %v751
        %761 = vmatmul.bf16.gmra.mxu0 %v748
        %v762 = vpop.f32.mrf.mxu0
        %v763 = vadd.f32 0.0, %v762
        %v764 = vpop.f32.mrf.mxu0
        %765 = vdwg.mxu0
        %v766 = vsel %vm671, %v763, -inf
        %767 = vmax.xlane.f32.xlu0 %v766
        %v768 = vpop.xlane.xlu0 %767
        %v769 = vsub.f32 %v763, %v768
        %v770 = vmul.f32 %v769, 1.442695
        %v771 = vpow.pop %v770
        %v772 = vsel %vm671, %v771, 0.0
        %773 = vadd.xlane.f32.xlu0 %v772
        %v774 = vpop.xlane.xlu0 %773
        %v775 = vrcp.pop %v774
        %v776 = vmul.f32 %v774, %v775
        %v777 = vsub.f32 1.0, %v776
        %v778 = vmul.f32 %v775, %v777
        %v779 = vadd.f32 %v775, %v778
        %vm780 = vweird.f32 %v774
        %vm781 = vweird.f32 %v775
        %vm782 = vmor %vm780, %vm781
        %v783 = vsel %vm782, %v775, %v779
        %v784 = vand.u32 2147483647, %v774
        %vm785 = vcmp.eq.f32.partialorder %v784, 8.507059e+37
        %v786 = vand.u32 %v774, 2147483648
        %v787 = vor.u32 1.1754944e-38, %v786
        %v788 = vsel %vm785, %v787, %v783
        %v789 = vmul.f32 %v771, %v788
        %v790 = vpack.c.bf16 %v789, %v789
        %v792 = vunpack.c.l.b16 %v669
        %v793 = vpack.c.b16 %v792, %v792
        %794 = vrot.lane.b32.xlu0 %v793, 120
        %v795 = vpop.permute.xlu0 %794
        %v797 = vsel %vm671, %v790, 0
        %v800 = vsel %vm719, %v795, 0
        %802 = vmatpush.bf16.msra.mxu0 0
        %803 = vmatpush.bf16.msra.mxu0 0
        %804 = vmatpush.bf16.msra.mxu0 0
        %805 = vmatpush.bf16.msra.mxu0 0
        %806 = vmatpush.bf16.msra.mxu0 0
        %807 = vmatpush.bf16.msra.mxu0 0
        %808 = vmatpush.bf16.msra.mxu0 0
        %809 = vmatpush.bf16.msra.mxu0 %v800
        %810 = vmatmul.bf16.gmra.mxu0 %v797
        %v811 = vpop.f32.mrf.mxu0
        %v812 = vadd.f32 0.0, %v811
        %v813 = vpop.f32.mrf.mxu0
        %814 = vdwg.mxu0
        %816 = vrot.lane.b32.xlu0 %v812, 8
        %v817 = vpop.permute.xlu0 %816
        %vm819 = vcmask 130112
        %820 = vst.msk [vmem:[#allocation2] sm:$0xff] %vm819, %v817
        %v821 = vld [vmem:[#allocation2] sm:$0xff]
        %v822 = vpack.c.bf16 %v821, %v821
        %v823 = vld [vmem:[#allocation7] sm:$0xf]
        %v824 = vld [vmem:[#allocation7 + $0x4] sm:$0xf]
        %v825 = vld [vmem:[#allocation7 + $0x8] sm:$0xf]
        %v826 = vld [vmem:[#allocation7 + $0xc] sm:$0xf]
        %v827 = vld [vmem:[#allocation7 + $0x10] sm:$0xf]
        %v828 = vld [vmem:[#allocation7 + $0x14] sm:$0xf]
        %v829 = vld [vmem:[#allocation7 + $0x18] sm:$0xf]
        %v830 = vld [vmem:[#allocation7 + $0x1c] sm:$0xf]
        %v831 = vld [vmem:[#allocation7 + $0x20] sm:$0xf]
        %v832 = vld [vmem:[#allocation7 + $0x24] sm:$0xf]
        %v833 = vld [vmem:[#allocation7 + $0x28] sm:$0xf]
        %v834 = vld [vmem:[#allocation7 + $0x2c] sm:$0xf]
        %v835 = vld [vmem:[#allocation7 + $0x30] sm:$0xf]
        %v836 = vld [vmem:[#allocation7 + $0x34] sm:$0xf]
        %v837 = vld [vmem:[#allocation7 + $0x38] sm:$0xf]
        %v838 = vld [vmem:[#allocation7 + $0x3c] sm:$0xf]
        %v839 = vld [vmem:[%s7] sm:$0x1]
        %v841 = vperm.slane %v839, 0
        %v859 = vunpack.c.l.b16 %v823
        %v860 = vunpack.c.l.b16 %v824
        %v861 = vunpack.c.l.b16 %v825
        %v862 = vunpack.c.l.b16 %v826
        %v863 = vunpack.c.l.b16 %v827
        %v864 = vunpack.c.l.b16 %v828
        %v865 = vunpack.c.l.b16 %v829
        %v866 = vunpack.c.l.b16 %v830
        %v867 = vunpack.c.l.b16 %v831
        %v868 = vunpack.c.l.b16 %v832
        %v869 = vunpack.c.l.b16 %v833
        %v870 = vunpack.c.l.b16 %v834
        %v871 = vunpack.c.l.b16 %v835
        %v872 = vunpack.c.l.b16 %v836
        %v873 = vunpack.c.l.b16 %v837
        %v874 = vunpack.c.l.b16 %v838
        %v875 = vpack.c.b16 %v860, %v859
        %v876 = vpack.c.b16 %v862, %v861
        %v877 = vpack.c.b16 %v864, %v863
        %v878 = vpack.c.b16 %v866, %v865
        %v879 = vpack.c.b16 %v868, %v867
        %v880 = vpack.c.b16 %v870, %v869
        %v881 = vpack.c.b16 %v872, %v871
        %v882 = vpack.c.b16 %v874, %v873
        %891 = vmatpush.bf16.msra.mxu0 %v882
        %892 = vmatpush.bf16.msra.mxu0 %v881
        %893 = vmatpush.bf16.msra.mxu0 %v880
        %894 = vmatpush.bf16.msra.mxu0 %v879
        %895 = vmatpush.bf16.msra.mxu0 %v878
        %896 = vmatpush.bf16.msra.mxu0 %v877
        %897 = vmatpush.bf16.msra.mxu0 %v876
        %898 = vmatpush.bf16.msra.mxu0 %v875
        %899 = vmatmul.bf16.gmra.mxu0 %v822
        %v900 = vpop.f32.mrf.mxu0
        %v901 = vadd.f32 %v841, %v900
        %v902 = vpop.f32.mrf.mxu0
        %903 = vdwg.mxu0
        %v904 = vadd.f32 %v901, %v454
        %v905 = vld [vmem:[%s8] sm:$0x1]
        %v906 = vld [vmem:[%s9] sm:$0x1]
        %907 = vadd.xlane.f32.xlu0 %v904
        %v908 = vpop.xlane.xlu0 %907
        %v909 = vmul.f32 %v908, 0.0625
        %v910 = vsub.f32 %v904, %v909
        %v911 = vlaneseq
        %v912 = vand.u32 %v911, 127
        %vm913 = vcmp.lt.s32.totalorder %v912, 16
        %v914 = vsel %vm913, 1, 0
        %v915 = vcvt.s32.f32 %v914
        %v916 = vmul.f32 %v910, %v915
        %v917 = vmul.f32 %v916, %v916
        %918 = vadd.xlane.f32.xlu0 %v917
        %v919 = vpop.xlane.xlu0 %918
        %v920 = vmul.f32 %v919, 0.0625
        %v921 = vadd.f32 %v920, 1e-05
        %v922 = vrsqrt.pop %v921
        %v923 = vmul.f32 %v922, %v921
        %v924 = vmul.f32 %v923, %v922
        %v925 = vmul.f32 0.5, %v924
        %v926 = vsub.f32 1.5, %v925
        %v927 = vmul.f32 %v922, %v926
        %vm928 = vweird.f32 %v921
        %vm929 = vweird.f32 %v922
        %vm930 = vmor %vm928, %vm929
        %v931 = vsel %vm930, %v922, %v927
        %v932 = vmul.f32 %v916, %v931
        %v934 = vperm.slane %v905, 0
        %v936 = vmul.f32 %v932, %v934
        %v938 = vperm.slane %v906, 0
        %v940 = vadd.f32 %v936, %v938
        %941 = vst [vmem:[%s452] sm:$0xff] %v940
        %p942 = scmp.lt.s32.totalorder %s27, 1
        %s943 = scalar_select %p942, %s27, 1
        %p944 = scmp.lt.s32.totalorder %s28, 0
        %s945 = scalar_select %p944, %s28, 0
        %s946 = sadd.s32 %s945, %s943
        %s947 = smul.addr %s946, 8
        %s948 = scalar_lea.vmem %s10, %s947
        // Predicated region
        $region73: #{vqvae_forward.13} parent=59 // pred_check
          %p949 = pneg %p277
        $region74: #{vqvae_forward.13} parent=59 // pred_check_branch
          %951 = sbr.rel (%p949) target = $region76
        $region75: #{vqvae_forward.13} parent=59 // pred_region
          _
        $region76: #{vqvae_forward.13} parent=59 // pred_fallthru
          _
      $region60: #{vqvae_forward.13} parent=5 // pred_fallthru
        _
      %p952 = scmp.le.s32.totalorder 2, %s18
      // Predicated region
      $region77: #{vqvae_forward.13} parent=5 // pred_check
        %p953 = pneg %p952
      $region78: #{vqvae_forward.13} parent=5 // pred_check_branch
        %955 = sbr.rel (%p953) target = $region80
      $region79: #{vqvae_forward.13} parent=5 // pred_region
        %s956 = ssub.s32 %s18, 2
        // Predicated region
        $region81: #{vqvae_forward.13} parent=79 // pred_check
          %p957 = pneg %p283
        $region82: #{vqvae_forward.13} parent=79 // pred_check_branch
          %959 = sbr.rel (%p957) target = $region84
        $region83: #{vqvae_forward.13} parent=79 // pred_region
          %p960 = scmp.lt.s32.totalorder %s29, 1
          %s961 = scalar_select %p960, %s29, 1
          %p962 = scmp.lt.s32.totalorder %s30, 0
          %s963 = scalar_select %p962, %s30, 0
          %s964 = sadd.s32 %s963, %s961
          %s965 = smul.addr %s964, 8
          %s966 = scalar_lea.vmem %s10, %s965
        $region84: #{vqvae_forward.13} parent=79 // pred_fallthru
          _
      $region80: #{vqvae_forward.13} parent=5 // pred_fallthru
        _
    $region6: #{vqvae_forward.13} parent=1 // loop_footer
      %s22 = sadd.s32 1, %s18
    $region7: #{vqvae_forward.13} parent=1 // loop_footer_branch
      %17 = sbr.rel target = $region3
    $region8: #{vqvae_forward.13} parent=1 // loop_exit
      _
    %967 = vsyncpa [#allocation4], 1
    %s968 = scalar_lea.sflag [#allocation4], 1
    %969 = vsyncpa %s968, 1
    %970 = vsyncpa [#allocation6], 1

// kernel: vqvae_forward.15
$region0: #{vqvae_forward.15}
  #allocation0 [shape = 'u32[]', space=smem, size = 0x4, offset = 0x4, fixed_abs, tag = 'smem constant byte address 0x4 - core index']
  #allocation1 [shape = 'u32[72,128]{1,0:T(1,128)}', space=vmem, size = 0x9000, scoped, tag = 'internal scratch']
  %s0 = inlined_call_operand.vmem [shape: f32[16,128], index: 0, kind: input, shape index: {}]
  %s1 = inlined_call_operand.vmem [shape: f32[32,128], index: 1, kind: input, shape index: {}]
  %s2 = inlined_call_operand.vmem [shape: f32[1,32], index: 2, kind: input, shape index: {}]
  %s3 = inlined_call_operand.vmem [shape: f32[16,128], index: 3, kind: output, shape index: {0}]
  %s4 = inlined_call_operand.hbm [shape: f32[1,1,1], index: 4, kind: output, shape index: {1}]
  %5 = xla_tuple %s3, %s4
  %s6 = sld [smem:[#allocation0]]
  $region30: #{vqvae_forward.15} parent=0
    _
  %s8 = ssub.s32 1, %s6
  %s9 = scalar_select 0, %s8, %s6
  $region1: #{vqvae_forward.15} parent=0
    #allocation2 [shape = 'u8[512]{0}', space=vmem, size = 0x400, scoped, tag = 'output window, operand 1, single buffered']
    #allocation3 [shape = 's32[1]{0}', space=sflag, size = 0x4, scoped, tag = 'scoped memory for vqvae_forward.15']
    %10 = vsyncpa [#allocation3], 0
    // Predicated region
    $region2: #{vqvae_forward.15} parent=1 // pred_check
      _
    $region3: #{vqvae_forward.15} parent=1 // pred_check_branch
      %12 = sbr.rel (0) target = $region5
    $region4: #{vqvae_forward.15} parent=1 // pred_region
      _
    $region5: #{vqvae_forward.15} parent=1 // pred_fallthru
      _
    // Predicated region
    $region6: #{vqvae_forward.15} parent=1 // pred_check
      _
    $region7: #{vqvae_forward.15} parent=1 // pred_check_branch
      %14 = sbr.rel (0) target = $region9
    $region8: #{vqvae_forward.15} parent=1 // pred_region
      _
    $region9: #{vqvae_forward.15} parent=1 // pred_fallthru
      _
    // Predicated region
    $region10: #{vqvae_forward.15} parent=1 // pred_check
      _
    $region11: #{vqvae_forward.15} parent=1 // pred_check_branch
      %16 = sbr.rel (0) target = $region13
    $region12: #{vqvae_forward.15} parent=1 // pred_region
      _
    $region13: #{vqvae_forward.15} parent=1 // pred_fallthru
      _
    %v17 = vld [vmem:[%s0] sm:$0xff]
    %v18 = vld [vmem:[%s0 + $0x8] sm:$0xff]
    %v19 = vld [vmem:[%s1] sm:$0xff]
    %v20 = vld [vmem:[%s1 + $0x8] sm:$0xff]
    %v21 = vld [vmem:[%s1 + $0x10] sm:$0xff]
    %v22 = vld [vmem:[%s1 + $0x18] sm:$0xff]
    %v23 = vmul.f32 %v17, %v17
    %v24 = vmul.f32 %v18, %v18
    %25 = vadd.xlane.f32.xlu0 %v23
    %v26 = vpop.xlane.xlu0 %25
    %27 = vadd.xlane.f32.xlu0 %v24
    %v28 = vpop.xlane.xlu0 %27
    %29 = vmatpush.xpose.msra.mxu0 0.0
    %30 = vmatpush.xpose.msra.mxu0 0.0
    %31 = vmatpush.xpose.msra.mxu0 0.0
    %32 = vmatpush.xpose.msra.mxu0 0.0
    %33 = vmatpush.xpose.msra.mxu0 0.0
    %34 = vmatpush.xpose.msra.mxu0 0.0
    %35 = vmatpush.xpose.msra.mxu0 0.0
    %36 = vmatpush.xpose.msra.mxu0 0.0
    %37 = vmatpush.xpose.msra.mxu0 0.0
    %38 = vmatpush.xpose.msra.mxu0 0.0
    %39 = vmatpush.xpose.msra.mxu0 0.0
    %40 = vmatpush.xpose.msra.mxu0 0.0
    %41 = vmatpush.xpose.msra.mxu0 %v22
    %42 = vmatpush.xpose.msra.mxu0 %v21
    %43 = vmatpush.xpose.msra.mxu0 %v20
    %44 = vmatpush.xpose.msra.mxu0 %v19
    %45 = vmatmul.f32.gmra.mxu0 %v17
    %v46 = vpop.f32.mrf.mxu0
    %v47 = vadd.f32 0.0, %v46
    %48 = vmatmul.f32.gmra.mxu0 %v18
    %v49 = vpop.f32.mrf.mxu0
    %v50 = vadd.f32 0.0, %v49
    %51 = vdwg.mxu0
    %v52 = vmul.f32 %v47, 2.0
    %v53 = vmul.f32 %v50, 2.0
    %v54 = vsub.f32 %v26, %v52
    %v55 = vsub.f32 %v28, %v53
    %v56 = vld [vmem:[%s2] sm:$0x1]
    %v58 = vperm.slane %v56, 0
    %v60 = vadd.f32 %v54, %v58
    %v61 = vadd.f32 %v55, %v58
    %vm62 = vcmask 261120
    %v63 = vsel %vm62, %v60, inf
    %64 = vmin.xlane.f32.xlu0 %v63
    %v65 = vpop.xlane.xlu0 %64
    %v66 = vsel %vm62, %v61, inf
    %67 = vmin.xlane.f32.xlu0 %v66
    %v68 = vpop.xlane.xlu0 %67
    %v69 = vlaneseq
    %v70 = vand.u32 %v69, 127
    %vm71 = vcmp.le.f32.partialorder %v60, %v65
    %vm72 = vcmp.le.f32.partialorder %v61, %v68
    %v73 = vsel %vm71, %v70, 32
    %v74 = vsel %vm72, %v70, 32
    %v75 = vsel %vm62, %v73, 2147483647
    %v76 = vand.u32 %v75, 65535
    %v77 = vshra.s32 %v75, 16
    %v78 = vcvt.s32.f32 %v76
    %v79 = vcvt.s32.f32 %v77
    %80 = vmin.xlane.f32.xlu0 %v79
    %v81 = vpop.xlane.xlu0 %80
    %vm82 = vcmp.eq.f32.partialorder %v79, %v81
    %v83 = vsel %vm82, %v78, inf
    %84 = vmin.xlane.f32.xlu0 %v83
    %v85 = vpop.xlane.xlu0 %84
    %v86 = vcvt.f32.s32 %v85
    %v87 = vcvt.f32.s32 %v81
    %v88 = vshll.u32 %v87, 16
    %v89 = vadd.s32 %v88, %v86
    %v90 = vsel %vm62, %v74, 2147483647
    %v91 = vand.u32 %v90, 65535
    %v92 = vshra.s32 %v90, 16
    %v93 = vcvt.s32.f32 %v91
    %v94 = vcvt.s32.f32 %v92
    %95 = vmin.xlane.f32.xlu0 %v94
    %v96 = vpop.xlane.xlu0 %95
    %vm97 = vcmp.eq.f32.partialorder %v94, %v96
    %v98 = vsel %vm97, %v93, inf
    %99 = vmin.xlane.f32.xlu0 %v98
    %v100 = vpop.xlane.xlu0 %99
    %v101 = vcvt.f32.s32 %v100
    %v102 = vcvt.f32.s32 %v96
    %v103 = vshll.u32 %v102, 16
    %v104 = vadd.s32 %v103, %v101
    %vm105 = vcmp.eq.s32.totalorder %v70, %v89
    %vm106 = vcmp.eq.s32.totalorder %v70, %v104
    %v107 = vsel %vm105, 1, 0
    %v108 = vsel %vm106, 1, 0
    %v109 = vcvt.s32.f32 %v107
    %v110 = vcvt.s32.f32 %v108
    %v112 = vsel %vm62, %v109, 0
    %v115 = vsel %vm62, %v110, 0
    %117 = vmatpush.msra.mxu0 0.0
    %118 = vmatpush.msra.mxu0 0.0
    %119 = vmatpush.msra.mxu0 0.0
    %120 = vmatpush.msra.mxu0 0.0
    %121 = vmatpush.msra.mxu0 0.0
    %122 = vmatpush.msra.mxu0 0.0
    %123 = vmatpush.msra.mxu0 0.0
    %124 = vmatpush.msra.mxu0 0.0
    %125 = vmatpush.msra.mxu0 0.0
    %126 = vmatpush.msra.mxu0 0.0
    %127 = vmatpush.msra.mxu0 0.0
    %128 = vmatpush.msra.mxu0 0.0
    %129 = vmatpush.msra.mxu0 %v22
    %130 = vmatpush.msra.mxu0 %v21
    %131 = vmatpush.msra.mxu0 %v20
    %132 = vmatpush.msra.mxu0 %v19
    %133 = vmatmul.f32.gmra.mxu0 %v112
    %v134 = vpop.f32.mrf.mxu0
    %v135 = vadd.f32 0.0, %v134
    %136 = vmatmul.f32.gmra.mxu0 %v115
    %v137 = vpop.f32.mrf.mxu0
    %v138 = vadd.f32 0.0, %v137
    %139 = vdwg.mxu0
    %140 = vst [vmem:[%s3] sm:$0xff] %v135
    %141 = vst [vmem:[%s3 + $0x8] sm:$0xff] %v138
    %s142 = smul.u32 0, 16
    %v143 = vlaneseq
    %v144 = vshrl.u32 %v143, 7
    %v145 = vadd.s32 %v144, 8
    %v146 = vstv %s142
    %v147 = vadd.s32 %v146, %v144
    %v148 = vadd.s32 %v146, %v145
    %vm149 = vcmp.lt.s32.totalorder %v147, 16
    %vm150 = vcmp.lt.s32.totalorder %v148, 16
    %v151 = vsel %vm149, 1, 0
    %v152 = vsel %vm150, 1, 0
    %v153 = vcvt.s32.f32 %v151
    %v154 = vcvt.s32.f32 %v152
    %v155 = vsub.f32 %v135, %v17
    %v156 = vsub.f32 %v138, %v18
    %v157 = vmul.f32 %v155, %v153
    %v158 = vmul.f32 %v156, %v154
    %v159 = vmul.f32 %v157, %v157
    %v160 = vmul.f32 %v158, %v158
    %v161 = vadd.f32 %v159, %v160
    %162 = vadd.xlane.f32.xlu0 %v161
    %v163 = vpop.xlane.xlu0 %162
    %v164 = vrot.slane %v163, 4
    %v165 = vadd.f32 %v163, %v164
    %v166 = vrot.slane %v165, 2
    %v167 = vadd.f32 %v165, %v166
    %v168 = vrot.slane %v167, 1
    %v169 = vadd.f32 %v167, %v168
    %s170 = vtos %v169
    %v171 = vstv %s170
    %v172 = vmul.f32 %v171, 0.0048828125
    %vm173 = vcmask 0
    %174 = vst.msk [vmem:[#allocation2] sm:$0x1] %vm173, %v172
    // Predicated region
    $region14: #{vqvae_forward.15} parent=1 // pred_check
      _
    $region15: #{vqvae_forward.15} parent=1 // pred_check_branch
      %176 = sbr.rel (0) target = $region17
    $region16: #{vqvae_forward.15} parent=1 // pred_region
      _
    $region17: #{vqvae_forward.15} parent=1 // pred_fallthru
      _
    // Predicated region
    $region18: #{vqvae_forward.15} parent=1 // pred_check
      _
    $region19: #{vqvae_forward.15} parent=1 // pred_check_branch
      %178 = sbr.rel (0) target = $region21
    $region20: #{vqvae_forward.15} parent=1 // pred_region
      %180 = vsyncadd [#allocation3], 0
      %s182 = sshll.u32 [#allocation2], 4
      %s183 = int_to_ptr.vmem [resolvable:$true] %s182
      %s184 = sshll.u32 %s4, 4
      %s185 = int_to_ptr.hbm [resolvable:$true] %s184
      %187 = dma.vmem_to_hbm [thread:$0]  %s183, 16, %s185, [#allocation3]
    $region21: #{vqvae_forward.15} parent=1 // pred_fallthru
      _
    // Predicated region
    $region22: #{vqvae_forward.15} parent=1 // pred_check
      _
    $region23: #{vqvae_forward.15} parent=1 // pred_check_branch
      %189 = sbr.rel (0) target = $region25
    $region24: #{vqvae_forward.15} parent=1 // pred_region
      _
    $region25: #{vqvae_forward.15} parent=1 // pred_fallthru
      _
    // Predicated region
    $region26: #{vqvae_forward.15} parent=1 // pred_check
      _
    $region27: #{vqvae_forward.15} parent=1 // pred_check_branch
      %191 = sbr.rel (0) target = $region29
    $region28: #{vqvae_forward.15} parent=1 // pred_region
      %193 = dma.done [#allocation3], 16
    $region29: #{vqvae_forward.15} parent=1 // pred_fallthru
      _
    %194 = vsyncpa [#allocation3], 1

// kernel: vqvae_forward.19
$region0: #{vqvae_forward.19}
  #allocation0 [shape = 'u32[]', space=smem, size = 0x4, offset = 0x4, fixed_abs, tag = 'smem constant byte address 0x4 - core index']
  #allocation1 [shape = 'u32[72,128]{1,0:T(1,128)}', space=vmem, size = 0x9000, scoped, tag = 'internal scratch']
  #allocation2 [shape = 'f32[8,128]{1,0:T(8,128)}', space=vmem, size = 0x1000, scoped, tag = 'scratch operand']
  %s0 = inlined_call_operand.vmem [shape: f32[2,8,128], index: 0, kind: input, shape index: {}, may-alias: {0,1}]
  %s1 = inlined_call_operand.vmem [shape: f32[2,8,128], index: 1, kind: input, shape index: {}, may-alias: {0,1}]
  %s2 = inlined_call_operand.hbm [shape: bf16[128,128], index: 2, kind: input, shape index: {}]
  %s3 = inlined_call_operand.vmem [shape: f32[1,128], index: 3, kind: input, shape index: {}]
  %s4 = inlined_call_operand.hbm [shape: bf16[128,256], index: 4, kind: input, shape index: {}]
  %s5 = inlined_call_operand.vmem [shape: f32[1,256], index: 5, kind: input, shape index: {}]
  %s6 = inlined_call_operand.hbm [shape: bf16[128,128], index: 6, kind: input, shape index: {}]
  %s7 = inlined_call_operand.vmem [shape: f32[1,128], index: 7, kind: input, shape index: {}]
  %s8 = inlined_call_operand.hbm [shape: f32[1,128], index: 8, kind: input, shape index: {}]
  %s9 = inlined_call_operand.hbm [shape: f32[1,128], index: 9, kind: input, shape index: {}]
  %s10 = inlined_call_operand.vmem [shape: f32[2,8,128], index: 10, kind: output, shape index: {}]
  %s11 = sld [smem:[#allocation0]]
  $region93: #{vqvae_forward.19} parent=0
    _
  %s13 = ssub.s32 1, %s11
  %s14 = scalar_select 0, %s13, %s11
  $region1: #{vqvae_forward.19} parent=0
    #allocation3 [shape = 'u8[32768]{0}', space=vmem, size = 0x8000, scoped, tag = 'input window, operand 2, single buffered']
    #allocation4 [shape = 's32[2]{0}', space=sflag, size = 0x8, scoped, tag = 'scoped memory for vqvae_forward.19']
    #allocation5 [shape = 'u8[65536]{0}', space=vmem, size = 0x10000, scoped, tag = 'input window, operand 4, single buffered']
    #allocation6 [shape = 's32[1]{0}', space=sflag, size = 0x4, scoped, tag = 'scoped memory for vqvae_forward.19']
    #allocation7 [shape = 'u8[32768]{0}', space=vmem, size = 0x8000, scoped, tag = 'input window, operand 6, single buffered']
    #allocation8 [shape = 'u8[512]{0}', space=vmem, size = 0x400, scoped, tag = 'input window, operand 8, single buffered']
    #allocation9 [shape = 's32[1]{0}', space=sflag, size = 0x4, scoped, tag = 'scoped memory for vqvae_forward.19']
    #allocation10 [shape = 'u8[512]{0}', space=vmem, size = 0x400, scoped, tag = 'input window, operand 9, single buffered']
    %15 = vsyncpa [#allocation4], 0
    %16 = vsyncpa [#allocation6], 0
    %17 = vsyncpa [#allocation9], 0
    loop: start=0, step=1, limit=4
    $region2: #{vqvae_forward.19} parent=1 // loop_pre_header
      _
    $region3: #{vqvae_forward.19} parent=1 // loop_header
      %s19 = sphi 0, %s23
      %p20 = scmp.ge.s32.totalorder %s19, 4
      %s26 = sphi 0, %s38
      %s27 = sphi 0, %s34
      %s28 = sphi 0, %s26
      %s29 = sphi 0, %s27
      %s30 = sphi 0, %s28
      %s31 = sphi 0, %s29
      %s43 = sphi 0, %s45
      %s46 = sphi 0, %s43
      %s47 = sphi 0, %s46
      %s63 = sphi 0, %s47
      %s69 = sphi 0, %s71
      %s72 = sphi 0, %s69
      %s73 = sphi 0, %s72
      %s89 = sphi 0, %s73
      %s93 = sphi 0, %s93
      %s95 = sphi 0, %s93
      %s96 = sphi 0, %s95
      %s110 = sphi 0, %s96
      %s114 = sphi 0, %s114
      %s116 = sphi 0, %s114
      %s117 = sphi 0, %s116
      %s131 = sphi 0, %s117
      %s135 = sphi 0, %s135
      %s137 = sphi 0, %s135
      %s138 = sphi 0, %s137
      %s152 = sphi 0, %s138
      %s156 = sphi 0, %s156
      %s158 = sphi 0, %s156
      %s159 = sphi 0, %s158
      %s173 = sphi 0, %s159
      %s177 = sphi 0, %s177
      %s179 = sphi 0, %s177
      %s180 = sphi 0, %s179
      %s194 = sphi 0, %s180
      %s198 = sphi 0, %s198
      %s200 = sphi 0, %s198
      %s201 = sphi 0, %s200
      %s215 = sphi 0, %s201
      %s219 = sphi 0, %s219
      %s221 = sphi 0, %s219
      %s222 = sphi 0, %s221
      %s236 = sphi 0, %s222
      %s240 = sphi 0, %s240
      %s242 = sphi 0, %s240
      %s243 = sphi 0, %s242
      %s257 = sphi 0, %s243
      %s265 = sphi 0, %s267
      %s268 = sphi 0, %s265
      %s269 = sphi 0, %s268
      %s285 = sphi 0, %s269
    $region4: #{vqvae_forward.19} parent=1 // loop_header_branch
      %22 = sbr.rel (%p20) target = $region8
    $region5: #{vqvae_forward.19} parent=1 // loop_body
      %s24 = ssub.s32 %s19, 1
      %s25 = ssub.s32 %s19, 2
      %s32 = sadd.s32 1, %s27
      %p33 = scmp.ge.s32.totalorder %s32, 1
      %s34 = scalar_select %p33, 0, %s32
      %s35 = sadd.s32 1, %s26
      %s36 = scalar_select %p33, %s35, %s26
      %p37 = scmp.ge.s32.totalorder %s36, 2
      %s38 = scalar_select %p37, 0, %s36
      %s39 = ssub.s32 %s26, %s38
      %s40 = ssub.s32 %s27, %s34
      %s41 = sor.u32 %s39, %s40
      %p42 = scmp.eq.s32.totalorder %s41, 0
      %s44 = sadd.s32 %s43, 1
      %s45 = scalar_select %p42, %s43, %s44
      %p48 = pneg %p42
      %p49 = scmp.eq.s32.totalorder %s19, 1
      %p50 = por %p48, %p49
      %p51 = scmp.ne.s32.totalorder %s43, %s46
      %p52 = scmp.eq.s32.totalorder %s19, 0
      %p53 = por %p51, %p52
      %p54 = scmp.ne.s32.totalorder %s43, %s46
      %p55 = scmp.eq.s32.totalorder %s24, 1
      %p56 = por %p54, %p55
      %p57 = scmp.ne.s32.totalorder %s46, %s47
      %p58 = scmp.eq.s32.totalorder %s24, 0
      %p59 = por %p57, %p58
      %p60 = scmp.ne.s32.totalorder %s46, %s47
      %p61 = scmp.eq.s32.totalorder %s25, 1
      %p62 = por %p60, %p61
      %p64 = scmp.ne.s32.totalorder %s47, %s63
      %p65 = scmp.eq.s32.totalorder %s25, 0
      %p66 = por %p64, %p65
      %s67 = ssub.s32 %s26, %s38
      %p68 = scmp.eq.s32.totalorder %s67, 0
      %s70 = sadd.s32 %s69, 1
      %s71 = scalar_select %p68, %s69, %s70
      %p74 = pneg %p68
      %p75 = scmp.eq.s32.totalorder %s19, 1
      %p76 = por %p74, %p75
      %p77 = scmp.ne.s32.totalorder %s69, %s72
      %p78 = scmp.eq.s32.totalorder %s19, 0
      %p79 = por %p77, %p78
      %p80 = scmp.ne.s32.totalorder %s69, %s72
      %p81 = scmp.eq.s32.totalorder %s24, 1
      %p82 = por %p80, %p81
      %p83 = scmp.ne.s32.totalorder %s72, %s73
      %p84 = scmp.eq.s32.totalorder %s24, 0
      %p85 = por %p83, %p84
      %p86 = scmp.ne.s32.totalorder %s72, %s73
      %p87 = scmp.eq.s32.totalorder %s25, 1
      %p88 = por %p86, %p87
      %p90 = scmp.ne.s32.totalorder %s73, %s89
      %p91 = scmp.eq.s32.totalorder %s25, 0
      %p92 = por %p90, %p91
      %s94 = sadd.s32 %s93, 1
      %p97 = scmp.eq.s32.totalorder %s19, 1
      %p98 = scmp.ne.s32.totalorder %s93, %s95
      %p99 = scmp.eq.s32.totalorder %s19, 0
      %p100 = por %p98, %p99
      %p101 = scmp.ne.s32.totalorder %s93, %s95
      %p102 = scmp.eq.s32.totalorder %s24, 1
      %p103 = por %p101, %p102
      %p104 = scmp.ne.s32.totalorder %s95, %s96
      %p105 = scmp.eq.s32.totalorder %s24, 0
      %p106 = por %p104, %p105
      %p107 = scmp.ne.s32.totalorder %s95, %s96
      %p108 = scmp.eq.s32.totalorder %s25, 1
      %p109 = por %p107, %p108
      %p111 = scmp.ne.s32.totalorder %s96, %s110
      %p112 = scmp.eq.s32.totalorder %s25, 0
      %p113 = por %p111, %p112
      %s115 = sadd.s32 %s114, 1
      %p118 = scmp.eq.s32.totalorder %s19, 1
      %p119 = scmp.ne.s32.totalorder %s114, %s116
      %p120 = scmp.eq.s32.totalorder %s19, 0
      %p121 = por %p119, %p120
      %p122 = scmp.ne.s32.totalorder %s114, %s116
      %p123 = scmp.eq.s32.totalorder %s24, 1
      %p124 = por %p122, %p123
      %p125 = scmp.ne.s32.totalorder %s116, %s117
      %p126 = scmp.eq.s32.totalorder %s24, 0
      %p127 = por %p125, %p126
      %p128 = scmp.ne.s32.totalorder %s116, %s117
      %p129 = scmp.eq.s32.totalorder %s25, 1
      %p130 = por %p128, %p129
      %p132 = scmp.ne.s32.totalorder %s117, %s131
      %p133 = scmp.eq.s32.totalorder %s25, 0
      %p134 = por %p132, %p133
      %s136 = sadd.s32 %s135, 1
      %p139 = scmp.eq.s32.totalorder %s19, 1
      %p140 = scmp.ne.s32.totalorder %s135, %s137
      %p141 = scmp.eq.s32.totalorder %s19, 0
      %p142 = por %p140, %p141
      %p143 = scmp.ne.s32.totalorder %s135, %s137
      %p144 = scmp.eq.s32.totalorder %s24, 1
      %p145 = por %p143, %p144
      %p146 = scmp.ne.s32.totalorder %s137, %s138
      %p147 = scmp.eq.s32.totalorder %s24, 0
      %p148 = por %p146, %p147
      %p149 = scmp.ne.s32.totalorder %s137, %s138
      %p150 = scmp.eq.s32.totalorder %s25, 1
      %p151 = por %p149, %p150
      %p153 = scmp.ne.s32.totalorder %s138, %s152
      %p154 = scmp.eq.s32.totalorder %s25, 0
      %p155 = por %p153, %p154
      %s157 = sadd.s32 %s156, 1
      %p160 = scmp.eq.s32.totalorder %s19, 1
      %p161 = scmp.ne.s32.totalorder %s156, %s158
      %p162 = scmp.eq.s32.totalorder %s19, 0
      %p163 = por %p161, %p162
      %p164 = scmp.ne.s32.totalorder %s156, %s158
      %p165 = scmp.eq.s32.totalorder %s24, 1
      %p166 = por %p164, %p165
      %p167 = scmp.ne.s32.totalorder %s158, %s159
      %p168 = scmp.eq.s32.totalorder %s24, 0
      %p169 = por %p167, %p168
      %p170 = scmp.ne.s32.totalorder %s158, %s159
      %p171 = scmp.eq.s32.totalorder %s25, 1
      %p172 = por %p170, %p171
      %p174 = scmp.ne.s32.totalorder %s159, %s173
      %p175 = scmp.eq.s32.totalorder %s25, 0
      %p176 = por %p174, %p175
      %s178 = sadd.s32 %s177, 1
      %p181 = scmp.eq.s32.totalorder %s19, 1
      %p182 = scmp.ne.s32.totalorder %s177, %s179
      %p183 = scmp.eq.s32.totalorder %s19, 0
      %p184 = por %p182, %p183
      %p185 = scmp.ne.s32.totalorder %s177, %s179
      %p186 = scmp.eq.s32.totalorder %s24, 1
      %p187 = por %p185, %p186
      %p188 = scmp.ne.s32.totalorder %s179, %s180
      %p189 = scmp.eq.s32.totalorder %s24, 0
      %p190 = por %p188, %p189
      %p191 = scmp.ne.s32.totalorder %s179, %s180
      %p192 = scmp.eq.s32.totalorder %s25, 1
      %p193 = por %p191, %p192
      %p195 = scmp.ne.s32.totalorder %s180, %s194
      %p196 = scmp.eq.s32.totalorder %s25, 0
      %p197 = por %p195, %p196
      %s199 = sadd.s32 %s198, 1
      %p202 = scmp.eq.s32.totalorder %s19, 1
      %p203 = scmp.ne.s32.totalorder %s198, %s200
      %p204 = scmp.eq.s32.totalorder %s19, 0
      %p205 = por %p203, %p204
      %p206 = scmp.ne.s32.totalorder %s198, %s200
      %p207 = scmp.eq.s32.totalorder %s24, 1
      %p208 = por %p206, %p207
      %p209 = scmp.ne.s32.totalorder %s200, %s201
      %p210 = scmp.eq.s32.totalorder %s24, 0
      %p211 = por %p209, %p210
      %p212 = scmp.ne.s32.totalorder %s200, %s201
      %p213 = scmp.eq.s32.totalorder %s25, 1
      %p214 = por %p212, %p213
      %p216 = scmp.ne.s32.totalorder %s201, %s215
      %p217 = scmp.eq.s32.totalorder %s25, 0
      %p218 = por %p216, %p217
      %s220 = sadd.s32 %s219, 1
      %p223 = scmp.eq.s32.totalorder %s19, 1
      %p224 = scmp.ne.s32.totalorder %s219, %s221
      %p225 = scmp.eq.s32.totalorder %s19, 0
      %p226 = por %p224, %p225
      %p227 = scmp.ne.s32.totalorder %s219, %s221
      %p228 = scmp.eq.s32.totalorder %s24, 1
      %p229 = por %p227, %p228
      %p230 = scmp.ne.s32.totalorder %s221, %s222
      %p231 = scmp.eq.s32.totalorder %s24, 0
      %p232 = por %p230, %p231
      %p233 = scmp.ne.s32.totalorder %s221, %s222
      %p234 = scmp.eq.s32.totalorder %s25, 1
      %p235 = por %p233, %p234
      %p237 = scmp.ne.s32.totalorder %s222, %s236
      %p238 = scmp.eq.s32.totalorder %s25, 0
      %p239 = por %p237, %p238
      %s241 = sadd.s32 %s240, 1
      %p244 = scmp.eq.s32.totalorder %s19, 1
      %p245 = scmp.ne.s32.totalorder %s240, %s242
      %p246 = scmp.eq.s32.totalorder %s19, 0
      %p247 = por %p245, %p246
      %p248 = scmp.ne.s32.totalorder %s240, %s242
      %p249 = scmp.eq.s32.totalorder %s24, 1
      %p250 = por %p248, %p249
      %p251 = scmp.ne.s32.totalorder %s242, %s243
      %p252 = scmp.eq.s32.totalorder %s24, 0
      %p253 = por %p251, %p252
      %p254 = scmp.ne.s32.totalorder %s242, %s243
      %p255 = scmp.eq.s32.totalorder %s25, 1
      %p256 = por %p254, %p255
      %p258 = scmp.ne.s32.totalorder %s243, %s257
      %p259 = scmp.eq.s32.totalorder %s25, 0
      %p260 = por %p258, %p259
      %s261 = ssub.s32 %s26, %s38
      %s262 = ssub.s32 %s27, %s34
      %s263 = sor.u32 %s261, %s262
      %p264 = scmp.eq.s32.totalorder %s263, 0
      %s266 = sadd.s32 %s265, 1
      %s267 = scalar_select %p264, %s265, %s266
      %p270 = pneg %p264
      %p271 = scmp.eq.s32.totalorder %s19, 1
      %p272 = por %p270, %p271
      %p273 = scmp.ne.s32.totalorder %s265, %s268
      %p274 = scmp.eq.s32.totalorder %s19, 0
      %p275 = por %p273, %p274
      %p276 = scmp.ne.s32.totalorder %s265, %s268
      %p277 = scmp.eq.s32.totalorder %s24, 1
      %p278 = por %p276, %p277
      %p279 = scmp.ne.s32.totalorder %s268, %s269
      %p280 = scmp.eq.s32.totalorder %s24, 0
      %p281 = por %p279, %p280
      %p282 = scmp.ne.s32.totalorder %s268, %s269
      %p283 = scmp.eq.s32.totalorder %s25, 1
      %p284 = por %p282, %p283
      %p286 = scmp.ne.s32.totalorder %s269, %s285
      %p287 = scmp.eq.s32.totalorder %s25, 0
      %p288 = por %p286, %p287
      %p289 = scmp.le.s32.totalorder 1, %s19
      %p290 = scmp.lt.s32.totalorder %s19, 3
      %p291 = pnand %p289, %p290
      %p292 = pneg %p291
      // Predicated region
      $region9: #{vqvae_forward.19} parent=5 // pred_check
        _
      $region10: #{vqvae_forward.19} parent=5 // pred_check_branch
        %294 = sbr.rel (%p291) target = $region12
      $region11: #{vqvae_forward.19} parent=5 // pred_region
        %s295 = ssub.s32 %s19, 1
        // Predicated region
        $region13: #{vqvae_forward.19} parent=11 // pred_check
          %p296 = pneg %p106
        $region14: #{vqvae_forward.19} parent=11 // pred_check_branch
          %298 = sbr.rel (%p296) target = $region16
        $region15: #{vqvae_forward.19} parent=11 // pred_region
          %300 = vsyncadd [#allocation4], 0
          %s301 = sshll.u32 %s2, 4
          %s302 = int_to_ptr.hbm [resolvable:$true] %s301
          %s303 = sshll.u32 [#allocation3], 4
          %s304 = int_to_ptr.vmem [resolvable:$true] %s303
          %309 = dma.hbm_to_vmem [thread:$0]  %s302, 1024, %s304, [#allocation4], 64, 64, 4
        $region16: #{vqvae_forward.19} parent=11 // pred_fallthru
          _
        // Predicated region
        $region17: #{vqvae_forward.19} parent=11 // pred_check
          %p310 = pneg %p127
        $region18: #{vqvae_forward.19} parent=11 // pred_check_branch
          %312 = sbr.rel (%p310) target = $region20
        $region19: #{vqvae_forward.19} parent=11 // pred_region
          _
        $region20: #{vqvae_forward.19} parent=11 // pred_fallthru
          _
        // Predicated region
        $region21: #{vqvae_forward.19} parent=11 // pred_check
          %p313 = pneg %p148
        $region22: #{vqvae_forward.19} parent=11 // pred_check_branch
          %315 = sbr.rel (%p313) target = $region24
        $region23: #{vqvae_forward.19} parent=11 // pred_region
          %317 = vsyncadd [#allocation6], 0
          %s318 = sshll.u32 %s4, 4
          %s319 = int_to_ptr.hbm [resolvable:$true] %s318
          %s320 = sshll.u32 [#allocation5], 4
          %s321 = int_to_ptr.vmem [resolvable:$true] %s320
          %326 = dma.hbm_to_vmem [thread:$0]  %s319, 2048, %s321, [#allocation6], 128, 128, 8
        $region24: #{vqvae_forward.19} parent=11 // pred_fallthru
          _
        // Predicated region
        $region25: #{vqvae_forward.19} parent=11 // pred_check
          %p327 = pneg %p169
        $region26: #{vqvae_forward.19} parent=11 // pred_check_branch
          %329 = sbr.rel (%p327) target = $region28
        $region27: #{vqvae_forward.19} parent=11 // pred_region
          _
        $region28: #{vqvae_forward.19} parent=11 // pred_fallthru
          _
        // Predicated region
        $region29: #{vqvae_forward.19} parent=11 // pred_check
          %p330 = pneg %p190
        $region30: #{vqvae_forward.19} parent=11 // pred_check_branch
          %332 = sbr.rel (%p330) target = $region32
        $region31: #{vqvae_forward.19} parent=11 // pred_region
          %334 = vsyncadd [#allocation6], 0
          %s335 = sshll.u32 %s6, 4
          %s336 = int_to_ptr.hbm [resolvable:$true] %s335
          %s337 = sshll.u32 [#allocation7], 4
          %s338 = int_to_ptr.vmem [resolvable:$true] %s337
          %343 = dma.hbm_to_vmem [thread:$0]  %s336, 1024, %s338, [#allocation6], 64, 64, 4
        $region32: #{vqvae_forward.19} parent=11 // pred_fallthru
          _
        // Predicated region
        $region33: #{vqvae_forward.19} parent=11 // pred_check
          %p344 = pneg %p211
        $region34: #{vqvae_forward.19} parent=11 // pred_check_branch
          %346 = sbr.rel (%p344) target = $region36
        $region35: #{vqvae_forward.19} parent=11 // pred_region
          _
        $region36: #{vqvae_forward.19} parent=11 // pred_fallthru
          _
        // Predicated region
        $region37: #{vqvae_forward.19} parent=11 // pred_check
          %p347 = pneg %p232
        $region38: #{vqvae_forward.19} parent=11 // pred_check_branch
          %349 = sbr.rel (%p347) target = $region40
        $region39: #{vqvae_forward.19} parent=11 // pred_region
          %351 = vsyncadd [#allocation9], 0
          %s353 = sshll.u32 %s8, 4
          %s354 = int_to_ptr.hbm [resolvable:$true] %s353
          %s355 = sshll.u32 [#allocation8], 4
          %s356 = int_to_ptr.vmem [resolvable:$true] %s355
          %358 = dma.hbm_to_vmem [thread:$0]  %s354, 16, %s356, [#allocation9]
        $region40: #{vqvae_forward.19} parent=11 // pred_fallthru
          _
        // Predicated region
        $region41: #{vqvae_forward.19} parent=11 // pred_check
          %p359 = pneg %p253
        $region42: #{vqvae_forward.19} parent=11 // pred_check_branch
          %361 = sbr.rel (%p359) target = $region44
        $region43: #{vqvae_forward.19} parent=11 // pred_region
          %363 = vsyncadd [#allocation9], 0
          %s365 = sshll.u32 %s9, 4
          %s366 = int_to_ptr.hbm [resolvable:$true] %s365
          %s367 = sshll.u32 [#allocation10], 4
          %s368 = int_to_ptr.vmem [resolvable:$true] %s367
          %370 = dma.hbm_to_vmem [thread:$0]  %s366, 16, %s368, [#allocation9]
        $region44: #{vqvae_forward.19} parent=11 // pred_fallthru
          _
      $region12: #{vqvae_forward.19} parent=5 // pred_fallthru
        _
      %p371 = scmp.lt.s32.totalorder %s19, 2
      // Predicated region
      $region45: #{vqvae_forward.19} parent=5 // pred_check
        %p372 = pneg %p371
      $region46: #{vqvae_forward.19} parent=5 // pred_check_branch
        %374 = sbr.rel (%p372) target = $region48
      $region47: #{vqvae_forward.19} parent=5 // pred_region
        // Predicated region
        $region49: #{vqvae_forward.19} parent=47 // pred_check
          %p375 = pneg %p53
        $region50: #{vqvae_forward.19} parent=47 // pred_check_branch
          %377 = sbr.rel (%p375) target = $region52
        $region51: #{vqvae_forward.19} parent=47 // pred_region
          %p378 = scmp.lt.s32.totalorder %s26, 1
          %s379 = scalar_select %p378, %s26, 1
          %p380 = scmp.lt.s32.totalorder %s27, 0
          %s381 = scalar_select %p380, %s27, 0
          %s382 = sadd.s32 %s381, %s379
          %s383 = smul.addr %s382, 8
          %s384 = scalar_lea.vmem %s0, %s383
        $region52: #{vqvae_forward.19} parent=47 // pred_fallthru
          _
        // Predicated region
        $region53: #{vqvae_forward.19} parent=47 // pred_check
          %p385 = pneg %p79
        $region54: #{vqvae_forward.19} parent=47 // pred_check_branch
          %387 = sbr.rel (%p385) target = $region56
        $region55: #{vqvae_forward.19} parent=47 // pred_region
          %p388 = scmp.lt.s32.totalorder %s26, 1
          %s389 = scalar_select %p388, %s26, 1
          %s390 = smul.addr %s389, 8
          %s391 = scalar_lea.vmem %s1, %s390
        $region56: #{vqvae_forward.19} parent=47 // pred_fallthru
          _
      $region48: #{vqvae_forward.19} parent=5 // pred_fallthru
        _
      %p392 = scmp.le.s32.totalorder 1, %s19
      %p393 = scmp.lt.s32.totalorder %s19, 3
      %p394 = pnand %p392, %p393
      %p395 = pneg %p394
      // Predicated region
      $region57: #{vqvae_forward.19} parent=5 // pred_check
        _
      $region58: #{vqvae_forward.19} parent=5 // pred_check_branch
        %397 = sbr.rel (%p394) target = $region60
      $region59: #{vqvae_forward.19} parent=5 // pred_region
        %s398 = ssub.s32 %s19, 1
        // Predicated region
        $region61: #{vqvae_forward.19} parent=59 // pred_check
          %p399 = pneg %p106
        $region62: #{vqvae_forward.19} parent=59 // pred_check_branch
          %401 = sbr.rel (%p399) target = $region64
        $region63: #{vqvae_forward.19} parent=59 // pred_region
          %403 = dma.done [#allocation4], 1024
        $region64: #{vqvae_forward.19} parent=59 // pred_fallthru
          _
        // Predicated region
        $region65: #{vqvae_forward.19} parent=59 // pred_check
          %p404 = pneg %p148
        $region66: #{vqvae_forward.19} parent=59 // pred_check_branch
          %406 = sbr.rel (%p404) target = $region68
        $region67: #{vqvae_forward.19} parent=59 // pred_region
          %408 = dma.done [#allocation6], 2048
        $region68: #{vqvae_forward.19} parent=59 // pred_fallthru
          _
        // Predicated region
        $region69: #{vqvae_forward.19} parent=59 // pred_check
          %p409 = pneg %p190
        $region70: #{vqvae_forward.19} parent=59 // pred_check_branch
          %411 = sbr.rel (%p409) target = $region72
        $region71: #{vqvae_forward.19} parent=59 // pred_region
          %413 = dma.done [#allocation6], 1024
        $region72: #{vqvae_forward.19} parent=59 // pred_fallthru
          _
        // Predicated region
        $region73: #{vqvae_forward.19} parent=59 // pred_check
          %p414 = pneg %p232
        $region74: #{vqvae_forward.19} parent=59 // pred_check_branch
          %416 = sbr.rel (%p414) target = $region76
        $region75: #{vqvae_forward.19} parent=59 // pred_region
          %418 = dma.done [#allocation9], 16
        $region76: #{vqvae_forward.19} parent=59 // pred_fallthru
          _
        // Predicated region
        $region77: #{vqvae_forward.19} parent=59 // pred_check
          %p419 = pneg %p253
        $region78: #{vqvae_forward.19} parent=59 // pred_check_branch
          %421 = sbr.rel (%p419) target = $region80
        $region79: #{vqvae_forward.19} parent=59 // pred_region
          %423 = dma.done [#allocation9], 16
        $region80: #{vqvae_forward.19} parent=59 // pred_fallthru
          _
        %p424 = scmp.lt.s32.totalorder %s28, 1
        %s425 = scalar_select %p424, %s28, 1
        %p426 = scmp.lt.s32.totalorder %s29, 0
        %s427 = scalar_select %p426, %s29, 0
        %s428 = sadd.s32 %s427, %s425
        %s429 = smul.addr %s428, 8
        %s430 = scalar_lea.vmem %s0, %s429
        %p431 = pneg %p59
        %p432 = pneg %p56
        %p433 = scmp.lt.s32.totalorder %s28, 1
        %s434 = scalar_select %p433, %s28, 1
        %s435 = smul.addr %s434, 8
        %s436 = scalar_lea.vmem %s1, %s435
        %p437 = pneg %p85
        %p438 = pneg %p82
        %p439 = pneg %p106
        %p440 = pneg %p103
        %p441 = pneg %p127
        %p442 = pneg %p124
        %p443 = pneg %p148
        %p444 = pneg %p145
        %p445 = pneg %p169
        %p446 = pneg %p166
        %p447 = pneg %p190
        %p448 = pneg %p187
        %p449 = pneg %p211
        %p450 = pneg %p208
        %p451 = pneg %p232
        %p452 = pneg %p229
        %p453 = pneg %p253
        %p454 = pneg %p250
        %p455 = pneg %p281
        %p456 = pneg %p278
        %p457 = scmp.lt.s32.totalorder %s28, 1
        %s458 = scalar_select %p457, %s28, 1
        %p459 = scmp.lt.s32.totalorder %s29, 0
        %s460 = scalar_select %p459, %s29, 0
        %s461 = sadd.s32 %s460, %s458
        %s462 = smul.addr %s461, 8
        %s463 = scalar_lea.vmem %s10, %s462
        %p464 = scmp.lt.s32.totalorder %s28, 1
        %s465 = scalar_select %p464, %s28, 1
        %p466 = scmp.lt.s32.totalorder %s29, 0
        %s467 = scalar_select %p466, %s29, 0
        %s468 = sadd.s32 %s467, %s465
        %s469 = smul.addr %s468, 8
        %s470 = scalar_lea.vmem %s0, %s469
        %p471 = scmp.lt.s32.totalorder %s28, 1
        %s472 = scalar_select %p471, %s28, 1
        %s473 = smul.addr %s472, 8
        %s474 = scalar_lea.vmem %s1, %s473
        %p475 = scmp.lt.s32.totalorder %s28, 1
        %s476 = scalar_select %p475, %s28, 1
        %p477 = scmp.lt.s32.totalorder %s29, 0
        %s478 = scalar_select %p477, %s29, 0
        %s479 = sadd.s32 %s478, %s476
        %s480 = smul.addr %s479, 8
        %s481 = scalar_lea.vmem %s10, %s480
        %v483 = vld [vmem:[%s470] sm:$0xff]
        %v484 = vld [vmem:[%s474] sm:$0xff]
        %v485 = vpack.c.bf16 %v483, %v483
        %v486 = vld [vmem:[#allocation3] sm:$0xf]
        %v487 = vld [vmem:[#allocation3 + $0x4] sm:$0xf]
        %v488 = vld [vmem:[#allocation3 + $0x8] sm:$0xf]
        %v489 = vld [vmem:[#allocation3 + $0xc] sm:$0xf]
        %v490 = vld [vmem:[#allocation3 + $0x10] sm:$0xf]
        %v491 = vld [vmem:[#allocation3 + $0x14] sm:$0xf]
        %v492 = vld [vmem:[#allocation3 + $0x18] sm:$0xf]
        %v493 = vld [vmem:[#allocation3 + $0x1c] sm:$0xf]
        %v494 = vld [vmem:[#allocation3 + $0x20] sm:$0xf]
        %v495 = vld [vmem:[#allocation3 + $0x24] sm:$0xf]
        %v496 = vld [vmem:[#allocation3 + $0x28] sm:$0xf]
        %v497 = vld [vmem:[#allocation3 + $0x2c] sm:$0xf]
        %v498 = vld [vmem:[#allocation3 + $0x30] sm:$0xf]
        %v499 = vld [vmem:[#allocation3 + $0x34] sm:$0xf]
        %v500 = vld [vmem:[#allocation3 + $0x38] sm:$0xf]
        %v501 = vld [vmem:[#allocation3 + $0x3c] sm:$0xf]
        %v502 = vld [vmem:[%s3] sm:$0x1]
        %v504 = vperm.slane %v502, 0
        %v522 = vunpack.c.l.b16 %v486
        %v523 = vunpack.c.l.b16 %v487
        %v524 = vunpack.c.l.b16 %v488
        %v525 = vunpack.c.l.b16 %v489
        %v526 = vunpack.c.l.b16 %v490
        %v527 = vunpack.c.l.b16 %v491
        %v528 = vunpack.c.l.b16 %v492
        %v529 = vunpack.c.l.b16 %v493
        %v530 = vunpack.c.l.b16 %v494
        %v531 = vunpack.c.l.b16 %v495
        %v532 = vunpack.c.l.b16 %v496
        %v533 = vunpack.c.l.b16 %v497
        %v534 = vunpack.c.l.b16 %v498
        %v535 = vunpack.c.l.b16 %v499
        %v536 = vunpack.c.l.b16 %v500
        %v537 = vunpack.c.l.b16 %v501
        %v538 = vpack.c.b16 %v523, %v522
        %v539 = vpack.c.b16 %v525, %v524
        %v540 = vpack.c.b16 %v527, %v526
        %v541 = vpack.c.b16 %v529, %v528
        %v542 = vpack.c.b16 %v531, %v530
        %v543 = vpack.c.b16 %v533, %v532
        %v544 = vpack.c.b16 %v535, %v534
        %v545 = vpack.c.b16 %v537, %v536
        %554 = vmatpush.bf16.msra.mxu0 %v545
        %555 = vmatpush.bf16.msra.mxu0 %v544
        %556 = vmatpush.bf16.msra.mxu0 %v543
        %557 = vmatpush.bf16.msra.mxu0 %v542
        %558 = vmatpush.bf16.msra.mxu0 %v541
        %559 = vmatpush.bf16.msra.mxu0 %v540
        %560 = vmatpush.bf16.msra.mxu0 %v539
        %561 = vmatpush.bf16.msra.mxu0 %v538
        %562 = vmatmul.bf16.gmra.mxu0 %v485
        %v563 = vpop.f32.mrf.mxu0
        %v564 = vadd.f32 %v504, %v563
        %v565 = vpop.f32.mrf.mxu0
        %566 = vdwg.mxu0
        %v567 = vpack.c.bf16 %v484, %v484
        %v568 = vld [vmem:[#allocation5] sm:$0xff]
        %v569 = vld [vmem:[#allocation5 + $0x8] sm:$0xff]
        %v570 = vld [vmem:[#allocation5 + $0x10] sm:$0xff]
        %v571 = vld [vmem:[#allocation5 + $0x18] sm:$0xff]
        %v572 = vld [vmem:[#allocation5 + $0x20] sm:$0xff]
        %v573 = vld [vmem:[#allocation5 + $0x28] sm:$0xff]
        %v574 = vld [vmem:[#allocation5 + $0x30] sm:$0xff]
        %v575 = vld [vmem:[#allocation5 + $0x38] sm:$0xff]
        %v576 = vld [vmem:[#allocation5 + $0x40] sm:$0xff]
        %v577 = vld [vmem:[#allocation5 + $0x48] sm:$0xff]
        %v578 = vld [vmem:[#allocation5 + $0x50] sm:$0xff]
        %v579 = vld [vmem:[#allocation5 + $0x58] sm:$0xff]
        %v580 = vld [vmem:[#allocation5 + $0x60] sm:$0xff]
        %v581 = vld [vmem:[#allocation5 + $0x68] sm:$0xff]
        %v582 = vld [vmem:[#allocation5 + $0x70] sm:$0xff]
        %v583 = vld [vmem:[#allocation5 + $0x78] sm:$0xff]
        %v584 = vld [vmem:[%s5] sm:$0x3]
        %v586 = vperm.slane %v584, 0
        %v587 = vperm.slane %v584, 1
        %v606 = vunpack.c.l.b16 %v568
        %v607 = vunpack.c.h.b16 %v568
        %v608 = vunpack.c.l.b16 %v569
        %v609 = vunpack.c.h.b16 %v569
        %v610 = vunpack.c.l.b16 %v570
        %v611 = vunpack.c.h.b16 %v570
        %v612 = vunpack.c.l.b16 %v571
        %v613 = vunpack.c.h.b16 %v571
        %v614 = vunpack.c.l.b16 %v572
        %v615 = vunpack.c.h.b16 %v572
        %v616 = vunpack.c.l.b16 %v573
        %v617 = vunpack.c.h.b16 %v573
        %v618 = vunpack.c.l.b16 %v574
        %v619 = vunpack.c.h.b16 %v574
        %v620 = vunpack.c.l.b16 %v575
        %v621 = vunpack.c.h.b16 %v575
        %v622 = vunpack.c.l.b16 %v576
        %v623 = vunpack.c.h.b16 %v576
        %v624 = vunpack.c.l.b16 %v577
        %v625 = vunpack.c.h.b16 %v577
        %v626 = vunpack.c.l.b16 %v578
        %v627 = vunpack.c.h.b16 %v578
        %v628 = vunpack.c.l.b16 %v579
        %v629 = vunpack.c.h.b16 %v579
        %v630 = vunpack.c.l.b16 %v580
        %v631 = vunpack.c.h.b16 %v580
        %v632 = vunpack.c.l.b16 %v581
        %v633 = vunpack.c.h.b16 %v581
        %v634 = vunpack.c.l.b16 %v582
        %v635 = vunpack.c.h.b16 %v582
        %v636 = vunpack.c.l.b16 %v583
        %v637 = vunpack.c.h.b16 %v583
        %v638 = vpack.c.b16 %v608, %v606
        %v639 = vpack.c.b16 %v609, %v607
        %v640 = vpack.c.b16 %v612, %v610
        %v641 = vpack.c.b16 %v613, %v611
        %v642 = vpack.c.b16 %v616, %v614
        %v643 = vpack.c.b16 %v617, %v615
        %v644 = vpack.c.b16 %v620, %v618
        %v645 = vpack.c.b16 %v621, %v619
        %v646 = vpack.c.b16 %v624, %v622
        %v647 = vpack.c.b16 %v625, %v623
        %v648 = vpack.c.b16 %v628, %v626
        %v649 = vpack.c.b16 %v629, %v627
        %v650 = vpack.c.b16 %v632, %v630
        %v651 = vpack.c.b16 %v633, %v631
        %v652 = vpack.c.b16 %v636, %v634
        %v653 = vpack.c.b16 %v637, %v635
        %670 = vmatpush.bf16.msra.mxu0 %v652
        %671 = vmatpush.bf16.msra.mxu0 %v650
        %672 = vmatpush.bf16.msra.mxu0 %v648
        %673 = vmatpush.bf16.msra.mxu0 %v646
        %674 = vmatpush.bf16.msra.mxu0 %v644
        %675 = vmatpush.bf16.msra.mxu0 %v642
        %676 = vmatpush.bf16.msra.mxu0 %v640
        %677 = vmatpush.bf16.msra.mxu0 %v638
        %678 = vmatmul.bf16.gmra.mxu0 %v567
        %v679 = vpop.f32.mrf.mxu0
        %v680 = vadd.f32 %v586, %v679
        %v681 = vpop.f32.mrf.mxu0
        %682 = vdwg.mxu0
        %683 = vmatpush.bf16.msra.mxu0 %v653
        %684 = vmatpush.bf16.msra.mxu0 %v651
        %685 = vmatpush.bf16.msra.mxu0 %v649
        %686 = vmatpush.bf16.msra.mxu0 %v647
        %687 = vmatpush.bf16.msra.mxu0 %v645
        %688 = vmatpush.bf16.msra.mxu0 %v643
        %689 = vmatpush.bf16.msra.mxu0 %v641
        %690 = vmatpush.bf16.msra.mxu0 %v639
        %691 = vmatmul.bf16.gmra.mxu0 %v567
        %v692 = vpop.f32.mrf.mxu0
        %v693 = vadd.f32 %v587, %v692
        %v694 = vpop.f32.mrf.mxu0
        %695 = vdwg.mxu0
        %v696 = vpack.c.bf16 %v564, %v564
        %v697 = vpack.c.bf16 %v680, %v680
        %v698 = vpack.c.bf16 %v693, %v693
        %699 = vst [vmem:[#allocation2] sm:$0xff] 0.0
        %vm700 = vcmask 64512
        %v702 = vsel %vm700, %v696, 0
        %v705 = vsel %vm700, %v697, 0
        %707 = vmatpush.bf16.xpose.msra.mxu0 0
        %708 = vmatpush.bf16.xpose.msra.mxu0 0
        %709 = vmatpush.bf16.xpose.msra.mxu0 0
        %710 = vmatpush.bf16.xpose.msra.mxu0 0
        %711 = vmatpush.bf16.xpose.msra.mxu0 0
        %712 = vmatpush.bf16.xpose.msra.mxu0 0
        %713 = vmatpush.bf16.xpose.msra.mxu0 0
        %714 = vmatpush.bf16.xpose.msra.mxu0 %v705
        %715 = vmatmul.bf16.gmra.mxu0 %v702
        %v716 = vpop.f32.mrf.mxu0
        %v717 = vadd.f32 0.0, %v716
        %v718 = vpop.f32.mrf.mxu0
        %719 = vdwg.mxu0
        %v720 = vsel %vm700, %v717, -inf
        %721 = vmax.xlane.f32.xlu0 %v720
        %v722 = vpop.xlane.xlu0 %721
        %v723 = vsub.f32 %v717, %v722
        %v724 = vmul.f32 %v723, 1.442695
        %v725 = vpow.pop %v724
        %v726 = vsel %vm700, %v725, 0.0
        %727 = vadd.xlane.f32.xlu0 %v726
        %v728 = vpop.xlane.xlu0 %727
        %v729 = vrcp.pop %v728
        %v730 = vmul.f32 %v728, %v729
        %v731 = vsub.f32 1.0, %v730
        %v732 = vmul.f32 %v729, %v731
        %v733 = vadd.f32 %v729, %v732
        %vm734 = vweird.f32 %v728
        %vm735 = vweird.f32 %v729
        %vm736 = vmor %vm734, %vm735
        %v737 = vsel %vm736, %v729, %v733
        %v738 = vand.u32 2147483647, %v728
        %vm739 = vcmp.eq.f32.partialorder %v738, 8.507059e+37
        %v740 = vand.u32 %v728, 2147483648
        %v741 = vor.u32 1.1754944e-38, %v740
        %v742 = vsel %vm739, %v741, %v737
        %v743 = vmul.f32 %v725, %v742
        %v744 = vpack.c.bf16 %v743, %v743
        %v746 = vsel %vm700, %v744, 0
        %vm748 = vcmask 1043456
        %v750 = vsel %vm748, %v698, 0
        %752 = vmatpush.bf16.msra.mxu0 0
        %753 = vmatpush.bf16.msra.mxu0 0
        %754 = vmatpush.bf16.msra.mxu0 0
        %755 = vmatpush.bf16.msra.mxu0 0
        %756 = vmatpush.bf16.msra.mxu0 0
        %757 = vmatpush.bf16.msra.mxu0 0
        %758 = vmatpush.bf16.msra.mxu0 0
        %759 = vmatpush.bf16.msra.mxu0 %v750
        %760 = vmatmul.bf16.gmra.mxu0 %v746
        %v761 = vpop.f32.mrf.mxu0
        %v762 = vadd.f32 0.0, %v761
        %v763 = vpop.f32.mrf.mxu0
        %764 = vdwg.mxu0
        %765 = vst.msk [vmem:[#allocation2] sm:$0xff] %vm700, %v762
        %v767 = vunpack.c.l.b16 %v696
        %v768 = vpack.c.b16 %v767, %v767
        %769 = vrot.lane.b32.xlu0 %v768, 120
        %v770 = vpop.permute.xlu0 %769
        %v772 = vunpack.c.l.b16 %v697
        %v773 = vpack.c.b16 %v772, %v772
        %774 = vrot.lane.b32.xlu0 %v773, 120
        %v775 = vpop.permute.xlu0 %774
        %v777 = vsel %vm700, %v770, 0
        %v780 = vsel %vm700, %v775, 0
        %782 = vmatpush.bf16.xpose.msra.mxu0 0
        %783 = vmatpush.bf16.xpose.msra.mxu0 0
        %784 = vmatpush.bf16.xpose.msra.mxu0 0
        %785 = vmatpush.bf16.xpose.msra.mxu0 0
        %786 = vmatpush.bf16.xpose.msra.mxu0 0
        %787 = vmatpush.bf16.xpose.msra.mxu0 0
        %788 = vmatpush.bf16.xpose.msra.mxu0 0
        %789 = vmatpush.bf16.xpose.msra.mxu0 %v780
        %790 = vmatmul.bf16.gmra.mxu0 %v777
        %v791 = vpop.f32.mrf.mxu0
        %v792 = vadd.f32 0.0, %v791
        %v793 = vpop.f32.mrf.mxu0
        %794 = vdwg.mxu0
        %v795 = vsel %vm700, %v792, -inf
        %796 = vmax.xlane.f32.xlu0 %v795
        %v797 = vpop.xlane.xlu0 %796
        %v798 = vsub.f32 %v792, %v797
        %v799 = vmul.f32 %v798, 1.442695
        %v800 = vpow.pop %v799
        %v801 = vsel %vm700, %v800, 0.0
        %802 = vadd.xlane.f32.xlu0 %v801
        %v803 = vpop.xlane.xlu0 %802
        %v804 = vrcp.pop %v803
        %v805 = vmul.f32 %v803, %v804
        %v806 = vsub.f32 1.0, %v805
        %v807 = vmul.f32 %v804, %v806
        %v808 = vadd.f32 %v804, %v807
        %vm809 = vweird.f32 %v803
        %vm810 = vweird.f32 %v804
        %vm811 = vmor %vm809, %vm810
        %v812 = vsel %vm811, %v804, %v808
        %v813 = vand.u32 2147483647, %v803
        %vm814 = vcmp.eq.f32.partialorder %v813, 8.507059e+37
        %v815 = vand.u32 %v803, 2147483648
        %v816 = vor.u32 1.1754944e-38, %v815
        %v817 = vsel %vm814, %v816, %v812
        %v818 = vmul.f32 %v800, %v817
        %v819 = vpack.c.bf16 %v818, %v818
        %v821 = vunpack.c.l.b16 %v698
        %v822 = vpack.c.b16 %v821, %v821
        %823 = vrot.lane.b32.xlu0 %v822, 120
        %v824 = vpop.permute.xlu0 %823
        %v826 = vsel %vm700, %v819, 0
        %v829 = vsel %vm748, %v824, 0
        %831 = vmatpush.bf16.msra.mxu0 0
        %832 = vmatpush.bf16.msra.mxu0 0
        %833 = vmatpush.bf16.msra.mxu0 0
        %834 = vmatpush.bf16.msra.mxu0 0
        %835 = vmatpush.bf16.msra.mxu0 0
        %836 = vmatpush.bf16.msra.mxu0 0
        %837 = vmatpush.bf16.msra.mxu0 0
        %838 = vmatpush.bf16.msra.mxu0 %v829
        %839 = vmatmul.bf16.gmra.mxu0 %v826
        %v840 = vpop.f32.mrf.mxu0
        %v841 = vadd.f32 0.0, %v840
        %v842 = vpop.f32.mrf.mxu0
        %843 = vdwg.mxu0
        %845 = vrot.lane.b32.xlu0 %v841, 8
        %v846 = vpop.permute.xlu0 %845
        %vm848 = vcmask 130112
        %849 = vst.msk [vmem:[#allocation2] sm:$0xff] %vm848, %v846
        %v850 = vld [vmem:[#allocation2] sm:$0xff]
        %v851 = vpack.c.bf16 %v850, %v850
        %v852 = vld [vmem:[#allocation7] sm:$0xf]
        %v853 = vld [vmem:[#allocation7 + $0x4] sm:$0xf]
        %v854 = vld [vmem:[#allocation7 + $0x8] sm:$0xf]
        %v855 = vld [vmem:[#allocation7 + $0xc] sm:$0xf]
        %v856 = vld [vmem:[#allocation7 + $0x10] sm:$0xf]
        %v857 = vld [vmem:[#allocation7 + $0x14] sm:$0xf]
        %v858 = vld [vmem:[#allocation7 + $0x18] sm:$0xf]
        %v859 = vld [vmem:[#allocation7 + $0x1c] sm:$0xf]
        %v860 = vld [vmem:[#allocation7 + $0x20] sm:$0xf]
        %v861 = vld [vmem:[#allocation7 + $0x24] sm:$0xf]
        %v862 = vld [vmem:[#allocation7 + $0x28] sm:$0xf]
        %v863 = vld [vmem:[#allocation7 + $0x2c] sm:$0xf]
        %v864 = vld [vmem:[#allocation7 + $0x30] sm:$0xf]
        %v865 = vld [vmem:[#allocation7 + $0x34] sm:$0xf]
        %v866 = vld [vmem:[#allocation7 + $0x38] sm:$0xf]
        %v867 = vld [vmem:[#allocation7 + $0x3c] sm:$0xf]
        %v868 = vld [vmem:[%s7] sm:$0x1]
        %v870 = vperm.slane %v868, 0
        %v888 = vunpack.c.l.b16 %v852
        %v889 = vunpack.c.l.b16 %v853
        %v890 = vunpack.c.l.b16 %v854
        %v891 = vunpack.c.l.b16 %v855
        %v892 = vunpack.c.l.b16 %v856
        %v893 = vunpack.c.l.b16 %v857
        %v894 = vunpack.c.l.b16 %v858
        %v895 = vunpack.c.l.b16 %v859
        %v896 = vunpack.c.l.b16 %v860
        %v897 = vunpack.c.l.b16 %v861
        %v898 = vunpack.c.l.b16 %v862
        %v899 = vunpack.c.l.b16 %v863
        %v900 = vunpack.c.l.b16 %v864
        %v901 = vunpack.c.l.b16 %v865
        %v902 = vunpack.c.l.b16 %v866
        %v903 = vunpack.c.l.b16 %v867
        %v904 = vpack.c.b16 %v889, %v888
        %v905 = vpack.c.b16 %v891, %v890
        %v906 = vpack.c.b16 %v893, %v892
        %v907 = vpack.c.b16 %v895, %v894
        %v908 = vpack.c.b16 %v897, %v896
        %v909 = vpack.c.b16 %v899, %v898
        %v910 = vpack.c.b16 %v901, %v900
        %v911 = vpack.c.b16 %v903, %v902
        %920 = vmatpush.bf16.msra.mxu0 %v911
        %921 = vmatpush.bf16.msra.mxu0 %v910
        %922 = vmatpush.bf16.msra.mxu0 %v909
        %923 = vmatpush.bf16.msra.mxu0 %v908
        %924 = vmatpush.bf16.msra.mxu0 %v907
        %925 = vmatpush.bf16.msra.mxu0 %v906
        %926 = vmatpush.bf16.msra.mxu0 %v905
        %927 = vmatpush.bf16.msra.mxu0 %v904
        %928 = vmatmul.bf16.gmra.mxu0 %v851
        %v929 = vpop.f32.mrf.mxu0
        %v930 = vadd.f32 %v870, %v929
        %v931 = vpop.f32.mrf.mxu0
        %932 = vdwg.mxu0
        %v933 = vadd.f32 %v930, %v483
        %v934 = vld [vmem:[#allocation8] sm:$0x1]
        %v935 = vld [vmem:[#allocation10] sm:$0x1]
        %936 = vadd.xlane.f32.xlu0 %v933
        %v937 = vpop.xlane.xlu0 %936
        %v938 = vmul.f32 %v937, 0.0625
        %v939 = vsub.f32 %v933, %v938
        %v940 = vlaneseq
        %v941 = vand.u32 %v940, 127
        %vm942 = vcmp.lt.s32.totalorder %v941, 16
        %v943 = vsel %vm942, 1, 0
        %v944 = vcvt.s32.f32 %v943
        %v945 = vmul.f32 %v939, %v944
        %v946 = vmul.f32 %v945, %v945
        %947 = vadd.xlane.f32.xlu0 %v946
        %v948 = vpop.xlane.xlu0 %947
        %v949 = vmul.f32 %v948, 0.0625
        %v950 = vadd.f32 %v949, 1e-05
        %v951 = vrsqrt.pop %v950
        %v952 = vmul.f32 %v951, %v950
        %v953 = vmul.f32 %v952, %v951
        %v954 = vmul.f32 0.5, %v953
        %v955 = vsub.f32 1.5, %v954
        %v956 = vmul.f32 %v951, %v955
        %vm957 = vweird.f32 %v950
        %vm958 = vweird.f32 %v951
        %vm959 = vmor %vm957, %vm958
        %v960 = vsel %vm959, %v951, %v956
        %v961 = vmul.f32 %v945, %v960
        %v963 = vperm.slane %v934, 0
        %v965 = vmul.f32 %v961, %v963
        %v967 = vperm.slane %v935, 0
        %v969 = vadd.f32 %v965, %v967
        %970 = vst [vmem:[%s481] sm:$0xff] %v969
        %p971 = scmp.lt.s32.totalorder %s28, 1
        %s972 = scalar_select %p971, %s28, 1
        %p973 = scmp.lt.s32.totalorder %s29, 0
        %s974 = scalar_select %p973, %s29, 0
        %s975 = sadd.s32 %s974, %s972
        %s976 = smul.addr %s975, 8
        %s977 = scalar_lea.vmem %s10, %s976
        // Predicated region
        $region81: #{vqvae_forward.19} parent=59 // pred_check
          %p978 = pneg %p278
        $region82: #{vqvae_forward.19} parent=59 // pred_check_branch
          %980 = sbr.rel (%p978) target = $region84
        $region83: #{vqvae_forward.19} parent=59 // pred_region
          _
        $region84: #{vqvae_forward.19} parent=59 // pred_fallthru
          _
      $region60: #{vqvae_forward.19} parent=5 // pred_fallthru
        _
      %p981 = scmp.le.s32.totalorder 2, %s19
      // Predicated region
      $region85: #{vqvae_forward.19} parent=5 // pred_check
        %p982 = pneg %p981
      $region86: #{vqvae_forward.19} parent=5 // pred_check_branch
        %984 = sbr.rel (%p982) target = $region88
      $region87: #{vqvae_forward.19} parent=5 // pred_region
        %s985 = ssub.s32 %s19, 2
        // Predicated region
        $region89: #{vqvae_forward.19} parent=87 // pred_check
          %p986 = pneg %p284
        $region90: #{vqvae_forward.19} parent=87 // pred_check_branch
          %988 = sbr.rel (%p986) target = $region92
        $region91: #{vqvae_forward.19} parent=87 // pred_region
          %p989 = scmp.lt.s32.totalorder %s30, 1
          %s990 = scalar_select %p989, %s30, 1
          %p991 = scmp.lt.s32.totalorder %s31, 0
          %s992 = scalar_select %p991, %s31, 0
          %s993 = sadd.s32 %s992, %s990
          %s994 = smul.addr %s993, 8
          %s995 = scalar_lea.vmem %s10, %s994
        $region92: #{vqvae_forward.19} parent=87 // pred_fallthru
          _
      $region88: #{vqvae_forward.19} parent=5 // pred_fallthru
        _
    $region6: #{vqvae_forward.19} parent=1 // loop_footer
      %s23 = sadd.s32 1, %s19
    $region7: #{vqvae_forward.19} parent=1 // loop_footer_branch
      %18 = sbr.rel target = $region3
    $region8: #{vqvae_forward.19} parent=1 // loop_exit
      _
    %996 = vsyncpa [#allocation4], 1
    %s997 = scalar_lea.sflag [#allocation4], 1
    %998 = vsyncpa %s997, 1
    %999 = vsyncpa [#allocation6], 1
    %1000 = vsyncpa [#allocation9], 1

// kernel: vqvae_forward.21
$region0: #{vqvae_forward.21}
  #allocation0 [shape = 'u32[]', space=smem, size = 0x4, offset = 0x4, fixed_abs, tag = 'smem constant byte address 0x4 - core index']
  #allocation1 [shape = 'u32[72,128]{1,0:T(1,128)}', space=vmem, size = 0x9000, scoped, tag = 'internal scratch']
  %s0 = inlined_call_operand.vmem [shape: f32[16,128], index: 0, kind: input, shape index: {}]
  %s1 = inlined_call_operand.hbm [shape: bf16[128,128], index: 1, kind: input, shape index: {}]
  %s2 = inlined_call_operand.vmem [shape: f32[1,128], index: 2, kind: input, shape index: {}]
  %s3 = inlined_call_operand.hbm [shape: bf16[128,128], index: 3, kind: input, shape index: {}]
  %s4 = inlined_call_operand.vmem [shape: f32[1,128], index: 4, kind: input, shape index: {}]
  %s5 = inlined_call_operand.hbm [shape: f32[1,128], index: 5, kind: input, shape index: {}]
  %s6 = inlined_call_operand.hbm [shape: f32[1,128], index: 6, kind: input, shape index: {}]
  %s7 = inlined_call_operand.hbm [shape: f32[16,128], index: 7, kind: output, shape index: {}]
  %s8 = sld [smem:[#allocation0]]
  $region54: #{vqvae_forward.21} parent=0
    _
  %s10 = ssub.s32 1, %s8
  %s11 = scalar_select 0, %s10, %s8
  $region1: #{vqvae_forward.21} parent=0
    #allocation2 [shape = 'u8[32768]{0}', space=vmem, size = 0x8000, scoped, tag = 'input window, operand 1, single buffered']
    #allocation3 [shape = 's32[1]{0}', space=sflag, size = 0x4, scoped, tag = 'scoped memory for vqvae_forward.21']
    #allocation4 [shape = 's32[1]{0}', space=sflag, size = 0x4, scoped, tag = 'scoped memory for vqvae_forward.21']
    #allocation5 [shape = 'u8[32768]{0}', space=vmem, size = 0x8000, scoped, tag = 'input window, operand 3, single buffered']
    #allocation6 [shape = 's32[1]{0}', space=sflag, size = 0x4, scoped, tag = 'scoped memory for vqvae_forward.21']
    #allocation7 [shape = 'u8[512]{0}', space=vmem, size = 0x400, scoped, tag = 'input window, operand 5, single buffered']
    #allocation8 [shape = 'u8[512]{0}', space=vmem, size = 0x400, scoped, tag = 'input window, operand 6, single buffered']
    #allocation9 [shape = 's32[1]{0}', space=sflag, size = 0x4, scoped, tag = 'scoped memory for vqvae_forward.21']
    #allocation10 [shape = 'u8[8192]{0}', space=vmem, size = 0x2000, scoped, tag = 'output window, operand 0, single buffered']
    %12 = vsyncpa [#allocation3], 0
    %13 = vsyncpa [#allocation6], 0
    %14 = vsyncpa [#allocation9], 0
    %15 = vsyncpa [#allocation4], 0
    // Predicated region
    $region2: #{vqvae_forward.21} parent=1 // pred_check
      _
    $region3: #{vqvae_forward.21} parent=1 // pred_check_branch
      %17 = sbr.rel (0) target = $region5
    $region4: #{vqvae_forward.21} parent=1 // pred_region
      _
    $region5: #{vqvae_forward.21} parent=1 // pred_fallthru
      _
    // Predicated region
    $region6: #{vqvae_forward.21} parent=1 // pred_check
      _
    $region7: #{vqvae_forward.21} parent=1 // pred_check_branch
      %19 = sbr.rel (0) target = $region9
    $region8: #{vqvae_forward.21} parent=1 // pred_region
      %21 = vsyncadd [#allocation3], 0
      %s22 = sshll.u32 %s1, 4
      %s23 = int_to_ptr.hbm [resolvable:$true] %s22
      %s24 = sshll.u32 [#allocation2], 4
      %s25 = int_to_ptr.vmem [resolvable:$true] %s24
      %30 = dma.hbm_to_vmem [thread:$0]  %s23, 1024, %s25, [#allocation3], 64, 64, 4
    $region9: #{vqvae_forward.21} parent=1 // pred_fallthru
      _
    // Predicated region
    $region10: #{vqvae_forward.21} parent=1 // pred_check
      _
    $region11: #{vqvae_forward.21} parent=1 // pred_check_branch
      %32 = sbr.rel (0) target = $region13
    $region12: #{vqvae_forward.21} parent=1 // pred_region
      _
    $region13: #{vqvae_forward.21} parent=1 // pred_fallthru
      _
    // Predicated region
    $region14: #{vqvae_forward.21} parent=1 // pred_check
      _
    $region15: #{vqvae_forward.21} parent=1 // pred_check_branch
      %34 = sbr.rel (0) target = $region17
    $region16: #{vqvae_forward.21} parent=1 // pred_region
      %36 = vsyncadd [#allocation6], 0
      %s37 = sshll.u32 %s3, 4
      %s38 = int_to_ptr.hbm [resolvable:$true] %s37
      %s39 = sshll.u32 [#allocation5], 4
      %s40 = int_to_ptr.vmem [resolvable:$true] %s39
      %45 = dma.hbm_to_vmem [thread:$0]  %s38, 1024, %s40, [#allocation6], 64, 64, 4
    $region17: #{vqvae_forward.21} parent=1 // pred_fallthru
      _
    // Predicated region
    $region18: #{vqvae_forward.21} parent=1 // pred_check
      _
    $region19: #{vqvae_forward.21} parent=1 // pred_check_branch
      %47 = sbr.rel (0) target = $region21
    $region20: #{vqvae_forward.21} parent=1 // pred_region
      _
    $region21: #{vqvae_forward.21} parent=1 // pred_fallthru
      _
    // Predicated region
    $region22: #{vqvae_forward.21} parent=1 // pred_check
      _
    $region23: #{vqvae_forward.21} parent=1 // pred_check_branch
      %49 = sbr.rel (0) target = $region25
    $region24: #{vqvae_forward.21} parent=1 // pred_region
      %51 = vsyncadd [#allocation6], 0
      %s53 = sshll.u32 %s5, 4
      %s54 = int_to_ptr.hbm [resolvable:$true] %s53
      %s55 = sshll.u32 [#allocation7], 4
      %s56 = int_to_ptr.vmem [resolvable:$true] %s55
      %58 = dma.hbm_to_vmem [thread:$0]  %s54, 16, %s56, [#allocation6]
    $region25: #{vqvae_forward.21} parent=1 // pred_fallthru
      _
    // Predicated region
    $region26: #{vqvae_forward.21} parent=1 // pred_check
      _
    $region27: #{vqvae_forward.21} parent=1 // pred_check_branch
      %60 = sbr.rel (0) target = $region29
    $region28: #{vqvae_forward.21} parent=1 // pred_region
      %62 = vsyncadd [#allocation9], 0
      %s64 = sshll.u32 %s6, 4
      %s65 = int_to_ptr.hbm [resolvable:$true] %s64
      %s66 = sshll.u32 [#allocation8], 4
      %s67 = int_to_ptr.vmem [resolvable:$true] %s66
      %69 = dma.hbm_to_vmem [thread:$0]  %s65, 16, %s67, [#allocation9]
    $region29: #{vqvae_forward.21} parent=1 // pred_fallthru
      _
    // Predicated region
    $region30: #{vqvae_forward.21} parent=1 // pred_check
      _
    $region31: #{vqvae_forward.21} parent=1 // pred_check_branch
      %71 = sbr.rel (0) target = $region33
    $region32: #{vqvae_forward.21} parent=1 // pred_region
      %73 = dma.done [#allocation3], 1024
    $region33: #{vqvae_forward.21} parent=1 // pred_fallthru
      _
    // Predicated region
    $region34: #{vqvae_forward.21} parent=1 // pred_check
      _
    $region35: #{vqvae_forward.21} parent=1 // pred_check_branch
      %75 = sbr.rel (0) target = $region37
    $region36: #{vqvae_forward.21} parent=1 // pred_region
      %77 = dma.done [#allocation6], 1024
    $region37: #{vqvae_forward.21} parent=1 // pred_fallthru
      _
    // Predicated region
    $region38: #{vqvae_forward.21} parent=1 // pred_check
      _
    $region39: #{vqvae_forward.21} parent=1 // pred_check_branch
      %79 = sbr.rel (0) target = $region41
    $region40: #{vqvae_forward.21} parent=1 // pred_region
      %81 = dma.done [#allocation6], 16
    $region41: #{vqvae_forward.21} parent=1 // pred_fallthru
      _
    // Predicated region
    $region42: #{vqvae_forward.21} parent=1 // pred_check
      _
    $region43: #{vqvae_forward.21} parent=1 // pred_check_branch
      %83 = sbr.rel (0) target = $region45
    $region44: #{vqvae_forward.21} parent=1 // pred_region
      %85 = dma.done [#allocation9], 16
    $region45: #{vqvae_forward.21} parent=1 // pred_fallthru
      _
    %v86 = vld [vmem:[%s0] sm:$0xff]
    %v87 = vld [vmem:[%s0 + $0x8] sm:$0xff]
    %v88 = vpack.c.bf16 %v87, %v86
    %v89 = vld [vmem:[#allocation2] sm:$0xf]
    %v90 = vld [vmem:[#allocation2 + $0x4] sm:$0xf]
    %v91 = vld [vmem:[#allocation2 + $0x8] sm:$0xf]
    %v92 = vld [vmem:[#allocation2 + $0xc] sm:$0xf]
    %v93 = vld [vmem:[#allocation2 + $0x10] sm:$0xf]
    %v94 = vld [vmem:[#allocation2 + $0x14] sm:$0xf]
    %v95 = vld [vmem:[#allocation2 + $0x18] sm:$0xf]
    %v96 = vld [vmem:[#allocation2 + $0x1c] sm:$0xf]
    %v97 = vld [vmem:[#allocation2 + $0x20] sm:$0xf]
    %v98 = vld [vmem:[#allocation2 + $0x24] sm:$0xf]
    %v99 = vld [vmem:[#allocation2 + $0x28] sm:$0xf]
    %v100 = vld [vmem:[#allocation2 + $0x2c] sm:$0xf]
    %v101 = vld [vmem:[#allocation2 + $0x30] sm:$0xf]
    %v102 = vld [vmem:[#allocation2 + $0x34] sm:$0xf]
    %v103 = vld [vmem:[#allocation2 + $0x38] sm:$0xf]
    %v104 = vld [vmem:[#allocation2 + $0x3c] sm:$0xf]
    %v105 = vld [vmem:[%s2] sm:$0x1]
    %v107 = vperm.slane %v105, 0
    %v125 = vunpack.c.l.b16 %v89
    %v126 = vunpack.c.l.b16 %v90
    %v127 = vunpack.c.l.b16 %v91
    %v128 = vunpack.c.l.b16 %v92
    %v129 = vunpack.c.l.b16 %v93
    %v130 = vunpack.c.l.b16 %v94
    %v131 = vunpack.c.l.b16 %v95
    %v132 = vunpack.c.l.b16 %v96
    %v133 = vunpack.c.l.b16 %v97
    %v134 = vunpack.c.l.b16 %v98
    %v135 = vunpack.c.l.b16 %v99
    %v136 = vunpack.c.l.b16 %v100
    %v137 = vunpack.c.l.b16 %v101
    %v138 = vunpack.c.l.b16 %v102
    %v139 = vunpack.c.l.b16 %v103
    %v140 = vunpack.c.l.b16 %v104
    %v141 = vpack.c.b16 %v126, %v125
    %v142 = vpack.c.b16 %v128, %v127
    %v143 = vpack.c.b16 %v130, %v129
    %v144 = vpack.c.b16 %v132, %v131
    %v145 = vpack.c.b16 %v134, %v133
    %v146 = vpack.c.b16 %v136, %v135
    %v147 = vpack.c.b16 %v138, %v137
    %v148 = vpack.c.b16 %v140, %v139
    %157 = vmatpush.bf16.msra.mxu0 %v148
    %158 = vmatpush.bf16.msra.mxu0 %v147
    %159 = vmatpush.bf16.msra.mxu0 %v146
    %160 = vmatpush.bf16.msra.mxu0 %v145
    %161 = vmatpush.bf16.msra.mxu0 %v144
    %162 = vmatpush.bf16.msra.mxu0 %v143
    %163 = vmatpush.bf16.msra.mxu0 %v142
    %164 = vmatpush.bf16.msra.mxu0 %v141
    %165 = vmatmul.bf16.gmra.mxu0 %v88
    %v166 = vpop.f32.mrf.mxu0
    %v167 = vadd.f32 %v107, %v166
    %v168 = vpop.f32.mrf.mxu0
    %v169 = vadd.f32 %v107, %v168
    %170 = vdwg.mxu0
    %v171 = vmax.f32 %v167, 0.0
    %v172 = vmax.f32 %v169, 0.0
    %v173 = vpack.c.bf16 %v172, %v171
    %v174 = vld [vmem:[#allocation5] sm:$0xf]
    %v175 = vld [vmem:[#allocation5 + $0x4] sm:$0xf]
    %v176 = vld [vmem:[#allocation5 + $0x8] sm:$0xf]
    %v177 = vld [vmem:[#allocation5 + $0xc] sm:$0xf]
    %v178 = vld [vmem:[#allocation5 + $0x10] sm:$0xf]
    %v179 = vld [vmem:[#allocation5 + $0x14] sm:$0xf]
    %v180 = vld [vmem:[#allocation5 + $0x18] sm:$0xf]
    %v181 = vld [vmem:[#allocation5 + $0x1c] sm:$0xf]
    %v182 = vld [vmem:[#allocation5 + $0x20] sm:$0xf]
    %v183 = vld [vmem:[#allocation5 + $0x24] sm:$0xf]
    %v184 = vld [vmem:[#allocation5 + $0x28] sm:$0xf]
    %v185 = vld [vmem:[#allocation5 + $0x2c] sm:$0xf]
    %v186 = vld [vmem:[#allocation5 + $0x30] sm:$0xf]
    %v187 = vld [vmem:[#allocation5 + $0x34] sm:$0xf]
    %v188 = vld [vmem:[#allocation5 + $0x38] sm:$0xf]
    %v189 = vld [vmem:[#allocation5 + $0x3c] sm:$0xf]
    %v190 = vld [vmem:[%s4] sm:$0x1]
    %v192 = vperm.slane %v190, 0
    %v210 = vunpack.c.l.b16 %v174
    %v211 = vunpack.c.l.b16 %v175
    %v212 = vunpack.c.l.b16 %v176
    %v213 = vunpack.c.l.b16 %v177
    %v214 = vunpack.c.l.b16 %v178
    %v215 = vunpack.c.l.b16 %v179
    %v216 = vunpack.c.l.b16 %v180
    %v217 = vunpack.c.l.b16 %v181
    %v218 = vunpack.c.l.b16 %v182
    %v219 = vunpack.c.l.b16 %v183
    %v220 = vunpack.c.l.b16 %v184
    %v221 = vunpack.c.l.b16 %v185
    %v222 = vunpack.c.l.b16 %v186
    %v223 = vunpack.c.l.b16 %v187
    %v224 = vunpack.c.l.b16 %v188
    %v225 = vunpack.c.l.b16 %v189
    %v226 = vpack.c.b16 %v211, %v210
    %v227 = vpack.c.b16 %v213, %v212
    %v228 = vpack.c.b16 %v215, %v214
    %v229 = vpack.c.b16 %v217, %v216
    %v230 = vpack.c.b16 %v219, %v218
    %v231 = vpack.c.b16 %v221, %v220
    %v232 = vpack.c.b16 %v223, %v222
    %v233 = vpack.c.b16 %v225, %v224
    %242 = vmatpush.bf16.msra.mxu0 %v233
    %243 = vmatpush.bf16.msra.mxu0 %v232
    %244 = vmatpush.bf16.msra.mxu0 %v231
    %245 = vmatpush.bf16.msra.mxu0 %v230
    %246 = vmatpush.bf16.msra.mxu0 %v229
    %247 = vmatpush.bf16.msra.mxu0 %v228
    %248 = vmatpush.bf16.msra.mxu0 %v227
    %249 = vmatpush.bf16.msra.mxu0 %v226
    %250 = vmatmul.bf16.gmra.mxu0 %v173
    %v251 = vpop.f32.mrf.mxu0
    %v252 = vadd.f32 %v192, %v251
    %v253 = vpop.f32.mrf.mxu0
    %v254 = vadd.f32 %v192, %v253
    %255 = vdwg.mxu0
    %v256 = vadd.f32 %v252, %v86
    %v257 = vadd.f32 %v254, %v87
    %v258 = vld [vmem:[#allocation7] sm:$0x1]
    %v259 = vld [vmem:[#allocation8] sm:$0x1]
    %260 = vadd.xlane.f32.xlu0 %v256
    %v261 = vpop.xlane.xlu0 %260
    %262 = vadd.xlane.f32.xlu0 %v257
    %v263 = vpop.xlane.xlu0 %262
    %v264 = vmul.f32 %v261, 0.0625
    %v265 = vmul.f32 %v263, 0.0625
    %v266 = vsub.f32 %v256, %v264
    %v267 = vsub.f32 %v257, %v265
    %v268 = vlaneseq
    %v269 = vand.u32 %v268, 127
    %vm270 = vcmp.lt.s32.totalorder %v269, 16
    %v271 = vsel %vm270, 1, 0
    %v272 = vcvt.s32.f32 %v271
    %v273 = vmul.f32 %v266, %v272
    %v274 = vmul.f32 %v267, %v272
    %v275 = vmul.f32 %v273, %v273
    %v276 = vmul.f32 %v274, %v274
    %277 = vadd.xlane.f32.xlu0 %v275
    %v278 = vpop.xlane.xlu0 %277
    %279 = vadd.xlane.f32.xlu0 %v276
    %v280 = vpop.xlane.xlu0 %279
    %v281 = vmul.f32 %v278, 0.0625
    %v282 = vmul.f32 %v280, 0.0625
    %v283 = vadd.f32 %v281, 1e-05
    %v284 = vadd.f32 %v282, 1e-05
    %v285 = vrsqrt.pop %v283
    %v286 = vmul.f32 %v285, %v283
    %v287 = vmul.f32 %v286, %v285
    %v288 = vmul.f32 0.5, %v287
    %v289 = vsub.f32 1.5, %v288
    %v290 = vmul.f32 %v285, %v289
    %vm291 = vweird.f32 %v283
    %vm292 = vweird.f32 %v285
    %vm293 = vmor %vm291, %vm292
    %v294 = vsel %vm293, %v285, %v290
    %v295 = vrsqrt.pop %v284
    %v296 = vmul.f32 %v295, %v284
    %v297 = vmul.f32 %v296, %v295
    %v298 = vmul.f32 0.5, %v297
    %v299 = vsub.f32 1.5, %v298
    %v300 = vmul.f32 %v295, %v299
    %vm301 = vweird.f32 %v284
    %vm302 = vweird.f32 %v295
    %vm303 = vmor %vm301, %vm302
    %v304 = vsel %vm303, %v295, %v300
    %v305 = vmul.f32 %v273, %v294
    %v306 = vmul.f32 %v274, %v304
    %v308 = vperm.slane %v258, 0
    %v310 = vmul.f32 %v305, %v308
    %v311 = vmul.f32 %v306, %v308
    %v313 = vperm.slane %v259, 0
    %v315 = vadd.f32 %v310, %v313
    %v316 = vadd.f32 %v311, %v313
    %317 = vst [vmem:[#allocation10] sm:$0xff] %v315
    %318 = vst [vmem:[#allocation10 + $0x8] sm:$0xff] %v316
    // Predicated region
    $region46: #{vqvae_forward.21} parent=1 // pred_check
      _
    $region47: #{vqvae_forward.21} parent=1 // pred_check_branch
      %320 = sbr.rel (0) target = $region49
    $region48: #{vqvae_forward.21} parent=1 // pred_region
      %322 = vsyncadd [#allocation4], 0
      %s323 = sshll.u32 [#allocation10], 4
      %s324 = int_to_ptr.vmem [resolvable:$true] %s323
      %s325 = sshll.u32 %s7, 4
      %s326 = int_to_ptr.hbm [resolvable:$true] %s325
      %331 = dma.vmem_to_hbm [thread:$0]  %s324, 256, %s326, [#allocation4], 128, 128, 8
    $region49: #{vqvae_forward.21} parent=1 // pred_fallthru
      _
    // Predicated region
    $region50: #{vqvae_forward.21} parent=1 // pred_check
      _
    $region51: #{vqvae_forward.21} parent=1 // pred_check_branch
      %333 = sbr.rel (0) target = $region53
    $region52: #{vqvae_forward.21} parent=1 // pred_region
      %335 = dma.done [#allocation4], 256
    $region53: #{vqvae_forward.21} parent=1 // pred_fallthru
      _
    %336 = vsyncpa [#allocation3], 1
    %337 = vsyncpa [#allocation6], 1
    %338 = vsyncpa [#allocation9], 1
    %339 = vsyncpa [#allocation4], 1

// kernel: vqvae_forward.20
$region0: #{vqvae_forward.20}
  #allocation0 [shape = 'u32[]', space=smem, size = 0x4, offset = 0x4, fixed_abs, tag = 'smem constant byte address 0x4 - core index']
  #allocation1 [shape = 'u32[72,128]{1,0:T(1,128)}', space=vmem, size = 0x9000, scoped, tag = 'internal scratch']
  #allocation2 [shape = 'f32[8,128]{1,0:T(8,128)}', space=vmem, size = 0x1000, scoped, tag = 'scratch operand']
  %s0 = inlined_call_operand.vmem [shape: f32[2,8,128], index: 0, kind: input, shape index: {}]
  %s1 = inlined_call_operand.vmem [shape: f32[2,8,128], index: 1, kind: input, shape index: {}]
  %s2 = inlined_call_operand.hbm [shape: bf16[128,128], index: 2, kind: input, shape index: {}]
  %s3 = inlined_call_operand.hbm [shape: f32[1,128], index: 3, kind: input, shape index: {}]
  %s4 = inlined_call_operand.hbm [shape: bf16[128,256], index: 4, kind: input, shape index: {}]
  %s5 = inlined_call_operand.vmem [shape: f32[1,256], index: 5, kind: input, shape index: {}]
  %s6 = inlined_call_operand.hbm [shape: bf16[128,128], index: 6, kind: input, shape index: {}]
  %s7 = inlined_call_operand.hbm [shape: f32[1,128], index: 7, kind: input, shape index: {}]
  %s8 = inlined_call_operand.hbm [shape: f32[1,128], index: 8, kind: input, shape index: {}]
  %s9 = inlined_call_operand.hbm [shape: f32[1,128], index: 9, kind: input, shape index: {}]
  %s10 = inlined_call_operand.vmem [shape: f32[2,8,128], index: 10, kind: output, shape index: {}]
  %s11 = sld [smem:[#allocation0]]
  $region101: #{vqvae_forward.20} parent=0
    _
  %s13 = ssub.s32 1, %s11
  %s14 = scalar_select 0, %s13, %s11
  $region1: #{vqvae_forward.20} parent=0
    #allocation3 [shape = 'u8[32768]{0}', space=vmem, size = 0x8000, scoped, tag = 'input window, operand 2, single buffered']
    #allocation4 [shape = 's32[2]{0}', space=sflag, size = 0x8, scoped, tag = 'scoped memory for vqvae_forward.20']
    #allocation5 [shape = 'u8[512]{0}', space=vmem, size = 0x400, scoped, tag = 'input window, operand 3, single buffered']
    #allocation6 [shape = 's32[1]{0}', space=sflag, size = 0x4, scoped, tag = 'scoped memory for vqvae_forward.20']
    #allocation7 [shape = 'u8[65536]{0}', space=vmem, size = 0x10000, scoped, tag = 'input window, operand 4, single buffered']
    #allocation8 [shape = 'u8[32768]{0}', space=vmem, size = 0x8000, scoped, tag = 'input window, operand 6, single buffered']
    #allocation9 [shape = 's32[1]{0}', space=sflag, size = 0x4, scoped, tag = 'scoped memory for vqvae_forward.20']
    #allocation10 [shape = 'u8[512]{0}', space=vmem, size = 0x400, scoped, tag = 'input window, operand 7, single buffered']
    #allocation11 [shape = 'u8[512]{0}', space=vmem, size = 0x400, scoped, tag = 'input window, operand 8, single buffered']
    #allocation12 [shape = 's32[1]{0}', space=sflag, size = 0x4, scoped, tag = 'scoped memory for vqvae_forward.20']
    #allocation13 [shape = 'u8[512]{0}', space=vmem, size = 0x400, scoped, tag = 'input window, operand 9, single buffered']
    %15 = vsyncpa [#allocation4], 0
    %16 = vsyncpa [#allocation6], 0
    %17 = vsyncpa [#allocation9], 0
    %18 = vsyncpa [#allocation12], 0
    loop: start=0, step=1, limit=4
    $region2: #{vqvae_forward.20} parent=1 // loop_pre_header
      _
    $region3: #{vqvae_forward.20} parent=1 // loop_header
      %s20 = sphi 0, %s24
      %p21 = scmp.ge.s32.totalorder %s20, 4
      %s27 = sphi 0, %s39
      %s28 = sphi 0, %s35
      %s29 = sphi 0, %s27
      %s30 = sphi 0, %s28
      %s31 = sphi 0, %s29
      %s32 = sphi 0, %s30
      %s44 = sphi 0, %s46
      %s47 = sphi 0, %s44
      %s48 = sphi 0, %s47
      %s64 = sphi 0, %s48
      %s70 = sphi 0, %s72
      %s73 = sphi 0, %s70
      %s74 = sphi 0, %s73
      %s90 = sphi 0, %s74
      %s94 = sphi 0, %s94
      %s96 = sphi 0, %s94
      %s97 = sphi 0, %s96
      %s111 = sphi 0, %s97
      %s115 = sphi 0, %s115
      %s117 = sphi 0, %s115
      %s118 = sphi 0, %s117
      %s132 = sphi 0, %s118
      %s136 = sphi 0, %s136
      %s138 = sphi 0, %s136
      %s139 = sphi 0, %s138
      %s153 = sphi 0, %s139
      %s157 = sphi 0, %s157
      %s159 = sphi 0, %s157
      %s160 = sphi 0, %s159
      %s174 = sphi 0, %s160
      %s178 = sphi 0, %s178
      %s180 = sphi 0, %s178
      %s181 = sphi 0, %s180
      %s195 = sphi 0, %s181
      %s199 = sphi 0, %s199
      %s201 = sphi 0, %s199
      %s202 = sphi 0, %s201
      %s216 = sphi 0, %s202
      %s220 = sphi 0, %s220
      %s222 = sphi 0, %s220
      %s223 = sphi 0, %s222
      %s237 = sphi 0, %s223
      %s241 = sphi 0, %s241
      %s243 = sphi 0, %s241
      %s244 = sphi 0, %s243
      %s258 = sphi 0, %s244
      %s266 = sphi 0, %s268
      %s269 = sphi 0, %s266
      %s270 = sphi 0, %s269
      %s286 = sphi 0, %s270
    $region4: #{vqvae_forward.20} parent=1 // loop_header_branch
      %23 = sbr.rel (%p21) target = $region8
    $region5: #{vqvae_forward.20} parent=1 // loop_body
      %s25 = ssub.s32 %s20, 1
      %s26 = ssub.s32 %s20, 2
      %s33 = sadd.s32 1, %s28
      %p34 = scmp.ge.s32.totalorder %s33, 1
      %s35 = scalar_select %p34, 0, %s33
      %s36 = sadd.s32 1, %s27
      %s37 = scalar_select %p34, %s36, %s27
      %p38 = scmp.ge.s32.totalorder %s37, 2
      %s39 = scalar_select %p38, 0, %s37
      %s40 = ssub.s32 %s27, %s39
      %s41 = ssub.s32 %s28, %s35
      %s42 = sor.u32 %s40, %s41
      %p43 = scmp.eq.s32.totalorder %s42, 0
      %s45 = sadd.s32 %s44, 1
      %s46 = scalar_select %p43, %s44, %s45
      %p49 = pneg %p43
      %p50 = scmp.eq.s32.totalorder %s20, 1
      %p51 = por %p49, %p50
      %p52 = scmp.ne.s32.totalorder %s44, %s47
      %p53 = scmp.eq.s32.totalorder %s20, 0
      %p54 = por %p52, %p53
      %p55 = scmp.ne.s32.totalorder %s44, %s47
      %p56 = scmp.eq.s32.totalorder %s25, 1
      %p57 = por %p55, %p56
      %p58 = scmp.ne.s32.totalorder %s47, %s48
      %p59 = scmp.eq.s32.totalorder %s25, 0
      %p60 = por %p58, %p59
      %p61 = scmp.ne.s32.totalorder %s47, %s48
      %p62 = scmp.eq.s32.totalorder %s26, 1
      %p63 = por %p61, %p62
      %p65 = scmp.ne.s32.totalorder %s48, %s64
      %p66 = scmp.eq.s32.totalorder %s26, 0
      %p67 = por %p65, %p66
      %s68 = ssub.s32 %s27, %s39
      %p69 = scmp.eq.s32.totalorder %s68, 0
      %s71 = sadd.s32 %s70, 1
      %s72 = scalar_select %p69, %s70, %s71
      %p75 = pneg %p69
      %p76 = scmp.eq.s32.totalorder %s20, 1
      %p77 = por %p75, %p76
      %p78 = scmp.ne.s32.totalorder %s70, %s73
      %p79 = scmp.eq.s32.totalorder %s20, 0
      %p80 = por %p78, %p79
      %p81 = scmp.ne.s32.totalorder %s70, %s73
      %p82 = scmp.eq.s32.totalorder %s25, 1
      %p83 = por %p81, %p82
      %p84 = scmp.ne.s32.totalorder %s73, %s74
      %p85 = scmp.eq.s32.totalorder %s25, 0
      %p86 = por %p84, %p85
      %p87 = scmp.ne.s32.totalorder %s73, %s74
      %p88 = scmp.eq.s32.totalorder %s26, 1
      %p89 = por %p87, %p88
      %p91 = scmp.ne.s32.totalorder %s74, %s90
      %p92 = scmp.eq.s32.totalorder %s26, 0
      %p93 = por %p91, %p92
      %s95 = sadd.s32 %s94, 1
      %p98 = scmp.eq.s32.totalorder %s20, 1
      %p99 = scmp.ne.s32.totalorder %s94, %s96
      %p100 = scmp.eq.s32.totalorder %s20, 0
      %p101 = por %p99, %p100
      %p102 = scmp.ne.s32.totalorder %s94, %s96
      %p103 = scmp.eq.s32.totalorder %s25, 1
      %p104 = por %p102, %p103
      %p105 = scmp.ne.s32.totalorder %s96, %s97
      %p106 = scmp.eq.s32.totalorder %s25, 0
      %p107 = por %p105, %p106
      %p108 = scmp.ne.s32.totalorder %s96, %s97
      %p109 = scmp.eq.s32.totalorder %s26, 1
      %p110 = por %p108, %p109
      %p112 = scmp.ne.s32.totalorder %s97, %s111
      %p113 = scmp.eq.s32.totalorder %s26, 0
      %p114 = por %p112, %p113
      %s116 = sadd.s32 %s115, 1
      %p119 = scmp.eq.s32.totalorder %s20, 1
      %p120 = scmp.ne.s32.totalorder %s115, %s117
      %p121 = scmp.eq.s32.totalorder %s20, 0
      %p122 = por %p120, %p121
      %p123 = scmp.ne.s32.totalorder %s115, %s117
      %p124 = scmp.eq.s32.totalorder %s25, 1
      %p125 = por %p123, %p124
      %p126 = scmp.ne.s32.totalorder %s117, %s118
      %p127 = scmp.eq.s32.totalorder %s25, 0
      %p128 = por %p126, %p127
      %p129 = scmp.ne.s32.totalorder %s117, %s118
      %p130 = scmp.eq.s32.totalorder %s26, 1
      %p131 = por %p129, %p130
      %p133 = scmp.ne.s32.totalorder %s118, %s132
      %p134 = scmp.eq.s32.totalorder %s26, 0
      %p135 = por %p133, %p134
      %s137 = sadd.s32 %s136, 1
      %p140 = scmp.eq.s32.totalorder %s20, 1
      %p141 = scmp.ne.s32.totalorder %s136, %s138
      %p142 = scmp.eq.s32.totalorder %s20, 0
      %p143 = por %p141, %p142
      %p144 = scmp.ne.s32.totalorder %s136, %s138
      %p145 = scmp.eq.s32.totalorder %s25, 1
      %p146 = por %p144, %p145
      %p147 = scmp.ne.s32.totalorder %s138, %s139
      %p148 = scmp.eq.s32.totalorder %s25, 0
      %p149 = por %p147, %p148
      %p150 = scmp.ne.s32.totalorder %s138, %s139
      %p151 = scmp.eq.s32.totalorder %s26, 1
      %p152 = por %p150, %p151
      %p154 = scmp.ne.s32.totalorder %s139, %s153
      %p155 = scmp.eq.s32.totalorder %s26, 0
      %p156 = por %p154, %p155
      %s158 = sadd.s32 %s157, 1
      %p161 = scmp.eq.s32.totalorder %s20, 1
      %p162 = scmp.ne.s32.totalorder %s157, %s159
      %p163 = scmp.eq.s32.totalorder %s20, 0
      %p164 = por %p162, %p163
      %p165 = scmp.ne.s32.totalorder %s157, %s159
      %p166 = scmp.eq.s32.totalorder %s25, 1
      %p167 = por %p165, %p166
      %p168 = scmp.ne.s32.totalorder %s159, %s160
      %p169 = scmp.eq.s32.totalorder %s25, 0
      %p170 = por %p168, %p169
      %p171 = scmp.ne.s32.totalorder %s159, %s160
      %p172 = scmp.eq.s32.totalorder %s26, 1
      %p173 = por %p171, %p172
      %p175 = scmp.ne.s32.totalorder %s160, %s174
      %p176 = scmp.eq.s32.totalorder %s26, 0
      %p177 = por %p175, %p176
      %s179 = sadd.s32 %s178, 1
      %p182 = scmp.eq.s32.totalorder %s20, 1
      %p183 = scmp.ne.s32.totalorder %s178, %s180
      %p184 = scmp.eq.s32.totalorder %s20, 0
      %p185 = por %p183, %p184
      %p186 = scmp.ne.s32.totalorder %s178, %s180
      %p187 = scmp.eq.s32.totalorder %s25, 1
      %p188 = por %p186, %p187
      %p189 = scmp.ne.s32.totalorder %s180, %s181
      %p190 = scmp.eq.s32.totalorder %s25, 0
      %p191 = por %p189, %p190
      %p192 = scmp.ne.s32.totalorder %s180, %s181
      %p193 = scmp.eq.s32.totalorder %s26, 1
      %p194 = por %p192, %p193
      %p196 = scmp.ne.s32.totalorder %s181, %s195
      %p197 = scmp.eq.s32.totalorder %s26, 0
      %p198 = por %p196, %p197
      %s200 = sadd.s32 %s199, 1
      %p203 = scmp.eq.s32.totalorder %s20, 1
      %p204 = scmp.ne.s32.totalorder %s199, %s201
      %p205 = scmp.eq.s32.totalorder %s20, 0
      %p206 = por %p204, %p205
      %p207 = scmp.ne.s32.totalorder %s199, %s201
      %p208 = scmp.eq.s32.totalorder %s25, 1
      %p209 = por %p207, %p208
      %p210 = scmp.ne.s32.totalorder %s201, %s202
      %p211 = scmp.eq.s32.totalorder %s25, 0
      %p212 = por %p210, %p211
      %p213 = scmp.ne.s32.totalorder %s201, %s202
      %p214 = scmp.eq.s32.totalorder %s26, 1
      %p215 = por %p213, %p214
      %p217 = scmp.ne.s32.totalorder %s202, %s216
      %p218 = scmp.eq.s32.totalorder %s26, 0
      %p219 = por %p217, %p218
      %s221 = sadd.s32 %s220, 1
      %p224 = scmp.eq.s32.totalorder %s20, 1
      %p225 = scmp.ne.s32.totalorder %s220, %s222
      %p226 = scmp.eq.s32.totalorder %s20, 0
      %p227 = por %p225, %p226
      %p228 = scmp.ne.s32.totalorder %s220, %s222
      %p229 = scmp.eq.s32.totalorder %s25, 1
      %p230 = por %p228, %p229
      %p231 = scmp.ne.s32.totalorder %s222, %s223
      %p232 = scmp.eq.s32.totalorder %s25, 0
      %p233 = por %p231, %p232
      %p234 = scmp.ne.s32.totalorder %s222, %s223
      %p235 = scmp.eq.s32.totalorder %s26, 1
      %p236 = por %p234, %p235
      %p238 = scmp.ne.s32.totalorder %s223, %s237
      %p239 = scmp.eq.s32.totalorder %s26, 0
      %p240 = por %p238, %p239
      %s242 = sadd.s32 %s241, 1
      %p245 = scmp.eq.s32.totalorder %s20, 1
      %p246 = scmp.ne.s32.totalorder %s241, %s243
      %p247 = scmp.eq.s32.totalorder %s20, 0
      %p248 = por %p246, %p247
      %p249 = scmp.ne.s32.totalorder %s241, %s243
      %p250 = scmp.eq.s32.totalorder %s25, 1
      %p251 = por %p249, %p250
      %p252 = scmp.ne.s32.totalorder %s243, %s244
      %p253 = scmp.eq.s32.totalorder %s25, 0
      %p254 = por %p252, %p253
      %p255 = scmp.ne.s32.totalorder %s243, %s244
      %p256 = scmp.eq.s32.totalorder %s26, 1
      %p257 = por %p255, %p256
      %p259 = scmp.ne.s32.totalorder %s244, %s258
      %p260 = scmp.eq.s32.totalorder %s26, 0
      %p261 = por %p259, %p260
      %s262 = ssub.s32 %s27, %s39
      %s263 = ssub.s32 %s28, %s35
      %s264 = sor.u32 %s262, %s263
      %p265 = scmp.eq.s32.totalorder %s264, 0
      %s267 = sadd.s32 %s266, 1
      %s268 = scalar_select %p265, %s266, %s267
      %p271 = pneg %p265
      %p272 = scmp.eq.s32.totalorder %s20, 1
      %p273 = por %p271, %p272
      %p274 = scmp.ne.s32.totalorder %s266, %s269
      %p275 = scmp.eq.s32.totalorder %s20, 0
      %p276 = por %p274, %p275
      %p277 = scmp.ne.s32.totalorder %s266, %s269
      %p278 = scmp.eq.s32.totalorder %s25, 1
      %p279 = por %p277, %p278
      %p280 = scmp.ne.s32.totalorder %s269, %s270
      %p281 = scmp.eq.s32.totalorder %s25, 0
      %p282 = por %p280, %p281
      %p283 = scmp.ne.s32.totalorder %s269, %s270
      %p284 = scmp.eq.s32.totalorder %s26, 1
      %p285 = por %p283, %p284
      %p287 = scmp.ne.s32.totalorder %s270, %s286
      %p288 = scmp.eq.s32.totalorder %s26, 0
      %p289 = por %p287, %p288
      %p290 = scmp.le.s32.totalorder 1, %s20
      %p291 = scmp.lt.s32.totalorder %s20, 3
      %p292 = pnand %p290, %p291
      %p293 = pneg %p292
      // Predicated region
      $region9: #{vqvae_forward.20} parent=5 // pred_check
        _
      $region10: #{vqvae_forward.20} parent=5 // pred_check_branch
        %295 = sbr.rel (%p292) target = $region12
      $region11: #{vqvae_forward.20} parent=5 // pred_region
        %s296 = ssub.s32 %s20, 1
        // Predicated region
        $region13: #{vqvae_forward.20} parent=11 // pred_check
          %p297 = pneg %p107
        $region14: #{vqvae_forward.20} parent=11 // pred_check_branch
          %299 = sbr.rel (%p297) target = $region16
        $region15: #{vqvae_forward.20} parent=11 // pred_region
          %301 = vsyncadd [#allocation4], 0
          %s302 = sshll.u32 %s2, 4
          %s303 = int_to_ptr.hbm [resolvable:$true] %s302
          %s304 = sshll.u32 [#allocation3], 4
          %s305 = int_to_ptr.vmem [resolvable:$true] %s304
          %310 = dma.hbm_to_vmem [thread:$0]  %s303, 1024, %s305, [#allocation4], 64, 64, 4
        $region16: #{vqvae_forward.20} parent=11 // pred_fallthru
          _
        // Predicated region
        $region17: #{vqvae_forward.20} parent=11 // pred_check
          %p311 = pneg %p128
        $region18: #{vqvae_forward.20} parent=11 // pred_check_branch
          %313 = sbr.rel (%p311) target = $region20
        $region19: #{vqvae_forward.20} parent=11 // pred_region
          %315 = vsyncadd [#allocation6], 0
          %s317 = sshll.u32 %s3, 4
          %s318 = int_to_ptr.hbm [resolvable:$true] %s317
          %s319 = sshll.u32 [#allocation5], 4
          %s320 = int_to_ptr.vmem [resolvable:$true] %s319
          %322 = dma.hbm_to_vmem [thread:$0]  %s318, 16, %s320, [#allocation6]
        $region20: #{vqvae_forward.20} parent=11 // pred_fallthru
          _
        // Predicated region
        $region21: #{vqvae_forward.20} parent=11 // pred_check
          %p323 = pneg %p149
        $region22: #{vqvae_forward.20} parent=11 // pred_check_branch
          %325 = sbr.rel (%p323) target = $region24
        $region23: #{vqvae_forward.20} parent=11 // pred_region
          %327 = vsyncadd [#allocation6], 0
          %s328 = sshll.u32 %s4, 4
          %s329 = int_to_ptr.hbm [resolvable:$true] %s328
          %s330 = sshll.u32 [#allocation7], 4
          %s331 = int_to_ptr.vmem [resolvable:$true] %s330
          %336 = dma.hbm_to_vmem [thread:$0]  %s329, 2048, %s331, [#allocation6], 128, 128, 8
        $region24: #{vqvae_forward.20} parent=11 // pred_fallthru
          _
        // Predicated region
        $region25: #{vqvae_forward.20} parent=11 // pred_check
          %p337 = pneg %p170
        $region26: #{vqvae_forward.20} parent=11 // pred_check_branch
          %339 = sbr.rel (%p337) target = $region28
        $region27: #{vqvae_forward.20} parent=11 // pred_region
          _
        $region28: #{vqvae_forward.20} parent=11 // pred_fallthru
          _
        // Predicated region
        $region29: #{vqvae_forward.20} parent=11 // pred_check
          %p340 = pneg %p191
        $region30: #{vqvae_forward.20} parent=11 // pred_check_branch
          %342 = sbr.rel (%p340) target = $region32
        $region31: #{vqvae_forward.20} parent=11 // pred_region
          %344 = vsyncadd [#allocation9], 0
          %s345 = sshll.u32 %s6, 4
          %s346 = int_to_ptr.hbm [resolvable:$true] %s345
          %s347 = sshll.u32 [#allocation8], 4
          %s348 = int_to_ptr.vmem [resolvable:$true] %s347
          %353 = dma.hbm_to_vmem [thread:$0]  %s346, 1024, %s348, [#allocation9], 64, 64, 4
        $region32: #{vqvae_forward.20} parent=11 // pred_fallthru
          _
        // Predicated region
        $region33: #{vqvae_forward.20} parent=11 // pred_check
          %p354 = pneg %p212
        $region34: #{vqvae_forward.20} parent=11 // pred_check_branch
          %356 = sbr.rel (%p354) target = $region36
        $region35: #{vqvae_forward.20} parent=11 // pred_region
          %358 = vsyncadd [#allocation9], 0
          %s360 = sshll.u32 %s7, 4
          %s361 = int_to_ptr.hbm [resolvable:$true] %s360
          %s362 = sshll.u32 [#allocation10], 4
          %s363 = int_to_ptr.vmem [resolvable:$true] %s362
          %365 = dma.hbm_to_vmem [thread:$0]  %s361, 16, %s363, [#allocation9]
        $region36: #{vqvae_forward.20} parent=11 // pred_fallthru
          _
        // Predicated region
        $region37: #{vqvae_forward.20} parent=11 // pred_check
          %p366 = pneg %p233
        $region38: #{vqvae_forward.20} parent=11 // pred_check_branch
          %368 = sbr.rel (%p366) target = $region40
        $region39: #{vqvae_forward.20} parent=11 // pred_region
          %370 = vsyncadd [#allocation12], 0
          %s372 = sshll.u32 %s8, 4
          %s373 = int_to_ptr.hbm [resolvable:$true] %s372
          %s374 = sshll.u32 [#allocation11], 4
          %s375 = int_to_ptr.vmem [resolvable:$true] %s374
          %377 = dma.hbm_to_vmem [thread:$0]  %s373, 16, %s375, [#allocation12]
        $region40: #{vqvae_forward.20} parent=11 // pred_fallthru
          _
        // Predicated region
        $region41: #{vqvae_forward.20} parent=11 // pred_check
          %p378 = pneg %p254
        $region42: #{vqvae_forward.20} parent=11 // pred_check_branch
          %380 = sbr.rel (%p378) target = $region44
        $region43: #{vqvae_forward.20} parent=11 // pred_region
          %382 = vsyncadd [#allocation12], 0
          %s384 = sshll.u32 %s9, 4
          %s385 = int_to_ptr.hbm [resolvable:$true] %s384
          %s386 = sshll.u32 [#allocation13], 4
          %s387 = int_to_ptr.vmem [resolvable:$true] %s386
          %389 = dma.hbm_to_vmem [thread:$0]  %s385, 16, %s387, [#allocation12]
        $region44: #{vqvae_forward.20} parent=11 // pred_fallthru
          _
      $region12: #{vqvae_forward.20} parent=5 // pred_fallthru
        _
      %p390 = scmp.lt.s32.totalorder %s20, 2
      // Predicated region
      $region45: #{vqvae_forward.20} parent=5 // pred_check
        %p391 = pneg %p390
      $region46: #{vqvae_forward.20} parent=5 // pred_check_branch
        %393 = sbr.rel (%p391) target = $region48
      $region47: #{vqvae_forward.20} parent=5 // pred_region
        // Predicated region
        $region49: #{vqvae_forward.20} parent=47 // pred_check
          %p394 = pneg %p54
        $region50: #{vqvae_forward.20} parent=47 // pred_check_branch
          %396 = sbr.rel (%p394) target = $region52
        $region51: #{vqvae_forward.20} parent=47 // pred_region
          %p397 = scmp.lt.s32.totalorder %s27, 1
          %s398 = scalar_select %p397, %s27, 1
          %p399 = scmp.lt.s32.totalorder %s28, 0
          %s400 = scalar_select %p399, %s28, 0
          %s401 = sadd.s32 %s400, %s398
          %s402 = smul.addr %s401, 8
          %s403 = scalar_lea.vmem %s0, %s402
        $region52: #{vqvae_forward.20} parent=47 // pred_fallthru
          _
        // Predicated region
        $region53: #{vqvae_forward.20} parent=47 // pred_check
          %p404 = pneg %p80
        $region54: #{vqvae_forward.20} parent=47 // pred_check_branch
          %406 = sbr.rel (%p404) target = $region56
        $region55: #{vqvae_forward.20} parent=47 // pred_region
          %p407 = scmp.lt.s32.totalorder %s27, 1
          %s408 = scalar_select %p407, %s27, 1
          %s409 = smul.addr %s408, 8
          %s410 = scalar_lea.vmem %s1, %s409
        $region56: #{vqvae_forward.20} parent=47 // pred_fallthru
          _
      $region48: #{vqvae_forward.20} parent=5 // pred_fallthru
        _
      %p411 = scmp.le.s32.totalorder 1, %s20
      %p412 = scmp.lt.s32.totalorder %s20, 3
      %p413 = pnand %p411, %p412
      %p414 = pneg %p413
      // Predicated region
      $region57: #{vqvae_forward.20} parent=5 // pred_check
        _
      $region58: #{vqvae_forward.20} parent=5 // pred_check_branch
        %416 = sbr.rel (%p413) target = $region60
      $region59: #{vqvae_forward.20} parent=5 // pred_region
        %s417 = ssub.s32 %s20, 1
        // Predicated region
        $region61: #{vqvae_forward.20} parent=59 // pred_check
          %p418 = pneg %p107
        $region62: #{vqvae_forward.20} parent=59 // pred_check_branch
          %420 = sbr.rel (%p418) target = $region64
        $region63: #{vqvae_forward.20} parent=59 // pred_region
          %422 = dma.done [#allocation4], 1024
        $region64: #{vqvae_forward.20} parent=59 // pred_fallthru
          _
        // Predicated region
        $region65: #{vqvae_forward.20} parent=59 // pred_check
          %p423 = pneg %p128
        $region66: #{vqvae_forward.20} parent=59 // pred_check_branch
          %425 = sbr.rel (%p423) target = $region68
        $region67: #{vqvae_forward.20} parent=59 // pred_region
          %427 = dma.done [#allocation6], 16
        $region68: #{vqvae_forward.20} parent=59 // pred_fallthru
          _
        // Predicated region
        $region69: #{vqvae_forward.20} parent=59 // pred_check
          %p428 = pneg %p149
        $region70: #{vqvae_forward.20} parent=59 // pred_check_branch
          %430 = sbr.rel (%p428) target = $region72
        $region71: #{vqvae_forward.20} parent=59 // pred_region
          %432 = dma.done [#allocation6], 2048
        $region72: #{vqvae_forward.20} parent=59 // pred_fallthru
          _
        // Predicated region
        $region73: #{vqvae_forward.20} parent=59 // pred_check
          %p433 = pneg %p191
        $region74: #{vqvae_forward.20} parent=59 // pred_check_branch
          %435 = sbr.rel (%p433) target = $region76
        $region75: #{vqvae_forward.20} parent=59 // pred_region
          %437 = dma.done [#allocation9], 1024
        $region76: #{vqvae_forward.20} parent=59 // pred_fallthru
          _
        // Predicated region
        $region77: #{vqvae_forward.20} parent=59 // pred_check
          %p438 = pneg %p212
        $region78: #{vqvae_forward.20} parent=59 // pred_check_branch
          %440 = sbr.rel (%p438) target = $region80
        $region79: #{vqvae_forward.20} parent=59 // pred_region
          %442 = dma.done [#allocation9], 16
        $region80: #{vqvae_forward.20} parent=59 // pred_fallthru
          _
        // Predicated region
        $region81: #{vqvae_forward.20} parent=59 // pred_check
          %p443 = pneg %p233
        $region82: #{vqvae_forward.20} parent=59 // pred_check_branch
          %445 = sbr.rel (%p443) target = $region84
        $region83: #{vqvae_forward.20} parent=59 // pred_region
          %447 = dma.done [#allocation12], 16
        $region84: #{vqvae_forward.20} parent=59 // pred_fallthru
          _
        // Predicated region
        $region85: #{vqvae_forward.20} parent=59 // pred_check
          %p448 = pneg %p254
        $region86: #{vqvae_forward.20} parent=59 // pred_check_branch
          %450 = sbr.rel (%p448) target = $region88
        $region87: #{vqvae_forward.20} parent=59 // pred_region
          %452 = dma.done [#allocation12], 16
        $region88: #{vqvae_forward.20} parent=59 // pred_fallthru
          _
        %p453 = scmp.lt.s32.totalorder %s29, 1
        %s454 = scalar_select %p453, %s29, 1
        %p455 = scmp.lt.s32.totalorder %s30, 0
        %s456 = scalar_select %p455, %s30, 0
        %s457 = sadd.s32 %s456, %s454
        %s458 = smul.addr %s457, 8
        %s459 = scalar_lea.vmem %s0, %s458
        %p460 = pneg %p60
        %p461 = pneg %p57
        %p462 = scmp.lt.s32.totalorder %s29, 1
        %s463 = scalar_select %p462, %s29, 1
        %s464 = smul.addr %s463, 8
        %s465 = scalar_lea.vmem %s1, %s464
        %p466 = pneg %p86
        %p467 = pneg %p83
        %p468 = pneg %p107
        %p469 = pneg %p104
        %p470 = pneg %p128
        %p471 = pneg %p125
        %p472 = pneg %p149
        %p473 = pneg %p146
        %p474 = pneg %p170
        %p475 = pneg %p167
        %p476 = pneg %p191
        %p477 = pneg %p188
        %p478 = pneg %p212
        %p479 = pneg %p209
        %p480 = pneg %p233
        %p481 = pneg %p230
        %p482 = pneg %p254
        %p483 = pneg %p251
        %p484 = pneg %p282
        %p485 = pneg %p279
        %p486 = scmp.lt.s32.totalorder %s29, 1
        %s487 = scalar_select %p486, %s29, 1
        %p488 = scmp.lt.s32.totalorder %s30, 0
        %s489 = scalar_select %p488, %s30, 0
        %s490 = sadd.s32 %s489, %s487
        %s491 = smul.addr %s490, 8
        %s492 = scalar_lea.vmem %s10, %s491
        %p493 = scmp.lt.s32.totalorder %s29, 1
        %s494 = scalar_select %p493, %s29, 1
        %p495 = scmp.lt.s32.totalorder %s30, 0
        %s496 = scalar_select %p495, %s30, 0
        %s497 = sadd.s32 %s496, %s494
        %s498 = smul.addr %s497, 8
        %s499 = scalar_lea.vmem %s0, %s498
        %p500 = scmp.lt.s32.totalorder %s29, 1
        %s501 = scalar_select %p500, %s29, 1
        %s502 = smul.addr %s501, 8
        %s503 = scalar_lea.vmem %s1, %s502
        %p504 = scmp.lt.s32.totalorder %s29, 1
        %s505 = scalar_select %p504, %s29, 1
        %p506 = scmp.lt.s32.totalorder %s30, 0
        %s507 = scalar_select %p506, %s30, 0
        %s508 = sadd.s32 %s507, %s505
        %s509 = smul.addr %s508, 8
        %s510 = scalar_lea.vmem %s10, %s509
        %v512 = vld [vmem:[%s499] sm:$0xff]
        %v513 = vld [vmem:[%s503] sm:$0xff]
        %v514 = vpack.c.bf16 %v512, %v512
        %v515 = vld [vmem:[#allocation3] sm:$0xf]
        %v516 = vld [vmem:[#allocation3 + $0x4] sm:$0xf]
        %v517 = vld [vmem:[#allocation3 + $0x8] sm:$0xf]
        %v518 = vld [vmem:[#allocation3 + $0xc] sm:$0xf]
        %v519 = vld [vmem:[#allocation3 + $0x10] sm:$0xf]
        %v520 = vld [vmem:[#allocation3 + $0x14] sm:$0xf]
        %v521 = vld [vmem:[#allocation3 + $0x18] sm:$0xf]
        %v522 = vld [vmem:[#allocation3 + $0x1c] sm:$0xf]
        %v523 = vld [vmem:[#allocation3 + $0x20] sm:$0xf]
        %v524 = vld [vmem:[#allocation3 + $0x24] sm:$0xf]
        %v525 = vld [vmem:[#allocation3 + $0x28] sm:$0xf]
        %v526 = vld [vmem:[#allocation3 + $0x2c] sm:$0xf]
        %v527 = vld [vmem:[#allocation3 + $0x30] sm:$0xf]
        %v528 = vld [vmem:[#allocation3 + $0x34] sm:$0xf]
        %v529 = vld [vmem:[#allocation3 + $0x38] sm:$0xf]
        %v530 = vld [vmem:[#allocation3 + $0x3c] sm:$0xf]
        %v531 = vld [vmem:[#allocation5] sm:$0x1]
        %v533 = vperm.slane %v531, 0
        %v551 = vunpack.c.l.b16 %v515
        %v552 = vunpack.c.l.b16 %v516
        %v553 = vunpack.c.l.b16 %v517
        %v554 = vunpack.c.l.b16 %v518
        %v555 = vunpack.c.l.b16 %v519
        %v556 = vunpack.c.l.b16 %v520
        %v557 = vunpack.c.l.b16 %v521
        %v558 = vunpack.c.l.b16 %v522
        %v559 = vunpack.c.l.b16 %v523
        %v560 = vunpack.c.l.b16 %v524
        %v561 = vunpack.c.l.b16 %v525
        %v562 = vunpack.c.l.b16 %v526
        %v563 = vunpack.c.l.b16 %v527
        %v564 = vunpack.c.l.b16 %v528
        %v565 = vunpack.c.l.b16 %v529
        %v566 = vunpack.c.l.b16 %v530
        %v567 = vpack.c.b16 %v552, %v551
        %v568 = vpack.c.b16 %v554, %v553
        %v569 = vpack.c.b16 %v556, %v555
        %v570 = vpack.c.b16 %v558, %v557
        %v571 = vpack.c.b16 %v560, %v559
        %v572 = vpack.c.b16 %v562, %v561
        %v573 = vpack.c.b16 %v564, %v563
        %v574 = vpack.c.b16 %v566, %v565
        %583 = vmatpush.bf16.msra.mxu0 %v574
        %584 = vmatpush.bf16.msra.mxu0 %v573
        %585 = vmatpush.bf16.msra.mxu0 %v572
        %586 = vmatpush.bf16.msra.mxu0 %v571
        %587 = vmatpush.bf16.msra.mxu0 %v570
        %588 = vmatpush.bf16.msra.mxu0 %v569
        %589 = vmatpush.bf16.msra.mxu0 %v568
        %590 = vmatpush.bf16.msra.mxu0 %v567
        %591 = vmatmul.bf16.gmra.mxu0 %v514
        %v592 = vpop.f32.mrf.mxu0
        %v593 = vadd.f32 %v533, %v592
        %v594 = vpop.f32.mrf.mxu0
        %595 = vdwg.mxu0
        %v596 = vpack.c.bf16 %v513, %v513
        %v597 = vld [vmem:[#allocation7] sm:$0xff]
        %v598 = vld [vmem:[#allocation7 + $0x8] sm:$0xff]
        %v599 = vld [vmem:[#allocation7 + $0x10] sm:$0xff]
        %v600 = vld [vmem:[#allocation7 + $0x18] sm:$0xff]
        %v601 = vld [vmem:[#allocation7 + $0x20] sm:$0xff]
        %v602 = vld [vmem:[#allocation7 + $0x28] sm:$0xff]
        %v603 = vld [vmem:[#allocation7 + $0x30] sm:$0xff]
        %v604 = vld [vmem:[#allocation7 + $0x38] sm:$0xff]
        %v605 = vld [vmem:[#allocation7 + $0x40] sm:$0xff]
        %v606 = vld [vmem:[#allocation7 + $0x48] sm:$0xff]
        %v607 = vld [vmem:[#allocation7 + $0x50] sm:$0xff]
        %v608 = vld [vmem:[#allocation7 + $0x58] sm:$0xff]
        %v609 = vld [vmem:[#allocation7 + $0x60] sm:$0xff]
        %v610 = vld [vmem:[#allocation7 + $0x68] sm:$0xff]
        %v611 = vld [vmem:[#allocation7 + $0x70] sm:$0xff]
        %v612 = vld [vmem:[#allocation7 + $0x78] sm:$0xff]
        %v613 = vld [vmem:[%s5] sm:$0x3]
        %v615 = vperm.slane %v613, 0
        %v616 = vperm.slane %v613, 1
        %v635 = vunpack.c.l.b16 %v597
        %v636 = vunpack.c.h.b16 %v597
        %v637 = vunpack.c.l.b16 %v598
        %v638 = vunpack.c.h.b16 %v598
        %v639 = vunpack.c.l.b16 %v599
        %v640 = vunpack.c.h.b16 %v599
        %v641 = vunpack.c.l.b16 %v600
        %v642 = vunpack.c.h.b16 %v600
        %v643 = vunpack.c.l.b16 %v601
        %v644 = vunpack.c.h.b16 %v601
        %v645 = vunpack.c.l.b16 %v602
        %v646 = vunpack.c.h.b16 %v602
        %v647 = vunpack.c.l.b16 %v603
        %v648 = vunpack.c.h.b16 %v603
        %v649 = vunpack.c.l.b16 %v604
        %v650 = vunpack.c.h.b16 %v604
        %v651 = vunpack.c.l.b16 %v605
        %v652 = vunpack.c.h.b16 %v605
        %v653 = vunpack.c.l.b16 %v606
        %v654 = vunpack.c.h.b16 %v606
        %v655 = vunpack.c.l.b16 %v607
        %v656 = vunpack.c.h.b16 %v607
        %v657 = vunpack.c.l.b16 %v608
        %v658 = vunpack.c.h.b16 %v608
        %v659 = vunpack.c.l.b16 %v609
        %v660 = vunpack.c.h.b16 %v609
        %v661 = vunpack.c.l.b16 %v610
        %v662 = vunpack.c.h.b16 %v610
        %v663 = vunpack.c.l.b16 %v611
        %v664 = vunpack.c.h.b16 %v611
        %v665 = vunpack.c.l.b16 %v612
        %v666 = vunpack.c.h.b16 %v612
        %v667 = vpack.c.b16 %v637, %v635
        %v668 = vpack.c.b16 %v638, %v636
        %v669 = vpack.c.b16 %v641, %v639
        %v670 = vpack.c.b16 %v642, %v640
        %v671 = vpack.c.b16 %v645, %v643
        %v672 = vpack.c.b16 %v646, %v644
        %v673 = vpack.c.b16 %v649, %v647
        %v674 = vpack.c.b16 %v650, %v648
        %v675 = vpack.c.b16 %v653, %v651
        %v676 = vpack.c.b16 %v654, %v652
        %v677 = vpack.c.b16 %v657, %v655
        %v678 = vpack.c.b16 %v658, %v656
        %v679 = vpack.c.b16 %v661, %v659
        %v680 = vpack.c.b16 %v662, %v660
        %v681 = vpack.c.b16 %v665, %v663
        %v682 = vpack.c.b16 %v666, %v664
        %699 = vmatpush.bf16.msra.mxu0 %v681
        %700 = vmatpush.bf16.msra.mxu0 %v679
        %701 = vmatpush.bf16.msra.mxu0 %v677
        %702 = vmatpush.bf16.msra.mxu0 %v675
        %703 = vmatpush.bf16.msra.mxu0 %v673
        %704 = vmatpush.bf16.msra.mxu0 %v671
        %705 = vmatpush.bf16.msra.mxu0 %v669
        %706 = vmatpush.bf16.msra.mxu0 %v667
        %707 = vmatmul.bf16.gmra.mxu0 %v596
        %v708 = vpop.f32.mrf.mxu0
        %v709 = vadd.f32 %v615, %v708
        %v710 = vpop.f32.mrf.mxu0
        %711 = vdwg.mxu0
        %712 = vmatpush.bf16.msra.mxu0 %v682
        %713 = vmatpush.bf16.msra.mxu0 %v680
        %714 = vmatpush.bf16.msra.mxu0 %v678
        %715 = vmatpush.bf16.msra.mxu0 %v676
        %716 = vmatpush.bf16.msra.mxu0 %v674
        %717 = vmatpush.bf16.msra.mxu0 %v672
        %718 = vmatpush.bf16.msra.mxu0 %v670
        %719 = vmatpush.bf16.msra.mxu0 %v668
        %720 = vmatmul.bf16.gmra.mxu0 %v596
        %v721 = vpop.f32.mrf.mxu0
        %v722 = vadd.f32 %v616, %v721
        %v723 = vpop.f32.mrf.mxu0
        %724 = vdwg.mxu0
        %v725 = vpack.c.bf16 %v593, %v593
        %v726 = vpack.c.bf16 %v709, %v709
        %v727 = vpack.c.bf16 %v722, %v722
        %728 = vst [vmem:[#allocation2] sm:$0xff] 0.0
        %vm729 = vcmask 64512
        %v731 = vsel %vm729, %v725, 0
        %v734 = vsel %vm729, %v726, 0
        %736 = vmatpush.bf16.xpose.msra.mxu0 0
        %737 = vmatpush.bf16.xpose.msra.mxu0 0
        %738 = vmatpush.bf16.xpose.msra.mxu0 0
        %739 = vmatpush.bf16.xpose.msra.mxu0 0
        %740 = vmatpush.bf16.xpose.msra.mxu0 0
        %741 = vmatpush.bf16.xpose.msra.mxu0 0
        %742 = vmatpush.bf16.xpose.msra.mxu0 0
        %743 = vmatpush.bf16.xpose.msra.mxu0 %v734
        %744 = vmatmul.bf16.gmra.mxu0 %v731
        %v745 = vpop.f32.mrf.mxu0
        %v746 = vadd.f32 0.0, %v745
        %v747 = vpop.f32.mrf.mxu0
        %748 = vdwg.mxu0
        %v749 = vsel %vm729, %v746, -inf
        %750 = vmax.xlane.f32.xlu0 %v749
        %v751 = vpop.xlane.xlu0 %750
        %v752 = vsub.f32 %v746, %v751
        %v753 = vmul.f32 %v752, 1.442695
        %v754 = vpow.pop %v753
        %v755 = vsel %vm729, %v754, 0.0
        %756 = vadd.xlane.f32.xlu0 %v755
        %v757 = vpop.xlane.xlu0 %756
        %v758 = vrcp.pop %v757
        %v759 = vmul.f32 %v757, %v758
        %v760 = vsub.f32 1.0, %v759
        %v761 = vmul.f32 %v758, %v760
        %v762 = vadd.f32 %v758, %v761
        %vm763 = vweird.f32 %v757
        %vm764 = vweird.f32 %v758
        %vm765 = vmor %vm763, %vm764
        %v766 = vsel %vm765, %v758, %v762
        %v767 = vand.u32 2147483647, %v757
        %vm768 = vcmp.eq.f32.partialorder %v767, 8.507059e+37
        %v769 = vand.u32 %v757, 2147483648
        %v770 = vor.u32 1.1754944e-38, %v769
        %v771 = vsel %vm768, %v770, %v766
        %v772 = vmul.f32 %v754, %v771
        %v773 = vpack.c.bf16 %v772, %v772
        %v775 = vsel %vm729, %v773, 0
        %vm777 = vcmask 1043456
        %v779 = vsel %vm777, %v727, 0
        %781 = vmatpush.bf16.msra.mxu0 0
        %782 = vmatpush.bf16.msra.mxu0 0
        %783 = vmatpush.bf16.msra.mxu0 0
        %784 = vmatpush.bf16.msra.mxu0 0
        %785 = vmatpush.bf16.msra.mxu0 0
        %786 = vmatpush.bf16.msra.mxu0 0
        %787 = vmatpush.bf16.msra.mxu0 0
        %788 = vmatpush.bf16.msra.mxu0 %v779
        %789 = vmatmul.bf16.gmra.mxu0 %v775
        %v790 = vpop.f32.mrf.mxu0
        %v791 = vadd.f32 0.0, %v790
        %v792 = vpop.f32.mrf.mxu0
        %793 = vdwg.mxu0
        %794 = vst.msk [vmem:[#allocation2] sm:$0xff] %vm729, %v791
        %v796 = vunpack.c.l.b16 %v725
        %v797 = vpack.c.b16 %v796, %v796
        %798 = vrot.lane.b32.xlu0 %v797, 120
        %v799 = vpop.permute.xlu0 %798
        %v801 = vunpack.c.l.b16 %v726
        %v802 = vpack.c.b16 %v801, %v801
        %803 = vrot.lane.b32.xlu0 %v802, 120
        %v804 = vpop.permute.xlu0 %803
        %v806 = vsel %vm729, %v799, 0
        %v809 = vsel %vm729, %v804, 0
        %811 = vmatpush.bf16.xpose.msra.mxu0 0
        %812 = vmatpush.bf16.xpose.msra.mxu0 0
        %813 = vmatpush.bf16.xpose.msra.mxu0 0
        %814 = vmatpush.bf16.xpose.msra.mxu0 0
        %815 = vmatpush.bf16.xpose.msra.mxu0 0
        %816 = vmatpush.bf16.xpose.msra.mxu0 0
        %817 = vmatpush.bf16.xpose.msra.mxu0 0
        %818 = vmatpush.bf16.xpose.msra.mxu0 %v809
        %819 = vmatmul.bf16.gmra.mxu0 %v806
        %v820 = vpop.f32.mrf.mxu0
        %v821 = vadd.f32 0.0, %v820
        %v822 = vpop.f32.mrf.mxu0
        %823 = vdwg.mxu0
        %v824 = vsel %vm729, %v821, -inf
        %825 = vmax.xlane.f32.xlu0 %v824
        %v826 = vpop.xlane.xlu0 %825
        %v827 = vsub.f32 %v821, %v826
        %v828 = vmul.f32 %v827, 1.442695
        %v829 = vpow.pop %v828
        %v830 = vsel %vm729, %v829, 0.0
        %831 = vadd.xlane.f32.xlu0 %v830
        %v832 = vpop.xlane.xlu0 %831
        %v833 = vrcp.pop %v832
        %v834 = vmul.f32 %v832, %v833
        %v835 = vsub.f32 1.0, %v834
        %v836 = vmul.f32 %v833, %v835
        %v837 = vadd.f32 %v833, %v836
        %vm838 = vweird.f32 %v832
        %vm839 = vweird.f32 %v833
        %vm840 = vmor %vm838, %vm839
        %v841 = vsel %vm840, %v833, %v837
        %v842 = vand.u32 2147483647, %v832
        %vm843 = vcmp.eq.f32.partialorder %v842, 8.507059e+37
        %v844 = vand.u32 %v832, 2147483648
        %v845 = vor.u32 1.1754944e-38, %v844
        %v846 = vsel %vm843, %v845, %v841
        %v847 = vmul.f32 %v829, %v846
        %v848 = vpack.c.bf16 %v847, %v847
        %v850 = vunpack.c.l.b16 %v727
        %v851 = vpack.c.b16 %v850, %v850
        %852 = vrot.lane.b32.xlu0 %v851, 120
        %v853 = vpop.permute.xlu0 %852
        %v855 = vsel %vm729, %v848, 0
        %v858 = vsel %vm777, %v853, 0
        %860 = vmatpush.bf16.msra.mxu0 0
        %861 = vmatpush.bf16.msra.mxu0 0
        %862 = vmatpush.bf16.msra.mxu0 0
        %863 = vmatpush.bf16.msra.mxu0 0
        %864 = vmatpush.bf16.msra.mxu0 0
        %865 = vmatpush.bf16.msra.mxu0 0
        %866 = vmatpush.bf16.msra.mxu0 0
        %867 = vmatpush.bf16.msra.mxu0 %v858
        %868 = vmatmul.bf16.gmra.mxu0 %v855
        %v869 = vpop.f32.mrf.mxu0
        %v870 = vadd.f32 0.0, %v869
        %v871 = vpop.f32.mrf.mxu0
        %872 = vdwg.mxu0
        %874 = vrot.lane.b32.xlu0 %v870, 8
        %v875 = vpop.permute.xlu0 %874
        %vm877 = vcmask 130112
        %878 = vst.msk [vmem:[#allocation2] sm:$0xff] %vm877, %v875
        %v879 = vld [vmem:[#allocation2] sm:$0xff]
        %v880 = vpack.c.bf16 %v879, %v879
        %v881 = vld [vmem:[#allocation8] sm:$0xf]
        %v882 = vld [vmem:[#allocation8 + $0x4] sm:$0xf]
        %v883 = vld [vmem:[#allocation8 + $0x8] sm:$0xf]
        %v884 = vld [vmem:[#allocation8 + $0xc] sm:$0xf]
        %v885 = vld [vmem:[#allocation8 + $0x10] sm:$0xf]
        %v886 = vld [vmem:[#allocation8 + $0x14] sm:$0xf]
        %v887 = vld [vmem:[#allocation8 + $0x18] sm:$0xf]
        %v888 = vld [vmem:[#allocation8 + $0x1c] sm:$0xf]
        %v889 = vld [vmem:[#allocation8 + $0x20] sm:$0xf]
        %v890 = vld [vmem:[#allocation8 + $0x24] sm:$0xf]
        %v891 = vld [vmem:[#allocation8 + $0x28] sm:$0xf]
        %v892 = vld [vmem:[#allocation8 + $0x2c] sm:$0xf]
        %v893 = vld [vmem:[#allocation8 + $0x30] sm:$0xf]
        %v894 = vld [vmem:[#allocation8 + $0x34] sm:$0xf]
        %v895 = vld [vmem:[#allocation8 + $0x38] sm:$0xf]
        %v896 = vld [vmem:[#allocation8 + $0x3c] sm:$0xf]
        %v897 = vld [vmem:[#allocation10] sm:$0x1]
        %v899 = vperm.slane %v897, 0
        %v917 = vunpack.c.l.b16 %v881
        %v918 = vunpack.c.l.b16 %v882
        %v919 = vunpack.c.l.b16 %v883
        %v920 = vunpack.c.l.b16 %v884
        %v921 = vunpack.c.l.b16 %v885
        %v922 = vunpack.c.l.b16 %v886
        %v923 = vunpack.c.l.b16 %v887
        %v924 = vunpack.c.l.b16 %v888
        %v925 = vunpack.c.l.b16 %v889
        %v926 = vunpack.c.l.b16 %v890
        %v927 = vunpack.c.l.b16 %v891
        %v928 = vunpack.c.l.b16 %v892
        %v929 = vunpack.c.l.b16 %v893
        %v930 = vunpack.c.l.b16 %v894
        %v931 = vunpack.c.l.b16 %v895
        %v932 = vunpack.c.l.b16 %v896
        %v933 = vpack.c.b16 %v918, %v917
        %v934 = vpack.c.b16 %v920, %v919
        %v935 = vpack.c.b16 %v922, %v921
        %v936 = vpack.c.b16 %v924, %v923
        %v937 = vpack.c.b16 %v926, %v925
        %v938 = vpack.c.b16 %v928, %v927
        %v939 = vpack.c.b16 %v930, %v929
        %v940 = vpack.c.b16 %v932, %v931
        %949 = vmatpush.bf16.msra.mxu0 %v940
        %950 = vmatpush.bf16.msra.mxu0 %v939
        %951 = vmatpush.bf16.msra.mxu0 %v938
        %952 = vmatpush.bf16.msra.mxu0 %v937
        %953 = vmatpush.bf16.msra.mxu0 %v936
        %954 = vmatpush.bf16.msra.mxu0 %v935
        %955 = vmatpush.bf16.msra.mxu0 %v934
        %956 = vmatpush.bf16.msra.mxu0 %v933
        %957 = vmatmul.bf16.gmra.mxu0 %v880
        %v958 = vpop.f32.mrf.mxu0
        %v959 = vadd.f32 %v899, %v958
        %v960 = vpop.f32.mrf.mxu0
        %961 = vdwg.mxu0
        %v962 = vadd.f32 %v959, %v512
        %v963 = vld [vmem:[#allocation11] sm:$0x1]
        %v964 = vld [vmem:[#allocation13] sm:$0x1]
        %965 = vadd.xlane.f32.xlu0 %v962
        %v966 = vpop.xlane.xlu0 %965
        %v967 = vmul.f32 %v966, 0.0625
        %v968 = vsub.f32 %v962, %v967
        %v969 = vlaneseq
        %v970 = vand.u32 %v969, 127
        %vm971 = vcmp.lt.s32.totalorder %v970, 16
        %v972 = vsel %vm971, 1, 0
        %v973 = vcvt.s32.f32 %v972
        %v974 = vmul.f32 %v968, %v973
        %v975 = vmul.f32 %v974, %v974
        %976 = vadd.xlane.f32.xlu0 %v975
        %v977 = vpop.xlane.xlu0 %976
        %v978 = vmul.f32 %v977, 0.0625
        %v979 = vadd.f32 %v978, 1e-05
        %v980 = vrsqrt.pop %v979
        %v981 = vmul.f32 %v980, %v979
        %v982 = vmul.f32 %v981, %v980
        %v983 = vmul.f32 0.5, %v982
        %v984 = vsub.f32 1.5, %v983
        %v985 = vmul.f32 %v980, %v984
        %vm986 = vweird.f32 %v979
        %vm987 = vweird.f32 %v980
        %vm988 = vmor %vm986, %vm987
        %v989 = vsel %vm988, %v980, %v985
        %v990 = vmul.f32 %v974, %v989
        %v992 = vperm.slane %v963, 0
        %v994 = vmul.f32 %v990, %v992
        %v996 = vperm.slane %v964, 0
        %v998 = vadd.f32 %v994, %v996
        %999 = vst [vmem:[%s510] sm:$0xff] %v998
        %p1000 = scmp.lt.s32.totalorder %s29, 1
        %s1001 = scalar_select %p1000, %s29, 1
        %p1002 = scmp.lt.s32.totalorder %s30, 0
        %s1003 = scalar_select %p1002, %s30, 0
        %s1004 = sadd.s32 %s1003, %s1001
        %s1005 = smul.addr %s1004, 8
        %s1006 = scalar_lea.vmem %s10, %s1005
        // Predicated region
        $region89: #{vqvae_forward.20} parent=59 // pred_check
          %p1007 = pneg %p279
        $region90: #{vqvae_forward.20} parent=59 // pred_check_branch
          %1009 = sbr.rel (%p1007) target = $region92
        $region91: #{vqvae_forward.20} parent=59 // pred_region
          _
        $region92: #{vqvae_forward.20} parent=59 // pred_fallthru
          _
      $region60: #{vqvae_forward.20} parent=5 // pred_fallthru
        _
      %p1010 = scmp.le.s32.totalorder 2, %s20
      // Predicated region
      $region93: #{vqvae_forward.20} parent=5 // pred_check
        %p1011 = pneg %p1010
      $region94: #{vqvae_forward.20} parent=5 // pred_check_branch
        %1013 = sbr.rel (%p1011) target = $region96
      $region95: #{vqvae_forward.20} parent=5 // pred_region
        %s1014 = ssub.s32 %s20, 2
        // Predicated region
        $region97: #{vqvae_forward.20} parent=95 // pred_check
          %p1015 = pneg %p285
        $region98: #{vqvae_forward.20} parent=95 // pred_check_branch
          %1017 = sbr.rel (%p1015) target = $region100
        $region99: #{vqvae_forward.20} parent=95 // pred_region
          %p1018 = scmp.lt.s32.totalorder %s31, 1
          %s1019 = scalar_select %p1018, %s31, 1
          %p1020 = scmp.lt.s32.totalorder %s32, 0
          %s1021 = scalar_select %p1020, %s32, 0
          %s1022 = sadd.s32 %s1021, %s1019
          %s1023 = smul.addr %s1022, 8
          %s1024 = scalar_lea.vmem %s10, %s1023
        $region100: #{vqvae_forward.20} parent=95 // pred_fallthru
          _
      $region96: #{vqvae_forward.20} parent=5 // pred_fallthru
        _
    $region6: #{vqvae_forward.20} parent=1 // loop_footer
      %s24 = sadd.s32 1, %s20
    $region7: #{vqvae_forward.20} parent=1 // loop_footer_branch
      %19 = sbr.rel target = $region3
    $region8: #{vqvae_forward.20} parent=1 // loop_exit
      _
    %1025 = vsyncpa [#allocation4], 1
    %s1026 = scalar_lea.sflag [#allocation4], 1
    %1027 = vsyncpa %s1026, 1
    %1028 = vsyncpa [#allocation6], 1
    %1029 = vsyncpa [#allocation9], 1
    %1030 = vsyncpa [#allocation12], 1

</llo_original>
